<compile_context>
chip_gen: v7x
topology: tpu7x:2x2x1
jax: 0.10.0
libtpu: 0.0.40
codegen_flags: <defaults>
</compile_context>

<pallas_src>
import functools

import jax
import jax.numpy as jnp
from jax.experimental import pallas as pl
from jax.experimental.pallas import tpu as pltpu


NEG_SLOPE = 0.2
IN_IMG = 784           # flattened 28x28 image
IN_EMB = 10            # label-embedding width
IN_RAW = IN_IMG + IN_EMB
H1, H2, H3 = 1024, 512, 256
OUT_PAD = 128          # final layer N=1 padded to a full lane width


def _round_up(x, m):
    return (x + m - 1) // m * m


def _leaky_relu(v):
    return jnp.where(v > 0, v, NEG_SLOPE * v)


# ----------------------------------------------------------------------------
# Pallas kernel: fused 4-layer MLP + LeakyReLU + sigmoid, one batch tile / step
# ----------------------------------------------------------------------------
def _disc_mlp_kernel(x_ref, c_ref, w1a_ref, w1b_ref, b1_ref,
                     w2_ref, b2_ref, w3_ref, b3_ref, w4_ref, b4_ref, o_ref):
    # Layer 1, split-K: image part (tm,784)@(784,1024) in bf16 on the MXU plus
    # the tiny label-embedding part (tm,10)@(10,1024) in f32; f32 accumulation.
    h = (jnp.dot(x_ref[...], w1a_ref[...], preferred_element_type=jnp.float32)
         + jnp.dot(c_ref[...], w1b_ref[...], preferred_element_type=jnp.float32)
         + b1_ref[...])
    h = _leaky_relu(h).astype(w2_ref.dtype)
    # Layer 2: (tm, 1024) @ (1024, 512)
    h = jnp.dot(h, w2_ref[...], preferred_element_type=jnp.float32) + b2_ref[...]
    h = _leaky_relu(h).astype(w3_ref.dtype)
    # Layer 3: (tm, 512) @ (512, 256)
    h = jnp.dot(h, w3_ref[...], preferred_element_type=jnp.float32) + b3_ref[...]
    h = _leaky_relu(h).astype(w4_ref.dtype)
    # Layer 4 (N padded 1 -> 128, lane-dense store) + sigmoid on the EUP
    # (exp and approx reciprocal both use the EUP slot; VALU stays free).
    h = jnp.dot(h, w4_ref[...], preferred_element_type=jnp.float32) + b4_ref[...]
    o_ref[...] = pl.reciprocal(1.0 + jnp.exp(-h), approx=True)
    # NOTE: nn.Dropout(0.3) is eval-mode identity here (inference semantics).


# ----------------------------------------------------------------------------
# Parameters (PyTorch-default-style init), stored in (in, out) layout.
# ----------------------------------------------------------------------------
def init_params(key):
    def uni(k, shape, fan_in):
        s = 1.0 / jnp.sqrt(jnp.float32(fan_in))
        return jax.random.uniform(k, shape, jnp.float32, -s, s)

    ks = jax.random.split(key, 9)
    p = {}
    p["emb"] = jax.random.normal(ks[0], (10, 10), jnp.float32)   # nn.Embedding
    p["w1"] = uni(ks[1], (IN_RAW, H1), IN_RAW); p["b1"] = uni(ks[2], (H1,), IN_RAW)
    p["w2"] = uni(ks[3], (H1, H2), H1);         p["b2"] = uni(ks[4], (H2,), H1)
    p["w3"] = uni(ks[5], (H2, H3), H2);         p["b3"] = uni(ks[6], (H3,), H2)
    p["w4"] = uni(ks[7], (H3, 1), H3);          p["b4"] = uni(ks[8], (1,), H3)
    return p


def prepare_params(p, compute_dtype=jnp.bfloat16):
    """Split / pad / cast weights ONCE, outside the per-call path."""
    w1 = p["w1"]
    return {
        "emb": p["emb"].astype(jnp.float32),
        # Layer-1 weight split: image rows (bf16) + label-embedding rows (f32).
        "w1a": w1[:IN_IMG].astype(compute_dtype),        # (784, 1024)
        "w1b": w1[IN_IMG:].astype(jnp.float32),          # (10, 1024)
        "b1": p["b1"].reshape(1, H1).astype(jnp.float32),
        "w2": p["w2"].astype(compute_dtype),
        "b2": p["b2"].reshape(1, H2).astype(jnp.float32),
        "w3": p["w3"].astype(compute_dtype),
        "b3": p["b3"].reshape(1, H3).astype(jnp.float32),
        "w4": jnp.zeros((H3, OUT_PAD), compute_dtype)
                 .at[:, :1].set(p["w4"].astype(compute_dtype)),
        "b4": jnp.zeros((1, OUT_PAD), jnp.float32)
                 .at[0, :1].set(p["b4"].astype(jnp.float32)),
    }


# ----------------------------------------------------------------------------
# Forward
# ----------------------------------------------------------------------------
def discriminator_forward(pp, x, labels, *, single_buffer_weights=True):
    B = x.shape[0]
    cdt = pp["w1a"].dtype

    # Glue (tiny, stays in XLA): flatten image, embedding lookup.
    xf = x.reshape(B, IN_IMG).astype(cdt)                 # (B, 784) bf16
    c = jnp.take(pp["emb"], labels, axis=0)               # (B, 10)  f32

    # Batch tiling: >=16-row tiles (bf16 sublane packing), cap tm at 256, and
    # for anything larger than a tiny batch guarantee >=2 grid steps so both
    # v7x TensorCores get work (harmless ~0.35us/step on v5e/v6e).
    B16 = _round_up(B, 16)
    if B16 <= 32:
        Bp, tm = B16, B16
    else:
        tm = min(256, _round_up(B16 // 2, 16))
        Bp = _round_up(B16, tm)

    if Bp != B:
        xf = jnp.zeros((Bp, IN_IMG), cdt).at[:B].set(xf)
        c = jnp.zeros((Bp, IN_EMB), jnp.float32).at[:B].set(c)

    # Constant (grid-invariant) weight/bias tiles: single-buffer them to halve
    # their VMEM footprint.  Fall back to default buffering if this JAX build
    # does not accept the pipeline_mode kwarg (handled by caller's retry).
    const_kwargs = dict(pipeline_mode=pl.Buffered(1)) if single_buffer_weights else {}

    def const(shape):
        return pl.BlockSpec(shape, lambda i: (0, 0), **const_kwargs)

    out_p = pl.pallas_call(
        _disc_mlp_kernel,
        out_shape=jax.ShapeDtypeStruct((Bp, OUT_PAD), jnp.float32),
        grid_spec=pltpu.PrefetchScalarGridSpec(
            num_scalar_prefetch=0,
            grid=(Bp // tm,),
            in_specs=[
                pl.BlockSpec((tm, IN_IMG), lambda i: (i, 0)),   # image pixels
                pl.BlockSpec((tm, IN_EMB), lambda i: (i, 0)),   # label features
                const((IN_IMG, H1)), const((IN_EMB, H1)), const((1, H1)),
                const((H1, H2)), const((1, H2)),
                const((H2, H3)), const((1, H3)),
                const((H3, OUT_PAD)), const((1, OUT_PAD)),
            ],
            out_specs=pl.BlockSpec((tm, OUT_PAD), lambda i: (i, 0)),
        ),
        compiler_params=pltpu.CompilerParams(
            dimension_semantics=("parallel",),
            vmem_limit_bytes=32 * 1024 * 1024,
        ),
    )(xf, c, pp["w1a"], pp["w1b"], pp["b1"], pp["w2"], pp["b2"],
      pp["w3"], pp["b3"], pp["w4"], pp["b4"])

    # Column 0 is the real (N=1) output; matches torch's out.squeeze() for B>1.
    return out_p[:B, 0]


# Pure-JAX reference (f32) for cross-checking.
def reference_forward(p, x, labels):
    B = x.shape[0]
    xf = x.reshape(B, IN_IMG)
    c = p["emb"][labels]
    h = jnp.concatenate([xf, c], axis=1)
    h = _leaky_relu(h @ p["w1"] + p["b1"])
    h = _leaky_relu(h @ p["w2"] + p["b2"])
    h = _leaky_relu(h @ p["w3"] + p["b3"])
    h = h @ p["w4"] + p["b4"]
    return jax.nn.sigmoid(h)[:, 0]


if __name__ == "__main__":
    key = jax.random.PRNGKey(0)
    k_param, k_x, k_lab = jax.random.split(key, 3)

    params = init_params(k_param)
    padded_params = prepare_params(params)      # one-time split/pad/cast

    x = jax.random.normal(k_x, (2, 1, 28, 28), jnp.float32)     # MNIST-shaped
    labels = jax.random.randint(k_lab, (2,), 0, 10, jnp.int32)

    try:
        fwd = jax.jit(functools.partial(discriminator_forward,
                                        single_buffer_weights=True))
        out = jax.block_until_ready(fwd(padded_params, x, labels))
    except Exception:
        # pl.Buffered(1) pipeline_mode not supported on this build ->
        # fall back to default (double-buffered) constant weights.
        fwd = jax.jit(functools.partial(discriminator_forward,
                                        single_buffer_weights=False))
        out = jax.block_until_ready(fwd(padded_params, x, labels))

    assert out.shape == (2,), out.shape
    assert bool(jnp.all(jnp.isfinite(out)))
    assert bool(jnp.all((out >= 0.0) & (out <= 1.0)))           # sigmoid range

    ref = jax.block_until_ready(
        jax.jit(reference_forward)(params, x, labels))
    err = float(jnp.max(jnp.abs(out - ref)))
    assert err < 2e-2, f"max abs error too large: {err}"

    print("KERNEL_OK")
</pallas_src>

<mosaic_0001>
module attributes {stable_mosaic.version = 11 : i64} {
  func.func @_disc_mlp_kernel(%arg0: i32, %arg1: memref<16x784xbf16, #tpu.memory_space<vmem>>, %arg2: memref<16x10xf32, #tpu.memory_space<vmem>>, %arg3: memref<784x1024xbf16, #tpu.memory_space<vmem>>, %arg4: memref<10x1024xf32, #tpu.memory_space<vmem>>, %arg5: memref<1x1024xf32, #tpu.memory_space<vmem>>, %arg6: memref<1024x512xbf16, #tpu.memory_space<vmem>>, %arg7: memref<1x512xf32, #tpu.memory_space<vmem>>, %arg8: memref<512x256xbf16, #tpu.memory_space<vmem>>, %arg9: memref<1x256xf32, #tpu.memory_space<vmem>>, %arg10: memref<256x128xbf16, #tpu.memory_space<vmem>>, %arg11: memref<1x128xf32, #tpu.memory_space<vmem>>, %arg12: memref<16x128xf32, #tpu.memory_space<vmem>>) attributes {dimension_semantics = [#tpu.dimension_semantics<parallel>], iteration_bounds = array<i64: 1>, scalar_prefetch = 0 : i64, scratch_operands = 0 : i64, tpu.core_type = #tpu.core_type<tc>, window_params = [{transform_indices = @transform_0, window_bounds = array<i64: 16, 784>}, {transform_indices = @transform_1, window_bounds = array<i64: 16, 10>}, {pipeline_mode = #tpu.pipeline_mode<synchronous>, transform_indices = @transform_2, window_bounds = array<i64: 784, 1024>}, {pipeline_mode = #tpu.pipeline_mode<synchronous>, transform_indices = @transform_3, window_bounds = array<i64: 10, 1024>}, {pipeline_mode = #tpu.pipeline_mode<synchronous>, transform_indices = @transform_4, window_bounds = array<i64: 1, 1024>}, {pipeline_mode = #tpu.pipeline_mode<synchronous>, transform_indices = @transform_5, window_bounds = array<i64: 1024, 512>}, {pipeline_mode = #tpu.pipeline_mode<synchronous>, transform_indices = @transform_6, window_bounds = array<i64: 1, 512>}, {pipeline_mode = #tpu.pipeline_mode<synchronous>, transform_indices = @transform_7, window_bounds = array<i64: 512, 256>}, {pipeline_mode = #tpu.pipeline_mode<synchronous>, transform_indices = @transform_8, window_bounds = array<i64: 1, 256>}, {pipeline_mode = #tpu.pipeline_mode<synchronous>, transform_indices = @transform_9, window_bounds = array<i64: 256, 128>}, {pipeline_mode = #tpu.pipeline_mode<synchronous>, transform_indices = @transform_10, window_bounds = array<i64: 1, 128>}, {transform_indices = @transform_11, window_bounds = array<i64: 16, 128>}]} {
    %c0 = arith.constant 0 : index
    %c0_0 = arith.constant 0 : index
    %0 = vector.load %arg1[%c0, %c0_0] : memref<16x784xbf16, #tpu.memory_space<vmem>>, vector<16x784xbf16>
    %c0_1 = arith.constant 0 : index
    %c0_2 = arith.constant 0 : index
    %1 = vector.load %arg3[%c0_1, %c0_2] : memref<784x1024xbf16, #tpu.memory_space<vmem>>, vector<784x1024xbf16>
    %cst = arith.constant dense<0.000000e+00> : vector<16x1024xf32>
    %2 = tpu.matmul %0, %1, %cst {dimension_numbers = #tpu.dot_dimension_numbers<[1], [0], [0], [1], [0, 0, 1, 1], [], []>} : vector<16x784xbf16>, vector<784x1024xbf16>, vector<16x1024xf32> -> vector<16x1024xf32>
    %c0_3 = arith.constant 0 : index
    %c0_4 = arith.constant 0 : index
    %3 = vector.load %arg2[%c0_3, %c0_4] : memref<16x10xf32, #tpu.memory_space<vmem>>, vector<16x10xf32>
    %c0_5 = arith.constant 0 : index
    %c0_6 = arith.constant 0 : index
    %4 = vector.load %arg4[%c0_5, %c0_6] : memref<10x1024xf32, #tpu.memory_space<vmem>>, vector<10x1024xf32>
    %cst_7 = arith.constant dense<0.000000e+00> : vector<16x1024xf32>
    %5 = tpu.matmul %3, %4, %cst_7 {dimension_numbers = #tpu.dot_dimension_numbers<[1], [0], [0], [1], [0, 0, 1, 1], [], []>} : vector<16x10xf32>, vector<10x1024xf32>, vector<16x1024xf32> -> vector<16x1024xf32>
    %6 = arith.addf %2, %5 : vector<16x1024xf32>
    %c0_8 = arith.constant 0 : index
    %c0_9 = arith.constant 0 : index
    %7 = vector.load %arg5[%c0_8, %c0_9] : memref<1x1024xf32, #tpu.memory_space<vmem>>, vector<1x1024xf32>
    %8 = vector.broadcast %7 : vector<1x1024xf32> to vector<16x1024xf32>
    %9 = arith.addf %6, %8 : vector<16x1024xf32>
    %cst_10 = arith.constant 0.000000e+00 : f32
    %10 = vector.broadcast %cst_10 : f32 to vector<16x1024xf32>
    %11 = arith.cmpf ogt, %9, %10 : vector<16x1024xf32>
    %cst_11 = arith.constant 2.000000e-01 : f32
    %12 = vector.broadcast %cst_11 : f32 to vector<16x1024xf32>
    %13 = arith.mulf %12, %9 : vector<16x1024xf32>
    %14 = arith.select %11, %9, %13 : vector<16x1024xi1>, vector<16x1024xf32>
    %15 = arith.truncf %14 : vector<16x1024xf32> to vector<16x1024xbf16>
    %c0_12 = arith.constant 0 : index
    %c0_13 = arith.constant 0 : index
    %16 = vector.load %arg6[%c0_12, %c0_13] : memref<1024x512xbf16, #tpu.memory_space<vmem>>, vector<1024x512xbf16>
    %cst_14 = arith.constant dense<0.000000e+00> : vector<16x512xf32>
    %17 = tpu.matmul %15, %16, %cst_14 {dimension_numbers = #tpu.dot_dimension_numbers<[1], [0], [0], [1], [0, 0, 1, 1], [], []>} : vector<16x1024xbf16>, vector<1024x512xbf16>, vector<16x512xf32> -> vector<16x512xf32>
    %c0_15 = arith.constant 0 : index
    %c0_16 = arith.constant 0 : index
    %18 = vector.load %arg7[%c0_15, %c0_16] : memref<1x512xf32, #tpu.memory_space<vmem>>, vector<1x512xf32>
    %19 = vector.broadcast %18 : vector<1x512xf32> to vector<16x512xf32>
    %20 = arith.addf %17, %19 : vector<16x512xf32>
    %cst_17 = arith.constant 0.000000e+00 : f32
    %21 = vector.broadcast %cst_17 : f32 to vector<16x512xf32>
    %22 = arith.cmpf ogt, %20, %21 : vector<16x512xf32>
    %cst_18 = arith.constant 2.000000e-01 : f32
    %23 = vector.broadcast %cst_18 : f32 to vector<16x512xf32>
    %24 = arith.mulf %23, %20 : vector<16x512xf32>
    %25 = arith.select %22, %20, %24 : vector<16x512xi1>, vector<16x512xf32>
    %26 = arith.truncf %25 : vector<16x512xf32> to vector<16x512xbf16>
    %c0_19 = arith.constant 0 : index
    %c0_20 = arith.constant 0 : index
    %27 = vector.load %arg8[%c0_19, %c0_20] : memref<512x256xbf16, #tpu.memory_space<vmem>>, vector<512x256xbf16>
    %cst_21 = arith.constant dense<0.000000e+00> : vector<16x256xf32>
    %28 = tpu.matmul %26, %27, %cst_21 {dimension_numbers = #tpu.dot_dimension_numbers<[1], [0], [0], [1], [0, 0, 1, 1], [], []>} : vector<16x512xbf16>, vector<512x256xbf16>, vector<16x256xf32> -> vector<16x256xf32>
    %c0_22 = arith.constant 0 : index
    %c0_23 = arith.constant 0 : index
    %29 = vector.load %arg9[%c0_22, %c0_23] : memref<1x256xf32, #tpu.memory_space<vmem>>, vector<1x256xf32>
    %30 = vector.broadcast %29 : vector<1x256xf32> to vector<16x256xf32>
    %31 = arith.addf %28, %30 : vector<16x256xf32>
    %cst_24 = arith.constant 0.000000e+00 : f32
    %32 = vector.broadcast %cst_24 : f32 to vector<16x256xf32>
    %33 = arith.cmpf ogt, %31, %32 : vector<16x256xf32>
    %cst_25 = arith.constant 2.000000e-01 : f32
    %34 = vector.broadcast %cst_25 : f32 to vector<16x256xf32>
    %35 = arith.mulf %34, %31 : vector<16x256xf32>
    %36 = arith.select %33, %31, %35 : vector<16x256xi1>, vector<16x256xf32>
    %37 = arith.truncf %36 : vector<16x256xf32> to vector<16x256xbf16>
    %c0_26 = arith.constant 0 : index
    %c0_27 = arith.constant 0 : index
    %38 = vector.load %arg10[%c0_26, %c0_27] : memref<256x128xbf16, #tpu.memory_space<vmem>>, vector<256x128xbf16>
    %cst_28 = arith.constant dense<0.000000e+00> : vector<16x128xf32>
    %39 = tpu.matmul %37, %38, %cst_28 {dimension_numbers = #tpu.dot_dimension_numbers<[1], [0], [0], [1], [0, 0, 1, 1], [], []>} : vector<16x256xbf16>, vector<256x128xbf16>, vector<16x128xf32> -> vector<16x128xf32>
    %c0_29 = arith.constant 0 : index
    %c0_30 = arith.constant 0 : index
    %40 = vector.load %arg11[%c0_29, %c0_30] : memref<1x128xf32, #tpu.memory_space<vmem>>, vector<1x128xf32>
    %41 = vector.broadcast %40 : vector<1x128xf32> to vector<16x128xf32>
    %42 = arith.addf %39, %41 : vector<16x128xf32>
    %cst_31 = arith.constant 0.000000e+00 : f32
    %43 = vector.broadcast %cst_31 : f32 to vector<16x128xf32>
    %44 = arith.subf %43, %42 : vector<16x128xf32>
    %45 = math.exp %44 : vector<16x128xf32>
    %cst_32 = arith.constant 1.000000e+00 : f32
    %46 = vector.broadcast %cst_32 : f32 to vector<16x128xf32>
    %47 = arith.addf %46, %45 : vector<16x128xf32>
    %48 = tpu.reciprocal %47 {approx = true} : vector<16x128xf32> -> vector<16x128xf32>
    %c0_33 = arith.constant 0 : index
    %c0_34 = arith.constant 0 : index
    %49 = vector.load %arg12[%c0_33, %c0_34] : memref<16x128xf32, #tpu.memory_space<vmem>>, vector<16x128xf32>
    tpu.vector_store %arg12[%c0_33, %c0_34], %48 {strides = array<i32>} : memref<16x128xf32, #tpu.memory_space<vmem>>, vector<16x128xf32>,
    return
  }
  func.func @transform_0(%arg0: i32) -> (i32, i32) {
    %c0_i32 = arith.constant 0 : i32
    %c0_i32_0 = arith.constant 0 : i32
    return %arg0, %c0_i32 : i32, i32
  }
  func.func @transform_1(%arg0: i32) -> (i32, i32) {
    %c0_i32 = arith.constant 0 : i32
    %c0_i32_0 = arith.constant 0 : i32
    return %arg0, %c0_i32 : i32, i32
  }
  func.func @transform_2(%arg0: i32) -> (i32, i32) {
    %c0_i32 = arith.constant 0 : i32
    %c0_i32_0 = arith.constant 0 : i32
    %c0_i32_1 = arith.constant 0 : i32
    return %c0_i32, %c0_i32_0 : i32, i32
  }
  func.func @transform_3(%arg0: i32) -> (i32, i32) {
    %c0_i32 = arith.constant 0 : i32
    %c0_i32_0 = arith.constant 0 : i32
    %c0_i32_1 = arith.constant 0 : i32
    return %c0_i32, %c0_i32_0 : i32, i32
  }
  func.func @transform_4(%arg0: i32) -> (i32, i32) {
    %c0_i32 = arith.constant 0 : i32
    %c0_i32_0 = arith.constant 0 : i32
    %c0_i32_1 = arith.constant 0 : i32
    return %c0_i32, %c0_i32_0 : i32, i32
  }
  func.func @transform_5(%arg0: i32) -> (i32, i32) {
    %c0_i32 = arith.constant 0 : i32
    %c0_i32_0 = arith.constant 0 : i32
    %c0_i32_1 = arith.constant 0 : i32
    return %c0_i32, %c0_i32_0 : i32, i32
  }
  func.func @transform_6(%arg0: i32) -> (i32, i32) {
    %c0_i32 = arith.constant 0 : i32
    %c0_i32_0 = arith.constant 0 : i32
    %c0_i32_1 = arith.constant 0 : i32
    return %c0_i32, %c0_i32_0 : i32, i32
  }
  func.func @transform_7(%arg0: i32) -> (i32, i32) {
    %c0_i32 = arith.constant 0 : i32
    %c0_i32_0 = arith.constant 0 : i32
    %c0_i32_1 = arith.constant 0 : i32
    return %c0_i32, %c0_i32_0 : i32, i32
  }
  func.func @transform_8(%arg0: i32) -> (i32, i32) {
    %c0_i32 = arith.constant 0 : i32
    %c0_i32_0 = arith.constant 0 : i32
    %c0_i32_1 = arith.constant 0 : i32
    return %c0_i32, %c0_i32_0 : i32, i32
  }
  func.func @transform_9(%arg0: i32) -> (i32, i32) {
    %c0_i32 = arith.constant 0 : i32
    %c0_i32_0 = arith.constant 0 : i32
    %c0_i32_1 = arith.constant 0 : i32
    return %c0_i32, %c0_i32_0 : i32, i32
  }
  func.func @transform_10(%arg0: i32) -> (i32, i32) {
    %c0_i32 = arith.constant 0 : i32
    %c0_i32_0 = arith.constant 0 : i32
    %c0_i32_1 = arith.constant 0 : i32
    return %c0_i32, %c0_i32_0 : i32, i32
  }
  func.func @transform_11(%arg0: i32) -> (i32, i32) {
    %c0_i32 = arith.constant 0 : i32
    %c0_i32_0 = arith.constant 0 : i32
    return %arg0, %c0_i32 : i32, i32
  }
}

module attributes {stable_mosaic.version = 11 : i64} {
  func.func @_disc_mlp_kernel(%arg0: i32, %arg1: memref<16x784xbf16, #tpu.memory_space<vmem>>, %arg2: memref<16x10xf32, #tpu.memory_space<vmem>>, %arg3: memref<784x1024xbf16, #tpu.memory_space<vmem>>, %arg4: memref<10x1024xf32, #tpu.memory_space<vmem>>, %arg5: memref<1x1024xf32, #tpu.memory_space<vmem>>, %arg6: memref<1024x512xbf16, #tpu.memory_space<vmem>>, %arg7: memref<1x512xf32, #tpu.memory_space<vmem>>, %arg8: memref<512x256xbf16, #tpu.memory_space<vmem>>, %arg9: memref<1x256xf32, #tpu.memory_space<vmem>>, %arg10: memref<256x128xbf16, #tpu.memory_space<vmem>>, %arg11: memref<1x128xf32, #tpu.memory_space<vmem>>, %arg12: memref<16x128xf32, #tpu.memory_space<vmem>>) attributes {dimension_semantics = [#tpu.dimension_semantics<parallel>], iteration_bounds = array<i64: 1>, scalar_prefetch = 0 : i64, scratch_operands = 0 : i64, tpu.core_type = #tpu.core_type<tc>, window_params = [{transform_indices = @transform_0, window_bounds = array<i64: 16, 784>}, {transform_indices = @transform_1, window_bounds = array<i64: 16, 10>}, {pipeline_mode = #tpu.pipeline_mode<synchronous>, transform_indices = @transform_2, window_bounds = array<i64: 784, 1024>}, {pipeline_mode = #tpu.pipeline_mode<synchronous>, transform_indices = @transform_3, window_bounds = array<i64: 10, 1024>}, {pipeline_mode = #tpu.pipeline_mode<synchronous>, transform_indices = @transform_4, window_bounds = array<i64: 1, 1024>}, {pipeline_mode = #tpu.pipeline_mode<synchronous>, transform_indices = @transform_5, window_bounds = array<i64: 1024, 512>}, {pipeline_mode = #tpu.pipeline_mode<synchronous>, transform_indices = @transform_6, window_bounds = array<i64: 1, 512>}, {pipeline_mode = #tpu.pipeline_mode<synchronous>, transform_indices = @transform_7, window_bounds = array<i64: 512, 256>}, {pipeline_mode = #tpu.pipeline_mode<synchronous>, transform_indices = @transform_8, window_bounds = array<i64: 1, 256>}, {pipeline_mode = #tpu.pipeline_mode<synchronous>, transform_indices = @transform_9, window_bounds = array<i64: 256, 128>}, {pipeline_mode = #tpu.pipeline_mode<synchronous>, transform_indices = @transform_10, window_bounds = array<i64: 1, 128>}, {transform_indices = @transform_11, window_bounds = array<i64: 16, 128>}]} {
    %c0 = arith.constant 0 : index
    %c0_0 = arith.constant 0 : index
    %0 = vector.load %arg1[%c0, %c0_0] : memref<16x784xbf16, #tpu.memory_space<vmem>>, vector<16x784xbf16>
    %c0_1 = arith.constant 0 : index
    %c0_2 = arith.constant 0 : index
    %1 = vector.load %arg3[%c0_1, %c0_2] : memref<784x1024xbf16, #tpu.memory_space<vmem>>, vector<784x1024xbf16>
    %cst = arith.constant dense<0.000000e+00> : vector<16x1024xf32>
    %2 = tpu.matmul %0, %1, %cst {dimension_numbers = #tpu.dot_dimension_numbers<[1], [0], [0], [1], [0, 0, 1, 1], [], []>} : vector<16x784xbf16>, vector<784x1024xbf16>, vector<16x1024xf32> -> vector<16x1024xf32>
    %c0_3 = arith.constant 0 : index
    %c0_4 = arith.constant 0 : index
    %3 = vector.load %arg2[%c0_3, %c0_4] : memref<16x10xf32, #tpu.memory_space<vmem>>, vector<16x10xf32>
    %c0_5 = arith.constant 0 : index
    %c0_6 = arith.constant 0 : index
    %4 = vector.load %arg4[%c0_5, %c0_6] : memref<10x1024xf32, #tpu.memory_space<vmem>>, vector<10x1024xf32>
    %cst_7 = arith.constant dense<0.000000e+00> : vector<16x1024xf32>
    %5 = tpu.matmul %3, %4, %cst_7 {dimension_numbers = #tpu.dot_dimension_numbers<[1], [0], [0], [1], [0, 0, 1, 1], [], []>} : vector<16x10xf32>, vector<10x1024xf32>, vector<16x1024xf32> -> vector<16x1024xf32>
    %6 = arith.addf %2, %5 : vector<16x1024xf32>
    %c0_8 = arith.constant 0 : index
    %c0_9 = arith.constant 0 : index
    %7 = vector.load %arg5[%c0_8, %c0_9] : memref<1x1024xf32, #tpu.memory_space<vmem>>, vector<1x1024xf32>
    %8 = vector.broadcast %7 : vector<1x1024xf32> to vector<16x1024xf32>
    %9 = arith.addf %6, %8 : vector<16x1024xf32>
    %cst_10 = arith.constant 0.000000e+00 : f32
    %10 = vector.broadcast %cst_10 : f32 to vector<16x1024xf32>
    %11 = arith.cmpf ogt, %9, %10 : vector<16x1024xf32>
    %cst_11 = arith.constant 2.000000e-01 : f32
    %12 = vector.broadcast %cst_11 : f32 to vector<16x1024xf32>
    %13 = arith.mulf %12, %9 : vector<16x1024xf32>
    %14 = arith.select %11, %9, %13 : vector<16x1024xi1>, vector<16x1024xf32>
    %15 = arith.truncf %14 : vector<16x1024xf32> to vector<16x1024xbf16>
    %c0_12 = arith.constant 0 : index
    %c0_13 = arith.constant 0 : index
    %16 = vector.load %arg6[%c0_12, %c0_13] : memref<1024x512xbf16, #tpu.memory_space<vmem>>, vector<1024x512xbf16>
    %cst_14 = arith.constant dense<0.000000e+00> : vector<16x512xf32>
    %17 = tpu.matmul %15, %16, %cst_14 {dimension_numbers = #tpu.dot_dimension_numbers<[1], [0], [0], [1], [0, 0, 1, 1], [], []>} : vector<16x1024xbf16>, vector<1024x512xbf16>, vector<16x512xf32> -> vector<16x512xf32>
    %c0_15 = arith.constant 0 : index
    %c0_16 = arith.constant 0 : index
    %18 = vector.load %arg7[%c0_15, %c0_16] : memref<1x512xf32, #tpu.memory_space<vmem>>, vector<1x512xf32>
    %19 = vector.broadcast %18 : vector<1x512xf32> to vector<16x512xf32>
    %20 = arith.addf %17, %19 : vector<16x512xf32>
    %cst_17 = arith.constant 0.000000e+00 : f32
    %21 = vector.broadcast %cst_17 : f32 to vector<16x512xf32>
    %22 = arith.cmpf ogt, %20, %21 : vector<16x512xf32>
    %cst_18 = arith.constant 2.000000e-01 : f32
    %23 = vector.broadcast %cst_18 : f32 to vector<16x512xf32>
    %24 = arith.mulf %23, %20 : vector<16x512xf32>
    %25 = arith.select %22, %20, %24 : vector<16x512xi1>, vector<16x512xf32>
    %26 = arith.truncf %25 : vector<16x512xf32> to vector<16x512xbf16>
    %c0_19 = arith.constant 0 : index
    %c0_20 = arith.constant 0 : index
    %27 = vector.load %arg8[%c0_19, %c0_20] : memref<512x256xbf16, #tpu.memory_space<vmem>>, vector<512x256xbf16>
    %cst_21 = arith.constant dense<0.000000e+00> : vector<16x256xf32>
    %28 = tpu.matmul %26, %27, %cst_21 {dimension_numbers = #tpu.dot_dimension_numbers<[1], [0], [0], [1], [0, 0, 1, 1], [], []>} : vector<16x512xbf16>, vector<512x256xbf16>, vector<16x256xf32> -> vector<16x256xf32>
    %c0_22 = arith.constant 0 : index
    %c0_23 = arith.constant 0 : index
    %29 = vector.load %arg9[%c0_22, %c0_23] : memref<1x256xf32, #tpu.memory_space<vmem>>, vector<1x256xf32>
    %30 = vector.broadcast %29 : vector<1x256xf32> to vector<16x256xf32>
    %31 = arith.addf %28, %30 : vector<16x256xf32>
    %cst_24 = arith.constant 0.000000e+00 : f32
    %32 = vector.broadcast %cst_24 : f32 to vector<16x256xf32>
    %33 = arith.cmpf ogt, %31, %32 : vector<16x256xf32>
    %cst_25 = arith.constant 2.000000e-01 : f32
    %34 = vector.broadcast %cst_25 : f32 to vector<16x256xf32>
    %35 = arith.mulf %34, %31 : vector<16x256xf32>
    %36 = arith.select %33, %31, %35 : vector<16x256xi1>, vector<16x256xf32>
    %37 = arith.truncf %36 : vector<16x256xf32> to vector<16x256xbf16>
    %c0_26 = arith.constant 0 : index
    %c0_27 = arith.constant 0 : index
    %38 = vector.load %arg10[%c0_26, %c0_27] : memref<256x128xbf16, #tpu.memory_space<vmem>>, vector<256x128xbf16>
    %cst_28 = arith.constant dense<0.000000e+00> : vector<16x128xf32>
    %39 = tpu.matmul %37, %38, %cst_28 {dimension_numbers = #tpu.dot_dimension_numbers<[1], [0], [0], [1], [0, 0, 1, 1], [], []>} : vector<16x256xbf16>, vector<256x128xbf16>, vector<16x128xf32> -> vector<16x128xf32>
    %c0_29 = arith.constant 0 : index
    %c0_30 = arith.constant 0 : index
    %40 = vector.load %arg11[%c0_29, %c0_30] : memref<1x128xf32, #tpu.memory_space<vmem>>, vector<1x128xf32>
    %41 = vector.broadcast %40 : vector<1x128xf32> to vector<16x128xf32>
    %42 = arith.addf %39, %41 : vector<16x128xf32>
    %cst_31 = arith.constant 0.000000e+00 : f32
    %43 = vector.broadcast %cst_31 : f32 to vector<16x128xf32>
    %44 = arith.subf %43, %42 : vector<16x128xf32>
    %45 = math.exp %44 : vector<16x128xf32>
    %cst_32 = arith.constant 1.000000e+00 : f32
    %46 = vector.broadcast %cst_32 : f32 to vector<16x128xf32>
    %47 = arith.addf %46, %45 : vector<16x128xf32>
    %48 = tpu.reciprocal %47 {approx = true} : vector<16x128xf32> -> vector<16x128xf32>
    %c0_33 = arith.constant 0 : index
    %c0_34 = arith.constant 0 : index
    %49 = vector.load %arg12[%c0_33, %c0_34] : memref<16x128xf32, #tpu.memory_space<vmem>>, vector<16x128xf32>
    tpu.vector_store %arg12[%c0_33, %c0_34], %48 {strides = array<i32>} : memref<16x128xf32, #tpu.memory_space<vmem>>, vector<16x128xf32>,
    return
  }
  func.func @transform_0(%arg0: i32) -> (i32, i32) {
    %c0_i32 = arith.constant 0 : i32
    %c0_i32_0 = arith.constant 0 : i32
    return %arg0, %c0_i32 : i32, i32
  }
  func.func @transform_1(%arg0: i32) -> (i32, i32) {
    %c0_i32 = arith.constant 0 : i32
    %c0_i32_0 = arith.constant 0 : i32
    return %arg0, %c0_i32 : i32, i32
  }
  func.func @transform_2(%arg0: i32) -> (i32, i32) {
    %c0_i32 = arith.constant 0 : i32
    %c0_i32_0 = arith.constant 0 : i32
    %c0_i32_1 = arith.constant 0 : i32
    return %c0_i32, %c0_i32_0 : i32, i32
  }
  func.func @transform_3(%arg0: i32) -> (i32, i32) {
    %c0_i32 = arith.constant 0 : i32
    %c0_i32_0 = arith.constant 0 : i32
    %c0_i32_1 = arith.constant 0 : i32
    return %c0_i32, %c0_i32_0 : i32, i32
  }
  func.func @transform_4(%arg0: i32) -> (i32, i32) {
    %c0_i32 = arith.constant 0 : i32
    %c0_i32_0 = arith.constant 0 : i32
    %c0_i32_1 = arith.constant 0 : i32
    return %c0_i32, %c0_i32_0 : i32, i32
  }
  func.func @transform_5(%arg0: i32) -> (i32, i32) {
    %c0_i32 = arith.constant 0 : i32
    %c0_i32_0 = arith.constant 0 : i32
    %c0_i32_1 = arith.constant 0 : i32
    return %c0_i32, %c0_i32_0 : i32, i32
  }
  func.func @transform_6(%arg0: i32) -> (i32, i32) {
    %c0_i32 = arith.constant 0 : i32
    %c0_i32_0 = arith.constant 0 : i32
    %c0_i32_1 = arith.constant 0 : i32
    return %c0_i32, %c0_i32_0 : i32, i32
  }
  func.func @transform_7(%arg0: i32) -> (i32, i32) {
    %c0_i32 = arith.constant 0 : i32
    %c0_i32_0 = arith.constant 0 : i32
    %c0_i32_1 = arith.constant 0 : i32
    return %c0_i32, %c0_i32_0 : i32, i32
  }
  func.func @transform_8(%arg0: i32) -> (i32, i32) {
    %c0_i32 = arith.constant 0 : i32
    %c0_i32_0 = arith.constant 0 : i32
    %c0_i32_1 = arith.constant 0 : i32
    return %c0_i32, %c0_i32_0 : i32, i32
  }
  func.func @transform_9(%arg0: i32) -> (i32, i32) {
    %c0_i32 = arith.constant 0 : i32
    %c0_i32_0 = arith.constant 0 : i32
    %c0_i32_1 = arith.constant 0 : i32
    return %c0_i32, %c0_i32_0 : i32, i32
  }
  func.func @transform_10(%arg0: i32) -> (i32, i32) {
    %c0_i32 = arith.constant 0 : i32
    %c0_i32_0 = arith.constant 0 : i32
    %c0_i32_1 = arith.constant 0 : i32
    return %c0_i32, %c0_i32_0 : i32, i32
  }
  func.func @transform_11(%arg0: i32) -> (i32, i32) {
    %c0_i32 = arith.constant 0 : i32
    %c0_i32_0 = arith.constant 0 : i32
    return %arg0, %c0_i32 : i32, i32
  }
}

</mosaic_0001>

<llo_original>
// kernel: discriminator_forward.1
$region0: #{discriminator_forward.1}
  #allocation0 [shape = 'u32[]', space=smem, size = 0x4, offset = 0x4, fixed_abs, tag = 'smem constant byte address 0x4 - core index']
  #allocation1 [shape = 'u32[144,128]{1,0:T(1,128)}', space=vmem, size = 0x12000, scoped, tag = 'internal scratch']
  %s0 = inlined_call_operand.vmem [shape: bf16[16,784], index: 0, kind: input, shape index: {}]
  %s1 = inlined_call_operand.vmem [shape: f32[16,10], index: 1, kind: input, shape index: {}]
  %s2 = inlined_call_operand.hbm [shape: bf16[784,1024], index: 2, kind: input, shape index: {}]
  %s3 = inlined_call_operand.hbm [shape: f32[10,1024], index: 3, kind: input, shape index: {}]
  %s4 = inlined_call_operand.hbm [shape: f32[1,1024], index: 4, kind: input, shape index: {}]
  %s5 = inlined_call_operand.hbm [shape: bf16[1024,512], index: 5, kind: input, shape index: {}]
  %s6 = inlined_call_operand.hbm [shape: f32[1,512], index: 6, kind: input, shape index: {}]
  %s7 = inlined_call_operand.hbm [shape: bf16[512,256], index: 7, kind: input, shape index: {}]
  %s8 = inlined_call_operand.hbm [shape: f32[1,256], index: 8, kind: input, shape index: {}]
  %s9 = inlined_call_operand.hbm [shape: bf16[256,128], index: 9, kind: input, shape index: {}]
  %s10 = inlined_call_operand.hbm [shape: f32[1,128], index: 10, kind: input, shape index: {}]
  %s11 = inlined_call_operand.vmem [shape: f32[16,128], index: 11, kind: output, shape index: {}]
  %s12 = sld [smem:[#allocation0]]
  $region90: #{discriminator_forward.1} parent=0
    _
  %s14 = ssub.s32 1, %s12
  %s15 = scalar_select 0, %s14, %s12
  $region1: #{discriminator_forward.1} parent=0
    #allocation2 [shape = 'u8[1605632]{0}', space=vmem, size = 0x188000, scoped, tag = 'input window, operand 2, single buffered']
    #allocation3 [shape = 's32[1]{0}', space=sflag, size = 0x4, scoped, tag = 'scoped memory for discriminator_forward.1']
    #allocation4 [shape = 'u8[65536]{0}', space=vmem, size = 0x10000, scoped, tag = 'input window, operand 3, single buffered']
    #allocation5 [shape = 's32[1]{0}', space=sflag, size = 0x4, scoped, tag = 'scoped memory for discriminator_forward.1']
    #allocation6 [shape = 'u8[4096]{0}', space=vmem, size = 0x1000, scoped, tag = 'input window, operand 4, single buffered']
    #allocation7 [shape = 'u8[1048576]{0}', space=vmem, size = 0x100000, scoped, tag = 'input window, operand 5, single buffered']
    #allocation8 [shape = 's32[1]{0}', space=sflag, size = 0x4, scoped, tag = 'scoped memory for discriminator_forward.1']
    #allocation9 [shape = 'u8[2048]{0}', space=vmem, size = 0x800, scoped, tag = 'input window, operand 6, single buffered']
    #allocation10 [shape = 'u8[262144]{0}', space=vmem, size = 0x40000, scoped, tag = 'input window, operand 7, single buffered']
    #allocation11 [shape = 's32[1]{0}', space=sflag, size = 0x4, scoped, tag = 'scoped memory for discriminator_forward.1']
    #allocation12 [shape = 'u8[1024]{0}', space=vmem, size = 0x400, scoped, tag = 'input window, operand 8, single buffered']
    #allocation13 [shape = 'u8[65536]{0}', space=vmem, size = 0x10000, scoped, tag = 'input window, operand 9, single buffered']
    #allocation14 [shape = 's32[1]{0}', space=sflag, size = 0x4, scoped, tag = 'scoped memory for discriminator_forward.1']
    #allocation15 [shape = 'u8[512]{0}', space=vmem, size = 0x400, scoped, tag = 'input window, operand 10, single buffered']
    %16 = vsyncpa [#allocation3], 0
    %17 = vsyncpa [#allocation5], 0
    %18 = vsyncpa [#allocation8], 0
    %19 = vsyncpa [#allocation11], 0
    %20 = vsyncpa [#allocation14], 0
    // Predicated region
    $region2: #{discriminator_forward.1} parent=1 // pred_check
      _
    $region3: #{discriminator_forward.1} parent=1 // pred_check_branch
      %22 = sbr.rel (0) target = $region5
    $region4: #{discriminator_forward.1} parent=1 // pred_region
      _
    $region5: #{discriminator_forward.1} parent=1 // pred_fallthru
      _
    // Predicated region
    $region6: #{discriminator_forward.1} parent=1 // pred_check
      _
    $region7: #{discriminator_forward.1} parent=1 // pred_check_branch
      %24 = sbr.rel (0) target = $region9
    $region8: #{discriminator_forward.1} parent=1 // pred_region
      _
    $region9: #{discriminator_forward.1} parent=1 // pred_fallthru
      _
    // Predicated region
    $region10: #{discriminator_forward.1} parent=1 // pred_check
      _
    $region11: #{discriminator_forward.1} parent=1 // pred_check_branch
      %26 = sbr.rel (0) target = $region13
    $region12: #{discriminator_forward.1} parent=1 // pred_region
      %s28 = ssub.s32 50176, 50176
      %29 = vsyncadd [#allocation3], %s28
      %s30 = sshll.u32 [#allocation2], 4
      %s31 = int_to_ptr.vmem [resolvable:$true] %s30
      %36 = dma.hbm_to_vmem [thread:$0]  %s2, 50176, %s31, [#allocation3], 512, 512, 32
    $region13: #{discriminator_forward.1} parent=1 // pred_fallthru
      _
    // Predicated region
    $region14: #{discriminator_forward.1} parent=1 // pred_check
      _
    $region15: #{discriminator_forward.1} parent=1 // pred_check_branch
      %38 = sbr.rel (0) target = $region17
    $region16: #{discriminator_forward.1} parent=1 // pred_region
      %s40 = ssub.s32 2048, 2048
      %41 = vsyncadd [#allocation5], %s40
      %s42 = sshll.u32 [#allocation4], 4
      %s43 = int_to_ptr.vmem [resolvable:$true] %s42
      %48 = dma.hbm_to_vmem [thread:$0]  %s3, 2048, %s43, [#allocation5], 1024, 1024, 64
    $region17: #{discriminator_forward.1} parent=1 // pred_fallthru
      _
    // Predicated region
    $region18: #{discriminator_forward.1} parent=1 // pred_check
      _
    $region19: #{discriminator_forward.1} parent=1 // pred_check_branch
      %50 = sbr.rel (0) target = $region21
    $region20: #{discriminator_forward.1} parent=1 // pred_region
      %s52 = ssub.s32 128, 128
      %53 = vsyncadd [#allocation5], %s52
      %s55 = sshll.u32 [#allocation6], 4
      %s56 = int_to_ptr.vmem [resolvable:$true] %s55
      %58 = dma.hbm_to_vmem [thread:$0]  %s4, 128, %s56, [#allocation5]
    $region21: #{discriminator_forward.1} parent=1 // pred_fallthru
      _
    // Predicated region
    $region22: #{discriminator_forward.1} parent=1 // pred_check
      _
    $region23: #{discriminator_forward.1} parent=1 // pred_check_branch
      %60 = sbr.rel (0) target = $region25
    $region24: #{discriminator_forward.1} parent=1 // pred_region
      %s62 = ssub.s32 32768, 32768
      %63 = vsyncadd [#allocation8], %s62
      %s64 = sshll.u32 [#allocation7], 4
      %s65 = int_to_ptr.vmem [resolvable:$true] %s64
      %70 = dma.hbm_to_vmem [thread:$0]  %s5, 32768, %s65, [#allocation8], 256, 256, 16
    $region25: #{discriminator_forward.1} parent=1 // pred_fallthru
      _
    // Predicated region
    $region26: #{discriminator_forward.1} parent=1 // pred_check
      _
    $region27: #{discriminator_forward.1} parent=1 // pred_check_branch
      %72 = sbr.rel (0) target = $region29
    $region28: #{discriminator_forward.1} parent=1 // pred_region
      %s74 = ssub.s32 64, 64
      %75 = vsyncadd [#allocation8], %s74
      %s77 = sshll.u32 [#allocation9], 4
      %s78 = int_to_ptr.vmem [resolvable:$true] %s77
      %80 = dma.hbm_to_vmem [thread:$0]  %s6, 64, %s78, [#allocation8]
    $region29: #{discriminator_forward.1} parent=1 // pred_fallthru
      _
    // Predicated region
    $region30: #{discriminator_forward.1} parent=1 // pred_check
      _
    $region31: #{discriminator_forward.1} parent=1 // pred_check_branch
      %82 = sbr.rel (0) target = $region33
    $region32: #{discriminator_forward.1} parent=1 // pred_region
      %s84 = ssub.s32 8192, 8192
      %85 = vsyncadd [#allocation11], %s84
      %s86 = sshll.u32 [#allocation10], 4
      %s87 = int_to_ptr.vmem [resolvable:$true] %s86
      %92 = dma.hbm_to_vmem [thread:$0]  %s7, 8192, %s87, [#allocation11], 128, 128, 8
    $region33: #{discriminator_forward.1} parent=1 // pred_fallthru
      _
    // Predicated region
    $region34: #{discriminator_forward.1} parent=1 // pred_check
      _
    $region35: #{discriminator_forward.1} parent=1 // pred_check_branch
      %94 = sbr.rel (0) target = $region37
    $region36: #{discriminator_forward.1} parent=1 // pred_region
      %s96 = ssub.s32 32, 32
      %97 = vsyncadd [#allocation11], %s96
      %s99 = sshll.u32 [#allocation12], 4
      %s100 = int_to_ptr.vmem [resolvable:$true] %s99
      %102 = dma.hbm_to_vmem [thread:$0]  %s8, 32, %s100, [#allocation11]
    $region37: #{discriminator_forward.1} parent=1 // pred_fallthru
      _
    // Predicated region
    $region38: #{discriminator_forward.1} parent=1 // pred_check
      _
    $region39: #{discriminator_forward.1} parent=1 // pred_check_branch
      %104 = sbr.rel (0) target = $region41
    $region40: #{discriminator_forward.1} parent=1 // pred_region
      %s106 = ssub.s32 2048, 2048
      %107 = vsyncadd [#allocation14], %s106
      %s108 = sshll.u32 [#allocation13], 4
      %s109 = int_to_ptr.vmem [resolvable:$true] %s108
      %114 = dma.hbm_to_vmem [thread:$0]  %s9, 2048, %s109, [#allocation14], 64, 64, 4
    $region41: #{discriminator_forward.1} parent=1 // pred_fallthru
      _
    // Predicated region
    $region42: #{discriminator_forward.1} parent=1 // pred_check
      _
    $region43: #{discriminator_forward.1} parent=1 // pred_check_branch
      %116 = sbr.rel (0) target = $region45
    $region44: #{discriminator_forward.1} parent=1 // pred_region
      %s118 = ssub.s32 16, 16
      %119 = vsyncadd [#allocation14], %s118
      %s121 = sshll.u32 [#allocation15], 4
      %s122 = int_to_ptr.vmem [resolvable:$true] %s121
      %124 = dma.hbm_to_vmem [thread:$0]  %s10, 16, %s122, [#allocation14]
    $region45: #{discriminator_forward.1} parent=1 // pred_fallthru
      _
    // Predicated region
    $region46: #{discriminator_forward.1} parent=1 // pred_check
      _
    $region47: #{discriminator_forward.1} parent=1 // pred_check_branch
      %126 = sbr.rel (0) target = $region49
    $region48: #{discriminator_forward.1} parent=1 // pred_region
      %127 = dma.done [#allocation3], 50176
    $region49: #{discriminator_forward.1} parent=1 // pred_fallthru
      _
    // Predicated region
    $region50: #{discriminator_forward.1} parent=1 // pred_check
      _
    $region51: #{discriminator_forward.1} parent=1 // pred_check_branch
      %129 = sbr.rel (0) target = $region53
    $region52: #{discriminator_forward.1} parent=1 // pred_region
      %130 = dma.done [#allocation5], 2048
    $region53: #{discriminator_forward.1} parent=1 // pred_fallthru
      _
    // Predicated region
    $region54: #{discriminator_forward.1} parent=1 // pred_check
      _
    $region55: #{discriminator_forward.1} parent=1 // pred_check_branch
      %132 = sbr.rel (0) target = $region57
    $region56: #{discriminator_forward.1} parent=1 // pred_region
      %133 = dma.done [#allocation5], 128
    $region57: #{discriminator_forward.1} parent=1 // pred_fallthru
      _
    // Predicated region
    $region58: #{discriminator_forward.1} parent=1 // pred_check
      _
    $region59: #{discriminator_forward.1} parent=1 // pred_check_branch
      %135 = sbr.rel (0) target = $region61
    $region60: #{discriminator_forward.1} parent=1 // pred_region
      %136 = dma.done [#allocation8], 32768
    $region61: #{discriminator_forward.1} parent=1 // pred_fallthru
      _
    // Predicated region
    $region62: #{discriminator_forward.1} parent=1 // pred_check
      _
    $region63: #{discriminator_forward.1} parent=1 // pred_check_branch
      %138 = sbr.rel (0) target = $region65
    $region64: #{discriminator_forward.1} parent=1 // pred_region
      %139 = dma.done [#allocation8], 64
    $region65: #{discriminator_forward.1} parent=1 // pred_fallthru
      _
    // Predicated region
    $region66: #{discriminator_forward.1} parent=1 // pred_check
      _
    $region67: #{discriminator_forward.1} parent=1 // pred_check_branch
      %141 = sbr.rel (0) target = $region69
    $region68: #{discriminator_forward.1} parent=1 // pred_region
      %142 = dma.done [#allocation11], 8192
    $region69: #{discriminator_forward.1} parent=1 // pred_fallthru
      _
    // Predicated region
    $region70: #{discriminator_forward.1} parent=1 // pred_check
      _
    $region71: #{discriminator_forward.1} parent=1 // pred_check_branch
      %144 = sbr.rel (0) target = $region73
    $region72: #{discriminator_forward.1} parent=1 // pred_region
      %145 = dma.done [#allocation11], 32
    $region73: #{discriminator_forward.1} parent=1 // pred_fallthru
      _
    // Predicated region
    $region74: #{discriminator_forward.1} parent=1 // pred_check
      _
    $region75: #{discriminator_forward.1} parent=1 // pred_check_branch
      %147 = sbr.rel (0) target = $region77
    $region76: #{discriminator_forward.1} parent=1 // pred_region
      %148 = dma.done [#allocation14], 2048
    $region77: #{discriminator_forward.1} parent=1 // pred_fallthru
      _
    // Predicated region
    $region78: #{discriminator_forward.1} parent=1 // pred_check
      _
    $region79: #{discriminator_forward.1} parent=1 // pred_check_branch
      %150 = sbr.rel (0) target = $region81
    $region80: #{discriminator_forward.1} parent=1 // pred_region
      %151 = dma.done [#allocation14], 16
    $region81: #{discriminator_forward.1} parent=1 // pred_fallthru
      _
    %v153 = vld [vmem:[%s0] sm:$0xff]
    %v154 = vld [vmem:[%s0 + $0x8] sm:$0xff]
    %v155 = vld [vmem:[%s0 + $0x10] sm:$0xff]
    %v156 = vld [vmem:[%s0 + $0x18] sm:$0xf]
    %v157 = vld [vmem:[%s0 + $0x1c] sm:$0xff]
    %v158 = vld [vmem:[%s0 + $0x24] sm:$0xff]
    %v159 = vld [vmem:[%s0 + $0x2c] sm:$0xff]
    %v160 = vld [vmem:[%s0 + $0x34] sm:$0xf]
    %v161 = vld [vmem:[#allocation2] sm:$0xff]
    %v162 = vld [vmem:[#allocation2 + $0x8] sm:$0xff]
    %v163 = vld [vmem:[#allocation2 + $0x10] sm:$0xff]
    %v164 = vld [vmem:[#allocation2 + $0x18] sm:$0xff]
    %v165 = vld [vmem:[#allocation2 + $0x20] sm:$0xff]
    %v166 = vld [vmem:[#allocation2 + $0x28] sm:$0xff]
    %v167 = vld [vmem:[#allocation2 + $0x30] sm:$0xff]
    %v168 = vld [vmem:[#allocation2 + $0x38] sm:$0xff]
    %v169 = vld [vmem:[#allocation2 + $0x40] sm:$0xff]
    %v170 = vld [vmem:[#allocation2 + $0x48] sm:$0xff]
    %v171 = vld [vmem:[#allocation2 + $0x50] sm:$0xff]
    %v172 = vld [vmem:[#allocation2 + $0x58] sm:$0xff]
    %v173 = vld [vmem:[#allocation2 + $0x60] sm:$0xff]
    %v174 = vld [vmem:[#allocation2 + $0x68] sm:$0xff]
    %v175 = vld [vmem:[#allocation2 + $0x70] sm:$0xff]
    %v176 = vld [vmem:[#allocation2 + $0x78] sm:$0xff]
    %v177 = vld [vmem:[#allocation2 + $0x80] sm:$0xff]
    %v178 = vld [vmem:[#allocation2 + $0x88] sm:$0xff]
    %v179 = vld [vmem:[#allocation2 + $0x90] sm:$0xff]
    %v180 = vld [vmem:[#allocation2 + $0x98] sm:$0xff]
    %v181 = vld [vmem:[#allocation2 + $0xa0] sm:$0xff]
    %v182 = vld [vmem:[#allocation2 + $0xa8] sm:$0xff]
    %v183 = vld [vmem:[#allocation2 + $0xb0] sm:$0xff]
    %v184 = vld [vmem:[#allocation2 + $0xb8] sm:$0xff]
    %v185 = vld [vmem:[#allocation2 + $0xc0] sm:$0xff]
    %v186 = vld [vmem:[#allocation2 + $0xc8] sm:$0xff]
    %v187 = vld [vmem:[#allocation2 + $0xd0] sm:$0xff]
    %v188 = vld [vmem:[#allocation2 + $0xd8] sm:$0xff]
    %v189 = vld [vmem:[#allocation2 + $0xe0] sm:$0xff]
    %v190 = vld [vmem:[#allocation2 + $0xe8] sm:$0xff]
    %v191 = vld [vmem:[#allocation2 + $0xf0] sm:$0xff]
    %v192 = vld [vmem:[#allocation2 + $0xf8] sm:$0xff]
    %v193 = vld [vmem:[#allocation2 + $0x100] sm:$0xff]
    %v194 = vld [vmem:[#allocation2 + $0x108] sm:$0xff]
    %v195 = vld [vmem:[#allocation2 + $0x110] sm:$0xff]
    %v196 = vld [vmem:[#allocation2 + $0x118] sm:$0xff]
    %v197 = vld [vmem:[#allocation2 + $0x120] sm:$0xff]
    %v198 = vld [vmem:[#allocation2 + $0x128] sm:$0xff]
    %v199 = vld [vmem:[#allocation2 + $0x130] sm:$0xff]
    %v200 = vld [vmem:[#allocation2 + $0x138] sm:$0xff]
    %v201 = vld [vmem:[#allocation2 + $0x140] sm:$0xff]
    %v202 = vld [vmem:[#allocation2 + $0x148] sm:$0xff]
    %v203 = vld [vmem:[#allocation2 + $0x150] sm:$0xff]
    %v204 = vld [vmem:[#allocation2 + $0x158] sm:$0xff]
    %v205 = vld [vmem:[#allocation2 + $0x160] sm:$0xff]
    %v206 = vld [vmem:[#allocation2 + $0x168] sm:$0xff]
    %v207 = vld [vmem:[#allocation2 + $0x170] sm:$0xff]
    %v208 = vld [vmem:[#allocation2 + $0x178] sm:$0xff]
    %v209 = vld [vmem:[#allocation2 + $0x180] sm:$0xff]
    %v210 = vld [vmem:[#allocation2 + $0x188] sm:$0xff]
    %v211 = vld [vmem:[#allocation2 + $0x190] sm:$0xff]
    %v212 = vld [vmem:[#allocation2 + $0x198] sm:$0xff]
    %v213 = vld [vmem:[#allocation2 + $0x1a0] sm:$0xff]
    %v214 = vld [vmem:[#allocation2 + $0x1a8] sm:$0xff]
    %v215 = vld [vmem:[#allocation2 + $0x1b0] sm:$0xff]
    %v216 = vld [vmem:[#allocation2 + $0x1b8] sm:$0xff]
    %v217 = vld [vmem:[#allocation2 + $0x1c0] sm:$0xff]
    %v218 = vld [vmem:[#allocation2 + $0x1c8] sm:$0xff]
    %v219 = vld [vmem:[#allocation2 + $0x1d0] sm:$0xff]
    %v220 = vld [vmem:[#allocation2 + $0x1d8] sm:$0xff]
    %v221 = vld [vmem:[#allocation2 + $0x1e0] sm:$0xff]
    %v222 = vld [vmem:[#allocation2 + $0x1e8] sm:$0xff]
    %v223 = vld [vmem:[#allocation2 + $0x1f0] sm:$0xff]
    %v224 = vld [vmem:[#allocation2 + $0x1f8] sm:$0xff]
    %v225 = vld [vmem:[#allocation2 + $0x200] sm:$0xff]
    %v226 = vld [vmem:[#allocation2 + $0x208] sm:$0xff]
    %v227 = vld [vmem:[#allocation2 + $0x210] sm:$0xff]
    %v228 = vld [vmem:[#allocation2 + $0x218] sm:$0xff]
    %v229 = vld [vmem:[#allocation2 + $0x220] sm:$0xff]
    %v230 = vld [vmem:[#allocation2 + $0x228] sm:$0xff]
    %v231 = vld [vmem:[#allocation2 + $0x230] sm:$0xff]
    %v232 = vld [vmem:[#allocation2 + $0x238] sm:$0xff]
    %v233 = vld [vmem:[#allocation2 + $0x240] sm:$0xff]
    %v234 = vld [vmem:[#allocation2 + $0x248] sm:$0xff]
    %v235 = vld [vmem:[#allocation2 + $0x250] sm:$0xff]
    %v236 = vld [vmem:[#allocation2 + $0x258] sm:$0xff]
    %v237 = vld [vmem:[#allocation2 + $0x260] sm:$0xff]
    %v238 = vld [vmem:[#allocation2 + $0x268] sm:$0xff]
    %v239 = vld [vmem:[#allocation2 + $0x270] sm:$0xff]
    %v240 = vld [vmem:[#allocation2 + $0x278] sm:$0xff]
    %v241 = vld [vmem:[#allocation2 + $0x280] sm:$0xff]
    %v242 = vld [vmem:[#allocation2 + $0x288] sm:$0xff]
    %v243 = vld [vmem:[#allocation2 + $0x290] sm:$0xff]
    %v244 = vld [vmem:[#allocation2 + $0x298] sm:$0xff]
    %v245 = vld [vmem:[#allocation2 + $0x2a0] sm:$0xff]
    %v246 = vld [vmem:[#allocation2 + $0x2a8] sm:$0xff]
    %v247 = vld [vmem:[#allocation2 + $0x2b0] sm:$0xff]
    %v248 = vld [vmem:[#allocation2 + $0x2b8] sm:$0xff]
    %v249 = vld [vmem:[#allocation2 + $0x2c0] sm:$0xff]
    %v250 = vld [vmem:[#allocation2 + $0x2c8] sm:$0xff]
    %v251 = vld [vmem:[#allocation2 + $0x2d0] sm:$0xff]
    %v252 = vld [vmem:[#allocation2 + $0x2d8] sm:$0xff]
    %v253 = vld [vmem:[#allocation2 + $0x2e0] sm:$0xff]
    %v254 = vld [vmem:[#allocation2 + $0x2e8] sm:$0xff]
    %v255 = vld [vmem:[#allocation2 + $0x2f0] sm:$0xff]
    %v256 = vld [vmem:[#allocation2 + $0x2f8] sm:$0xff]
    %v257 = vld [vmem:[#allocation2 + $0x300] sm:$0xff]
    %v258 = vld [vmem:[#allocation2 + $0x308] sm:$0xff]
    %v259 = vld [vmem:[#allocation2 + $0x310] sm:$0xff]
    %v260 = vld [vmem:[#allocation2 + $0x318] sm:$0xff]
    %v261 = vld [vmem:[#allocation2 + $0x320] sm:$0xff]
    %v262 = vld [vmem:[#allocation2 + $0x328] sm:$0xff]
    %v263 = vld [vmem:[#allocation2 + $0x330] sm:$0xff]
    %v264 = vld [vmem:[#allocation2 + $0x338] sm:$0xff]
    %v265 = vld [vmem:[#allocation2 + $0x340] sm:$0xff]
    %v266 = vld [vmem:[#allocation2 + $0x348] sm:$0xff]
    %v267 = vld [vmem:[#allocation2 + $0x350] sm:$0xff]
    %v268 = vld [vmem:[#allocation2 + $0x358] sm:$0xff]
    %v269 = vld [vmem:[#allocation2 + $0x360] sm:$0xff]
    %v270 = vld [vmem:[#allocation2 + $0x368] sm:$0xff]
    %v271 = vld [vmem:[#allocation2 + $0x370] sm:$0xff]
    %v272 = vld [vmem:[#allocation2 + $0x378] sm:$0xff]
    %v273 = vld [vmem:[#allocation2 + $0x380] sm:$0xff]
    %v274 = vld [vmem:[#allocation2 + $0x388] sm:$0xff]
    %v275 = vld [vmem:[#allocation2 + $0x390] sm:$0xff]
    %v276 = vld [vmem:[#allocation2 + $0x398] sm:$0xff]
    %v277 = vld [vmem:[#allocation2 + $0x3a0] sm:$0xff]
    %v278 = vld [vmem:[#allocation2 + $0x3a8] sm:$0xff]
    %v279 = vld [vmem:[#allocation2 + $0x3b0] sm:$0xff]
    %v280 = vld [vmem:[#allocation2 + $0x3b8] sm:$0xff]
    %v281 = vld [vmem:[#allocation2 + $0x3c0] sm:$0xff]
    %v282 = vld [vmem:[#allocation2 + $0x3c8] sm:$0xff]
    %v283 = vld [vmem:[#allocation2 + $0x3d0] sm:$0xff]
    %v284 = vld [vmem:[#allocation2 + $0x3d8] sm:$0xff]
    %v285 = vld [vmem:[#allocation2 + $0x3e0] sm:$0xff]
    %v286 = vld [vmem:[#allocation2 + $0x3e8] sm:$0xff]
    %v287 = vld [vmem:[#allocation2 + $0x3f0] sm:$0xff]
    %v288 = vld [vmem:[#allocation2 + $0x3f8] sm:$0xff]
    %v289 = vld [vmem:[#allocation2 + $0x400] sm:$0xff]
    %v290 = vld [vmem:[#allocation2 + $0x408] sm:$0xff]
    %v291 = vld [vmem:[#allocation2 + $0x410] sm:$0xff]
    %v292 = vld [vmem:[#allocation2 + $0x418] sm:$0xff]
    %v293 = vld [vmem:[#allocation2 + $0x420] sm:$0xff]
    %v294 = vld [vmem:[#allocation2 + $0x428] sm:$0xff]
    %v295 = vld [vmem:[#allocation2 + $0x430] sm:$0xff]
    %v296 = vld [vmem:[#allocation2 + $0x438] sm:$0xff]
    %v297 = vld [vmem:[#allocation2 + $0x440] sm:$0xff]
    %v298 = vld [vmem:[#allocation2 + $0x448] sm:$0xff]
    %v299 = vld [vmem:[#allocation2 + $0x450] sm:$0xff]
    %v300 = vld [vmem:[#allocation2 + $0x458] sm:$0xff]
    %v301 = vld [vmem:[#allocation2 + $0x460] sm:$0xff]
    %v302 = vld [vmem:[#allocation2 + $0x468] sm:$0xff]
    %v303 = vld [vmem:[#allocation2 + $0x470] sm:$0xff]
    %v304 = vld [vmem:[#allocation2 + $0x478] sm:$0xff]
    %v305 = vld [vmem:[#allocation2 + $0x480] sm:$0xff]
    %v306 = vld [vmem:[#allocation2 + $0x488] sm:$0xff]
    %v307 = vld [vmem:[#allocation2 + $0x490] sm:$0xff]
    %v308 = vld [vmem:[#allocation2 + $0x498] sm:$0xff]
    %v309 = vld [vmem:[#allocation2 + $0x4a0] sm:$0xff]
    %v310 = vld [vmem:[#allocation2 + $0x4a8] sm:$0xff]
    %v311 = vld [vmem:[#allocation2 + $0x4b0] sm:$0xff]
    %v312 = vld [vmem:[#allocation2 + $0x4b8] sm:$0xff]
    %v313 = vld [vmem:[#allocation2 + $0x4c0] sm:$0xff]
    %v314 = vld [vmem:[#allocation2 + $0x4c8] sm:$0xff]
    %v315 = vld [vmem:[#allocation2 + $0x4d0] sm:$0xff]
    %v316 = vld [vmem:[#allocation2 + $0x4d8] sm:$0xff]
    %v317 = vld [vmem:[#allocation2 + $0x4e0] sm:$0xff]
    %v318 = vld [vmem:[#allocation2 + $0x4e8] sm:$0xff]
    %v319 = vld [vmem:[#allocation2 + $0x4f0] sm:$0xff]
    %v320 = vld [vmem:[#allocation2 + $0x4f8] sm:$0xff]
    %v321 = vld [vmem:[#allocation2 + $0x500] sm:$0xff]
    %v322 = vld [vmem:[#allocation2 + $0x508] sm:$0xff]
    %v323 = vld [vmem:[#allocation2 + $0x510] sm:$0xff]
    %v324 = vld [vmem:[#allocation2 + $0x518] sm:$0xff]
    %v325 = vld [vmem:[#allocation2 + $0x520] sm:$0xff]
    %v326 = vld [vmem:[#allocation2 + $0x528] sm:$0xff]
    %v327 = vld [vmem:[#allocation2 + $0x530] sm:$0xff]
    %v328 = vld [vmem:[#allocation2 + $0x538] sm:$0xff]
    %v329 = vld [vmem:[#allocation2 + $0x540] sm:$0xff]
    %v330 = vld [vmem:[#allocation2 + $0x548] sm:$0xff]
    %v331 = vld [vmem:[#allocation2 + $0x550] sm:$0xff]
    %v332 = vld [vmem:[#allocation2 + $0x558] sm:$0xff]
    %v333 = vld [vmem:[#allocation2 + $0x560] sm:$0xff]
    %v334 = vld [vmem:[#allocation2 + $0x568] sm:$0xff]
    %v335 = vld [vmem:[#allocation2 + $0x570] sm:$0xff]
    %v336 = vld [vmem:[#allocation2 + $0x578] sm:$0xff]
    %v337 = vld [vmem:[#allocation2 + $0x580] sm:$0xff]
    %v338 = vld [vmem:[#allocation2 + $0x588] sm:$0xff]
    %v339 = vld [vmem:[#allocation2 + $0x590] sm:$0xff]
    %v340 = vld [vmem:[#allocation2 + $0x598] sm:$0xff]
    %v341 = vld [vmem:[#allocation2 + $0x5a0] sm:$0xff]
    %v342 = vld [vmem:[#allocation2 + $0x5a8] sm:$0xff]
    %v343 = vld [vmem:[#allocation2 + $0x5b0] sm:$0xff]
    %v344 = vld [vmem:[#allocation2 + $0x5b8] sm:$0xff]
    %v345 = vld [vmem:[#allocation2 + $0x5c0] sm:$0xff]
    %v346 = vld [vmem:[#allocation2 + $0x5c8] sm:$0xff]
    %v347 = vld [vmem:[#allocation2 + $0x5d0] sm:$0xff]
    %v348 = vld [vmem:[#allocation2 + $0x5d8] sm:$0xff]
    %v349 = vld [vmem:[#allocation2 + $0x5e0] sm:$0xff]
    %v350 = vld [vmem:[#allocation2 + $0x5e8] sm:$0xff]
    %v351 = vld [vmem:[#allocation2 + $0x5f0] sm:$0xff]
    %v352 = vld [vmem:[#allocation2 + $0x5f8] sm:$0xff]
    %v353 = vld [vmem:[#allocation2 + $0x600] sm:$0xff]
    %v354 = vld [vmem:[#allocation2 + $0x608] sm:$0xff]
    %v355 = vld [vmem:[#allocation2 + $0x610] sm:$0xff]
    %v356 = vld [vmem:[#allocation2 + $0x618] sm:$0xff]
    %v357 = vld [vmem:[#allocation2 + $0x620] sm:$0xff]
    %v358 = vld [vmem:[#allocation2 + $0x628] sm:$0xff]
    %v359 = vld [vmem:[#allocation2 + $0x630] sm:$0xff]
    %v360 = vld [vmem:[#allocation2 + $0x638] sm:$0xff]
    %v361 = vld [vmem:[#allocation2 + $0x640] sm:$0xff]
    %v362 = vld [vmem:[#allocation2 + $0x648] sm:$0xff]
    %v363 = vld [vmem:[#allocation2 + $0x650] sm:$0xff]
    %v364 = vld [vmem:[#allocation2 + $0x658] sm:$0xff]
    %v365 = vld [vmem:[#allocation2 + $0x660] sm:$0xff]
    %v366 = vld [vmem:[#allocation2 + $0x668] sm:$0xff]
    %v367 = vld [vmem:[#allocation2 + $0x670] sm:$0xff]
    %v368 = vld [vmem:[#allocation2 + $0x678] sm:$0xff]
    %v369 = vld [vmem:[#allocation2 + $0x680] sm:$0xff]
    %v370 = vld [vmem:[#allocation2 + $0x688] sm:$0xff]
    %v371 = vld [vmem:[#allocation2 + $0x690] sm:$0xff]
    %v372 = vld [vmem:[#allocation2 + $0x698] sm:$0xff]
    %v373 = vld [vmem:[#allocation2 + $0x6a0] sm:$0xff]
    %v374 = vld [vmem:[#allocation2 + $0x6a8] sm:$0xff]
    %v375 = vld [vmem:[#allocation2 + $0x6b0] sm:$0xff]
    %v376 = vld [vmem:[#allocation2 + $0x6b8] sm:$0xff]
    %v377 = vld [vmem:[#allocation2 + $0x6c0] sm:$0xff]
    %v378 = vld [vmem:[#allocation2 + $0x6c8] sm:$0xff]
    %v379 = vld [vmem:[#allocation2 + $0x6d0] sm:$0xff]
    %v380 = vld [vmem:[#allocation2 + $0x6d8] sm:$0xff]
    %v381 = vld [vmem:[#allocation2 + $0x6e0] sm:$0xff]
    %v382 = vld [vmem:[#allocation2 + $0x6e8] sm:$0xff]
    %v383 = vld [vmem:[#allocation2 + $0x6f0] sm:$0xff]
    %v384 = vld [vmem:[#allocation2 + $0x6f8] sm:$0xff]
    %v385 = vld [vmem:[#allocation2 + $0x700] sm:$0xff]
    %v386 = vld [vmem:[#allocation2 + $0x708] sm:$0xff]
    %v387 = vld [vmem:[#allocation2 + $0x710] sm:$0xff]
    %v388 = vld [vmem:[#allocation2 + $0x718] sm:$0xff]
    %v389 = vld [vmem:[#allocation2 + $0x720] sm:$0xff]
    %v390 = vld [vmem:[#allocation2 + $0x728] sm:$0xff]
    %v391 = vld [vmem:[#allocation2 + $0x730] sm:$0xff]
    %v392 = vld [vmem:[#allocation2 + $0x738] sm:$0xff]
    %v393 = vld [vmem:[#allocation2 + $0x740] sm:$0xff]
    %v394 = vld [vmem:[#allocation2 + $0x748] sm:$0xff]
    %v395 = vld [vmem:[#allocation2 + $0x750] sm:$0xff]
    %v396 = vld [vmem:[#allocation2 + $0x758] sm:$0xff]
    %v397 = vld [vmem:[#allocation2 + $0x760] sm:$0xff]
    %v398 = vld [vmem:[#allocation2 + $0x768] sm:$0xff]
    %v399 = vld [vmem:[#allocation2 + $0x770] sm:$0xff]
    %v400 = vld [vmem:[#allocation2 + $0x778] sm:$0xff]
    %v401 = vld [vmem:[#allocation2 + $0x780] sm:$0xff]
    %v402 = vld [vmem:[#allocation2 + $0x788] sm:$0xff]
    %v403 = vld [vmem:[#allocation2 + $0x790] sm:$0xff]
    %v404 = vld [vmem:[#allocation2 + $0x798] sm:$0xff]
    %v405 = vld [vmem:[#allocation2 + $0x7a0] sm:$0xff]
    %v406 = vld [vmem:[#allocation2 + $0x7a8] sm:$0xff]
    %v407 = vld [vmem:[#allocation2 + $0x7b0] sm:$0xff]
    %v408 = vld [vmem:[#allocation2 + $0x7b8] sm:$0xff]
    %v409 = vld [vmem:[#allocation2 + $0x7c0] sm:$0xff]
    %v410 = vld [vmem:[#allocation2 + $0x7c8] sm:$0xff]
    %v411 = vld [vmem:[#allocation2 + $0x7d0] sm:$0xff]
    %v412 = vld [vmem:[#allocation2 + $0x7d8] sm:$0xff]
    %v413 = vld [vmem:[#allocation2 + $0x7e0] sm:$0xff]
    %v414 = vld [vmem:[#allocation2 + $0x7e8] sm:$0xff]
    %v415 = vld [vmem:[#allocation2 + $0x7f0] sm:$0xff]
    %v416 = vld [vmem:[#allocation2 + $0x7f8] sm:$0xff]
    %v417 = vld [vmem:[#allocation2 + $0x800] sm:$0xff]
    %v418 = vld [vmem:[#allocation2 + $0x808] sm:$0xff]
    %v419 = vld [vmem:[#allocation2 + $0x810] sm:$0xff]
    %v420 = vld [vmem:[#allocation2 + $0x818] sm:$0xff]
    %v421 = vld [vmem:[#allocation2 + $0x820] sm:$0xff]
    %v422 = vld [vmem:[#allocation2 + $0x828] sm:$0xff]
    %v423 = vld [vmem:[#allocation2 + $0x830] sm:$0xff]
    %v424 = vld [vmem:[#allocation2 + $0x838] sm:$0xff]
    %v425 = vld [vmem:[#allocation2 + $0x840] sm:$0xff]
    %v426 = vld [vmem:[#allocation2 + $0x848] sm:$0xff]
    %v427 = vld [vmem:[#allocation2 + $0x850] sm:$0xff]
    %v428 = vld [vmem:[#allocation2 + $0x858] sm:$0xff]
    %v429 = vld [vmem:[#allocation2 + $0x860] sm:$0xff]
    %v430 = vld [vmem:[#allocation2 + $0x868] sm:$0xff]
    %v431 = vld [vmem:[#allocation2 + $0x870] sm:$0xff]
    %v432 = vld [vmem:[#allocation2 + $0x878] sm:$0xff]
    %v433 = vld [vmem:[#allocation2 + $0x880] sm:$0xff]
    %v434 = vld [vmem:[#allocation2 + $0x888] sm:$0xff]
    %v435 = vld [vmem:[#allocation2 + $0x890] sm:$0xff]
    %v436 = vld [vmem:[#allocation2 + $0x898] sm:$0xff]
    %v437 = vld [vmem:[#allocation2 + $0x8a0] sm:$0xff]
    %v438 = vld [vmem:[#allocation2 + $0x8a8] sm:$0xff]
    %v439 = vld [vmem:[#allocation2 + $0x8b0] sm:$0xff]
    %v440 = vld [vmem:[#allocation2 + $0x8b8] sm:$0xff]
    %v441 = vld [vmem:[#allocation2 + $0x8c0] sm:$0xff]
    %v442 = vld [vmem:[#allocation2 + $0x8c8] sm:$0xff]
    %v443 = vld [vmem:[#allocation2 + $0x8d0] sm:$0xff]
    %v444 = vld [vmem:[#allocation2 + $0x8d8] sm:$0xff]
    %v445 = vld [vmem:[#allocation2 + $0x8e0] sm:$0xff]
    %v446 = vld [vmem:[#allocation2 + $0x8e8] sm:$0xff]
    %v447 = vld [vmem:[#allocation2 + $0x8f0] sm:$0xff]
    %v448 = vld [vmem:[#allocation2 + $0x8f8] sm:$0xff]
    %v449 = vld [vmem:[#allocation2 + $0x900] sm:$0xff]
    %v450 = vld [vmem:[#allocation2 + $0x908] sm:$0xff]
    %v451 = vld [vmem:[#allocation2 + $0x910] sm:$0xff]
    %v452 = vld [vmem:[#allocation2 + $0x918] sm:$0xff]
    %v453 = vld [vmem:[#allocation2 + $0x920] sm:$0xff]
    %v454 = vld [vmem:[#allocation2 + $0x928] sm:$0xff]
    %v455 = vld [vmem:[#allocation2 + $0x930] sm:$0xff]
    %v456 = vld [vmem:[#allocation2 + $0x938] sm:$0xff]
    %v457 = vld [vmem:[#allocation2 + $0x940] sm:$0xff]
    %v458 = vld [vmem:[#allocation2 + $0x948] sm:$0xff]
    %v459 = vld [vmem:[#allocation2 + $0x950] sm:$0xff]
    %v460 = vld [vmem:[#allocation2 + $0x958] sm:$0xff]
    %v461 = vld [vmem:[#allocation2 + $0x960] sm:$0xff]
    %v462 = vld [vmem:[#allocation2 + $0x968] sm:$0xff]
    %v463 = vld [vmem:[#allocation2 + $0x970] sm:$0xff]
    %v464 = vld [vmem:[#allocation2 + $0x978] sm:$0xff]
    %v465 = vld [vmem:[#allocation2 + $0x980] sm:$0xff]
    %v466 = vld [vmem:[#allocation2 + $0x988] sm:$0xff]
    %v467 = vld [vmem:[#allocation2 + $0x990] sm:$0xff]
    %v468 = vld [vmem:[#allocation2 + $0x998] sm:$0xff]
    %v469 = vld [vmem:[#allocation2 + $0x9a0] sm:$0xff]
    %v470 = vld [vmem:[#allocation2 + $0x9a8] sm:$0xff]
    %v471 = vld [vmem:[#allocation2 + $0x9b0] sm:$0xff]
    %v472 = vld [vmem:[#allocation2 + $0x9b8] sm:$0xff]
    %v473 = vld [vmem:[#allocation2 + $0x9c0] sm:$0xff]
    %v474 = vld [vmem:[#allocation2 + $0x9c8] sm:$0xff]
    %v475 = vld [vmem:[#allocation2 + $0x9d0] sm:$0xff]
    %v476 = vld [vmem:[#allocation2 + $0x9d8] sm:$0xff]
    %v477 = vld [vmem:[#allocation2 + $0x9e0] sm:$0xff]
    %v478 = vld [vmem:[#allocation2 + $0x9e8] sm:$0xff]
    %v479 = vld [vmem:[#allocation2 + $0x9f0] sm:$0xff]
    %v480 = vld [vmem:[#allocation2 + $0x9f8] sm:$0xff]
    %v481 = vld [vmem:[#allocation2 + $0xa00] sm:$0xff]
    %v482 = vld [vmem:[#allocation2 + $0xa08] sm:$0xff]
    %v483 = vld [vmem:[#allocation2 + $0xa10] sm:$0xff]
    %v484 = vld [vmem:[#allocation2 + $0xa18] sm:$0xff]
    %v485 = vld [vmem:[#allocation2 + $0xa20] sm:$0xff]
    %v486 = vld [vmem:[#allocation2 + $0xa28] sm:$0xff]
    %v487 = vld [vmem:[#allocation2 + $0xa30] sm:$0xff]
    %v488 = vld [vmem:[#allocation2 + $0xa38] sm:$0xff]
    %v489 = vld [vmem:[#allocation2 + $0xa40] sm:$0xff]
    %v490 = vld [vmem:[#allocation2 + $0xa48] sm:$0xff]
    %v491 = vld [vmem:[#allocation2 + $0xa50] sm:$0xff]
    %v492 = vld [vmem:[#allocation2 + $0xa58] sm:$0xff]
    %v493 = vld [vmem:[#allocation2 + $0xa60] sm:$0xff]
    %v494 = vld [vmem:[#allocation2 + $0xa68] sm:$0xff]
    %v495 = vld [vmem:[#allocation2 + $0xa70] sm:$0xff]
    %v496 = vld [vmem:[#allocation2 + $0xa78] sm:$0xff]
    %v497 = vld [vmem:[#allocation2 + $0xa80] sm:$0xff]
    %v498 = vld [vmem:[#allocation2 + $0xa88] sm:$0xff]
    %v499 = vld [vmem:[#allocation2 + $0xa90] sm:$0xff]
    %v500 = vld [vmem:[#allocation2 + $0xa98] sm:$0xff]
    %v501 = vld [vmem:[#allocation2 + $0xaa0] sm:$0xff]
    %v502 = vld [vmem:[#allocation2 + $0xaa8] sm:$0xff]
    %v503 = vld [vmem:[#allocation2 + $0xab0] sm:$0xff]
    %v504 = vld [vmem:[#allocation2 + $0xab8] sm:$0xff]
    %v505 = vld [vmem:[#allocation2 + $0xac0] sm:$0xff]
    %v506 = vld [vmem:[#allocation2 + $0xac8] sm:$0xff]
    %v507 = vld [vmem:[#allocation2 + $0xad0] sm:$0xff]
    %v508 = vld [vmem:[#allocation2 + $0xad8] sm:$0xff]
    %v509 = vld [vmem:[#allocation2 + $0xae0] sm:$0xff]
    %v510 = vld [vmem:[#allocation2 + $0xae8] sm:$0xff]
    %v511 = vld [vmem:[#allocation2 + $0xaf0] sm:$0xff]
    %v512 = vld [vmem:[#allocation2 + $0xaf8] sm:$0xff]
    %v513 = vld [vmem:[#allocation2 + $0xb00] sm:$0xff]
    %v514 = vld [vmem:[#allocation2 + $0xb08] sm:$0xff]
    %v515 = vld [vmem:[#allocation2 + $0xb10] sm:$0xff]
    %v516 = vld [vmem:[#allocation2 + $0xb18] sm:$0xff]
    %v517 = vld [vmem:[#allocation2 + $0xb20] sm:$0xff]
    %v518 = vld [vmem:[#allocation2 + $0xb28] sm:$0xff]
    %v519 = vld [vmem:[#allocation2 + $0xb30] sm:$0xff]
    %v520 = vld [vmem:[#allocation2 + $0xb38] sm:$0xff]
    %v521 = vld [vmem:[#allocation2 + $0xb40] sm:$0xff]
    %v522 = vld [vmem:[#allocation2 + $0xb48] sm:$0xff]
    %v523 = vld [vmem:[#allocation2 + $0xb50] sm:$0xff]
    %v524 = vld [vmem:[#allocation2 + $0xb58] sm:$0xff]
    %v525 = vld [vmem:[#allocation2 + $0xb60] sm:$0xff]
    %v526 = vld [vmem:[#allocation2 + $0xb68] sm:$0xff]
    %v527 = vld [vmem:[#allocation2 + $0xb70] sm:$0xff]
    %v528 = vld [vmem:[#allocation2 + $0xb78] sm:$0xff]
    %v529 = vld [vmem:[#allocation2 + $0xb80] sm:$0xff]
    %v530 = vld [vmem:[#allocation2 + $0xb88] sm:$0xff]
    %v531 = vld [vmem:[#allocation2 + $0xb90] sm:$0xff]
    %v532 = vld [vmem:[#allocation2 + $0xb98] sm:$0xff]
    %v533 = vld [vmem:[#allocation2 + $0xba0] sm:$0xff]
    %v534 = vld [vmem:[#allocation2 + $0xba8] sm:$0xff]
    %v535 = vld [vmem:[#allocation2 + $0xbb0] sm:$0xff]
    %v536 = vld [vmem:[#allocation2 + $0xbb8] sm:$0xff]
    %v537 = vld [vmem:[#allocation2 + $0xbc0] sm:$0xff]
    %v538 = vld [vmem:[#allocation2 + $0xbc8] sm:$0xff]
    %v539 = vld [vmem:[#allocation2 + $0xbd0] sm:$0xff]
    %v540 = vld [vmem:[#allocation2 + $0xbd8] sm:$0xff]
    %v541 = vld [vmem:[#allocation2 + $0xbe0] sm:$0xff]
    %v542 = vld [vmem:[#allocation2 + $0xbe8] sm:$0xff]
    %v543 = vld [vmem:[#allocation2 + $0xbf0] sm:$0xff]
    %v544 = vld [vmem:[#allocation2 + $0xbf8] sm:$0xff]
    %v545 = vld [vmem:[#allocation2 + $0xc00] sm:$0xff]
    %v546 = vld [vmem:[#allocation2 + $0xc08] sm:$0xff]
    %v547 = vld [vmem:[#allocation2 + $0xc10] sm:$0xff]
    %v548 = vld [vmem:[#allocation2 + $0xc18] sm:$0xff]
    %v549 = vld [vmem:[#allocation2 + $0xc20] sm:$0xff]
    %v550 = vld [vmem:[#allocation2 + $0xc28] sm:$0xff]
    %v551 = vld [vmem:[#allocation2 + $0xc30] sm:$0xff]
    %v552 = vld [vmem:[#allocation2 + $0xc38] sm:$0xff]
    %v553 = vld [vmem:[%s1] sm:$0xff]
    %v554 = vld [vmem:[%s1 + $0x8] sm:$0xff]
    %v555 = vld [vmem:[#allocation4] sm:$0xff]
    %v556 = vld [vmem:[#allocation4 + $0x8] sm:$0xff]
    %v557 = vld [vmem:[#allocation4 + $0x10] sm:$0xff]
    %v558 = vld [vmem:[#allocation4 + $0x18] sm:$0xff]
    %v559 = vld [vmem:[#allocation4 + $0x20] sm:$0xff]
    %v560 = vld [vmem:[#allocation4 + $0x28] sm:$0xff]
    %v561 = vld [vmem:[#allocation4 + $0x30] sm:$0xff]
    %v562 = vld [vmem:[#allocation4 + $0x38] sm:$0xff]
    %v563 = vld [vmem:[#allocation4 + $0x40] sm:$0x3]
    %v564 = vld [vmem:[#allocation4 + $0x48] sm:$0x3]
    %v565 = vld [vmem:[#allocation4 + $0x50] sm:$0x3]
    %v566 = vld [vmem:[#allocation4 + $0x58] sm:$0x3]
    %v567 = vld [vmem:[#allocation4 + $0x60] sm:$0x3]
    %v568 = vld [vmem:[#allocation4 + $0x68] sm:$0x3]
    %v569 = vld [vmem:[#allocation4 + $0x70] sm:$0x3]
    %v570 = vld [vmem:[#allocation4 + $0x78] sm:$0x3]
    %vm571 = vcmask 80896
    %v573 = vsel %vm571, %v553, 0
    %v576 = vsel %vm571, %v554, 0
    %vm578 = vcmask 1041408
    %v580 = vsel %vm578, %v563, 0
    %v583 = vsel %vm578, %v564, 0
    %v586 = vsel %vm578, %v565, 0
    %v589 = vsel %vm578, %v566, 0
    %v592 = vsel %vm578, %v567, 0
    %v595 = vsel %vm578, %v568, 0
    %v598 = vsel %vm578, %v569, 0
    %v601 = vsel %vm578, %v570, 0
    %603 = vmatprep.subr.mxu0 %v556
    %604 = vmatpush1.msra.mxu0 %v555
    %605 = vmatprep.subr.mxu0 %v583
    %606 = vmatpush1.msra.mxu0 %v580
    %607 = vmatprep.subr.mxu0 0.0
    %608 = vmatpush1.msra.mxu0 0.0
    %609 = vmatprep.subr.mxu0 0.0
    %610 = vmatpush1.msra.mxu0 0.0
    %611 = vmatprep.subr.mxu0 0.0
    %612 = vmatpush1.msra.mxu0 0.0
    %613 = vmatprep.subr.mxu0 0.0
    %614 = vmatpush1.msra.mxu0 0.0
    %615 = vmatprep.subr.mxu0 0.0
    %616 = vmatpush1.msra.mxu0 0.0
    %617 = vmatprep.subr.mxu0 0.0
    %618 = vmatpush1.msra.mxu0 0.0
    %619 = vmatprep.subr.mxu0 0.0
    %620 = vmatpush1.msra.mxu0 0.0
    %621 = vmatprep.subr.mxu0 0.0
    %622 = vmatpush1.msra.mxu0 0.0
    %623 = vmatprep.subr.mxu0 0.0
    %624 = vmatpush1.msra.mxu0 0.0
    %625 = vmatprep.subr.mxu0 0.0
    %626 = vmatpush1.msra.mxu0 0.0
    %627 = vmatprep.subr.mxu0 0.0
    %628 = vmatpush1.msra.mxu0 0.0
    %629 = vmatprep.subr.mxu0 0.0
    %630 = vmatpush1.msra.mxu0 0.0
    %631 = vmatprep.subr.mxu0 0.0
    %632 = vmatpush1.msra.mxu0 0.0
    %633 = vmatprep.subr.mxu0 0.0
    %634 = vmatpush1.msra.mxu0 0.0
    %635 = vmatprep.subr.mxu0 0.0
    %636 = vmatpush1.msra.mxu0 0.0
    %637 = vmatprep.subr.mxu0 0.0
    %638 = vmatpush1.msra.mxu0 0.0
    %639 = vmatprep.subr.mxu0 0.0
    %640 = vmatpush1.msra.mxu0 0.0
    %641 = vmatprep.subr.mxu0 0.0
    %642 = vmatpush1.msra.mxu0 0.0
    %643 = vmatprep.subr.mxu0 0.0
    %644 = vmatpush1.msra.mxu0 0.0
    %645 = vmatprep.subr.mxu0 0.0
    %646 = vmatpush1.msra.mxu0 0.0
    %647 = vmatprep.subr.mxu0 0.0
    %648 = vmatpush1.msra.mxu0 0.0
    %649 = vmatprep.subr.mxu0 0.0
    %650 = vmatpush1.msra.mxu0 0.0
    %651 = vmatprep.subr.mxu0 0.0
    %652 = vmatpush1.msra.mxu0 0.0
    %653 = vmatprep.subr.mxu0 0.0
    %654 = vmatpush1.msra.mxu0 0.0
    %655 = vmatprep.subr.mxu0 0.0
    %656 = vmatpush1.msra.mxu0 0.0
    %657 = vmatprep.subr.mxu0 0.0
    %658 = vmatpush1.msra.mxu0 0.0
    %659 = vmatprep.subr.mxu0 0.0
    %660 = vmatpush1.msra.mxu0 0.0
    %661 = vmatprep.subr.mxu0 0.0
    %662 = vmatpush1.msra.mxu0 0.0
    %663 = vmatprep.subr.mxu0 0.0
    %664 = vmatpush1.msra.mxu0 0.0
    %665 = vmatprep.subr.mxu0 0.0
    %666 = vmatpush1.msra.mxu0 0.0
    %667 = vmatprep.mubr.f32.mxu0 0.0
    %668 = vmatmul.mubr.f32.gmra.mrb[0].mxu0 %v573
    %v669 = vpop.f32.mrb[0].mxu0
    %v670 = vadd.f32 0.0, %v669
    %v671 = vpop.f32.mrb[0].mxu0
    %v672 = vadd.f32 0.0, %v671
    %673 = vmatprep.mubr.f32.mxu0 0.0
    %674 = vmatmul.mubr.f32.gmra.mrb[0].mxu0 %v576
    %v675 = vpop.f32.mrb[0].mxu0
    %v676 = vadd.f32 0.0, %v675
    %v677 = vpop.f32.mrb[0].mxu0
    %v678 = vadd.f32 0.0, %v677
    %679 = vdwg.mxu0
    %680 = vmatprep.subr.mxu0 %v558
    %681 = vmatpush1.msra.mxu0 %v557
    %682 = vmatprep.subr.mxu0 %v589
    %683 = vmatpush1.msra.mxu0 %v586
    %684 = vmatprep.subr.mxu0 0.0
    %685 = vmatpush1.msra.mxu0 0.0
    %686 = vmatprep.subr.mxu0 0.0
    %687 = vmatpush1.msra.mxu0 0.0
    %688 = vmatprep.subr.mxu0 0.0
    %689 = vmatpush1.msra.mxu0 0.0
    %690 = vmatprep.subr.mxu0 0.0
    %691 = vmatpush1.msra.mxu0 0.0
    %692 = vmatprep.subr.mxu0 0.0
    %693 = vmatpush1.msra.mxu0 0.0
    %694 = vmatprep.subr.mxu0 0.0
    %695 = vmatpush1.msra.mxu0 0.0
    %696 = vmatprep.subr.mxu0 0.0
    %697 = vmatpush1.msra.mxu0 0.0
    %698 = vmatprep.subr.mxu0 0.0
    %699 = vmatpush1.msra.mxu0 0.0
    %700 = vmatprep.subr.mxu0 0.0
    %701 = vmatpush1.msra.mxu0 0.0
    %702 = vmatprep.subr.mxu0 0.0
    %703 = vmatpush1.msra.mxu0 0.0
    %704 = vmatprep.subr.mxu0 0.0
    %705 = vmatpush1.msra.mxu0 0.0
    %706 = vmatprep.subr.mxu0 0.0
    %707 = vmatpush1.msra.mxu0 0.0
    %708 = vmatprep.subr.mxu0 0.0
    %709 = vmatpush1.msra.mxu0 0.0
    %710 = vmatprep.subr.mxu0 0.0
    %711 = vmatpush1.msra.mxu0 0.0
    %712 = vmatprep.subr.mxu0 0.0
    %713 = vmatpush1.msra.mxu0 0.0
    %714 = vmatprep.subr.mxu0 0.0
    %715 = vmatpush1.msra.mxu0 0.0
    %716 = vmatprep.subr.mxu0 0.0
    %717 = vmatpush1.msra.mxu0 0.0
    %718 = vmatprep.subr.mxu0 0.0
    %719 = vmatpush1.msra.mxu0 0.0
    %720 = vmatprep.subr.mxu0 0.0
    %721 = vmatpush1.msra.mxu0 0.0
    %722 = vmatprep.subr.mxu0 0.0
    %723 = vmatpush1.msra.mxu0 0.0
    %724 = vmatprep.subr.mxu0 0.0
    %725 = vmatpush1.msra.mxu0 0.0
    %726 = vmatprep.subr.mxu0 0.0
    %727 = vmatpush1.msra.mxu0 0.0
    %728 = vmatprep.subr.mxu0 0.0
    %729 = vmatpush1.msra.mxu0 0.0
    %730 = vmatprep.subr.mxu0 0.0
    %731 = vmatpush1.msra.mxu0 0.0
    %732 = vmatprep.subr.mxu0 0.0
    %733 = vmatpush1.msra.mxu0 0.0
    %734 = vmatprep.subr.mxu0 0.0
    %735 = vmatpush1.msra.mxu0 0.0
    %736 = vmatprep.subr.mxu0 0.0
    %737 = vmatpush1.msra.mxu0 0.0
    %738 = vmatprep.subr.mxu0 0.0
    %739 = vmatpush1.msra.mxu0 0.0
    %740 = vmatprep.subr.mxu0 0.0
    %741 = vmatpush1.msra.mxu0 0.0
    %742 = vmatprep.subr.mxu0 0.0
    %743 = vmatpush1.msra.mxu0 0.0
    %744 = vmatprep.mubr.f32.mxu0 0.0
    %745 = vmatmul.mubr.f32.gmra.mrb[0].mxu0 %v573
    %v746 = vpop.f32.mrb[0].mxu0
    %v747 = vadd.f32 0.0, %v746
    %v748 = vpop.f32.mrb[0].mxu0
    %v749 = vadd.f32 0.0, %v748
    %750 = vmatprep.mubr.f32.mxu0 0.0
    %751 = vmatmul.mubr.f32.gmra.mrb[0].mxu0 %v576
    %v752 = vpop.f32.mrb[0].mxu0
    %v753 = vadd.f32 0.0, %v752
    %v754 = vpop.f32.mrb[0].mxu0
    %v755 = vadd.f32 0.0, %v754
    %756 = vdwg.mxu0
    %757 = vmatprep.subr.mxu0 %v560
    %758 = vmatpush1.msra.mxu0 %v559
    %759 = vmatprep.subr.mxu0 %v595
    %760 = vmatpush1.msra.mxu0 %v592
    %761 = vmatprep.subr.mxu0 0.0
    %762 = vmatpush1.msra.mxu0 0.0
    %763 = vmatprep.subr.mxu0 0.0
    %764 = vmatpush1.msra.mxu0 0.0
    %765 = vmatprep.subr.mxu0 0.0
    %766 = vmatpush1.msra.mxu0 0.0
    %767 = vmatprep.subr.mxu0 0.0
    %768 = vmatpush1.msra.mxu0 0.0
    %769 = vmatprep.subr.mxu0 0.0
    %770 = vmatpush1.msra.mxu0 0.0
    %771 = vmatprep.subr.mxu0 0.0
    %772 = vmatpush1.msra.mxu0 0.0
    %773 = vmatprep.subr.mxu0 0.0
    %774 = vmatpush1.msra.mxu0 0.0
    %775 = vmatprep.subr.mxu0 0.0
    %776 = vmatpush1.msra.mxu0 0.0
    %777 = vmatprep.subr.mxu0 0.0
    %778 = vmatpush1.msra.mxu0 0.0
    %779 = vmatprep.subr.mxu0 0.0
    %780 = vmatpush1.msra.mxu0 0.0
    %781 = vmatprep.subr.mxu0 0.0
    %782 = vmatpush1.msra.mxu0 0.0
    %783 = vmatprep.subr.mxu0 0.0
    %784 = vmatpush1.msra.mxu0 0.0
    %785 = vmatprep.subr.mxu0 0.0
    %786 = vmatpush1.msra.mxu0 0.0
    %787 = vmatprep.subr.mxu0 0.0
    %788 = vmatpush1.msra.mxu0 0.0
    %789 = vmatprep.subr.mxu0 0.0
    %790 = vmatpush1.msra.mxu0 0.0
    %791 = vmatprep.subr.mxu0 0.0
    %792 = vmatpush1.msra.mxu0 0.0
    %793 = vmatprep.subr.mxu0 0.0
    %794 = vmatpush1.msra.mxu0 0.0
    %795 = vmatprep.subr.mxu0 0.0
    %796 = vmatpush1.msra.mxu0 0.0
    %797 = vmatprep.subr.mxu0 0.0
    %798 = vmatpush1.msra.mxu0 0.0
    %799 = vmatprep.subr.mxu0 0.0
    %800 = vmatpush1.msra.mxu0 0.0
    %801 = vmatprep.subr.mxu0 0.0
    %802 = vmatpush1.msra.mxu0 0.0
    %803 = vmatprep.subr.mxu0 0.0
    %804 = vmatpush1.msra.mxu0 0.0
    %805 = vmatprep.subr.mxu0 0.0
    %806 = vmatpush1.msra.mxu0 0.0
    %807 = vmatprep.subr.mxu0 0.0
    %808 = vmatpush1.msra.mxu0 0.0
    %809 = vmatprep.subr.mxu0 0.0
    %810 = vmatpush1.msra.mxu0 0.0
    %811 = vmatprep.subr.mxu0 0.0
    %812 = vmatpush1.msra.mxu0 0.0
    %813 = vmatprep.subr.mxu0 0.0
    %814 = vmatpush1.msra.mxu0 0.0
    %815 = vmatprep.subr.mxu0 0.0
    %816 = vmatpush1.msra.mxu0 0.0
    %817 = vmatprep.subr.mxu0 0.0
    %818 = vmatpush1.msra.mxu0 0.0
    %819 = vmatprep.subr.mxu0 0.0
    %820 = vmatpush1.msra.mxu0 0.0
    %821 = vmatprep.mubr.f32.mxu0 0.0
    %822 = vmatmul.mubr.f32.gmra.mrb[0].mxu0 %v573
    %v823 = vpop.f32.mrb[0].mxu0
    %v824 = vadd.f32 0.0, %v823
    %v825 = vpop.f32.mrb[0].mxu0
    %v826 = vadd.f32 0.0, %v825
    %827 = vmatprep.mubr.f32.mxu0 0.0
    %828 = vmatmul.mubr.f32.gmra.mrb[0].mxu0 %v576
    %v829 = vpop.f32.mrb[0].mxu0
    %v830 = vadd.f32 0.0, %v829
    %v831 = vpop.f32.mrb[0].mxu0
    %v832 = vadd.f32 0.0, %v831
    %833 = vdwg.mxu0
    %834 = vmatprep.subr.mxu0 %v562
    %835 = vmatpush1.msra.mxu0 %v561
    %836 = vmatprep.subr.mxu0 %v601
    %837 = vmatpush1.msra.mxu0 %v598
    %838 = vmatprep.subr.mxu0 0.0
    %839 = vmatpush1.msra.mxu0 0.0
    %840 = vmatprep.subr.mxu0 0.0
    %841 = vmatpush1.msra.mxu0 0.0
    %842 = vmatprep.subr.mxu0 0.0
    %843 = vmatpush1.msra.mxu0 0.0
    %844 = vmatprep.subr.mxu0 0.0
    %845 = vmatpush1.msra.mxu0 0.0
    %846 = vmatprep.subr.mxu0 0.0
    %847 = vmatpush1.msra.mxu0 0.0
    %848 = vmatprep.subr.mxu0 0.0
    %849 = vmatpush1.msra.mxu0 0.0
    %850 = vmatprep.subr.mxu0 0.0
    %851 = vmatpush1.msra.mxu0 0.0
    %852 = vmatprep.subr.mxu0 0.0
    %853 = vmatpush1.msra.mxu0 0.0
    %854 = vmatprep.subr.mxu0 0.0
    %855 = vmatpush1.msra.mxu0 0.0
    %856 = vmatprep.subr.mxu0 0.0
    %857 = vmatpush1.msra.mxu0 0.0
    %858 = vmatprep.subr.mxu0 0.0
    %859 = vmatpush1.msra.mxu0 0.0
    %860 = vmatprep.subr.mxu0 0.0
    %861 = vmatpush1.msra.mxu0 0.0
    %862 = vmatprep.subr.mxu0 0.0
    %863 = vmatpush1.msra.mxu0 0.0
    %864 = vmatprep.subr.mxu0 0.0
    %865 = vmatpush1.msra.mxu0 0.0
    %866 = vmatprep.subr.mxu0 0.0
    %867 = vmatpush1.msra.mxu0 0.0
    %868 = vmatprep.subr.mxu0 0.0
    %869 = vmatpush1.msra.mxu0 0.0
    %870 = vmatprep.subr.mxu0 0.0
    %871 = vmatpush1.msra.mxu0 0.0
    %872 = vmatprep.subr.mxu0 0.0
    %873 = vmatpush1.msra.mxu0 0.0
    %874 = vmatprep.subr.mxu0 0.0
    %875 = vmatpush1.msra.mxu0 0.0
    %876 = vmatprep.subr.mxu0 0.0
    %877 = vmatpush1.msra.mxu0 0.0
    %878 = vmatprep.subr.mxu0 0.0
    %879 = vmatpush1.msra.mxu0 0.0
    %880 = vmatprep.subr.mxu0 0.0
    %881 = vmatpush1.msra.mxu0 0.0
    %882 = vmatprep.subr.mxu0 0.0
    %883 = vmatpush1.msra.mxu0 0.0
    %884 = vmatprep.subr.mxu0 0.0
    %885 = vmatpush1.msra.mxu0 0.0
    %886 = vmatprep.subr.mxu0 0.0
    %887 = vmatpush1.msra.mxu0 0.0
    %888 = vmatprep.subr.mxu0 0.0
    %889 = vmatpush1.msra.mxu0 0.0
    %890 = vmatprep.subr.mxu0 0.0
    %891 = vmatpush1.msra.mxu0 0.0
    %892 = vmatprep.subr.mxu0 0.0
    %893 = vmatpush1.msra.mxu0 0.0
    %894 = vmatprep.subr.mxu0 0.0
    %895 = vmatpush1.msra.mxu0 0.0
    %896 = vmatprep.subr.mxu0 0.0
    %897 = vmatpush1.msra.mxu0 0.0
    %898 = vmatprep.mubr.f32.mxu0 0.0
    %899 = vmatmul.mubr.f32.gmra.mrb[0].mxu0 %v573
    %v900 = vpop.f32.mrb[0].mxu0
    %v901 = vadd.f32 0.0, %v900
    %v902 = vpop.f32.mrb[0].mxu0
    %v903 = vadd.f32 0.0, %v902
    %904 = vmatprep.mubr.f32.mxu0 0.0
    %905 = vmatmul.mubr.f32.gmra.mrb[0].mxu0 %v576
    %v906 = vpop.f32.mrb[0].mxu0
    %v907 = vadd.f32 0.0, %v906
    %v908 = vpop.f32.mrb[0].mxu0
    %v909 = vadd.f32 0.0, %v908
    %910 = vdwg.mxu0
    %v919 = vunpack.c.l.b16 %v153
    %v920 = vunpack.c.h.b16 %v153
    %v921 = vunpack.c.l.b16 %v154
    %v922 = vunpack.c.h.b16 %v154
    %v923 = vunpack.c.l.b16 %v155
    %v924 = vunpack.c.h.b16 %v155
    %v925 = vunpack.c.l.b16 %v156
    %v926 = vunpack.c.l.b16 %v157
    %v927 = vunpack.c.h.b16 %v157
    %v928 = vunpack.c.l.b16 %v158
    %v929 = vunpack.c.h.b16 %v158
    %v930 = vunpack.c.l.b16 %v159
    %v931 = vunpack.c.h.b16 %v159
    %v932 = vunpack.c.l.b16 %v160
    %v933 = vpack.c.b16 %v926, %v919
    %v934 = vpack.c.b16 %v927, %v920
    %v935 = vpack.c.b16 %v928, %v921
    %v936 = vpack.c.b16 %v929, %v922
    %v937 = vpack.c.b16 %v930, %v923
    %v938 = vpack.c.b16 %v931, %v924
    %v939 = vpack.c.b16 %v932, %v925
    %v1338 = vunpack.c.l.b16 %v161
    %v1339 = vunpack.c.h.b16 %v161
    %v1340 = vunpack.c.l.b16 %v162
    %v1341 = vunpack.c.h.b16 %v162
    %v1342 = vunpack.c.l.b16 %v163
    %v1343 = vunpack.c.h.b16 %v163
    %v1344 = vunpack.c.l.b16 %v164
    %v1345 = vunpack.c.h.b16 %v164
    %v1346 = vunpack.c.l.b16 %v165
    %v1347 = vunpack.c.h.b16 %v165
    %v1348 = vunpack.c.l.b16 %v166
    %v1349 = vunpack.c.h.b16 %v166
    %v1350 = vunpack.c.l.b16 %v167
    %v1351 = vunpack.c.h.b16 %v167
    %v1352 = vunpack.c.l.b16 %v168
    %v1353 = vunpack.c.h.b16 %v168
    %v1354 = vunpack.c.l.b16 %v169
    %v1355 = vunpack.c.h.b16 %v169
    %v1356 = vunpack.c.l.b16 %v170
    %v1357 = vunpack.c.h.b16 %v170
    %v1358 = vunpack.c.l.b16 %v171
    %v1359 = vunpack.c.h.b16 %v171
    %v1360 = vunpack.c.l.b16 %v172
    %v1361 = vunpack.c.h.b16 %v172
    %v1362 = vunpack.c.l.b16 %v173
    %v1363 = vunpack.c.h.b16 %v173
    %v1364 = vunpack.c.l.b16 %v174
    %v1365 = vunpack.c.h.b16 %v174
    %v1366 = vunpack.c.l.b16 %v175
    %v1367 = vunpack.c.h.b16 %v175
    %v1368 = vunpack.c.l.b16 %v176
    %v1369 = vunpack.c.h.b16 %v176
    %v1370 = vunpack.c.l.b16 %v177
    %v1371 = vunpack.c.h.b16 %v177
    %v1372 = vunpack.c.l.b16 %v178
    %v1373 = vunpack.c.h.b16 %v178
    %v1374 = vunpack.c.l.b16 %v179
    %v1375 = vunpack.c.h.b16 %v179
    %v1376 = vunpack.c.l.b16 %v180
    %v1377 = vunpack.c.h.b16 %v180
    %v1378 = vunpack.c.l.b16 %v181
    %v1379 = vunpack.c.h.b16 %v181
    %v1380 = vunpack.c.l.b16 %v182
    %v1381 = vunpack.c.h.b16 %v182
    %v1382 = vunpack.c.l.b16 %v183
    %v1383 = vunpack.c.h.b16 %v183
    %v1384 = vunpack.c.l.b16 %v184
    %v1385 = vunpack.c.h.b16 %v184
    %v1386 = vunpack.c.l.b16 %v185
    %v1387 = vunpack.c.h.b16 %v185
    %v1388 = vunpack.c.l.b16 %v186
    %v1389 = vunpack.c.h.b16 %v186
    %v1390 = vunpack.c.l.b16 %v187
    %v1391 = vunpack.c.h.b16 %v187
    %v1392 = vunpack.c.l.b16 %v188
    %v1393 = vunpack.c.h.b16 %v188
    %v1394 = vunpack.c.l.b16 %v189
    %v1395 = vunpack.c.h.b16 %v189
    %v1396 = vunpack.c.l.b16 %v190
    %v1397 = vunpack.c.h.b16 %v190
    %v1398 = vunpack.c.l.b16 %v191
    %v1399 = vunpack.c.h.b16 %v191
    %v1400 = vunpack.c.l.b16 %v192
    %v1401 = vunpack.c.h.b16 %v192
    %v1402 = vunpack.c.l.b16 %v193
    %v1403 = vunpack.c.h.b16 %v193
    %v1404 = vunpack.c.l.b16 %v194
    %v1405 = vunpack.c.h.b16 %v194
    %v1406 = vunpack.c.l.b16 %v195
    %v1407 = vunpack.c.h.b16 %v195
    %v1408 = vunpack.c.l.b16 %v196
    %v1409 = vunpack.c.h.b16 %v196
    %v1410 = vunpack.c.l.b16 %v197
    %v1411 = vunpack.c.h.b16 %v197
    %v1412 = vunpack.c.l.b16 %v198
    %v1413 = vunpack.c.h.b16 %v198
    %v1414 = vunpack.c.l.b16 %v199
    %v1415 = vunpack.c.h.b16 %v199
    %v1416 = vunpack.c.l.b16 %v200
    %v1417 = vunpack.c.h.b16 %v200
    %v1418 = vunpack.c.l.b16 %v201
    %v1419 = vunpack.c.h.b16 %v201
    %v1420 = vunpack.c.l.b16 %v202
    %v1421 = vunpack.c.h.b16 %v202
    %v1422 = vunpack.c.l.b16 %v203
    %v1423 = vunpack.c.h.b16 %v203
    %v1424 = vunpack.c.l.b16 %v204
    %v1425 = vunpack.c.h.b16 %v204
    %v1426 = vunpack.c.l.b16 %v205
    %v1427 = vunpack.c.h.b16 %v205
    %v1428 = vunpack.c.l.b16 %v206
    %v1429 = vunpack.c.h.b16 %v206
    %v1430 = vunpack.c.l.b16 %v207
    %v1431 = vunpack.c.h.b16 %v207
    %v1432 = vunpack.c.l.b16 %v208
    %v1433 = vunpack.c.h.b16 %v208
    %v1434 = vunpack.c.l.b16 %v209
    %v1435 = vunpack.c.h.b16 %v209
    %v1436 = vunpack.c.l.b16 %v210
    %v1437 = vunpack.c.h.b16 %v210
    %v1438 = vunpack.c.l.b16 %v211
    %v1439 = vunpack.c.h.b16 %v211
    %v1440 = vunpack.c.l.b16 %v212
    %v1441 = vunpack.c.h.b16 %v212
    %v1442 = vunpack.c.l.b16 %v213
    %v1443 = vunpack.c.h.b16 %v213
    %v1444 = vunpack.c.l.b16 %v214
    %v1445 = vunpack.c.h.b16 %v214
    %v1446 = vunpack.c.l.b16 %v215
    %v1447 = vunpack.c.h.b16 %v215
    %v1448 = vunpack.c.l.b16 %v216
    %v1449 = vunpack.c.h.b16 %v216
    %v1450 = vunpack.c.l.b16 %v217
    %v1451 = vunpack.c.h.b16 %v217
    %v1452 = vunpack.c.l.b16 %v218
    %v1453 = vunpack.c.h.b16 %v218
    %v1454 = vunpack.c.l.b16 %v219
    %v1455 = vunpack.c.h.b16 %v219
    %v1456 = vunpack.c.l.b16 %v220
    %v1457 = vunpack.c.h.b16 %v220
    %v1458 = vunpack.c.l.b16 %v221
    %v1459 = vunpack.c.h.b16 %v221
    %v1460 = vunpack.c.l.b16 %v222
    %v1461 = vunpack.c.h.b16 %v222
    %v1462 = vunpack.c.l.b16 %v223
    %v1463 = vunpack.c.h.b16 %v223
    %v1464 = vunpack.c.l.b16 %v224
    %v1465 = vunpack.c.h.b16 %v224
    %v1466 = vunpack.c.l.b16 %v225
    %v1467 = vunpack.c.h.b16 %v225
    %v1468 = vunpack.c.l.b16 %v226
    %v1469 = vunpack.c.h.b16 %v226
    %v1470 = vunpack.c.l.b16 %v227
    %v1471 = vunpack.c.h.b16 %v227
    %v1472 = vunpack.c.l.b16 %v228
    %v1473 = vunpack.c.h.b16 %v228
    %v1474 = vunpack.c.l.b16 %v229
    %v1475 = vunpack.c.h.b16 %v229
    %v1476 = vunpack.c.l.b16 %v230
    %v1477 = vunpack.c.h.b16 %v230
    %v1478 = vunpack.c.l.b16 %v231
    %v1479 = vunpack.c.h.b16 %v231
    %v1480 = vunpack.c.l.b16 %v232
    %v1481 = vunpack.c.h.b16 %v232
    %v1482 = vunpack.c.l.b16 %v233
    %v1483 = vunpack.c.h.b16 %v233
    %v1484 = vunpack.c.l.b16 %v234
    %v1485 = vunpack.c.h.b16 %v234
    %v1486 = vunpack.c.l.b16 %v235
    %v1487 = vunpack.c.h.b16 %v235
    %v1488 = vunpack.c.l.b16 %v236
    %v1489 = vunpack.c.h.b16 %v236
    %v1490 = vunpack.c.l.b16 %v237
    %v1491 = vunpack.c.h.b16 %v237
    %v1492 = vunpack.c.l.b16 %v238
    %v1493 = vunpack.c.h.b16 %v238
    %v1494 = vunpack.c.l.b16 %v239
    %v1495 = vunpack.c.h.b16 %v239
    %v1496 = vunpack.c.l.b16 %v240
    %v1497 = vunpack.c.h.b16 %v240
    %v1498 = vunpack.c.l.b16 %v241
    %v1499 = vunpack.c.h.b16 %v241
    %v1500 = vunpack.c.l.b16 %v242
    %v1501 = vunpack.c.h.b16 %v242
    %v1502 = vunpack.c.l.b16 %v243
    %v1503 = vunpack.c.h.b16 %v243
    %v1504 = vunpack.c.l.b16 %v244
    %v1505 = vunpack.c.h.b16 %v244
    %v1506 = vunpack.c.l.b16 %v245
    %v1507 = vunpack.c.h.b16 %v245
    %v1508 = vunpack.c.l.b16 %v246
    %v1509 = vunpack.c.h.b16 %v246
    %v1510 = vunpack.c.l.b16 %v247
    %v1511 = vunpack.c.h.b16 %v247
    %v1512 = vunpack.c.l.b16 %v248
    %v1513 = vunpack.c.h.b16 %v248
    %v1514 = vunpack.c.l.b16 %v249
    %v1515 = vunpack.c.h.b16 %v249
    %v1516 = vunpack.c.l.b16 %v250
    %v1517 = vunpack.c.h.b16 %v250
    %v1518 = vunpack.c.l.b16 %v251
    %v1519 = vunpack.c.h.b16 %v251
    %v1520 = vunpack.c.l.b16 %v252
    %v1521 = vunpack.c.h.b16 %v252
    %v1522 = vunpack.c.l.b16 %v253
    %v1523 = vunpack.c.h.b16 %v253
    %v1524 = vunpack.c.l.b16 %v254
    %v1525 = vunpack.c.h.b16 %v254
    %v1526 = vunpack.c.l.b16 %v255
    %v1527 = vunpack.c.h.b16 %v255
    %v1528 = vunpack.c.l.b16 %v256
    %v1529 = vunpack.c.h.b16 %v256
    %v1530 = vunpack.c.l.b16 %v257
    %v1531 = vunpack.c.h.b16 %v257
    %v1532 = vunpack.c.l.b16 %v258
    %v1533 = vunpack.c.h.b16 %v258
    %v1534 = vunpack.c.l.b16 %v259
    %v1535 = vunpack.c.h.b16 %v259
    %v1536 = vunpack.c.l.b16 %v260
    %v1537 = vunpack.c.h.b16 %v260
    %v1538 = vunpack.c.l.b16 %v261
    %v1539 = vunpack.c.h.b16 %v261
    %v1540 = vunpack.c.l.b16 %v262
    %v1541 = vunpack.c.h.b16 %v262
    %v1542 = vunpack.c.l.b16 %v263
    %v1543 = vunpack.c.h.b16 %v263
    %v1544 = vunpack.c.l.b16 %v264
    %v1545 = vunpack.c.h.b16 %v264
    %v1546 = vunpack.c.l.b16 %v265
    %v1547 = vunpack.c.h.b16 %v265
    %v1548 = vunpack.c.l.b16 %v266
    %v1549 = vunpack.c.h.b16 %v266
    %v1550 = vunpack.c.l.b16 %v267
    %v1551 = vunpack.c.h.b16 %v267
    %v1552 = vunpack.c.l.b16 %v268
    %v1553 = vunpack.c.h.b16 %v268
    %v1554 = vunpack.c.l.b16 %v269
    %v1555 = vunpack.c.h.b16 %v269
    %v1556 = vunpack.c.l.b16 %v270
    %v1557 = vunpack.c.h.b16 %v270
    %v1558 = vunpack.c.l.b16 %v271
    %v1559 = vunpack.c.h.b16 %v271
    %v1560 = vunpack.c.l.b16 %v272
    %v1561 = vunpack.c.h.b16 %v272
    %v1562 = vunpack.c.l.b16 %v273
    %v1563 = vunpack.c.h.b16 %v273
    %v1564 = vunpack.c.l.b16 %v274
    %v1565 = vunpack.c.h.b16 %v274
    %v1566 = vunpack.c.l.b16 %v275
    %v1567 = vunpack.c.h.b16 %v275
    %v1568 = vunpack.c.l.b16 %v276
    %v1569 = vunpack.c.h.b16 %v276
    %v1570 = vunpack.c.l.b16 %v277
    %v1571 = vunpack.c.h.b16 %v277
    %v1572 = vunpack.c.l.b16 %v278
    %v1573 = vunpack.c.h.b16 %v278
    %v1574 = vunpack.c.l.b16 %v279
    %v1575 = vunpack.c.h.b16 %v279
    %v1576 = vunpack.c.l.b16 %v280
    %v1577 = vunpack.c.h.b16 %v280
    %v1578 = vunpack.c.l.b16 %v281
    %v1579 = vunpack.c.h.b16 %v281
    %v1580 = vunpack.c.l.b16 %v282
    %v1581 = vunpack.c.h.b16 %v282
    %v1582 = vunpack.c.l.b16 %v283
    %v1583 = vunpack.c.h.b16 %v283
    %v1584 = vunpack.c.l.b16 %v284
    %v1585 = vunpack.c.h.b16 %v284
    %v1586 = vunpack.c.l.b16 %v285
    %v1587 = vunpack.c.h.b16 %v285
    %v1588 = vunpack.c.l.b16 %v286
    %v1589 = vunpack.c.h.b16 %v286
    %v1590 = vunpack.c.l.b16 %v287
    %v1591 = vunpack.c.h.b16 %v287
    %v1592 = vunpack.c.l.b16 %v288
    %v1593 = vunpack.c.h.b16 %v288
    %v1594 = vunpack.c.l.b16 %v289
    %v1595 = vunpack.c.h.b16 %v289
    %v1596 = vunpack.c.l.b16 %v290
    %v1597 = vunpack.c.h.b16 %v290
    %v1598 = vunpack.c.l.b16 %v291
    %v1599 = vunpack.c.h.b16 %v291
    %v1600 = vunpack.c.l.b16 %v292
    %v1601 = vunpack.c.h.b16 %v292
    %v1602 = vunpack.c.l.b16 %v293
    %v1603 = vunpack.c.h.b16 %v293
    %v1604 = vunpack.c.l.b16 %v294
    %v1605 = vunpack.c.h.b16 %v294
    %v1606 = vunpack.c.l.b16 %v295
    %v1607 = vunpack.c.h.b16 %v295
    %v1608 = vunpack.c.l.b16 %v296
    %v1609 = vunpack.c.h.b16 %v296
    %v1610 = vunpack.c.l.b16 %v297
    %v1611 = vunpack.c.h.b16 %v297
    %v1612 = vunpack.c.l.b16 %v298
    %v1613 = vunpack.c.h.b16 %v298
    %v1614 = vunpack.c.l.b16 %v299
    %v1615 = vunpack.c.h.b16 %v299
    %v1616 = vunpack.c.l.b16 %v300
    %v1617 = vunpack.c.h.b16 %v300
    %v1618 = vunpack.c.l.b16 %v301
    %v1619 = vunpack.c.h.b16 %v301
    %v1620 = vunpack.c.l.b16 %v302
    %v1621 = vunpack.c.h.b16 %v302
    %v1622 = vunpack.c.l.b16 %v303
    %v1623 = vunpack.c.h.b16 %v303
    %v1624 = vunpack.c.l.b16 %v304
    %v1625 = vunpack.c.h.b16 %v304
    %v1626 = vunpack.c.l.b16 %v305
    %v1627 = vunpack.c.h.b16 %v305
    %v1628 = vunpack.c.l.b16 %v306
    %v1629 = vunpack.c.h.b16 %v306
    %v1630 = vunpack.c.l.b16 %v307
    %v1631 = vunpack.c.h.b16 %v307
    %v1632 = vunpack.c.l.b16 %v308
    %v1633 = vunpack.c.h.b16 %v308
    %v1634 = vunpack.c.l.b16 %v309
    %v1635 = vunpack.c.h.b16 %v309
    %v1636 = vunpack.c.l.b16 %v310
    %v1637 = vunpack.c.h.b16 %v310
    %v1638 = vunpack.c.l.b16 %v311
    %v1639 = vunpack.c.h.b16 %v311
    %v1640 = vunpack.c.l.b16 %v312
    %v1641 = vunpack.c.h.b16 %v312
    %v1642 = vunpack.c.l.b16 %v313
    %v1643 = vunpack.c.h.b16 %v313
    %v1644 = vunpack.c.l.b16 %v314
    %v1645 = vunpack.c.h.b16 %v314
    %v1646 = vunpack.c.l.b16 %v315
    %v1647 = vunpack.c.h.b16 %v315
    %v1648 = vunpack.c.l.b16 %v316
    %v1649 = vunpack.c.h.b16 %v316
    %v1650 = vunpack.c.l.b16 %v317
    %v1651 = vunpack.c.h.b16 %v317
    %v1652 = vunpack.c.l.b16 %v318
    %v1653 = vunpack.c.h.b16 %v318
    %v1654 = vunpack.c.l.b16 %v319
    %v1655 = vunpack.c.h.b16 %v319
    %v1656 = vunpack.c.l.b16 %v320
    %v1657 = vunpack.c.h.b16 %v320
    %v1658 = vunpack.c.l.b16 %v321
    %v1659 = vunpack.c.h.b16 %v321
    %v1660 = vunpack.c.l.b16 %v322
    %v1661 = vunpack.c.h.b16 %v322
    %v1662 = vunpack.c.l.b16 %v323
    %v1663 = vunpack.c.h.b16 %v323
    %v1664 = vunpack.c.l.b16 %v324
    %v1665 = vunpack.c.h.b16 %v324
    %v1666 = vunpack.c.l.b16 %v325
    %v1667 = vunpack.c.h.b16 %v325
    %v1668 = vunpack.c.l.b16 %v326
    %v1669 = vunpack.c.h.b16 %v326
    %v1670 = vunpack.c.l.b16 %v327
    %v1671 = vunpack.c.h.b16 %v327
    %v1672 = vunpack.c.l.b16 %v328
    %v1673 = vunpack.c.h.b16 %v328
    %v1674 = vunpack.c.l.b16 %v329
    %v1675 = vunpack.c.h.b16 %v329
    %v1676 = vunpack.c.l.b16 %v330
    %v1677 = vunpack.c.h.b16 %v330
    %v1678 = vunpack.c.l.b16 %v331
    %v1679 = vunpack.c.h.b16 %v331
    %v1680 = vunpack.c.l.b16 %v332
    %v1681 = vunpack.c.h.b16 %v332
    %v1682 = vunpack.c.l.b16 %v333
    %v1683 = vunpack.c.h.b16 %v333
    %v1684 = vunpack.c.l.b16 %v334
    %v1685 = vunpack.c.h.b16 %v334
    %v1686 = vunpack.c.l.b16 %v335
    %v1687 = vunpack.c.h.b16 %v335
    %v1688 = vunpack.c.l.b16 %v336
    %v1689 = vunpack.c.h.b16 %v336
    %v1690 = vunpack.c.l.b16 %v337
    %v1691 = vunpack.c.h.b16 %v337
    %v1692 = vunpack.c.l.b16 %v338
    %v1693 = vunpack.c.h.b16 %v338
    %v1694 = vunpack.c.l.b16 %v339
    %v1695 = vunpack.c.h.b16 %v339
    %v1696 = vunpack.c.l.b16 %v340
    %v1697 = vunpack.c.h.b16 %v340
    %v1698 = vunpack.c.l.b16 %v341
    %v1699 = vunpack.c.h.b16 %v341
    %v1700 = vunpack.c.l.b16 %v342
    %v1701 = vunpack.c.h.b16 %v342
    %v1702 = vunpack.c.l.b16 %v343
    %v1703 = vunpack.c.h.b16 %v343
    %v1704 = vunpack.c.l.b16 %v344
    %v1705 = vunpack.c.h.b16 %v344
    %v1706 = vunpack.c.l.b16 %v345
    %v1707 = vunpack.c.h.b16 %v345
    %v1708 = vunpack.c.l.b16 %v346
    %v1709 = vunpack.c.h.b16 %v346
    %v1710 = vunpack.c.l.b16 %v347
    %v1711 = vunpack.c.h.b16 %v347
    %v1712 = vunpack.c.l.b16 %v348
    %v1713 = vunpack.c.h.b16 %v348
    %v1714 = vunpack.c.l.b16 %v349
    %v1715 = vunpack.c.h.b16 %v349
    %v1716 = vunpack.c.l.b16 %v350
    %v1717 = vunpack.c.h.b16 %v350
    %v1718 = vunpack.c.l.b16 %v351
    %v1719 = vunpack.c.h.b16 %v351
    %v1720 = vunpack.c.l.b16 %v352
    %v1721 = vunpack.c.h.b16 %v352
    %v1722 = vunpack.c.l.b16 %v353
    %v1723 = vunpack.c.h.b16 %v353
    %v1724 = vunpack.c.l.b16 %v354
    %v1725 = vunpack.c.h.b16 %v354
    %v1726 = vunpack.c.l.b16 %v355
    %v1727 = vunpack.c.h.b16 %v355
    %v1728 = vunpack.c.l.b16 %v356
    %v1729 = vunpack.c.h.b16 %v356
    %v1730 = vunpack.c.l.b16 %v357
    %v1731 = vunpack.c.h.b16 %v357
    %v1732 = vunpack.c.l.b16 %v358
    %v1733 = vunpack.c.h.b16 %v358
    %v1734 = vunpack.c.l.b16 %v359
    %v1735 = vunpack.c.h.b16 %v359
    %v1736 = vunpack.c.l.b16 %v360
    %v1737 = vunpack.c.h.b16 %v360
    %v1738 = vunpack.c.l.b16 %v361
    %v1739 = vunpack.c.h.b16 %v361
    %v1740 = vunpack.c.l.b16 %v362
    %v1741 = vunpack.c.h.b16 %v362
    %v1742 = vunpack.c.l.b16 %v363
    %v1743 = vunpack.c.h.b16 %v363
    %v1744 = vunpack.c.l.b16 %v364
    %v1745 = vunpack.c.h.b16 %v364
    %v1746 = vunpack.c.l.b16 %v365
    %v1747 = vunpack.c.h.b16 %v365
    %v1748 = vunpack.c.l.b16 %v366
    %v1749 = vunpack.c.h.b16 %v366
    %v1750 = vunpack.c.l.b16 %v367
    %v1751 = vunpack.c.h.b16 %v367
    %v1752 = vunpack.c.l.b16 %v368
    %v1753 = vunpack.c.h.b16 %v368
    %v1754 = vunpack.c.l.b16 %v369
    %v1755 = vunpack.c.h.b16 %v369
    %v1756 = vunpack.c.l.b16 %v370
    %v1757 = vunpack.c.h.b16 %v370
    %v1758 = vunpack.c.l.b16 %v371
    %v1759 = vunpack.c.h.b16 %v371
    %v1760 = vunpack.c.l.b16 %v372
    %v1761 = vunpack.c.h.b16 %v372
    %v1762 = vunpack.c.l.b16 %v373
    %v1763 = vunpack.c.h.b16 %v373
    %v1764 = vunpack.c.l.b16 %v374
    %v1765 = vunpack.c.h.b16 %v374
    %v1766 = vunpack.c.l.b16 %v375
    %v1767 = vunpack.c.h.b16 %v375
    %v1768 = vunpack.c.l.b16 %v376
    %v1769 = vunpack.c.h.b16 %v376
    %v1770 = vunpack.c.l.b16 %v377
    %v1771 = vunpack.c.h.b16 %v377
    %v1772 = vunpack.c.l.b16 %v378
    %v1773 = vunpack.c.h.b16 %v378
    %v1774 = vunpack.c.l.b16 %v379
    %v1775 = vunpack.c.h.b16 %v379
    %v1776 = vunpack.c.l.b16 %v380
    %v1777 = vunpack.c.h.b16 %v380
    %v1778 = vunpack.c.l.b16 %v381
    %v1779 = vunpack.c.h.b16 %v381
    %v1780 = vunpack.c.l.b16 %v382
    %v1781 = vunpack.c.h.b16 %v382
    %v1782 = vunpack.c.l.b16 %v383
    %v1783 = vunpack.c.h.b16 %v383
    %v1784 = vunpack.c.l.b16 %v384
    %v1785 = vunpack.c.h.b16 %v384
    %v1786 = vunpack.c.l.b16 %v385
    %v1787 = vunpack.c.h.b16 %v385
    %v1788 = vunpack.c.l.b16 %v386
    %v1789 = vunpack.c.h.b16 %v386
    %v1790 = vunpack.c.l.b16 %v387
    %v1791 = vunpack.c.h.b16 %v387
    %v1792 = vunpack.c.l.b16 %v388
    %v1793 = vunpack.c.h.b16 %v388
    %v1794 = vunpack.c.l.b16 %v389
    %v1795 = vunpack.c.h.b16 %v389
    %v1796 = vunpack.c.l.b16 %v390
    %v1797 = vunpack.c.h.b16 %v390
    %v1798 = vunpack.c.l.b16 %v391
    %v1799 = vunpack.c.h.b16 %v391
    %v1800 = vunpack.c.l.b16 %v392
    %v1801 = vunpack.c.h.b16 %v392
    %v1802 = vunpack.c.l.b16 %v393
    %v1803 = vunpack.c.h.b16 %v393
    %v1804 = vunpack.c.l.b16 %v394
    %v1805 = vunpack.c.h.b16 %v394
    %v1806 = vunpack.c.l.b16 %v395
    %v1807 = vunpack.c.h.b16 %v395
    %v1808 = vunpack.c.l.b16 %v396
    %v1809 = vunpack.c.h.b16 %v396
    %v1810 = vunpack.c.l.b16 %v397
    %v1811 = vunpack.c.h.b16 %v397
    %v1812 = vunpack.c.l.b16 %v398
    %v1813 = vunpack.c.h.b16 %v398
    %v1814 = vunpack.c.l.b16 %v399
    %v1815 = vunpack.c.h.b16 %v399
    %v1816 = vunpack.c.l.b16 %v400
    %v1817 = vunpack.c.h.b16 %v400
    %v1818 = vunpack.c.l.b16 %v401
    %v1819 = vunpack.c.h.b16 %v401
    %v1820 = vunpack.c.l.b16 %v402
    %v1821 = vunpack.c.h.b16 %v402
    %v1822 = vunpack.c.l.b16 %v403
    %v1823 = vunpack.c.h.b16 %v403
    %v1824 = vunpack.c.l.b16 %v404
    %v1825 = vunpack.c.h.b16 %v404
    %v1826 = vunpack.c.l.b16 %v405
    %v1827 = vunpack.c.h.b16 %v405
    %v1828 = vunpack.c.l.b16 %v406
    %v1829 = vunpack.c.h.b16 %v406
    %v1830 = vunpack.c.l.b16 %v407
    %v1831 = vunpack.c.h.b16 %v407
    %v1832 = vunpack.c.l.b16 %v408
    %v1833 = vunpack.c.h.b16 %v408
    %v1834 = vunpack.c.l.b16 %v409
    %v1835 = vunpack.c.h.b16 %v409
    %v1836 = vunpack.c.l.b16 %v410
    %v1837 = vunpack.c.h.b16 %v410
    %v1838 = vunpack.c.l.b16 %v411
    %v1839 = vunpack.c.h.b16 %v411
    %v1840 = vunpack.c.l.b16 %v412
    %v1841 = vunpack.c.h.b16 %v412
    %v1842 = vunpack.c.l.b16 %v413
    %v1843 = vunpack.c.h.b16 %v413
    %v1844 = vunpack.c.l.b16 %v414
    %v1845 = vunpack.c.h.b16 %v414
    %v1846 = vunpack.c.l.b16 %v415
    %v1847 = vunpack.c.h.b16 %v415
    %v1848 = vunpack.c.l.b16 %v416
    %v1849 = vunpack.c.h.b16 %v416
    %v1850 = vunpack.c.l.b16 %v417
    %v1851 = vunpack.c.h.b16 %v417
    %v1852 = vunpack.c.l.b16 %v418
    %v1853 = vunpack.c.h.b16 %v418
    %v1854 = vunpack.c.l.b16 %v419
    %v1855 = vunpack.c.h.b16 %v419
    %v1856 = vunpack.c.l.b16 %v420
    %v1857 = vunpack.c.h.b16 %v420
    %v1858 = vunpack.c.l.b16 %v421
    %v1859 = vunpack.c.h.b16 %v421
    %v1860 = vunpack.c.l.b16 %v422
    %v1861 = vunpack.c.h.b16 %v422
    %v1862 = vunpack.c.l.b16 %v423
    %v1863 = vunpack.c.h.b16 %v423
    %v1864 = vunpack.c.l.b16 %v424
    %v1865 = vunpack.c.h.b16 %v424
    %v1866 = vunpack.c.l.b16 %v425
    %v1867 = vunpack.c.h.b16 %v425
    %v1868 = vunpack.c.l.b16 %v426
    %v1869 = vunpack.c.h.b16 %v426
    %v1870 = vunpack.c.l.b16 %v427
    %v1871 = vunpack.c.h.b16 %v427
    %v1872 = vunpack.c.l.b16 %v428
    %v1873 = vunpack.c.h.b16 %v428
    %v1874 = vunpack.c.l.b16 %v429
    %v1875 = vunpack.c.h.b16 %v429
    %v1876 = vunpack.c.l.b16 %v430
    %v1877 = vunpack.c.h.b16 %v430
    %v1878 = vunpack.c.l.b16 %v431
    %v1879 = vunpack.c.h.b16 %v431
    %v1880 = vunpack.c.l.b16 %v432
    %v1881 = vunpack.c.h.b16 %v432
    %v1882 = vunpack.c.l.b16 %v433
    %v1883 = vunpack.c.h.b16 %v433
    %v1884 = vunpack.c.l.b16 %v434
    %v1885 = vunpack.c.h.b16 %v434
    %v1886 = vunpack.c.l.b16 %v435
    %v1887 = vunpack.c.h.b16 %v435
    %v1888 = vunpack.c.l.b16 %v436
    %v1889 = vunpack.c.h.b16 %v436
    %v1890 = vunpack.c.l.b16 %v437
    %v1891 = vunpack.c.h.b16 %v437
    %v1892 = vunpack.c.l.b16 %v438
    %v1893 = vunpack.c.h.b16 %v438
    %v1894 = vunpack.c.l.b16 %v439
    %v1895 = vunpack.c.h.b16 %v439
    %v1896 = vunpack.c.l.b16 %v440
    %v1897 = vunpack.c.h.b16 %v440
    %v1898 = vunpack.c.l.b16 %v441
    %v1899 = vunpack.c.h.b16 %v441
    %v1900 = vunpack.c.l.b16 %v442
    %v1901 = vunpack.c.h.b16 %v442
    %v1902 = vunpack.c.l.b16 %v443
    %v1903 = vunpack.c.h.b16 %v443
    %v1904 = vunpack.c.l.b16 %v444
    %v1905 = vunpack.c.h.b16 %v444
    %v1906 = vunpack.c.l.b16 %v445
    %v1907 = vunpack.c.h.b16 %v445
    %v1908 = vunpack.c.l.b16 %v446
    %v1909 = vunpack.c.h.b16 %v446
    %v1910 = vunpack.c.l.b16 %v447
    %v1911 = vunpack.c.h.b16 %v447
    %v1912 = vunpack.c.l.b16 %v448
    %v1913 = vunpack.c.h.b16 %v448
    %v1914 = vunpack.c.l.b16 %v449
    %v1915 = vunpack.c.h.b16 %v449
    %v1916 = vunpack.c.l.b16 %v450
    %v1917 = vunpack.c.h.b16 %v450
    %v1918 = vunpack.c.l.b16 %v451
    %v1919 = vunpack.c.h.b16 %v451
    %v1920 = vunpack.c.l.b16 %v452
    %v1921 = vunpack.c.h.b16 %v452
    %v1922 = vunpack.c.l.b16 %v453
    %v1923 = vunpack.c.h.b16 %v453
    %v1924 = vunpack.c.l.b16 %v454
    %v1925 = vunpack.c.h.b16 %v454
    %v1926 = vunpack.c.l.b16 %v455
    %v1927 = vunpack.c.h.b16 %v455
    %v1928 = vunpack.c.l.b16 %v456
    %v1929 = vunpack.c.h.b16 %v456
    %v1930 = vunpack.c.l.b16 %v457
    %v1931 = vunpack.c.h.b16 %v457
    %v1932 = vunpack.c.l.b16 %v458
    %v1933 = vunpack.c.h.b16 %v458
    %v1934 = vunpack.c.l.b16 %v459
    %v1935 = vunpack.c.h.b16 %v459
    %v1936 = vunpack.c.l.b16 %v460
    %v1937 = vunpack.c.h.b16 %v460
    %v1938 = vunpack.c.l.b16 %v461
    %v1939 = vunpack.c.h.b16 %v461
    %v1940 = vunpack.c.l.b16 %v462
    %v1941 = vunpack.c.h.b16 %v462
    %v1942 = vunpack.c.l.b16 %v463
    %v1943 = vunpack.c.h.b16 %v463
    %v1944 = vunpack.c.l.b16 %v464
    %v1945 = vunpack.c.h.b16 %v464
    %v1946 = vunpack.c.l.b16 %v465
    %v1947 = vunpack.c.h.b16 %v465
    %v1948 = vunpack.c.l.b16 %v466
    %v1949 = vunpack.c.h.b16 %v466
    %v1950 = vunpack.c.l.b16 %v467
    %v1951 = vunpack.c.h.b16 %v467
    %v1952 = vunpack.c.l.b16 %v468
    %v1953 = vunpack.c.h.b16 %v468
    %v1954 = vunpack.c.l.b16 %v469
    %v1955 = vunpack.c.h.b16 %v469
    %v1956 = vunpack.c.l.b16 %v470
    %v1957 = vunpack.c.h.b16 %v470
    %v1958 = vunpack.c.l.b16 %v471
    %v1959 = vunpack.c.h.b16 %v471
    %v1960 = vunpack.c.l.b16 %v472
    %v1961 = vunpack.c.h.b16 %v472
    %v1962 = vunpack.c.l.b16 %v473
    %v1963 = vunpack.c.h.b16 %v473
    %v1964 = vunpack.c.l.b16 %v474
    %v1965 = vunpack.c.h.b16 %v474
    %v1966 = vunpack.c.l.b16 %v475
    %v1967 = vunpack.c.h.b16 %v475
    %v1968 = vunpack.c.l.b16 %v476
    %v1969 = vunpack.c.h.b16 %v476
    %v1970 = vunpack.c.l.b16 %v477
    %v1971 = vunpack.c.h.b16 %v477
    %v1972 = vunpack.c.l.b16 %v478
    %v1973 = vunpack.c.h.b16 %v478
    %v1974 = vunpack.c.l.b16 %v479
    %v1975 = vunpack.c.h.b16 %v479
    %v1976 = vunpack.c.l.b16 %v480
    %v1977 = vunpack.c.h.b16 %v480
    %v1978 = vunpack.c.l.b16 %v481
    %v1979 = vunpack.c.h.b16 %v481
    %v1980 = vunpack.c.l.b16 %v482
    %v1981 = vunpack.c.h.b16 %v482
    %v1982 = vunpack.c.l.b16 %v483
    %v1983 = vunpack.c.h.b16 %v483
    %v1984 = vunpack.c.l.b16 %v484
    %v1985 = vunpack.c.h.b16 %v484
    %v1986 = vunpack.c.l.b16 %v485
    %v1987 = vunpack.c.h.b16 %v485
    %v1988 = vunpack.c.l.b16 %v486
    %v1989 = vunpack.c.h.b16 %v486
    %v1990 = vunpack.c.l.b16 %v487
    %v1991 = vunpack.c.h.b16 %v487
    %v1992 = vunpack.c.l.b16 %v488
    %v1993 = vunpack.c.h.b16 %v488
    %v1994 = vunpack.c.l.b16 %v489
    %v1995 = vunpack.c.h.b16 %v489
    %v1996 = vunpack.c.l.b16 %v490
    %v1997 = vunpack.c.h.b16 %v490
    %v1998 = vunpack.c.l.b16 %v491
    %v1999 = vunpack.c.h.b16 %v491
    %v2000 = vunpack.c.l.b16 %v492
    %v2001 = vunpack.c.h.b16 %v492
    %v2002 = vunpack.c.l.b16 %v493
    %v2003 = vunpack.c.h.b16 %v493
    %v2004 = vunpack.c.l.b16 %v494
    %v2005 = vunpack.c.h.b16 %v494
    %v2006 = vunpack.c.l.b16 %v495
    %v2007 = vunpack.c.h.b16 %v495
    %v2008 = vunpack.c.l.b16 %v496
    %v2009 = vunpack.c.h.b16 %v496
    %v2010 = vunpack.c.l.b16 %v497
    %v2011 = vunpack.c.h.b16 %v497
    %v2012 = vunpack.c.l.b16 %v498
    %v2013 = vunpack.c.h.b16 %v498
    %v2014 = vunpack.c.l.b16 %v499
    %v2015 = vunpack.c.h.b16 %v499
    %v2016 = vunpack.c.l.b16 %v500
    %v2017 = vunpack.c.h.b16 %v500
    %v2018 = vunpack.c.l.b16 %v501
    %v2019 = vunpack.c.h.b16 %v501
    %v2020 = vunpack.c.l.b16 %v502
    %v2021 = vunpack.c.h.b16 %v502
    %v2022 = vunpack.c.l.b16 %v503
    %v2023 = vunpack.c.h.b16 %v503
    %v2024 = vunpack.c.l.b16 %v504
    %v2025 = vunpack.c.h.b16 %v504
    %v2026 = vunpack.c.l.b16 %v505
    %v2027 = vunpack.c.h.b16 %v505
    %v2028 = vunpack.c.l.b16 %v506
    %v2029 = vunpack.c.h.b16 %v506
    %v2030 = vunpack.c.l.b16 %v507
    %v2031 = vunpack.c.h.b16 %v507
    %v2032 = vunpack.c.l.b16 %v508
    %v2033 = vunpack.c.h.b16 %v508
    %v2034 = vunpack.c.l.b16 %v509
    %v2035 = vunpack.c.h.b16 %v509
    %v2036 = vunpack.c.l.b16 %v510
    %v2037 = vunpack.c.h.b16 %v510
    %v2038 = vunpack.c.l.b16 %v511
    %v2039 = vunpack.c.h.b16 %v511
    %v2040 = vunpack.c.l.b16 %v512
    %v2041 = vunpack.c.h.b16 %v512
    %v2042 = vunpack.c.l.b16 %v513
    %v2043 = vunpack.c.h.b16 %v513
    %v2044 = vunpack.c.l.b16 %v514
    %v2045 = vunpack.c.h.b16 %v514
    %v2046 = vunpack.c.l.b16 %v515
    %v2047 = vunpack.c.h.b16 %v515
    %v2048 = vunpack.c.l.b16 %v516
    %v2049 = vunpack.c.h.b16 %v516
    %v2050 = vunpack.c.l.b16 %v517
    %v2051 = vunpack.c.h.b16 %v517
    %v2052 = vunpack.c.l.b16 %v518
    %v2053 = vunpack.c.h.b16 %v518
    %v2054 = vunpack.c.l.b16 %v519
    %v2055 = vunpack.c.h.b16 %v519
    %v2056 = vunpack.c.l.b16 %v520
    %v2057 = vunpack.c.h.b16 %v520
    %v2058 = vunpack.c.l.b16 %v521
    %v2059 = vunpack.c.h.b16 %v521
    %v2060 = vunpack.c.l.b16 %v522
    %v2061 = vunpack.c.h.b16 %v522
    %v2062 = vunpack.c.l.b16 %v523
    %v2063 = vunpack.c.h.b16 %v523
    %v2064 = vunpack.c.l.b16 %v524
    %v2065 = vunpack.c.h.b16 %v524
    %v2066 = vunpack.c.l.b16 %v525
    %v2067 = vunpack.c.h.b16 %v525
    %v2068 = vunpack.c.l.b16 %v526
    %v2069 = vunpack.c.h.b16 %v526
    %v2070 = vunpack.c.l.b16 %v527
    %v2071 = vunpack.c.h.b16 %v527
    %v2072 = vunpack.c.l.b16 %v528
    %v2073 = vunpack.c.h.b16 %v528
    %v2074 = vunpack.c.l.b16 %v529
    %v2075 = vunpack.c.h.b16 %v529
    %v2076 = vunpack.c.l.b16 %v530
    %v2077 = vunpack.c.h.b16 %v530
    %v2078 = vunpack.c.l.b16 %v531
    %v2079 = vunpack.c.h.b16 %v531
    %v2080 = vunpack.c.l.b16 %v532
    %v2081 = vunpack.c.h.b16 %v532
    %v2082 = vunpack.c.l.b16 %v533
    %v2083 = vunpack.c.h.b16 %v533
    %v2084 = vunpack.c.l.b16 %v534
    %v2085 = vunpack.c.h.b16 %v534
    %v2086 = vunpack.c.l.b16 %v535
    %v2087 = vunpack.c.h.b16 %v535
    %v2088 = vunpack.c.l.b16 %v536
    %v2089 = vunpack.c.h.b16 %v536
    %v2090 = vunpack.c.l.b16 %v537
    %v2091 = vunpack.c.h.b16 %v537
    %v2092 = vunpack.c.l.b16 %v538
    %v2093 = vunpack.c.h.b16 %v538
    %v2094 = vunpack.c.l.b16 %v539
    %v2095 = vunpack.c.h.b16 %v539
    %v2096 = vunpack.c.l.b16 %v540
    %v2097 = vunpack.c.h.b16 %v540
    %v2098 = vunpack.c.l.b16 %v541
    %v2099 = vunpack.c.h.b16 %v541
    %v2100 = vunpack.c.l.b16 %v542
    %v2101 = vunpack.c.h.b16 %v542
    %v2102 = vunpack.c.l.b16 %v543
    %v2103 = vunpack.c.h.b16 %v543
    %v2104 = vunpack.c.l.b16 %v544
    %v2105 = vunpack.c.h.b16 %v544
    %v2106 = vunpack.c.l.b16 %v545
    %v2107 = vunpack.c.h.b16 %v545
    %v2108 = vunpack.c.l.b16 %v546
    %v2109 = vunpack.c.h.b16 %v546
    %v2110 = vunpack.c.l.b16 %v547
    %v2111 = vunpack.c.h.b16 %v547
    %v2112 = vunpack.c.l.b16 %v548
    %v2113 = vunpack.c.h.b16 %v548
    %v2114 = vunpack.c.l.b16 %v549
    %v2115 = vunpack.c.h.b16 %v549
    %v2116 = vunpack.c.l.b16 %v550
    %v2117 = vunpack.c.h.b16 %v550
    %v2118 = vunpack.c.l.b16 %v551
    %v2119 = vunpack.c.h.b16 %v551
    %v2120 = vunpack.c.l.b16 %v552
    %v2121 = vunpack.c.h.b16 %v552
    %v2122 = vpack.c.b16 %v1346, %v1338
    %v2123 = vpack.c.b16 %v1347, %v1339
    %v2124 = vpack.c.b16 %v1348, %v1340
    %v2125 = vpack.c.b16 %v1349, %v1341
    %v2126 = vpack.c.b16 %v1350, %v1342
    %v2127 = vpack.c.b16 %v1351, %v1343
    %v2128 = vpack.c.b16 %v1352, %v1344
    %v2129 = vpack.c.b16 %v1353, %v1345
    %v2130 = vpack.c.b16 %v1362, %v1354
    %v2131 = vpack.c.b16 %v1363, %v1355
    %v2132 = vpack.c.b16 %v1364, %v1356
    %v2133 = vpack.c.b16 %v1365, %v1357
    %v2134 = vpack.c.b16 %v1366, %v1358
    %v2135 = vpack.c.b16 %v1367, %v1359
    %v2136 = vpack.c.b16 %v1368, %v1360
    %v2137 = vpack.c.b16 %v1369, %v1361
    %v2138 = vpack.c.b16 %v1378, %v1370
    %v2139 = vpack.c.b16 %v1379, %v1371
    %v2140 = vpack.c.b16 %v1380, %v1372
    %v2141 = vpack.c.b16 %v1381, %v1373
    %v2142 = vpack.c.b16 %v1382, %v1374
    %v2143 = vpack.c.b16 %v1383, %v1375
    %v2144 = vpack.c.b16 %v1384, %v1376
    %v2145 = vpack.c.b16 %v1385, %v1377
    %v2146 = vpack.c.b16 %v1394, %v1386
    %v2147 = vpack.c.b16 %v1395, %v1387
    %v2148 = vpack.c.b16 %v1396, %v1388
    %v2149 = vpack.c.b16 %v1397, %v1389
    %v2150 = vpack.c.b16 %v1398, %v1390
    %v2151 = vpack.c.b16 %v1399, %v1391
    %v2152 = vpack.c.b16 %v1400, %v1392
    %v2153 = vpack.c.b16 %v1401, %v1393
    %v2154 = vpack.c.b16 %v1410, %v1402
    %v2155 = vpack.c.b16 %v1411, %v1403
    %v2156 = vpack.c.b16 %v1412, %v1404
    %v2157 = vpack.c.b16 %v1413, %v1405
    %v2158 = vpack.c.b16 %v1414, %v1406
    %v2159 = vpack.c.b16 %v1415, %v1407
    %v2160 = vpack.c.b16 %v1416, %v1408
    %v2161 = vpack.c.b16 %v1417, %v1409
    %v2162 = vpack.c.b16 %v1426, %v1418
    %v2163 = vpack.c.b16 %v1427, %v1419
    %v2164 = vpack.c.b16 %v1428, %v1420
    %v2165 = vpack.c.b16 %v1429, %v1421
    %v2166 = vpack.c.b16 %v1430, %v1422
    %v2167 = vpack.c.b16 %v1431, %v1423
    %v2168 = vpack.c.b16 %v1432, %v1424
    %v2169 = vpack.c.b16 %v1433, %v1425
    %v2170 = vpack.c.b16 %v1442, %v1434
    %v2171 = vpack.c.b16 %v1443, %v1435
    %v2172 = vpack.c.b16 %v1444, %v1436
    %v2173 = vpack.c.b16 %v1445, %v1437
    %v2174 = vpack.c.b16 %v1446, %v1438
    %v2175 = vpack.c.b16 %v1447, %v1439
    %v2176 = vpack.c.b16 %v1448, %v1440
    %v2177 = vpack.c.b16 %v1449, %v1441
    %v2178 = vpack.c.b16 %v1458, %v1450
    %v2179 = vpack.c.b16 %v1459, %v1451
    %v2180 = vpack.c.b16 %v1460, %v1452
    %v2181 = vpack.c.b16 %v1461, %v1453
    %v2182 = vpack.c.b16 %v1462, %v1454
    %v2183 = vpack.c.b16 %v1463, %v1455
    %v2184 = vpack.c.b16 %v1464, %v1456
    %v2185 = vpack.c.b16 %v1465, %v1457
    %v2186 = vpack.c.b16 %v1474, %v1466
    %v2187 = vpack.c.b16 %v1475, %v1467
    %v2188 = vpack.c.b16 %v1476, %v1468
    %v2189 = vpack.c.b16 %v1477, %v1469
    %v2190 = vpack.c.b16 %v1478, %v1470
    %v2191 = vpack.c.b16 %v1479, %v1471
    %v2192 = vpack.c.b16 %v1480, %v1472
    %v2193 = vpack.c.b16 %v1481, %v1473
    %v2194 = vpack.c.b16 %v1490, %v1482
    %v2195 = vpack.c.b16 %v1491, %v1483
    %v2196 = vpack.c.b16 %v1492, %v1484
    %v2197 = vpack.c.b16 %v1493, %v1485
    %v2198 = vpack.c.b16 %v1494, %v1486
    %v2199 = vpack.c.b16 %v1495, %v1487
    %v2200 = vpack.c.b16 %v1496, %v1488
    %v2201 = vpack.c.b16 %v1497, %v1489
    %v2202 = vpack.c.b16 %v1506, %v1498
    %v2203 = vpack.c.b16 %v1507, %v1499
    %v2204 = vpack.c.b16 %v1508, %v1500
    %v2205 = vpack.c.b16 %v1509, %v1501
    %v2206 = vpack.c.b16 %v1510, %v1502
    %v2207 = vpack.c.b16 %v1511, %v1503
    %v2208 = vpack.c.b16 %v1512, %v1504
    %v2209 = vpack.c.b16 %v1513, %v1505
    %v2210 = vpack.c.b16 %v1522, %v1514
    %v2211 = vpack.c.b16 %v1523, %v1515
    %v2212 = vpack.c.b16 %v1524, %v1516
    %v2213 = vpack.c.b16 %v1525, %v1517
    %v2214 = vpack.c.b16 %v1526, %v1518
    %v2215 = vpack.c.b16 %v1527, %v1519
    %v2216 = vpack.c.b16 %v1528, %v1520
    %v2217 = vpack.c.b16 %v1529, %v1521
    %v2218 = vpack.c.b16 %v1538, %v1530
    %v2219 = vpack.c.b16 %v1539, %v1531
    %v2220 = vpack.c.b16 %v1540, %v1532
    %v2221 = vpack.c.b16 %v1541, %v1533
    %v2222 = vpack.c.b16 %v1542, %v1534
    %v2223 = vpack.c.b16 %v1543, %v1535
    %v2224 = vpack.c.b16 %v1544, %v1536
    %v2225 = vpack.c.b16 %v1545, %v1537
    %v2226 = vpack.c.b16 %v1554, %v1546
    %v2227 = vpack.c.b16 %v1555, %v1547
    %v2228 = vpack.c.b16 %v1556, %v1548
    %v2229 = vpack.c.b16 %v1557, %v1549
    %v2230 = vpack.c.b16 %v1558, %v1550
    %v2231 = vpack.c.b16 %v1559, %v1551
    %v2232 = vpack.c.b16 %v1560, %v1552
    %v2233 = vpack.c.b16 %v1561, %v1553
    %v2234 = vpack.c.b16 %v1570, %v1562
    %v2235 = vpack.c.b16 %v1571, %v1563
    %v2236 = vpack.c.b16 %v1572, %v1564
    %v2237 = vpack.c.b16 %v1573, %v1565
    %v2238 = vpack.c.b16 %v1574, %v1566
    %v2239 = vpack.c.b16 %v1575, %v1567
    %v2240 = vpack.c.b16 %v1576, %v1568
    %v2241 = vpack.c.b16 %v1577, %v1569
    %v2242 = vpack.c.b16 %v1586, %v1578
    %v2243 = vpack.c.b16 %v1587, %v1579
    %v2244 = vpack.c.b16 %v1588, %v1580
    %v2245 = vpack.c.b16 %v1589, %v1581
    %v2246 = vpack.c.b16 %v1590, %v1582
    %v2247 = vpack.c.b16 %v1591, %v1583
    %v2248 = vpack.c.b16 %v1592, %v1584
    %v2249 = vpack.c.b16 %v1593, %v1585
    %v2250 = vpack.c.b16 %v1602, %v1594
    %v2251 = vpack.c.b16 %v1603, %v1595
    %v2252 = vpack.c.b16 %v1604, %v1596
    %v2253 = vpack.c.b16 %v1605, %v1597
    %v2254 = vpack.c.b16 %v1606, %v1598
    %v2255 = vpack.c.b16 %v1607, %v1599
    %v2256 = vpack.c.b16 %v1608, %v1600
    %v2257 = vpack.c.b16 %v1609, %v1601
    %v2258 = vpack.c.b16 %v1618, %v1610
    %v2259 = vpack.c.b16 %v1619, %v1611
    %v2260 = vpack.c.b16 %v1620, %v1612
    %v2261 = vpack.c.b16 %v1621, %v1613
    %v2262 = vpack.c.b16 %v1622, %v1614
    %v2263 = vpack.c.b16 %v1623, %v1615
    %v2264 = vpack.c.b16 %v1624, %v1616
    %v2265 = vpack.c.b16 %v1625, %v1617
    %v2266 = vpack.c.b16 %v1634, %v1626
    %v2267 = vpack.c.b16 %v1635, %v1627
    %v2268 = vpack.c.b16 %v1636, %v1628
    %v2269 = vpack.c.b16 %v1637, %v1629
    %v2270 = vpack.c.b16 %v1638, %v1630
    %v2271 = vpack.c.b16 %v1639, %v1631
    %v2272 = vpack.c.b16 %v1640, %v1632
    %v2273 = vpack.c.b16 %v1641, %v1633
    %v2274 = vpack.c.b16 %v1650, %v1642
    %v2275 = vpack.c.b16 %v1651, %v1643
    %v2276 = vpack.c.b16 %v1652, %v1644
    %v2277 = vpack.c.b16 %v1653, %v1645
    %v2278 = vpack.c.b16 %v1654, %v1646
    %v2279 = vpack.c.b16 %v1655, %v1647
    %v2280 = vpack.c.b16 %v1656, %v1648
    %v2281 = vpack.c.b16 %v1657, %v1649
    %v2282 = vpack.c.b16 %v1666, %v1658
    %v2283 = vpack.c.b16 %v1667, %v1659
    %v2284 = vpack.c.b16 %v1668, %v1660
    %v2285 = vpack.c.b16 %v1669, %v1661
    %v2286 = vpack.c.b16 %v1670, %v1662
    %v2287 = vpack.c.b16 %v1671, %v1663
    %v2288 = vpack.c.b16 %v1672, %v1664
    %v2289 = vpack.c.b16 %v1673, %v1665
    %v2290 = vpack.c.b16 %v1682, %v1674
    %v2291 = vpack.c.b16 %v1683, %v1675
    %v2292 = vpack.c.b16 %v1684, %v1676
    %v2293 = vpack.c.b16 %v1685, %v1677
    %v2294 = vpack.c.b16 %v1686, %v1678
    %v2295 = vpack.c.b16 %v1687, %v1679
    %v2296 = vpack.c.b16 %v1688, %v1680
    %v2297 = vpack.c.b16 %v1689, %v1681
    %v2298 = vpack.c.b16 %v1698, %v1690
    %v2299 = vpack.c.b16 %v1699, %v1691
    %v2300 = vpack.c.b16 %v1700, %v1692
    %v2301 = vpack.c.b16 %v1701, %v1693
    %v2302 = vpack.c.b16 %v1702, %v1694
    %v2303 = vpack.c.b16 %v1703, %v1695
    %v2304 = vpack.c.b16 %v1704, %v1696
    %v2305 = vpack.c.b16 %v1705, %v1697
    %v2306 = vpack.c.b16 %v1714, %v1706
    %v2307 = vpack.c.b16 %v1715, %v1707
    %v2308 = vpack.c.b16 %v1716, %v1708
    %v2309 = vpack.c.b16 %v1717, %v1709
    %v2310 = vpack.c.b16 %v1718, %v1710
    %v2311 = vpack.c.b16 %v1719, %v1711
    %v2312 = vpack.c.b16 %v1720, %v1712
    %v2313 = vpack.c.b16 %v1721, %v1713
    %v2314 = vpack.c.b16 %v1730, %v1722
    %v2315 = vpack.c.b16 %v1731, %v1723
    %v2316 = vpack.c.b16 %v1732, %v1724
    %v2317 = vpack.c.b16 %v1733, %v1725
    %v2318 = vpack.c.b16 %v1734, %v1726
    %v2319 = vpack.c.b16 %v1735, %v1727
    %v2320 = vpack.c.b16 %v1736, %v1728
    %v2321 = vpack.c.b16 %v1737, %v1729
    %v2322 = vpack.c.b16 %v1746, %v1738
    %v2323 = vpack.c.b16 %v1747, %v1739
    %v2324 = vpack.c.b16 %v1748, %v1740
    %v2325 = vpack.c.b16 %v1749, %v1741
    %v2326 = vpack.c.b16 %v1750, %v1742
    %v2327 = vpack.c.b16 %v1751, %v1743
    %v2328 = vpack.c.b16 %v1752, %v1744
    %v2329 = vpack.c.b16 %v1753, %v1745
    %v2330 = vpack.c.b16 %v1762, %v1754
    %v2331 = vpack.c.b16 %v1763, %v1755
    %v2332 = vpack.c.b16 %v1764, %v1756
    %v2333 = vpack.c.b16 %v1765, %v1757
    %v2334 = vpack.c.b16 %v1766, %v1758
    %v2335 = vpack.c.b16 %v1767, %v1759
    %v2336 = vpack.c.b16 %v1768, %v1760
    %v2337 = vpack.c.b16 %v1769, %v1761
    %v2338 = vpack.c.b16 %v1778, %v1770
    %v2339 = vpack.c.b16 %v1779, %v1771
    %v2340 = vpack.c.b16 %v1780, %v1772
    %v2341 = vpack.c.b16 %v1781, %v1773
    %v2342 = vpack.c.b16 %v1782, %v1774
    %v2343 = vpack.c.b16 %v1783, %v1775
    %v2344 = vpack.c.b16 %v1784, %v1776
    %v2345 = vpack.c.b16 %v1785, %v1777
    %v2346 = vpack.c.b16 %v1794, %v1786
    %v2347 = vpack.c.b16 %v1795, %v1787
    %v2348 = vpack.c.b16 %v1796, %v1788
    %v2349 = vpack.c.b16 %v1797, %v1789
    %v2350 = vpack.c.b16 %v1798, %v1790
    %v2351 = vpack.c.b16 %v1799, %v1791
    %v2352 = vpack.c.b16 %v1800, %v1792
    %v2353 = vpack.c.b16 %v1801, %v1793
    %v2354 = vpack.c.b16 %v1810, %v1802
    %v2355 = vpack.c.b16 %v1811, %v1803
    %v2356 = vpack.c.b16 %v1812, %v1804
    %v2357 = vpack.c.b16 %v1813, %v1805
    %v2358 = vpack.c.b16 %v1814, %v1806
    %v2359 = vpack.c.b16 %v1815, %v1807
    %v2360 = vpack.c.b16 %v1816, %v1808
    %v2361 = vpack.c.b16 %v1817, %v1809
    %v2362 = vpack.c.b16 %v1826, %v1818
    %v2363 = vpack.c.b16 %v1827, %v1819
    %v2364 = vpack.c.b16 %v1828, %v1820
    %v2365 = vpack.c.b16 %v1829, %v1821
    %v2366 = vpack.c.b16 %v1830, %v1822
    %v2367 = vpack.c.b16 %v1831, %v1823
    %v2368 = vpack.c.b16 %v1832, %v1824
    %v2369 = vpack.c.b16 %v1833, %v1825
    %v2370 = vpack.c.b16 %v1842, %v1834
    %v2371 = vpack.c.b16 %v1843, %v1835
    %v2372 = vpack.c.b16 %v1844, %v1836
    %v2373 = vpack.c.b16 %v1845, %v1837
    %v2374 = vpack.c.b16 %v1846, %v1838
    %v2375 = vpack.c.b16 %v1847, %v1839
    %v2376 = vpack.c.b16 %v1848, %v1840
    %v2377 = vpack.c.b16 %v1849, %v1841
    %v2378 = vpack.c.b16 %v1858, %v1850
    %v2379 = vpack.c.b16 %v1859, %v1851
    %v2380 = vpack.c.b16 %v1860, %v1852
    %v2381 = vpack.c.b16 %v1861, %v1853
    %v2382 = vpack.c.b16 %v1862, %v1854
    %v2383 = vpack.c.b16 %v1863, %v1855
    %v2384 = vpack.c.b16 %v1864, %v1856
    %v2385 = vpack.c.b16 %v1865, %v1857
    %v2386 = vpack.c.b16 %v1874, %v1866
    %v2387 = vpack.c.b16 %v1875, %v1867
    %v2388 = vpack.c.b16 %v1876, %v1868
    %v2389 = vpack.c.b16 %v1877, %v1869
    %v2390 = vpack.c.b16 %v1878, %v1870
    %v2391 = vpack.c.b16 %v1879, %v1871
    %v2392 = vpack.c.b16 %v1880, %v1872
    %v2393 = vpack.c.b16 %v1881, %v1873
    %v2394 = vpack.c.b16 %v1890, %v1882
    %v2395 = vpack.c.b16 %v1891, %v1883
    %v2396 = vpack.c.b16 %v1892, %v1884
    %v2397 = vpack.c.b16 %v1893, %v1885
    %v2398 = vpack.c.b16 %v1894, %v1886
    %v2399 = vpack.c.b16 %v1895, %v1887
    %v2400 = vpack.c.b16 %v1896, %v1888
    %v2401 = vpack.c.b16 %v1897, %v1889
    %v2402 = vpack.c.b16 %v1906, %v1898
    %v2403 = vpack.c.b16 %v1907, %v1899
    %v2404 = vpack.c.b16 %v1908, %v1900
    %v2405 = vpack.c.b16 %v1909, %v1901
    %v2406 = vpack.c.b16 %v1910, %v1902
    %v2407 = vpack.c.b16 %v1911, %v1903
    %v2408 = vpack.c.b16 %v1912, %v1904
    %v2409 = vpack.c.b16 %v1913, %v1905
    %v2410 = vpack.c.b16 %v1922, %v1914
    %v2411 = vpack.c.b16 %v1923, %v1915
    %v2412 = vpack.c.b16 %v1924, %v1916
    %v2413 = vpack.c.b16 %v1925, %v1917
    %v2414 = vpack.c.b16 %v1926, %v1918
    %v2415 = vpack.c.b16 %v1927, %v1919
    %v2416 = vpack.c.b16 %v1928, %v1920
    %v2417 = vpack.c.b16 %v1929, %v1921
    %v2418 = vpack.c.b16 %v1938, %v1930
    %v2419 = vpack.c.b16 %v1939, %v1931
    %v2420 = vpack.c.b16 %v1940, %v1932
    %v2421 = vpack.c.b16 %v1941, %v1933
    %v2422 = vpack.c.b16 %v1942, %v1934
    %v2423 = vpack.c.b16 %v1943, %v1935
    %v2424 = vpack.c.b16 %v1944, %v1936
    %v2425 = vpack.c.b16 %v1945, %v1937
    %v2426 = vpack.c.b16 %v1954, %v1946
    %v2427 = vpack.c.b16 %v1955, %v1947
    %v2428 = vpack.c.b16 %v1956, %v1948
    %v2429 = vpack.c.b16 %v1957, %v1949
    %v2430 = vpack.c.b16 %v1958, %v1950
    %v2431 = vpack.c.b16 %v1959, %v1951
    %v2432 = vpack.c.b16 %v1960, %v1952
    %v2433 = vpack.c.b16 %v1961, %v1953
    %v2434 = vpack.c.b16 %v1970, %v1962
    %v2435 = vpack.c.b16 %v1971, %v1963
    %v2436 = vpack.c.b16 %v1972, %v1964
    %v2437 = vpack.c.b16 %v1973, %v1965
    %v2438 = vpack.c.b16 %v1974, %v1966
    %v2439 = vpack.c.b16 %v1975, %v1967
    %v2440 = vpack.c.b16 %v1976, %v1968
    %v2441 = vpack.c.b16 %v1977, %v1969
    %v2442 = vpack.c.b16 %v1986, %v1978
    %v2443 = vpack.c.b16 %v1987, %v1979
    %v2444 = vpack.c.b16 %v1988, %v1980
    %v2445 = vpack.c.b16 %v1989, %v1981
    %v2446 = vpack.c.b16 %v1990, %v1982
    %v2447 = vpack.c.b16 %v1991, %v1983
    %v2448 = vpack.c.b16 %v1992, %v1984
    %v2449 = vpack.c.b16 %v1993, %v1985
    %v2450 = vpack.c.b16 %v2002, %v1994
    %v2451 = vpack.c.b16 %v2003, %v1995
    %v2452 = vpack.c.b16 %v2004, %v1996
    %v2453 = vpack.c.b16 %v2005, %v1997
    %v2454 = vpack.c.b16 %v2006, %v1998
    %v2455 = vpack.c.b16 %v2007, %v1999
    %v2456 = vpack.c.b16 %v2008, %v2000
    %v2457 = vpack.c.b16 %v2009, %v2001
    %v2458 = vpack.c.b16 %v2018, %v2010
    %v2459 = vpack.c.b16 %v2019, %v2011
    %v2460 = vpack.c.b16 %v2020, %v2012
    %v2461 = vpack.c.b16 %v2021, %v2013
    %v2462 = vpack.c.b16 %v2022, %v2014
    %v2463 = vpack.c.b16 %v2023, %v2015
    %v2464 = vpack.c.b16 %v2024, %v2016
    %v2465 = vpack.c.b16 %v2025, %v2017
    %v2466 = vpack.c.b16 %v2034, %v2026
    %v2467 = vpack.c.b16 %v2035, %v2027
    %v2468 = vpack.c.b16 %v2036, %v2028
    %v2469 = vpack.c.b16 %v2037, %v2029
    %v2470 = vpack.c.b16 %v2038, %v2030
    %v2471 = vpack.c.b16 %v2039, %v2031
    %v2472 = vpack.c.b16 %v2040, %v2032
    %v2473 = vpack.c.b16 %v2041, %v2033
    %v2474 = vpack.c.b16 %v2050, %v2042
    %v2475 = vpack.c.b16 %v2051, %v2043
    %v2476 = vpack.c.b16 %v2052, %v2044
    %v2477 = vpack.c.b16 %v2053, %v2045
    %v2478 = vpack.c.b16 %v2054, %v2046
    %v2479 = vpack.c.b16 %v2055, %v2047
    %v2480 = vpack.c.b16 %v2056, %v2048
    %v2481 = vpack.c.b16 %v2057, %v2049
    %v2482 = vpack.c.b16 %v2066, %v2058
    %v2483 = vpack.c.b16 %v2067, %v2059
    %v2484 = vpack.c.b16 %v2068, %v2060
    %v2485 = vpack.c.b16 %v2069, %v2061
    %v2486 = vpack.c.b16 %v2070, %v2062
    %v2487 = vpack.c.b16 %v2071, %v2063
    %v2488 = vpack.c.b16 %v2072, %v2064
    %v2489 = vpack.c.b16 %v2073, %v2065
    %v2490 = vpack.c.b16 %v2082, %v2074
    %v2491 = vpack.c.b16 %v2083, %v2075
    %v2492 = vpack.c.b16 %v2084, %v2076
    %v2493 = vpack.c.b16 %v2085, %v2077
    %v2494 = vpack.c.b16 %v2086, %v2078
    %v2495 = vpack.c.b16 %v2087, %v2079
    %v2496 = vpack.c.b16 %v2088, %v2080
    %v2497 = vpack.c.b16 %v2089, %v2081
    %v2498 = vpack.c.b16 %v2098, %v2090
    %v2499 = vpack.c.b16 %v2099, %v2091
    %v2500 = vpack.c.b16 %v2100, %v2092
    %v2501 = vpack.c.b16 %v2101, %v2093
    %v2502 = vpack.c.b16 %v2102, %v2094
    %v2503 = vpack.c.b16 %v2103, %v2095
    %v2504 = vpack.c.b16 %v2104, %v2096
    %v2505 = vpack.c.b16 %v2105, %v2097
    %v2506 = vpack.c.b16 %v2114, %v2106
    %v2507 = vpack.c.b16 %v2115, %v2107
    %v2508 = vpack.c.b16 %v2116, %v2108
    %v2509 = vpack.c.b16 %v2117, %v2109
    %v2510 = vpack.c.b16 %v2118, %v2110
    %v2511 = vpack.c.b16 %v2119, %v2111
    %v2512 = vpack.c.b16 %v2120, %v2112
    %v2513 = vpack.c.b16 %v2121, %v2113
    %vm2906 = vcmask 130048
    %v2908 = vsel %vm2906, %v939, 0
    %2910 = vmatprep.subr.bf16.mxu0 %v2123
    %2911 = vmatpush1.bf16.msra.mxu0 %v2122
    %2912 = vmatprep.subr.bf16.mxu0 %v2131
    %2913 = vmatpush1.bf16.msra.mxu0 %v2130
    %2914 = vmatprep.subr.bf16.mxu0 %v2139
    %2915 = vmatpush1.bf16.msra.mxu0 %v2138
    %2916 = vmatprep.subr.bf16.mxu0 %v2147
    %2917 = vmatpush1.bf16.msra.mxu0 %v2146
    %2918 = vmatprep.subr.bf16.mxu0 %v2155
    %2919 = vmatpush1.bf16.msra.mxu0 %v2154
    %2920 = vmatprep.subr.bf16.mxu0 %v2163
    %2921 = vmatpush1.bf16.msra.mxu0 %v2162
    %2922 = vmatprep.subr.bf16.mxu0 %v2171
    %2923 = vmatpush1.bf16.msra.mxu0 %v2170
    %2924 = vmatprep.subr.bf16.mxu0 %v2179
    %2925 = vmatpush1.bf16.msra.mxu0 %v2178
    %2926 = vmatprep.subr.bf16.mxu0 %v2187
    %2927 = vmatpush1.bf16.msra.mxu0 %v2186
    %2928 = vmatprep.subr.bf16.mxu0 %v2195
    %2929 = vmatpush1.bf16.msra.mxu0 %v2194
    %2930 = vmatprep.subr.bf16.mxu0 %v2203
    %2931 = vmatpush1.bf16.msra.mxu0 %v2202
    %2932 = vmatprep.subr.bf16.mxu0 %v2211
    %2933 = vmatpush1.bf16.msra.mxu0 %v2210
    %2934 = vmatprep.subr.bf16.mxu0 %v2219
    %2935 = vmatpush1.bf16.msra.mxu0 %v2218
    %2936 = vmatprep.subr.bf16.mxu0 %v2227
    %2937 = vmatpush1.bf16.msra.mxu0 %v2226
    %2938 = vmatprep.subr.bf16.mxu0 %v2235
    %2939 = vmatpush1.bf16.msra.mxu0 %v2234
    %2940 = vmatprep.subr.bf16.mxu0 %v2243
    %2941 = vmatpush1.bf16.msra.mxu0 %v2242
    %2942 = vmatprep.mubr.bf16.mxu0 %v934
    %2943 = vmatmul.mubr.bf16.gmra.mrb[0].mxu0 %v933
    %v2944 = vpop.f32.mrb[0].mxu0
    %v2945 = vadd.f32 %v670, %v2944
    %v2946 = vpop.f32.mrb[0].mxu0
    %v2947 = vadd.f32 %v672, %v2946
    %v2948 = vpop.f32.mrb[0].mxu0
    %v2949 = vadd.f32 %v676, %v2948
    %v2950 = vpop.f32.mrb[0].mxu0
    %v2951 = vadd.f32 %v678, %v2950
    %2952 = vdwg.mxu0
    %2953 = vmatprep.subr.bf16.mxu0 %v2251
    %2954 = vmatpush1.bf16.msra.mxu0 %v2250
    %2955 = vmatprep.subr.bf16.mxu0 %v2259
    %2956 = vmatpush1.bf16.msra.mxu0 %v2258
    %2957 = vmatprep.subr.bf16.mxu0 %v2267
    %2958 = vmatpush1.bf16.msra.mxu0 %v2266
    %2959 = vmatprep.subr.bf16.mxu0 %v2275
    %2960 = vmatpush1.bf16.msra.mxu0 %v2274
    %2961 = vmatprep.subr.bf16.mxu0 %v2283
    %2962 = vmatpush1.bf16.msra.mxu0 %v2282
    %2963 = vmatprep.subr.bf16.mxu0 %v2291
    %2964 = vmatpush1.bf16.msra.mxu0 %v2290
    %2965 = vmatprep.subr.bf16.mxu0 %v2299
    %2966 = vmatpush1.bf16.msra.mxu0 %v2298
    %2967 = vmatprep.subr.bf16.mxu0 %v2307
    %2968 = vmatpush1.bf16.msra.mxu0 %v2306
    %2969 = vmatprep.subr.bf16.mxu0 %v2315
    %2970 = vmatpush1.bf16.msra.mxu0 %v2314
    %2971 = vmatprep.subr.bf16.mxu0 %v2323
    %2972 = vmatpush1.bf16.msra.mxu0 %v2322
    %2973 = vmatprep.subr.bf16.mxu0 %v2331
    %2974 = vmatpush1.bf16.msra.mxu0 %v2330
    %2975 = vmatprep.subr.bf16.mxu0 %v2339
    %2976 = vmatpush1.bf16.msra.mxu0 %v2338
    %2977 = vmatprep.subr.bf16.mxu0 %v2347
    %2978 = vmatpush1.bf16.msra.mxu0 %v2346
    %2979 = vmatprep.subr.bf16.mxu0 %v2355
    %2980 = vmatpush1.bf16.msra.mxu0 %v2354
    %2981 = vmatprep.subr.bf16.mxu0 %v2363
    %2982 = vmatpush1.bf16.msra.mxu0 %v2362
    %2983 = vmatprep.subr.bf16.mxu0 %v2371
    %2984 = vmatpush1.bf16.msra.mxu0 %v2370
    %2985 = vmatprep.mubr.bf16.mxu0 %v936
    %2986 = vmatmul.mubr.bf16.gmra.mrb[0].mxu0 %v935
    %v2987 = vpop.f32.mrb[0].mxu0
    %v2988 = vadd.f32 %v2945, %v2987
    %v2989 = vpop.f32.mrb[0].mxu0
    %v2990 = vadd.f32 %v2947, %v2989
    %v2991 = vpop.f32.mrb[0].mxu0
    %v2992 = vadd.f32 %v2949, %v2991
    %v2993 = vpop.f32.mrb[0].mxu0
    %v2994 = vadd.f32 %v2951, %v2993
    %2995 = vdwg.mxu0
    %2996 = vmatprep.subr.bf16.mxu0 %v2379
    %2997 = vmatpush1.bf16.msra.mxu0 %v2378
    %2998 = vmatprep.subr.bf16.mxu0 %v2387
    %2999 = vmatpush1.bf16.msra.mxu0 %v2386
    %3000 = vmatprep.subr.bf16.mxu0 %v2395
    %3001 = vmatpush1.bf16.msra.mxu0 %v2394
    %3002 = vmatprep.subr.bf16.mxu0 %v2403
    %3003 = vmatpush1.bf16.msra.mxu0 %v2402
    %3004 = vmatprep.subr.bf16.mxu0 %v2411
    %3005 = vmatpush1.bf16.msra.mxu0 %v2410
    %3006 = vmatprep.subr.bf16.mxu0 %v2419
    %3007 = vmatpush1.bf16.msra.mxu0 %v2418
    %3008 = vmatprep.subr.bf16.mxu0 %v2427
    %3009 = vmatpush1.bf16.msra.mxu0 %v2426
    %3010 = vmatprep.subr.bf16.mxu0 %v2435
    %3011 = vmatpush1.bf16.msra.mxu0 %v2434
    %3012 = vmatprep.subr.bf16.mxu0 %v2443
    %3013 = vmatpush1.bf16.msra.mxu0 %v2442
    %3014 = vmatprep.subr.bf16.mxu0 %v2451
    %3015 = vmatpush1.bf16.msra.mxu0 %v2450
    %3016 = vmatprep.subr.bf16.mxu0 %v2459
    %3017 = vmatpush1.bf16.msra.mxu0 %v2458
    %3018 = vmatprep.subr.bf16.mxu0 %v2467
    %3019 = vmatpush1.bf16.msra.mxu0 %v2466
    %3020 = vmatprep.subr.bf16.mxu0 %v2475
    %3021 = vmatpush1.bf16.msra.mxu0 %v2474
    %3022 = vmatprep.subr.bf16.mxu0 %v2483
    %3023 = vmatpush1.bf16.msra.mxu0 %v2482
    %3024 = vmatprep.subr.bf16.mxu0 %v2491
    %3025 = vmatpush1.bf16.msra.mxu0 %v2490
    %3026 = vmatprep.subr.bf16.mxu0 %v2499
    %3027 = vmatpush1.bf16.msra.mxu0 %v2498
    %3028 = vmatprep.mubr.bf16.mxu0 %v938
    %3029 = vmatmul.mubr.bf16.gmra.mrb[0].mxu0 %v937
    %v3030 = vpop.f32.mrb[0].mxu0
    %v3031 = vadd.f32 %v2988, %v3030
    %v3032 = vpop.f32.mrb[0].mxu0
    %v3033 = vadd.f32 %v2990, %v3032
    %v3034 = vpop.f32.mrb[0].mxu0
    %v3035 = vadd.f32 %v2992, %v3034
    %v3036 = vpop.f32.mrb[0].mxu0
    %v3037 = vadd.f32 %v2994, %v3036
    %3038 = vdwg.mxu0
    %3039 = vmatprep.subr.bf16.mxu0 %v2507
    %3040 = vmatpush1.bf16.msra.mxu0 %v2506
    %3041 = vmatprep.subr.bf16.mxu0 0
    %3042 = vmatpush1.bf16.msra.mxu0 0
    %3043 = vmatprep.subr.bf16.mxu0 0
    %3044 = vmatpush1.bf16.msra.mxu0 0
    %3045 = vmatprep.subr.bf16.mxu0 0
    %3046 = vmatpush1.bf16.msra.mxu0 0
    %3047 = vmatprep.subr.bf16.mxu0 0
    %3048 = vmatpush1.bf16.msra.mxu0 0
    %3049 = vmatprep.subr.bf16.mxu0 0
    %3050 = vmatpush1.bf16.msra.mxu0 0
    %3051 = vmatprep.subr.bf16.mxu0 0
    %3052 = vmatpush1.bf16.msra.mxu0 0
    %3053 = vmatprep.subr.bf16.mxu0 0
    %3054 = vmatpush1.bf16.msra.mxu0 0
    %3055 = vmatprep.subr.bf16.mxu0 0
    %3056 = vmatpush1.bf16.msra.mxu0 0
    %3057 = vmatprep.subr.bf16.mxu0 0
    %3058 = vmatpush1.bf16.msra.mxu0 0
    %3059 = vmatprep.subr.bf16.mxu0 0
    %3060 = vmatpush1.bf16.msra.mxu0 0
    %3061 = vmatprep.subr.bf16.mxu0 0
    %3062 = vmatpush1.bf16.msra.mxu0 0
    %3063 = vmatprep.subr.bf16.mxu0 0
    %3064 = vmatpush1.bf16.msra.mxu0 0
    %3065 = vmatprep.subr.bf16.mxu0 0
    %3066 = vmatpush1.bf16.msra.mxu0 0
    %3067 = vmatprep.subr.bf16.mxu0 0
    %3068 = vmatpush1.bf16.msra.mxu0 0
    %3069 = vmatprep.subr.bf16.mxu0 0
    %3070 = vmatpush1.bf16.msra.mxu0 0
    %3071 = vmatprep.mubr.bf16.mxu0 0
    %3072 = vmatmul.mubr.bf16.gmra.mrb[0].mxu0 %v2908
    %v3073 = vpop.f32.mrb[0].mxu0
    %v3074 = vadd.f32 %v3031, %v3073
    %v3075 = vpop.f32.mrb[0].mxu0
    %v3076 = vadd.f32 %v3033, %v3075
    %v3077 = vpop.f32.mrb[0].mxu0
    %v3078 = vadd.f32 %v3035, %v3077
    %v3079 = vpop.f32.mrb[0].mxu0
    %v3080 = vadd.f32 %v3037, %v3079
    %3081 = vdwg.mxu0
    %3082 = vmatprep.subr.bf16.mxu0 %v2125
    %3083 = vmatpush1.bf16.msra.mxu0 %v2124
    %3084 = vmatprep.subr.bf16.mxu0 %v2133
    %3085 = vmatpush1.bf16.msra.mxu0 %v2132
    %3086 = vmatprep.subr.bf16.mxu0 %v2141
    %3087 = vmatpush1.bf16.msra.mxu0 %v2140
    %3088 = vmatprep.subr.bf16.mxu0 %v2149
    %3089 = vmatpush1.bf16.msra.mxu0 %v2148
    %3090 = vmatprep.subr.bf16.mxu0 %v2157
    %3091 = vmatpush1.bf16.msra.mxu0 %v2156
    %3092 = vmatprep.subr.bf16.mxu0 %v2165
    %3093 = vmatpush1.bf16.msra.mxu0 %v2164
    %3094 = vmatprep.subr.bf16.mxu0 %v2173
    %3095 = vmatpush1.bf16.msra.mxu0 %v2172
    %3096 = vmatprep.subr.bf16.mxu0 %v2181
    %3097 = vmatpush1.bf16.msra.mxu0 %v2180
    %3098 = vmatprep.subr.bf16.mxu0 %v2189
    %3099 = vmatpush1.bf16.msra.mxu0 %v2188
    %3100 = vmatprep.subr.bf16.mxu0 %v2197
    %3101 = vmatpush1.bf16.msra.mxu0 %v2196
    %3102 = vmatprep.subr.bf16.mxu0 %v2205
    %3103 = vmatpush1.bf16.msra.mxu0 %v2204
    %3104 = vmatprep.subr.bf16.mxu0 %v2213
    %3105 = vmatpush1.bf16.msra.mxu0 %v2212
    %3106 = vmatprep.subr.bf16.mxu0 %v2221
    %3107 = vmatpush1.bf16.msra.mxu0 %v2220
    %3108 = vmatprep.subr.bf16.mxu0 %v2229
    %3109 = vmatpush1.bf16.msra.mxu0 %v2228
    %3110 = vmatprep.subr.bf16.mxu0 %v2237
    %3111 = vmatpush1.bf16.msra.mxu0 %v2236
    %3112 = vmatprep.subr.bf16.mxu0 %v2245
    %3113 = vmatpush1.bf16.msra.mxu0 %v2244
    %3114 = vmatprep.mubr.bf16.mxu0 %v934
    %3115 = vmatmul.mubr.bf16.gmra.mrb[0].mxu0 %v933
    %v3116 = vpop.f32.mrb[0].mxu0
    %v3117 = vadd.f32 %v747, %v3116
    %v3118 = vpop.f32.mrb[0].mxu0
    %v3119 = vadd.f32 %v749, %v3118
    %v3120 = vpop.f32.mrb[0].mxu0
    %v3121 = vadd.f32 %v753, %v3120
    %v3122 = vpop.f32.mrb[0].mxu0
    %v3123 = vadd.f32 %v755, %v3122
    %3124 = vdwg.mxu0
    %3125 = vmatprep.subr.bf16.mxu0 %v2253
    %3126 = vmatpush1.bf16.msra.mxu0 %v2252
    %3127 = vmatprep.subr.bf16.mxu0 %v2261
    %3128 = vmatpush1.bf16.msra.mxu0 %v2260
    %3129 = vmatprep.subr.bf16.mxu0 %v2269
    %3130 = vmatpush1.bf16.msra.mxu0 %v2268
    %3131 = vmatprep.subr.bf16.mxu0 %v2277
    %3132 = vmatpush1.bf16.msra.mxu0 %v2276
    %3133 = vmatprep.subr.bf16.mxu0 %v2285
    %3134 = vmatpush1.bf16.msra.mxu0 %v2284
    %3135 = vmatprep.subr.bf16.mxu0 %v2293
    %3136 = vmatpush1.bf16.msra.mxu0 %v2292
    %3137 = vmatprep.subr.bf16.mxu0 %v2301
    %3138 = vmatpush1.bf16.msra.mxu0 %v2300
    %3139 = vmatprep.subr.bf16.mxu0 %v2309
    %3140 = vmatpush1.bf16.msra.mxu0 %v2308
    %3141 = vmatprep.subr.bf16.mxu0 %v2317
    %3142 = vmatpush1.bf16.msra.mxu0 %v2316
    %3143 = vmatprep.subr.bf16.mxu0 %v2325
    %3144 = vmatpush1.bf16.msra.mxu0 %v2324
    %3145 = vmatprep.subr.bf16.mxu0 %v2333
    %3146 = vmatpush1.bf16.msra.mxu0 %v2332
    %3147 = vmatprep.subr.bf16.mxu0 %v2341
    %3148 = vmatpush1.bf16.msra.mxu0 %v2340
    %3149 = vmatprep.subr.bf16.mxu0 %v2349
    %3150 = vmatpush1.bf16.msra.mxu0 %v2348
    %3151 = vmatprep.subr.bf16.mxu0 %v2357
    %3152 = vmatpush1.bf16.msra.mxu0 %v2356
    %3153 = vmatprep.subr.bf16.mxu0 %v2365
    %3154 = vmatpush1.bf16.msra.mxu0 %v2364
    %3155 = vmatprep.subr.bf16.mxu0 %v2373
    %3156 = vmatpush1.bf16.msra.mxu0 %v2372
    %3157 = vmatprep.mubr.bf16.mxu0 %v936
    %3158 = vmatmul.mubr.bf16.gmra.mrb[0].mxu0 %v935
    %v3159 = vpop.f32.mrb[0].mxu0
    %v3160 = vadd.f32 %v3117, %v3159
    %v3161 = vpop.f32.mrb[0].mxu0
    %v3162 = vadd.f32 %v3119, %v3161
    %v3163 = vpop.f32.mrb[0].mxu0
    %v3164 = vadd.f32 %v3121, %v3163
    %v3165 = vpop.f32.mrb[0].mxu0
    %v3166 = vadd.f32 %v3123, %v3165
    %3167 = vdwg.mxu0
    %3168 = vmatprep.subr.bf16.mxu0 %v2381
    %3169 = vmatpush1.bf16.msra.mxu0 %v2380
    %3170 = vmatprep.subr.bf16.mxu0 %v2389
    %3171 = vmatpush1.bf16.msra.mxu0 %v2388
    %3172 = vmatprep.subr.bf16.mxu0 %v2397
    %3173 = vmatpush1.bf16.msra.mxu0 %v2396
    %3174 = vmatprep.subr.bf16.mxu0 %v2405
    %3175 = vmatpush1.bf16.msra.mxu0 %v2404
    %3176 = vmatprep.subr.bf16.mxu0 %v2413
    %3177 = vmatpush1.bf16.msra.mxu0 %v2412
    %3178 = vmatprep.subr.bf16.mxu0 %v2421
    %3179 = vmatpush1.bf16.msra.mxu0 %v2420
    %3180 = vmatprep.subr.bf16.mxu0 %v2429
    %3181 = vmatpush1.bf16.msra.mxu0 %v2428
    %3182 = vmatprep.subr.bf16.mxu0 %v2437
    %3183 = vmatpush1.bf16.msra.mxu0 %v2436
    %3184 = vmatprep.subr.bf16.mxu0 %v2445
    %3185 = vmatpush1.bf16.msra.mxu0 %v2444
    %3186 = vmatprep.subr.bf16.mxu0 %v2453
    %3187 = vmatpush1.bf16.msra.mxu0 %v2452
    %3188 = vmatprep.subr.bf16.mxu0 %v2461
    %3189 = vmatpush1.bf16.msra.mxu0 %v2460
    %3190 = vmatprep.subr.bf16.mxu0 %v2469
    %3191 = vmatpush1.bf16.msra.mxu0 %v2468
    %3192 = vmatprep.subr.bf16.mxu0 %v2477
    %3193 = vmatpush1.bf16.msra.mxu0 %v2476
    %3194 = vmatprep.subr.bf16.mxu0 %v2485
    %3195 = vmatpush1.bf16.msra.mxu0 %v2484
    %3196 = vmatprep.subr.bf16.mxu0 %v2493
    %3197 = vmatpush1.bf16.msra.mxu0 %v2492
    %3198 = vmatprep.subr.bf16.mxu0 %v2501
    %3199 = vmatpush1.bf16.msra.mxu0 %v2500
    %3200 = vmatprep.mubr.bf16.mxu0 %v938
    %3201 = vmatmul.mubr.bf16.gmra.mrb[0].mxu0 %v937
    %v3202 = vpop.f32.mrb[0].mxu0
    %v3203 = vadd.f32 %v3160, %v3202
    %v3204 = vpop.f32.mrb[0].mxu0
    %v3205 = vadd.f32 %v3162, %v3204
    %v3206 = vpop.f32.mrb[0].mxu0
    %v3207 = vadd.f32 %v3164, %v3206
    %v3208 = vpop.f32.mrb[0].mxu0
    %v3209 = vadd.f32 %v3166, %v3208
    %3210 = vdwg.mxu0
    %3211 = vmatprep.subr.bf16.mxu0 %v2509
    %3212 = vmatpush1.bf16.msra.mxu0 %v2508
    %3213 = vmatprep.subr.bf16.mxu0 0
    %3214 = vmatpush1.bf16.msra.mxu0 0
    %3215 = vmatprep.subr.bf16.mxu0 0
    %3216 = vmatpush1.bf16.msra.mxu0 0
    %3217 = vmatprep.subr.bf16.mxu0 0
    %3218 = vmatpush1.bf16.msra.mxu0 0
    %3219 = vmatprep.subr.bf16.mxu0 0
    %3220 = vmatpush1.bf16.msra.mxu0 0
    %3221 = vmatprep.subr.bf16.mxu0 0
    %3222 = vmatpush1.bf16.msra.mxu0 0
    %3223 = vmatprep.subr.bf16.mxu0 0
    %3224 = vmatpush1.bf16.msra.mxu0 0
    %3225 = vmatprep.subr.bf16.mxu0 0
    %3226 = vmatpush1.bf16.msra.mxu0 0
    %3227 = vmatprep.subr.bf16.mxu0 0
    %3228 = vmatpush1.bf16.msra.mxu0 0
    %3229 = vmatprep.subr.bf16.mxu0 0
    %3230 = vmatpush1.bf16.msra.mxu0 0
    %3231 = vmatprep.subr.bf16.mxu0 0
    %3232 = vmatpush1.bf16.msra.mxu0 0
    %3233 = vmatprep.subr.bf16.mxu0 0
    %3234 = vmatpush1.bf16.msra.mxu0 0
    %3235 = vmatprep.subr.bf16.mxu0 0
    %3236 = vmatpush1.bf16.msra.mxu0 0
    %3237 = vmatprep.subr.bf16.mxu0 0
    %3238 = vmatpush1.bf16.msra.mxu0 0
    %3239 = vmatprep.subr.bf16.mxu0 0
    %3240 = vmatpush1.bf16.msra.mxu0 0
    %3241 = vmatprep.subr.bf16.mxu0 0
    %3242 = vmatpush1.bf16.msra.mxu0 0
    %3243 = vmatprep.mubr.bf16.mxu0 0
    %3244 = vmatmul.mubr.bf16.gmra.mrb[0].mxu0 %v2908
    %v3245 = vpop.f32.mrb[0].mxu0
    %v3246 = vadd.f32 %v3203, %v3245
    %v3247 = vpop.f32.mrb[0].mxu0
    %v3248 = vadd.f32 %v3205, %v3247
    %v3249 = vpop.f32.mrb[0].mxu0
    %v3250 = vadd.f32 %v3207, %v3249
    %v3251 = vpop.f32.mrb[0].mxu0
    %v3252 = vadd.f32 %v3209, %v3251
    %3253 = vdwg.mxu0
    %3254 = vmatprep.subr.bf16.mxu0 %v2127
    %3255 = vmatpush1.bf16.msra.mxu0 %v2126
    %3256 = vmatprep.subr.bf16.mxu0 %v2135
    %3257 = vmatpush1.bf16.msra.mxu0 %v2134
    %3258 = vmatprep.subr.bf16.mxu0 %v2143
    %3259 = vmatpush1.bf16.msra.mxu0 %v2142
    %3260 = vmatprep.subr.bf16.mxu0 %v2151
    %3261 = vmatpush1.bf16.msra.mxu0 %v2150
    %3262 = vmatprep.subr.bf16.mxu0 %v2159
    %3263 = vmatpush1.bf16.msra.mxu0 %v2158
    %3264 = vmatprep.subr.bf16.mxu0 %v2167
    %3265 = vmatpush1.bf16.msra.mxu0 %v2166
    %3266 = vmatprep.subr.bf16.mxu0 %v2175
    %3267 = vmatpush1.bf16.msra.mxu0 %v2174
    %3268 = vmatprep.subr.bf16.mxu0 %v2183
    %3269 = vmatpush1.bf16.msra.mxu0 %v2182
    %3270 = vmatprep.subr.bf16.mxu0 %v2191
    %3271 = vmatpush1.bf16.msra.mxu0 %v2190
    %3272 = vmatprep.subr.bf16.mxu0 %v2199
    %3273 = vmatpush1.bf16.msra.mxu0 %v2198
    %3274 = vmatprep.subr.bf16.mxu0 %v2207
    %3275 = vmatpush1.bf16.msra.mxu0 %v2206
    %3276 = vmatprep.subr.bf16.mxu0 %v2215
    %3277 = vmatpush1.bf16.msra.mxu0 %v2214
    %3278 = vmatprep.subr.bf16.mxu0 %v2223
    %3279 = vmatpush1.bf16.msra.mxu0 %v2222
    %3280 = vmatprep.subr.bf16.mxu0 %v2231
    %3281 = vmatpush1.bf16.msra.mxu0 %v2230
    %3282 = vmatprep.subr.bf16.mxu0 %v2239
    %3283 = vmatpush1.bf16.msra.mxu0 %v2238
    %3284 = vmatprep.subr.bf16.mxu0 %v2247
    %3285 = vmatpush1.bf16.msra.mxu0 %v2246
    %3286 = vmatprep.mubr.bf16.mxu0 %v934
    %3287 = vmatmul.mubr.bf16.gmra.mrb[0].mxu0 %v933
    %v3288 = vpop.f32.mrb[0].mxu0
    %v3289 = vadd.f32 %v824, %v3288
    %v3290 = vpop.f32.mrb[0].mxu0
    %v3291 = vadd.f32 %v826, %v3290
    %v3292 = vpop.f32.mrb[0].mxu0
    %v3293 = vadd.f32 %v830, %v3292
    %v3294 = vpop.f32.mrb[0].mxu0
    %v3295 = vadd.f32 %v832, %v3294
    %3296 = vdwg.mxu0
    %3297 = vmatprep.subr.bf16.mxu0 %v2255
    %3298 = vmatpush1.bf16.msra.mxu0 %v2254
    %3299 = vmatprep.subr.bf16.mxu0 %v2263
    %3300 = vmatpush1.bf16.msra.mxu0 %v2262
    %3301 = vmatprep.subr.bf16.mxu0 %v2271
    %3302 = vmatpush1.bf16.msra.mxu0 %v2270
    %3303 = vmatprep.subr.bf16.mxu0 %v2279
    %3304 = vmatpush1.bf16.msra.mxu0 %v2278
    %3305 = vmatprep.subr.bf16.mxu0 %v2287
    %3306 = vmatpush1.bf16.msra.mxu0 %v2286
    %3307 = vmatprep.subr.bf16.mxu0 %v2295
    %3308 = vmatpush1.bf16.msra.mxu0 %v2294
    %3309 = vmatprep.subr.bf16.mxu0 %v2303
    %3310 = vmatpush1.bf16.msra.mxu0 %v2302
    %3311 = vmatprep.subr.bf16.mxu0 %v2311
    %3312 = vmatpush1.bf16.msra.mxu0 %v2310
    %3313 = vmatprep.subr.bf16.mxu0 %v2319
    %3314 = vmatpush1.bf16.msra.mxu0 %v2318
    %3315 = vmatprep.subr.bf16.mxu0 %v2327
    %3316 = vmatpush1.bf16.msra.mxu0 %v2326
    %3317 = vmatprep.subr.bf16.mxu0 %v2335
    %3318 = vmatpush1.bf16.msra.mxu0 %v2334
    %3319 = vmatprep.subr.bf16.mxu0 %v2343
    %3320 = vmatpush1.bf16.msra.mxu0 %v2342
    %3321 = vmatprep.subr.bf16.mxu0 %v2351
    %3322 = vmatpush1.bf16.msra.mxu0 %v2350
    %3323 = vmatprep.subr.bf16.mxu0 %v2359
    %3324 = vmatpush1.bf16.msra.mxu0 %v2358
    %3325 = vmatprep.subr.bf16.mxu0 %v2367
    %3326 = vmatpush1.bf16.msra.mxu0 %v2366
    %3327 = vmatprep.subr.bf16.mxu0 %v2375
    %3328 = vmatpush1.bf16.msra.mxu0 %v2374
    %3329 = vmatprep.mubr.bf16.mxu0 %v936
    %3330 = vmatmul.mubr.bf16.gmra.mrb[0].mxu0 %v935
    %v3331 = vpop.f32.mrb[0].mxu0
    %v3332 = vadd.f32 %v3289, %v3331
    %v3333 = vpop.f32.mrb[0].mxu0
    %v3334 = vadd.f32 %v3291, %v3333
    %v3335 = vpop.f32.mrb[0].mxu0
    %v3336 = vadd.f32 %v3293, %v3335
    %v3337 = vpop.f32.mrb[0].mxu0
    %v3338 = vadd.f32 %v3295, %v3337
    %3339 = vdwg.mxu0
    %3340 = vmatprep.subr.bf16.mxu0 %v2383
    %3341 = vmatpush1.bf16.msra.mxu0 %v2382
    %3342 = vmatprep.subr.bf16.mxu0 %v2391
    %3343 = vmatpush1.bf16.msra.mxu0 %v2390
    %3344 = vmatprep.subr.bf16.mxu0 %v2399
    %3345 = vmatpush1.bf16.msra.mxu0 %v2398
    %3346 = vmatprep.subr.bf16.mxu0 %v2407
    %3347 = vmatpush1.bf16.msra.mxu0 %v2406
    %3348 = vmatprep.subr.bf16.mxu0 %v2415
    %3349 = vmatpush1.bf16.msra.mxu0 %v2414
    %3350 = vmatprep.subr.bf16.mxu0 %v2423
    %3351 = vmatpush1.bf16.msra.mxu0 %v2422
    %3352 = vmatprep.subr.bf16.mxu0 %v2431
    %3353 = vmatpush1.bf16.msra.mxu0 %v2430
    %3354 = vmatprep.subr.bf16.mxu0 %v2439
    %3355 = vmatpush1.bf16.msra.mxu0 %v2438
    %3356 = vmatprep.subr.bf16.mxu0 %v2447
    %3357 = vmatpush1.bf16.msra.mxu0 %v2446
    %3358 = vmatprep.subr.bf16.mxu0 %v2455
    %3359 = vmatpush1.bf16.msra.mxu0 %v2454
    %3360 = vmatprep.subr.bf16.mxu0 %v2463
    %3361 = vmatpush1.bf16.msra.mxu0 %v2462
    %3362 = vmatprep.subr.bf16.mxu0 %v2471
    %3363 = vmatpush1.bf16.msra.mxu0 %v2470
    %3364 = vmatprep.subr.bf16.mxu0 %v2479
    %3365 = vmatpush1.bf16.msra.mxu0 %v2478
    %3366 = vmatprep.subr.bf16.mxu0 %v2487
    %3367 = vmatpush1.bf16.msra.mxu0 %v2486
    %3368 = vmatprep.subr.bf16.mxu0 %v2495
    %3369 = vmatpush1.bf16.msra.mxu0 %v2494
    %3370 = vmatprep.subr.bf16.mxu0 %v2503
    %3371 = vmatpush1.bf16.msra.mxu0 %v2502
    %3372 = vmatprep.mubr.bf16.mxu0 %v938
    %3373 = vmatmul.mubr.bf16.gmra.mrb[0].mxu0 %v937
    %v3374 = vpop.f32.mrb[0].mxu0
    %v3375 = vadd.f32 %v3332, %v3374
    %v3376 = vpop.f32.mrb[0].mxu0
    %v3377 = vadd.f32 %v3334, %v3376
    %v3378 = vpop.f32.mrb[0].mxu0
    %v3379 = vadd.f32 %v3336, %v3378
    %v3380 = vpop.f32.mrb[0].mxu0
    %v3381 = vadd.f32 %v3338, %v3380
    %3382 = vdwg.mxu0
    %3383 = vmatprep.subr.bf16.mxu0 %v2511
    %3384 = vmatpush1.bf16.msra.mxu0 %v2510
    %3385 = vmatprep.subr.bf16.mxu0 0
    %3386 = vmatpush1.bf16.msra.mxu0 0
    %3387 = vmatprep.subr.bf16.mxu0 0
    %3388 = vmatpush1.bf16.msra.mxu0 0
    %3389 = vmatprep.subr.bf16.mxu0 0
    %3390 = vmatpush1.bf16.msra.mxu0 0
    %3391 = vmatprep.subr.bf16.mxu0 0
    %3392 = vmatpush1.bf16.msra.mxu0 0
    %3393 = vmatprep.subr.bf16.mxu0 0
    %3394 = vmatpush1.bf16.msra.mxu0 0
    %3395 = vmatprep.subr.bf16.mxu0 0
    %3396 = vmatpush1.bf16.msra.mxu0 0
    %3397 = vmatprep.subr.bf16.mxu0 0
    %3398 = vmatpush1.bf16.msra.mxu0 0
    %3399 = vmatprep.subr.bf16.mxu0 0
    %3400 = vmatpush1.bf16.msra.mxu0 0
    %3401 = vmatprep.subr.bf16.mxu0 0
    %3402 = vmatpush1.bf16.msra.mxu0 0
    %3403 = vmatprep.subr.bf16.mxu0 0
    %3404 = vmatpush1.bf16.msra.mxu0 0
    %3405 = vmatprep.subr.bf16.mxu0 0
    %3406 = vmatpush1.bf16.msra.mxu0 0
    %3407 = vmatprep.subr.bf16.mxu0 0
    %3408 = vmatpush1.bf16.msra.mxu0 0
    %3409 = vmatprep.subr.bf16.mxu0 0
    %3410 = vmatpush1.bf16.msra.mxu0 0
    %3411 = vmatprep.subr.bf16.mxu0 0
    %3412 = vmatpush1.bf16.msra.mxu0 0
    %3413 = vmatprep.subr.bf16.mxu0 0
    %3414 = vmatpush1.bf16.msra.mxu0 0
    %3415 = vmatprep.mubr.bf16.mxu0 0
    %3416 = vmatmul.mubr.bf16.gmra.mrb[0].mxu0 %v2908
    %v3417 = vpop.f32.mrb[0].mxu0
    %v3418 = vadd.f32 %v3375, %v3417
    %v3419 = vpop.f32.mrb[0].mxu0
    %v3420 = vadd.f32 %v3377, %v3419
    %v3421 = vpop.f32.mrb[0].mxu0
    %v3422 = vadd.f32 %v3379, %v3421
    %v3423 = vpop.f32.mrb[0].mxu0
    %v3424 = vadd.f32 %v3381, %v3423
    %3425 = vdwg.mxu0
    %3426 = vmatprep.subr.bf16.mxu0 %v2129
    %3427 = vmatpush1.bf16.msra.mxu0 %v2128
    %3428 = vmatprep.subr.bf16.mxu0 %v2137
    %3429 = vmatpush1.bf16.msra.mxu0 %v2136
    %3430 = vmatprep.subr.bf16.mxu0 %v2145
    %3431 = vmatpush1.bf16.msra.mxu0 %v2144
    %3432 = vmatprep.subr.bf16.mxu0 %v2153
    %3433 = vmatpush1.bf16.msra.mxu0 %v2152
    %3434 = vmatprep.subr.bf16.mxu0 %v2161
    %3435 = vmatpush1.bf16.msra.mxu0 %v2160
    %3436 = vmatprep.subr.bf16.mxu0 %v2169
    %3437 = vmatpush1.bf16.msra.mxu0 %v2168
    %3438 = vmatprep.subr.bf16.mxu0 %v2177
    %3439 = vmatpush1.bf16.msra.mxu0 %v2176
    %3440 = vmatprep.subr.bf16.mxu0 %v2185
    %3441 = vmatpush1.bf16.msra.mxu0 %v2184
    %3442 = vmatprep.subr.bf16.mxu0 %v2193
    %3443 = vmatpush1.bf16.msra.mxu0 %v2192
    %3444 = vmatprep.subr.bf16.mxu0 %v2201
    %3445 = vmatpush1.bf16.msra.mxu0 %v2200
    %3446 = vmatprep.subr.bf16.mxu0 %v2209
    %3447 = vmatpush1.bf16.msra.mxu0 %v2208
    %3448 = vmatprep.subr.bf16.mxu0 %v2217
    %3449 = vmatpush1.bf16.msra.mxu0 %v2216
    %3450 = vmatprep.subr.bf16.mxu0 %v2225
    %3451 = vmatpush1.bf16.msra.mxu0 %v2224
    %3452 = vmatprep.subr.bf16.mxu0 %v2233
    %3453 = vmatpush1.bf16.msra.mxu0 %v2232
    %3454 = vmatprep.subr.bf16.mxu0 %v2241
    %3455 = vmatpush1.bf16.msra.mxu0 %v2240
    %3456 = vmatprep.subr.bf16.mxu0 %v2249
    %3457 = vmatpush1.bf16.msra.mxu0 %v2248
    %3458 = vmatprep.mubr.bf16.mxu0 %v934
    %3459 = vmatmul.mubr.bf16.gmra.mrb[0].mxu0 %v933
    %v3460 = vpop.f32.mrb[0].mxu0
    %v3461 = vadd.f32 %v901, %v3460
    %v3462 = vpop.f32.mrb[0].mxu0
    %v3463 = vadd.f32 %v903, %v3462
    %v3464 = vpop.f32.mrb[0].mxu0
    %v3465 = vadd.f32 %v907, %v3464
    %v3466 = vpop.f32.mrb[0].mxu0
    %v3467 = vadd.f32 %v909, %v3466
    %3468 = vdwg.mxu0
    %3469 = vmatprep.subr.bf16.mxu0 %v2257
    %3470 = vmatpush1.bf16.msra.mxu0 %v2256
    %3471 = vmatprep.subr.bf16.mxu0 %v2265
    %3472 = vmatpush1.bf16.msra.mxu0 %v2264
    %3473 = vmatprep.subr.bf16.mxu0 %v2273
    %3474 = vmatpush1.bf16.msra.mxu0 %v2272
    %3475 = vmatprep.subr.bf16.mxu0 %v2281
    %3476 = vmatpush1.bf16.msra.mxu0 %v2280
    %3477 = vmatprep.subr.bf16.mxu0 %v2289
    %3478 = vmatpush1.bf16.msra.mxu0 %v2288
    %3479 = vmatprep.subr.bf16.mxu0 %v2297
    %3480 = vmatpush1.bf16.msra.mxu0 %v2296
    %3481 = vmatprep.subr.bf16.mxu0 %v2305
    %3482 = vmatpush1.bf16.msra.mxu0 %v2304
    %3483 = vmatprep.subr.bf16.mxu0 %v2313
    %3484 = vmatpush1.bf16.msra.mxu0 %v2312
    %3485 = vmatprep.subr.bf16.mxu0 %v2321
    %3486 = vmatpush1.bf16.msra.mxu0 %v2320
    %3487 = vmatprep.subr.bf16.mxu0 %v2329
    %3488 = vmatpush1.bf16.msra.mxu0 %v2328
    %3489 = vmatprep.subr.bf16.mxu0 %v2337
    %3490 = vmatpush1.bf16.msra.mxu0 %v2336
    %3491 = vmatprep.subr.bf16.mxu0 %v2345
    %3492 = vmatpush1.bf16.msra.mxu0 %v2344
    %3493 = vmatprep.subr.bf16.mxu0 %v2353
    %3494 = vmatpush1.bf16.msra.mxu0 %v2352
    %3495 = vmatprep.subr.bf16.mxu0 %v2361
    %3496 = vmatpush1.bf16.msra.mxu0 %v2360
    %3497 = vmatprep.subr.bf16.mxu0 %v2369
    %3498 = vmatpush1.bf16.msra.mxu0 %v2368
    %3499 = vmatprep.subr.bf16.mxu0 %v2377
    %3500 = vmatpush1.bf16.msra.mxu0 %v2376
    %3501 = vmatprep.mubr.bf16.mxu0 %v936
    %3502 = vmatmul.mubr.bf16.gmra.mrb[0].mxu0 %v935
    %v3503 = vpop.f32.mrb[0].mxu0
    %v3504 = vadd.f32 %v3461, %v3503
    %v3505 = vpop.f32.mrb[0].mxu0
    %v3506 = vadd.f32 %v3463, %v3505
    %v3507 = vpop.f32.mrb[0].mxu0
    %v3508 = vadd.f32 %v3465, %v3507
    %v3509 = vpop.f32.mrb[0].mxu0
    %v3510 = vadd.f32 %v3467, %v3509
    %3511 = vdwg.mxu0
    %3512 = vmatprep.subr.bf16.mxu0 %v2385
    %3513 = vmatpush1.bf16.msra.mxu0 %v2384
    %3514 = vmatprep.subr.bf16.mxu0 %v2393
    %3515 = vmatpush1.bf16.msra.mxu0 %v2392
    %3516 = vmatprep.subr.bf16.mxu0 %v2401
    %3517 = vmatpush1.bf16.msra.mxu0 %v2400
    %3518 = vmatprep.subr.bf16.mxu0 %v2409
    %3519 = vmatpush1.bf16.msra.mxu0 %v2408
    %3520 = vmatprep.subr.bf16.mxu0 %v2417
    %3521 = vmatpush1.bf16.msra.mxu0 %v2416
    %3522 = vmatprep.subr.bf16.mxu0 %v2425
    %3523 = vmatpush1.bf16.msra.mxu0 %v2424
    %3524 = vmatprep.subr.bf16.mxu0 %v2433
    %3525 = vmatpush1.bf16.msra.mxu0 %v2432
    %3526 = vmatprep.subr.bf16.mxu0 %v2441
    %3527 = vmatpush1.bf16.msra.mxu0 %v2440
    %3528 = vmatprep.subr.bf16.mxu0 %v2449
    %3529 = vmatpush1.bf16.msra.mxu0 %v2448
    %3530 = vmatprep.subr.bf16.mxu0 %v2457
    %3531 = vmatpush1.bf16.msra.mxu0 %v2456
    %3532 = vmatprep.subr.bf16.mxu0 %v2465
    %3533 = vmatpush1.bf16.msra.mxu0 %v2464
    %3534 = vmatprep.subr.bf16.mxu0 %v2473
    %3535 = vmatpush1.bf16.msra.mxu0 %v2472
    %3536 = vmatprep.subr.bf16.mxu0 %v2481
    %3537 = vmatpush1.bf16.msra.mxu0 %v2480
    %3538 = vmatprep.subr.bf16.mxu0 %v2489
    %3539 = vmatpush1.bf16.msra.mxu0 %v2488
    %3540 = vmatprep.subr.bf16.mxu0 %v2497
    %3541 = vmatpush1.bf16.msra.mxu0 %v2496
    %3542 = vmatprep.subr.bf16.mxu0 %v2505
    %3543 = vmatpush1.bf16.msra.mxu0 %v2504
    %3544 = vmatprep.mubr.bf16.mxu0 %v938
    %3545 = vmatmul.mubr.bf16.gmra.mrb[0].mxu0 %v937
    %v3546 = vpop.f32.mrb[0].mxu0
    %v3547 = vadd.f32 %v3504, %v3546
    %v3548 = vpop.f32.mrb[0].mxu0
    %v3549 = vadd.f32 %v3506, %v3548
    %v3550 = vpop.f32.mrb[0].mxu0
    %v3551 = vadd.f32 %v3508, %v3550
    %v3552 = vpop.f32.mrb[0].mxu0
    %v3553 = vadd.f32 %v3510, %v3552
    %3554 = vdwg.mxu0
    %3555 = vmatprep.subr.bf16.mxu0 %v2513
    %3556 = vmatpush1.bf16.msra.mxu0 %v2512
    %3557 = vmatprep.subr.bf16.mxu0 0
    %3558 = vmatpush1.bf16.msra.mxu0 0
    %3559 = vmatprep.subr.bf16.mxu0 0
    %3560 = vmatpush1.bf16.msra.mxu0 0
    %3561 = vmatprep.subr.bf16.mxu0 0
    %3562 = vmatpush1.bf16.msra.mxu0 0
    %3563 = vmatprep.subr.bf16.mxu0 0
    %3564 = vmatpush1.bf16.msra.mxu0 0
    %3565 = vmatprep.subr.bf16.mxu0 0
    %3566 = vmatpush1.bf16.msra.mxu0 0
    %3567 = vmatprep.subr.bf16.mxu0 0
    %3568 = vmatpush1.bf16.msra.mxu0 0
    %3569 = vmatprep.subr.bf16.mxu0 0
    %3570 = vmatpush1.bf16.msra.mxu0 0
    %3571 = vmatprep.subr.bf16.mxu0 0
    %3572 = vmatpush1.bf16.msra.mxu0 0
    %3573 = vmatprep.subr.bf16.mxu0 0
    %3574 = vmatpush1.bf16.msra.mxu0 0
    %3575 = vmatprep.subr.bf16.mxu0 0
    %3576 = vmatpush1.bf16.msra.mxu0 0
    %3577 = vmatprep.subr.bf16.mxu0 0
    %3578 = vmatpush1.bf16.msra.mxu0 0
    %3579 = vmatprep.subr.bf16.mxu0 0
    %3580 = vmatpush1.bf16.msra.mxu0 0
    %3581 = vmatprep.subr.bf16.mxu0 0
    %3582 = vmatpush1.bf16.msra.mxu0 0
    %3583 = vmatprep.subr.bf16.mxu0 0
    %3584 = vmatpush1.bf16.msra.mxu0 0
    %3585 = vmatprep.subr.bf16.mxu0 0
    %3586 = vmatpush1.bf16.msra.mxu0 0
    %3587 = vmatprep.mubr.bf16.mxu0 0
    %3588 = vmatmul.mubr.bf16.gmra.mrb[0].mxu0 %v2908
    %v3589 = vpop.f32.mrb[0].mxu0
    %v3590 = vadd.f32 %v3547, %v3589
    %v3591 = vpop.f32.mrb[0].mxu0
    %v3592 = vadd.f32 %v3549, %v3591
    %v3593 = vpop.f32.mrb[0].mxu0
    %v3594 = vadd.f32 %v3551, %v3593
    %v3595 = vpop.f32.mrb[0].mxu0
    %v3596 = vadd.f32 %v3553, %v3595
    %3597 = vdwg.mxu0
    %v3598 = vld [vmem:[#allocation6] sm:$0xff]
    %v3600 = vlaneseq
    %v3601 = vshrl.u32 %v3600, 7
    %v3602 = vsub.s32 0, %v3601
    %v3603 = vrot.slane %v3598, %v3602
    %v3604 = vlaneseq
    %v3605 = vshrl.u32 %v3604, 7
    %v3606 = vsub.s32 1, %v3605
    %v3607 = vrot.slane %v3598, %v3606
    %v3608 = vlaneseq
    %v3609 = vshrl.u32 %v3608, 7
    %v3610 = vsub.s32 2, %v3609
    %v3611 = vrot.slane %v3598, %v3610
    %v3612 = vlaneseq
    %v3613 = vshrl.u32 %v3612, 7
    %v3614 = vsub.s32 3, %v3613
    %v3615 = vrot.slane %v3598, %v3614
    %v3616 = vlaneseq
    %v3617 = vshrl.u32 %v3616, 7
    %v3618 = vsub.s32 4, %v3617
    %v3619 = vrot.slane %v3598, %v3618
    %v3620 = vlaneseq
    %v3621 = vshrl.u32 %v3620, 7
    %v3622 = vsub.s32 5, %v3621
    %v3623 = vrot.slane %v3598, %v3622
    %v3624 = vlaneseq
    %v3625 = vshrl.u32 %v3624, 7
    %v3626 = vsub.s32 6, %v3625
    %v3627 = vrot.slane %v3598, %v3626
    %v3628 = vlaneseq
    %v3629 = vshrl.u32 %v3628, 7
    %v3630 = vsub.s32 7, %v3629
    %v3631 = vrot.slane %v3598, %v3630
    %v3640 = vadd.f32 %v3074, %v3603
    %v3641 = vadd.f32 %v3076, %v3607
    %v3642 = vadd.f32 %v3246, %v3611
    %v3643 = vadd.f32 %v3248, %v3615
    %v3644 = vadd.f32 %v3418, %v3619
    %v3645 = vadd.f32 %v3420, %v3623
    %v3646 = vadd.f32 %v3590, %v3627
    %v3647 = vadd.f32 %v3592, %v3631
    %v3648 = vadd.f32 %v3078, %v3603
    %v3649 = vadd.f32 %v3080, %v3607
    %v3650 = vadd.f32 %v3250, %v3611
    %v3651 = vadd.f32 %v3252, %v3615
    %v3652 = vadd.f32 %v3422, %v3619
    %v3653 = vadd.f32 %v3424, %v3623
    %v3654 = vadd.f32 %v3594, %v3627
    %v3655 = vadd.f32 %v3596, %v3631
    %vm3656 = vcmp.gt.f32.partialorder %v3640, 0.0
    %vm3657 = vcmp.gt.f32.partialorder %v3641, 0.0
    %vm3658 = vcmp.gt.f32.partialorder %v3642, 0.0
    %vm3659 = vcmp.gt.f32.partialorder %v3643, 0.0
    %vm3660 = vcmp.gt.f32.partialorder %v3644, 0.0
    %vm3661 = vcmp.gt.f32.partialorder %v3645, 0.0
    %vm3662 = vcmp.gt.f32.partialorder %v3646, 0.0
    %vm3663 = vcmp.gt.f32.partialorder %v3647, 0.0
    %vm3664 = vcmp.gt.f32.partialorder %v3648, 0.0
    %vm3665 = vcmp.gt.f32.partialorder %v3649, 0.0
    %vm3666 = vcmp.gt.f32.partialorder %v3650, 0.0
    %vm3667 = vcmp.gt.f32.partialorder %v3651, 0.0
    %vm3668 = vcmp.gt.f32.partialorder %v3652, 0.0
    %vm3669 = vcmp.gt.f32.partialorder %v3653, 0.0
    %vm3670 = vcmp.gt.f32.partialorder %v3654, 0.0
    %vm3671 = vcmp.gt.f32.partialorder %v3655, 0.0
    %v3672 = vmul.f32 %v3640, 0.2
    %v3673 = vmul.f32 %v3641, 0.2
    %v3674 = vmul.f32 %v3642, 0.2
    %v3675 = vmul.f32 %v3643, 0.2
    %v3676 = vmul.f32 %v3644, 0.2
    %v3677 = vmul.f32 %v3645, 0.2
    %v3678 = vmul.f32 %v3646, 0.2
    %v3679 = vmul.f32 %v3647, 0.2
    %v3680 = vmul.f32 %v3648, 0.2
    %v3681 = vmul.f32 %v3649, 0.2
    %v3682 = vmul.f32 %v3650, 0.2
    %v3683 = vmul.f32 %v3651, 0.2
    %v3684 = vmul.f32 %v3652, 0.2
    %v3685 = vmul.f32 %v3653, 0.2
    %v3686 = vmul.f32 %v3654, 0.2
    %v3687 = vmul.f32 %v3655, 0.2
    %v3688 = vsel %vm3656, %v3640, %v3672
    %v3689 = vsel %vm3657, %v3641, %v3673
    %v3690 = vsel %vm3658, %v3642, %v3674
    %v3691 = vsel %vm3659, %v3643, %v3675
    %v3692 = vsel %vm3660, %v3644, %v3676
    %v3693 = vsel %vm3661, %v3645, %v3677
    %v3694 = vsel %vm3662, %v3646, %v3678
    %v3695 = vsel %vm3663, %v3647, %v3679
    %v3696 = vsel %vm3664, %v3648, %v3680
    %v3697 = vsel %vm3665, %v3649, %v3681
    %v3698 = vsel %vm3666, %v3650, %v3682
    %v3699 = vsel %vm3667, %v3651, %v3683
    %v3700 = vsel %vm3668, %v3652, %v3684
    %v3701 = vsel %vm3669, %v3653, %v3685
    %v3702 = vsel %vm3670, %v3654, %v3686
    %v3703 = vsel %vm3671, %v3655, %v3687
    %v3704 = vpack.c.bf16 %v3696, %v3688
    %v3705 = vpack.c.bf16 %v3697, %v3689
    %v3706 = vpack.c.bf16 %v3698, %v3690
    %v3707 = vpack.c.bf16 %v3699, %v3691
    %v3708 = vpack.c.bf16 %v3700, %v3692
    %v3709 = vpack.c.bf16 %v3701, %v3693
    %v3710 = vpack.c.bf16 %v3702, %v3694
    %v3711 = vpack.c.bf16 %v3703, %v3695
    %v3712 = vld [vmem:[#allocation7] sm:$0xff]
    %v3713 = vld [vmem:[#allocation7 + $0x8] sm:$0xff]
    %v3714 = vld [vmem:[#allocation7 + $0x10] sm:$0xff]
    %v3715 = vld [vmem:[#allocation7 + $0x18] sm:$0xff]
    %v3716 = vld [vmem:[#allocation7 + $0x20] sm:$0xff]
    %v3717 = vld [vmem:[#allocation7 + $0x28] sm:$0xff]
    %v3718 = vld [vmem:[#allocation7 + $0x30] sm:$0xff]
    %v3719 = vld [vmem:[#allocation7 + $0x38] sm:$0xff]
    %v3720 = vld [vmem:[#allocation7 + $0x40] sm:$0xff]
    %v3721 = vld [vmem:[#allocation7 + $0x48] sm:$0xff]
    %v3722 = vld [vmem:[#allocation7 + $0x50] sm:$0xff]
    %v3723 = vld [vmem:[#allocation7 + $0x58] sm:$0xff]
    %v3724 = vld [vmem:[#allocation7 + $0x60] sm:$0xff]
    %v3725 = vld [vmem:[#allocation7 + $0x68] sm:$0xff]
    %v3726 = vld [vmem:[#allocation7 + $0x70] sm:$0xff]
    %v3727 = vld [vmem:[#allocation7 + $0x78] sm:$0xff]
    %v3728 = vld [vmem:[#allocation7 + $0x80] sm:$0xff]
    %v3729 = vld [vmem:[#allocation7 + $0x88] sm:$0xff]
    %v3730 = vld [vmem:[#allocation7 + $0x90] sm:$0xff]
    %v3731 = vld [vmem:[#allocation7 + $0x98] sm:$0xff]
    %v3732 = vld [vmem:[#allocation7 + $0xa0] sm:$0xff]
    %v3733 = vld [vmem:[#allocation7 + $0xa8] sm:$0xff]
    %v3734 = vld [vmem:[#allocation7 + $0xb0] sm:$0xff]
    %v3735 = vld [vmem:[#allocation7 + $0xb8] sm:$0xff]
    %v3736 = vld [vmem:[#allocation7 + $0xc0] sm:$0xff]
    %v3737 = vld [vmem:[#allocation7 + $0xc8] sm:$0xff]
    %v3738 = vld [vmem:[#allocation7 + $0xd0] sm:$0xff]
    %v3739 = vld [vmem:[#allocation7 + $0xd8] sm:$0xff]
    %v3740 = vld [vmem:[#allocation7 + $0xe0] sm:$0xff]
    %v3741 = vld [vmem:[#allocation7 + $0xe8] sm:$0xff]
    %v3742 = vld [vmem:[#allocation7 + $0xf0] sm:$0xff]
    %v3743 = vld [vmem:[#allocation7 + $0xf8] sm:$0xff]
    %v3744 = vld [vmem:[#allocation7 + $0x100] sm:$0xff]
    %v3745 = vld [vmem:[#allocation7 + $0x108] sm:$0xff]
    %v3746 = vld [vmem:[#allocation7 + $0x110] sm:$0xff]
    %v3747 = vld [vmem:[#allocation7 + $0x118] sm:$0xff]
    %v3748 = vld [vmem:[#allocation7 + $0x120] sm:$0xff]
    %v3749 = vld [vmem:[#allocation7 + $0x128] sm:$0xff]
    %v3750 = vld [vmem:[#allocation7 + $0x130] sm:$0xff]
    %v3751 = vld [vmem:[#allocation7 + $0x138] sm:$0xff]
    %v3752 = vld [vmem:[#allocation7 + $0x140] sm:$0xff]
    %v3753 = vld [vmem:[#allocation7 + $0x148] sm:$0xff]
    %v3754 = vld [vmem:[#allocation7 + $0x150] sm:$0xff]
    %v3755 = vld [vmem:[#allocation7 + $0x158] sm:$0xff]
    %v3756 = vld [vmem:[#allocation7 + $0x160] sm:$0xff]
    %v3757 = vld [vmem:[#allocation7 + $0x168] sm:$0xff]
    %v3758 = vld [vmem:[#allocation7 + $0x170] sm:$0xff]
    %v3759 = vld [vmem:[#allocation7 + $0x178] sm:$0xff]
    %v3760 = vld [vmem:[#allocation7 + $0x180] sm:$0xff]
    %v3761 = vld [vmem:[#allocation7 + $0x188] sm:$0xff]
    %v3762 = vld [vmem:[#allocation7 + $0x190] sm:$0xff]
    %v3763 = vld [vmem:[#allocation7 + $0x198] sm:$0xff]
    %v3764 = vld [vmem:[#allocation7 + $0x1a0] sm:$0xff]
    %v3765 = vld [vmem:[#allocation7 + $0x1a8] sm:$0xff]
    %v3766 = vld [vmem:[#allocation7 + $0x1b0] sm:$0xff]
    %v3767 = vld [vmem:[#allocation7 + $0x1b8] sm:$0xff]
    %v3768 = vld [vmem:[#allocation7 + $0x1c0] sm:$0xff]
    %v3769 = vld [vmem:[#allocation7 + $0x1c8] sm:$0xff]
    %v3770 = vld [vmem:[#allocation7 + $0x1d0] sm:$0xff]
    %v3771 = vld [vmem:[#allocation7 + $0x1d8] sm:$0xff]
    %v3772 = vld [vmem:[#allocation7 + $0x1e0] sm:$0xff]
    %v3773 = vld [vmem:[#allocation7 + $0x1e8] sm:$0xff]
    %v3774 = vld [vmem:[#allocation7 + $0x1f0] sm:$0xff]
    %v3775 = vld [vmem:[#allocation7 + $0x1f8] sm:$0xff]
    %v3776 = vld [vmem:[#allocation7 + $0x200] sm:$0xff]
    %v3777 = vld [vmem:[#allocation7 + $0x208] sm:$0xff]
    %v3778 = vld [vmem:[#allocation7 + $0x210] sm:$0xff]
    %v3779 = vld [vmem:[#allocation7 + $0x218] sm:$0xff]
    %v3780 = vld [vmem:[#allocation7 + $0x220] sm:$0xff]
    %v3781 = vld [vmem:[#allocation7 + $0x228] sm:$0xff]
    %v3782 = vld [vmem:[#allocation7 + $0x230] sm:$0xff]
    %v3783 = vld [vmem:[#allocation7 + $0x238] sm:$0xff]
    %v3784 = vld [vmem:[#allocation7 + $0x240] sm:$0xff]
    %v3785 = vld [vmem:[#allocation7 + $0x248] sm:$0xff]
    %v3786 = vld [vmem:[#allocation7 + $0x250] sm:$0xff]
    %v3787 = vld [vmem:[#allocation7 + $0x258] sm:$0xff]
    %v3788 = vld [vmem:[#allocation7 + $0x260] sm:$0xff]
    %v3789 = vld [vmem:[#allocation7 + $0x268] sm:$0xff]
    %v3790 = vld [vmem:[#allocation7 + $0x270] sm:$0xff]
    %v3791 = vld [vmem:[#allocation7 + $0x278] sm:$0xff]
    %v3792 = vld [vmem:[#allocation7 + $0x280] sm:$0xff]
    %v3793 = vld [vmem:[#allocation7 + $0x288] sm:$0xff]
    %v3794 = vld [vmem:[#allocation7 + $0x290] sm:$0xff]
    %v3795 = vld [vmem:[#allocation7 + $0x298] sm:$0xff]
    %v3796 = vld [vmem:[#allocation7 + $0x2a0] sm:$0xff]
    %v3797 = vld [vmem:[#allocation7 + $0x2a8] sm:$0xff]
    %v3798 = vld [vmem:[#allocation7 + $0x2b0] sm:$0xff]
    %v3799 = vld [vmem:[#allocation7 + $0x2b8] sm:$0xff]
    %v3800 = vld [vmem:[#allocation7 + $0x2c0] sm:$0xff]
    %v3801 = vld [vmem:[#allocation7 + $0x2c8] sm:$0xff]
    %v3802 = vld [vmem:[#allocation7 + $0x2d0] sm:$0xff]
    %v3803 = vld [vmem:[#allocation7 + $0x2d8] sm:$0xff]
    %v3804 = vld [vmem:[#allocation7 + $0x2e0] sm:$0xff]
    %v3805 = vld [vmem:[#allocation7 + $0x2e8] sm:$0xff]
    %v3806 = vld [vmem:[#allocation7 + $0x2f0] sm:$0xff]
    %v3807 = vld [vmem:[#allocation7 + $0x2f8] sm:$0xff]
    %v3808 = vld [vmem:[#allocation7 + $0x300] sm:$0xff]
    %v3809 = vld [vmem:[#allocation7 + $0x308] sm:$0xff]
    %v3810 = vld [vmem:[#allocation7 + $0x310] sm:$0xff]
    %v3811 = vld [vmem:[#allocation7 + $0x318] sm:$0xff]
    %v3812 = vld [vmem:[#allocation7 + $0x320] sm:$0xff]
    %v3813 = vld [vmem:[#allocation7 + $0x328] sm:$0xff]
    %v3814 = vld [vmem:[#allocation7 + $0x330] sm:$0xff]
    %v3815 = vld [vmem:[#allocation7 + $0x338] sm:$0xff]
    %v3816 = vld [vmem:[#allocation7 + $0x340] sm:$0xff]
    %v3817 = vld [vmem:[#allocation7 + $0x348] sm:$0xff]
    %v3818 = vld [vmem:[#allocation7 + $0x350] sm:$0xff]
    %v3819 = vld [vmem:[#allocation7 + $0x358] sm:$0xff]
    %v3820 = vld [vmem:[#allocation7 + $0x360] sm:$0xff]
    %v3821 = vld [vmem:[#allocation7 + $0x368] sm:$0xff]
    %v3822 = vld [vmem:[#allocation7 + $0x370] sm:$0xff]
    %v3823 = vld [vmem:[#allocation7 + $0x378] sm:$0xff]
    %v3824 = vld [vmem:[#allocation7 + $0x380] sm:$0xff]
    %v3825 = vld [vmem:[#allocation7 + $0x388] sm:$0xff]
    %v3826 = vld [vmem:[#allocation7 + $0x390] sm:$0xff]
    %v3827 = vld [vmem:[#allocation7 + $0x398] sm:$0xff]
    %v3828 = vld [vmem:[#allocation7 + $0x3a0] sm:$0xff]
    %v3829 = vld [vmem:[#allocation7 + $0x3a8] sm:$0xff]
    %v3830 = vld [vmem:[#allocation7 + $0x3b0] sm:$0xff]
    %v3831 = vld [vmem:[#allocation7 + $0x3b8] sm:$0xff]
    %v3832 = vld [vmem:[#allocation7 + $0x3c0] sm:$0xff]
    %v3833 = vld [vmem:[#allocation7 + $0x3c8] sm:$0xff]
    %v3834 = vld [vmem:[#allocation7 + $0x3d0] sm:$0xff]
    %v3835 = vld [vmem:[#allocation7 + $0x3d8] sm:$0xff]
    %v3836 = vld [vmem:[#allocation7 + $0x3e0] sm:$0xff]
    %v3837 = vld [vmem:[#allocation7 + $0x3e8] sm:$0xff]
    %v3838 = vld [vmem:[#allocation7 + $0x3f0] sm:$0xff]
    %v3839 = vld [vmem:[#allocation7 + $0x3f8] sm:$0xff]
    %v3840 = vld [vmem:[#allocation7 + $0x400] sm:$0xff]
    %v3841 = vld [vmem:[#allocation7 + $0x408] sm:$0xff]
    %v3842 = vld [vmem:[#allocation7 + $0x410] sm:$0xff]
    %v3843 = vld [vmem:[#allocation7 + $0x418] sm:$0xff]
    %v3844 = vld [vmem:[#allocation7 + $0x420] sm:$0xff]
    %v3845 = vld [vmem:[#allocation7 + $0x428] sm:$0xff]
    %v3846 = vld [vmem:[#allocation7 + $0x430] sm:$0xff]
    %v3847 = vld [vmem:[#allocation7 + $0x438] sm:$0xff]
    %v3848 = vld [vmem:[#allocation7 + $0x440] sm:$0xff]
    %v3849 = vld [vmem:[#allocation7 + $0x448] sm:$0xff]
    %v3850 = vld [vmem:[#allocation7 + $0x450] sm:$0xff]
    %v3851 = vld [vmem:[#allocation7 + $0x458] sm:$0xff]
    %v3852 = vld [vmem:[#allocation7 + $0x460] sm:$0xff]
    %v3853 = vld [vmem:[#allocation7 + $0x468] sm:$0xff]
    %v3854 = vld [vmem:[#allocation7 + $0x470] sm:$0xff]
    %v3855 = vld [vmem:[#allocation7 + $0x478] sm:$0xff]
    %v3856 = vld [vmem:[#allocation7 + $0x480] sm:$0xff]
    %v3857 = vld [vmem:[#allocation7 + $0x488] sm:$0xff]
    %v3858 = vld [vmem:[#allocation7 + $0x490] sm:$0xff]
    %v3859 = vld [vmem:[#allocation7 + $0x498] sm:$0xff]
    %v3860 = vld [vmem:[#allocation7 + $0x4a0] sm:$0xff]
    %v3861 = vld [vmem:[#allocation7 + $0x4a8] sm:$0xff]
    %v3862 = vld [vmem:[#allocation7 + $0x4b0] sm:$0xff]
    %v3863 = vld [vmem:[#allocation7 + $0x4b8] sm:$0xff]
    %v3864 = vld [vmem:[#allocation7 + $0x4c0] sm:$0xff]
    %v3865 = vld [vmem:[#allocation7 + $0x4c8] sm:$0xff]
    %v3866 = vld [vmem:[#allocation7 + $0x4d0] sm:$0xff]
    %v3867 = vld [vmem:[#allocation7 + $0x4d8] sm:$0xff]
    %v3868 = vld [vmem:[#allocation7 + $0x4e0] sm:$0xff]
    %v3869 = vld [vmem:[#allocation7 + $0x4e8] sm:$0xff]
    %v3870 = vld [vmem:[#allocation7 + $0x4f0] sm:$0xff]
    %v3871 = vld [vmem:[#allocation7 + $0x4f8] sm:$0xff]
    %v3872 = vld [vmem:[#allocation7 + $0x500] sm:$0xff]
    %v3873 = vld [vmem:[#allocation7 + $0x508] sm:$0xff]
    %v3874 = vld [vmem:[#allocation7 + $0x510] sm:$0xff]
    %v3875 = vld [vmem:[#allocation7 + $0x518] sm:$0xff]
    %v3876 = vld [vmem:[#allocation7 + $0x520] sm:$0xff]
    %v3877 = vld [vmem:[#allocation7 + $0x528] sm:$0xff]
    %v3878 = vld [vmem:[#allocation7 + $0x530] sm:$0xff]
    %v3879 = vld [vmem:[#allocation7 + $0x538] sm:$0xff]
    %v3880 = vld [vmem:[#allocation7 + $0x540] sm:$0xff]
    %v3881 = vld [vmem:[#allocation7 + $0x548] sm:$0xff]
    %v3882 = vld [vmem:[#allocation7 + $0x550] sm:$0xff]
    %v3883 = vld [vmem:[#allocation7 + $0x558] sm:$0xff]
    %v3884 = vld [vmem:[#allocation7 + $0x560] sm:$0xff]
    %v3885 = vld [vmem:[#allocation7 + $0x568] sm:$0xff]
    %v3886 = vld [vmem:[#allocation7 + $0x570] sm:$0xff]
    %v3887 = vld [vmem:[#allocation7 + $0x578] sm:$0xff]
    %v3888 = vld [vmem:[#allocation7 + $0x580] sm:$0xff]
    %v3889 = vld [vmem:[#allocation7 + $0x588] sm:$0xff]
    %v3890 = vld [vmem:[#allocation7 + $0x590] sm:$0xff]
    %v3891 = vld [vmem:[#allocation7 + $0x598] sm:$0xff]
    %v3892 = vld [vmem:[#allocation7 + $0x5a0] sm:$0xff]
    %v3893 = vld [vmem:[#allocation7 + $0x5a8] sm:$0xff]
    %v3894 = vld [vmem:[#allocation7 + $0x5b0] sm:$0xff]
    %v3895 = vld [vmem:[#allocation7 + $0x5b8] sm:$0xff]
    %v3896 = vld [vmem:[#allocation7 + $0x5c0] sm:$0xff]
    %v3897 = vld [vmem:[#allocation7 + $0x5c8] sm:$0xff]
    %v3898 = vld [vmem:[#allocation7 + $0x5d0] sm:$0xff]
    %v3899 = vld [vmem:[#allocation7 + $0x5d8] sm:$0xff]
    %v3900 = vld [vmem:[#allocation7 + $0x5e0] sm:$0xff]
    %v3901 = vld [vmem:[#allocation7 + $0x5e8] sm:$0xff]
    %v3902 = vld [vmem:[#allocation7 + $0x5f0] sm:$0xff]
    %v3903 = vld [vmem:[#allocation7 + $0x5f8] sm:$0xff]
    %v3904 = vld [vmem:[#allocation7 + $0x600] sm:$0xff]
    %v3905 = vld [vmem:[#allocation7 + $0x608] sm:$0xff]
    %v3906 = vld [vmem:[#allocation7 + $0x610] sm:$0xff]
    %v3907 = vld [vmem:[#allocation7 + $0x618] sm:$0xff]
    %v3908 = vld [vmem:[#allocation7 + $0x620] sm:$0xff]
    %v3909 = vld [vmem:[#allocation7 + $0x628] sm:$0xff]
    %v3910 = vld [vmem:[#allocation7 + $0x630] sm:$0xff]
    %v3911 = vld [vmem:[#allocation7 + $0x638] sm:$0xff]
    %v3912 = vld [vmem:[#allocation7 + $0x640] sm:$0xff]
    %v3913 = vld [vmem:[#allocation7 + $0x648] sm:$0xff]
    %v3914 = vld [vmem:[#allocation7 + $0x650] sm:$0xff]
    %v3915 = vld [vmem:[#allocation7 + $0x658] sm:$0xff]
    %v3916 = vld [vmem:[#allocation7 + $0x660] sm:$0xff]
    %v3917 = vld [vmem:[#allocation7 + $0x668] sm:$0xff]
    %v3918 = vld [vmem:[#allocation7 + $0x670] sm:$0xff]
    %v3919 = vld [vmem:[#allocation7 + $0x678] sm:$0xff]
    %v3920 = vld [vmem:[#allocation7 + $0x680] sm:$0xff]
    %v3921 = vld [vmem:[#allocation7 + $0x688] sm:$0xff]
    %v3922 = vld [vmem:[#allocation7 + $0x690] sm:$0xff]
    %v3923 = vld [vmem:[#allocation7 + $0x698] sm:$0xff]
    %v3924 = vld [vmem:[#allocation7 + $0x6a0] sm:$0xff]
    %v3925 = vld [vmem:[#allocation7 + $0x6a8] sm:$0xff]
    %v3926 = vld [vmem:[#allocation7 + $0x6b0] sm:$0xff]
    %v3927 = vld [vmem:[#allocation7 + $0x6b8] sm:$0xff]
    %v3928 = vld [vmem:[#allocation7 + $0x6c0] sm:$0xff]
    %v3929 = vld [vmem:[#allocation7 + $0x6c8] sm:$0xff]
    %v3930 = vld [vmem:[#allocation7 + $0x6d0] sm:$0xff]
    %v3931 = vld [vmem:[#allocation7 + $0x6d8] sm:$0xff]
    %v3932 = vld [vmem:[#allocation7 + $0x6e0] sm:$0xff]
    %v3933 = vld [vmem:[#allocation7 + $0x6e8] sm:$0xff]
    %v3934 = vld [vmem:[#allocation7 + $0x6f0] sm:$0xff]
    %v3935 = vld [vmem:[#allocation7 + $0x6f8] sm:$0xff]
    %v3936 = vld [vmem:[#allocation7 + $0x700] sm:$0xff]
    %v3937 = vld [vmem:[#allocation7 + $0x708] sm:$0xff]
    %v3938 = vld [vmem:[#allocation7 + $0x710] sm:$0xff]
    %v3939 = vld [vmem:[#allocation7 + $0x718] sm:$0xff]
    %v3940 = vld [vmem:[#allocation7 + $0x720] sm:$0xff]
    %v3941 = vld [vmem:[#allocation7 + $0x728] sm:$0xff]
    %v3942 = vld [vmem:[#allocation7 + $0x730] sm:$0xff]
    %v3943 = vld [vmem:[#allocation7 + $0x738] sm:$0xff]
    %v3944 = vld [vmem:[#allocation7 + $0x740] sm:$0xff]
    %v3945 = vld [vmem:[#allocation7 + $0x748] sm:$0xff]
    %v3946 = vld [vmem:[#allocation7 + $0x750] sm:$0xff]
    %v3947 = vld [vmem:[#allocation7 + $0x758] sm:$0xff]
    %v3948 = vld [vmem:[#allocation7 + $0x760] sm:$0xff]
    %v3949 = vld [vmem:[#allocation7 + $0x768] sm:$0xff]
    %v3950 = vld [vmem:[#allocation7 + $0x770] sm:$0xff]
    %v3951 = vld [vmem:[#allocation7 + $0x778] sm:$0xff]
    %v3952 = vld [vmem:[#allocation7 + $0x780] sm:$0xff]
    %v3953 = vld [vmem:[#allocation7 + $0x788] sm:$0xff]
    %v3954 = vld [vmem:[#allocation7 + $0x790] sm:$0xff]
    %v3955 = vld [vmem:[#allocation7 + $0x798] sm:$0xff]
    %v3956 = vld [vmem:[#allocation7 + $0x7a0] sm:$0xff]
    %v3957 = vld [vmem:[#allocation7 + $0x7a8] sm:$0xff]
    %v3958 = vld [vmem:[#allocation7 + $0x7b0] sm:$0xff]
    %v3959 = vld [vmem:[#allocation7 + $0x7b8] sm:$0xff]
    %v3960 = vld [vmem:[#allocation7 + $0x7c0] sm:$0xff]
    %v3961 = vld [vmem:[#allocation7 + $0x7c8] sm:$0xff]
    %v3962 = vld [vmem:[#allocation7 + $0x7d0] sm:$0xff]
    %v3963 = vld [vmem:[#allocation7 + $0x7d8] sm:$0xff]
    %v3964 = vld [vmem:[#allocation7 + $0x7e0] sm:$0xff]
    %v3965 = vld [vmem:[#allocation7 + $0x7e8] sm:$0xff]
    %v3966 = vld [vmem:[#allocation7 + $0x7f0] sm:$0xff]
    %v3967 = vld [vmem:[#allocation7 + $0x7f8] sm:$0xff]
    %v3968 = vld [vmem:[#allocation9] sm:$0xf]
    %v3970 = vlaneseq
    %v3971 = vshrl.u32 %v3970, 7
    %v3972 = vsub.s32 0, %v3971
    %v3973 = vrot.slane %v3968, %v3972
    %v3974 = vlaneseq
    %v3975 = vshrl.u32 %v3974, 7
    %v3976 = vsub.s32 1, %v3975
    %v3977 = vrot.slane %v3968, %v3976
    %v3978 = vlaneseq
    %v3979 = vshrl.u32 %v3978, 7
    %v3980 = vsub.s32 2, %v3979
    %v3981 = vrot.slane %v3968, %v3980
    %v3982 = vlaneseq
    %v3983 = vshrl.u32 %v3982, 7
    %v3984 = vsub.s32 3, %v3983
    %v3985 = vrot.slane %v3968, %v3984
    %v4246 = vunpack.c.l.b16 %v3712
    %v4247 = vunpack.c.h.b16 %v3712
    %v4248 = vunpack.c.l.b16 %v3713
    %v4249 = vunpack.c.h.b16 %v3713
    %v4250 = vunpack.c.l.b16 %v3714
    %v4251 = vunpack.c.h.b16 %v3714
    %v4252 = vunpack.c.l.b16 %v3715
    %v4253 = vunpack.c.h.b16 %v3715
    %v4254 = vunpack.c.l.b16 %v3716
    %v4255 = vunpack.c.h.b16 %v3716
    %v4256 = vunpack.c.l.b16 %v3717
    %v4257 = vunpack.c.h.b16 %v3717
    %v4258 = vunpack.c.l.b16 %v3718
    %v4259 = vunpack.c.h.b16 %v3718
    %v4260 = vunpack.c.l.b16 %v3719
    %v4261 = vunpack.c.h.b16 %v3719
    %v4262 = vunpack.c.l.b16 %v3720
    %v4263 = vunpack.c.h.b16 %v3720
    %v4264 = vunpack.c.l.b16 %v3721
    %v4265 = vunpack.c.h.b16 %v3721
    %v4266 = vunpack.c.l.b16 %v3722
    %v4267 = vunpack.c.h.b16 %v3722
    %v4268 = vunpack.c.l.b16 %v3723
    %v4269 = vunpack.c.h.b16 %v3723
    %v4270 = vunpack.c.l.b16 %v3724
    %v4271 = vunpack.c.h.b16 %v3724
    %v4272 = vunpack.c.l.b16 %v3725
    %v4273 = vunpack.c.h.b16 %v3725
    %v4274 = vunpack.c.l.b16 %v3726
    %v4275 = vunpack.c.h.b16 %v3726
    %v4276 = vunpack.c.l.b16 %v3727
    %v4277 = vunpack.c.h.b16 %v3727
    %v4278 = vunpack.c.l.b16 %v3728
    %v4279 = vunpack.c.h.b16 %v3728
    %v4280 = vunpack.c.l.b16 %v3729
    %v4281 = vunpack.c.h.b16 %v3729
    %v4282 = vunpack.c.l.b16 %v3730
    %v4283 = vunpack.c.h.b16 %v3730
    %v4284 = vunpack.c.l.b16 %v3731
    %v4285 = vunpack.c.h.b16 %v3731
    %v4286 = vunpack.c.l.b16 %v3732
    %v4287 = vunpack.c.h.b16 %v3732
    %v4288 = vunpack.c.l.b16 %v3733
    %v4289 = vunpack.c.h.b16 %v3733
    %v4290 = vunpack.c.l.b16 %v3734
    %v4291 = vunpack.c.h.b16 %v3734
    %v4292 = vunpack.c.l.b16 %v3735
    %v4293 = vunpack.c.h.b16 %v3735
    %v4294 = vunpack.c.l.b16 %v3736
    %v4295 = vunpack.c.h.b16 %v3736
    %v4296 = vunpack.c.l.b16 %v3737
    %v4297 = vunpack.c.h.b16 %v3737
    %v4298 = vunpack.c.l.b16 %v3738
    %v4299 = vunpack.c.h.b16 %v3738
    %v4300 = vunpack.c.l.b16 %v3739
    %v4301 = vunpack.c.h.b16 %v3739
    %v4302 = vunpack.c.l.b16 %v3740
    %v4303 = vunpack.c.h.b16 %v3740
    %v4304 = vunpack.c.l.b16 %v3741
    %v4305 = vunpack.c.h.b16 %v3741
    %v4306 = vunpack.c.l.b16 %v3742
    %v4307 = vunpack.c.h.b16 %v3742
    %v4308 = vunpack.c.l.b16 %v3743
    %v4309 = vunpack.c.h.b16 %v3743
    %v4310 = vunpack.c.l.b16 %v3744
    %v4311 = vunpack.c.h.b16 %v3744
    %v4312 = vunpack.c.l.b16 %v3745
    %v4313 = vunpack.c.h.b16 %v3745
    %v4314 = vunpack.c.l.b16 %v3746
    %v4315 = vunpack.c.h.b16 %v3746
    %v4316 = vunpack.c.l.b16 %v3747
    %v4317 = vunpack.c.h.b16 %v3747
    %v4318 = vunpack.c.l.b16 %v3748
    %v4319 = vunpack.c.h.b16 %v3748
    %v4320 = vunpack.c.l.b16 %v3749
    %v4321 = vunpack.c.h.b16 %v3749
    %v4322 = vunpack.c.l.b16 %v3750
    %v4323 = vunpack.c.h.b16 %v3750
    %v4324 = vunpack.c.l.b16 %v3751
    %v4325 = vunpack.c.h.b16 %v3751
    %v4326 = vunpack.c.l.b16 %v3752
    %v4327 = vunpack.c.h.b16 %v3752
    %v4328 = vunpack.c.l.b16 %v3753
    %v4329 = vunpack.c.h.b16 %v3753
    %v4330 = vunpack.c.l.b16 %v3754
    %v4331 = vunpack.c.h.b16 %v3754
    %v4332 = vunpack.c.l.b16 %v3755
    %v4333 = vunpack.c.h.b16 %v3755
    %v4334 = vunpack.c.l.b16 %v3756
    %v4335 = vunpack.c.h.b16 %v3756
    %v4336 = vunpack.c.l.b16 %v3757
    %v4337 = vunpack.c.h.b16 %v3757
    %v4338 = vunpack.c.l.b16 %v3758
    %v4339 = vunpack.c.h.b16 %v3758
    %v4340 = vunpack.c.l.b16 %v3759
    %v4341 = vunpack.c.h.b16 %v3759
    %v4342 = vunpack.c.l.b16 %v3760
    %v4343 = vunpack.c.h.b16 %v3760
    %v4344 = vunpack.c.l.b16 %v3761
    %v4345 = vunpack.c.h.b16 %v3761
    %v4346 = vunpack.c.l.b16 %v3762
    %v4347 = vunpack.c.h.b16 %v3762
    %v4348 = vunpack.c.l.b16 %v3763
    %v4349 = vunpack.c.h.b16 %v3763
    %v4350 = vunpack.c.l.b16 %v3764
    %v4351 = vunpack.c.h.b16 %v3764
    %v4352 = vunpack.c.l.b16 %v3765
    %v4353 = vunpack.c.h.b16 %v3765
    %v4354 = vunpack.c.l.b16 %v3766
    %v4355 = vunpack.c.h.b16 %v3766
    %v4356 = vunpack.c.l.b16 %v3767
    %v4357 = vunpack.c.h.b16 %v3767
    %v4358 = vunpack.c.l.b16 %v3768
    %v4359 = vunpack.c.h.b16 %v3768
    %v4360 = vunpack.c.l.b16 %v3769
    %v4361 = vunpack.c.h.b16 %v3769
    %v4362 = vunpack.c.l.b16 %v3770
    %v4363 = vunpack.c.h.b16 %v3770
    %v4364 = vunpack.c.l.b16 %v3771
    %v4365 = vunpack.c.h.b16 %v3771
    %v4366 = vunpack.c.l.b16 %v3772
    %v4367 = vunpack.c.h.b16 %v3772
    %v4368 = vunpack.c.l.b16 %v3773
    %v4369 = vunpack.c.h.b16 %v3773
    %v4370 = vunpack.c.l.b16 %v3774
    %v4371 = vunpack.c.h.b16 %v3774
    %v4372 = vunpack.c.l.b16 %v3775
    %v4373 = vunpack.c.h.b16 %v3775
    %v4374 = vunpack.c.l.b16 %v3776
    %v4375 = vunpack.c.h.b16 %v3776
    %v4376 = vunpack.c.l.b16 %v3777
    %v4377 = vunpack.c.h.b16 %v3777
    %v4378 = vunpack.c.l.b16 %v3778
    %v4379 = vunpack.c.h.b16 %v3778
    %v4380 = vunpack.c.l.b16 %v3779
    %v4381 = vunpack.c.h.b16 %v3779
    %v4382 = vunpack.c.l.b16 %v3780
    %v4383 = vunpack.c.h.b16 %v3780
    %v4384 = vunpack.c.l.b16 %v3781
    %v4385 = vunpack.c.h.b16 %v3781
    %v4386 = vunpack.c.l.b16 %v3782
    %v4387 = vunpack.c.h.b16 %v3782
    %v4388 = vunpack.c.l.b16 %v3783
    %v4389 = vunpack.c.h.b16 %v3783
    %v4390 = vunpack.c.l.b16 %v3784
    %v4391 = vunpack.c.h.b16 %v3784
    %v4392 = vunpack.c.l.b16 %v3785
    %v4393 = vunpack.c.h.b16 %v3785
    %v4394 = vunpack.c.l.b16 %v3786
    %v4395 = vunpack.c.h.b16 %v3786
    %v4396 = vunpack.c.l.b16 %v3787
    %v4397 = vunpack.c.h.b16 %v3787
    %v4398 = vunpack.c.l.b16 %v3788
    %v4399 = vunpack.c.h.b16 %v3788
    %v4400 = vunpack.c.l.b16 %v3789
    %v4401 = vunpack.c.h.b16 %v3789
    %v4402 = vunpack.c.l.b16 %v3790
    %v4403 = vunpack.c.h.b16 %v3790
    %v4404 = vunpack.c.l.b16 %v3791
    %v4405 = vunpack.c.h.b16 %v3791
    %v4406 = vunpack.c.l.b16 %v3792
    %v4407 = vunpack.c.h.b16 %v3792
    %v4408 = vunpack.c.l.b16 %v3793
    %v4409 = vunpack.c.h.b16 %v3793
    %v4410 = vunpack.c.l.b16 %v3794
    %v4411 = vunpack.c.h.b16 %v3794
    %v4412 = vunpack.c.l.b16 %v3795
    %v4413 = vunpack.c.h.b16 %v3795
    %v4414 = vunpack.c.l.b16 %v3796
    %v4415 = vunpack.c.h.b16 %v3796
    %v4416 = vunpack.c.l.b16 %v3797
    %v4417 = vunpack.c.h.b16 %v3797
    %v4418 = vunpack.c.l.b16 %v3798
    %v4419 = vunpack.c.h.b16 %v3798
    %v4420 = vunpack.c.l.b16 %v3799
    %v4421 = vunpack.c.h.b16 %v3799
    %v4422 = vunpack.c.l.b16 %v3800
    %v4423 = vunpack.c.h.b16 %v3800
    %v4424 = vunpack.c.l.b16 %v3801
    %v4425 = vunpack.c.h.b16 %v3801
    %v4426 = vunpack.c.l.b16 %v3802
    %v4427 = vunpack.c.h.b16 %v3802
    %v4428 = vunpack.c.l.b16 %v3803
    %v4429 = vunpack.c.h.b16 %v3803
    %v4430 = vunpack.c.l.b16 %v3804
    %v4431 = vunpack.c.h.b16 %v3804
    %v4432 = vunpack.c.l.b16 %v3805
    %v4433 = vunpack.c.h.b16 %v3805
    %v4434 = vunpack.c.l.b16 %v3806
    %v4435 = vunpack.c.h.b16 %v3806
    %v4436 = vunpack.c.l.b16 %v3807
    %v4437 = vunpack.c.h.b16 %v3807
    %v4438 = vunpack.c.l.b16 %v3808
    %v4439 = vunpack.c.h.b16 %v3808
    %v4440 = vunpack.c.l.b16 %v3809
    %v4441 = vunpack.c.h.b16 %v3809
    %v4442 = vunpack.c.l.b16 %v3810
    %v4443 = vunpack.c.h.b16 %v3810
    %v4444 = vunpack.c.l.b16 %v3811
    %v4445 = vunpack.c.h.b16 %v3811
    %v4446 = vunpack.c.l.b16 %v3812
    %v4447 = vunpack.c.h.b16 %v3812
    %v4448 = vunpack.c.l.b16 %v3813
    %v4449 = vunpack.c.h.b16 %v3813
    %v4450 = vunpack.c.l.b16 %v3814
    %v4451 = vunpack.c.h.b16 %v3814
    %v4452 = vunpack.c.l.b16 %v3815
    %v4453 = vunpack.c.h.b16 %v3815
    %v4454 = vunpack.c.l.b16 %v3816
    %v4455 = vunpack.c.h.b16 %v3816
    %v4456 = vunpack.c.l.b16 %v3817
    %v4457 = vunpack.c.h.b16 %v3817
    %v4458 = vunpack.c.l.b16 %v3818
    %v4459 = vunpack.c.h.b16 %v3818
    %v4460 = vunpack.c.l.b16 %v3819
    %v4461 = vunpack.c.h.b16 %v3819
    %v4462 = vunpack.c.l.b16 %v3820
    %v4463 = vunpack.c.h.b16 %v3820
    %v4464 = vunpack.c.l.b16 %v3821
    %v4465 = vunpack.c.h.b16 %v3821
    %v4466 = vunpack.c.l.b16 %v3822
    %v4467 = vunpack.c.h.b16 %v3822
    %v4468 = vunpack.c.l.b16 %v3823
    %v4469 = vunpack.c.h.b16 %v3823
    %v4470 = vunpack.c.l.b16 %v3824
    %v4471 = vunpack.c.h.b16 %v3824
    %v4472 = vunpack.c.l.b16 %v3825
    %v4473 = vunpack.c.h.b16 %v3825
    %v4474 = vunpack.c.l.b16 %v3826
    %v4475 = vunpack.c.h.b16 %v3826
    %v4476 = vunpack.c.l.b16 %v3827
    %v4477 = vunpack.c.h.b16 %v3827
    %v4478 = vunpack.c.l.b16 %v3828
    %v4479 = vunpack.c.h.b16 %v3828
    %v4480 = vunpack.c.l.b16 %v3829
    %v4481 = vunpack.c.h.b16 %v3829
    %v4482 = vunpack.c.l.b16 %v3830
    %v4483 = vunpack.c.h.b16 %v3830
    %v4484 = vunpack.c.l.b16 %v3831
    %v4485 = vunpack.c.h.b16 %v3831
    %v4486 = vunpack.c.l.b16 %v3832
    %v4487 = vunpack.c.h.b16 %v3832
    %v4488 = vunpack.c.l.b16 %v3833
    %v4489 = vunpack.c.h.b16 %v3833
    %v4490 = vunpack.c.l.b16 %v3834
    %v4491 = vunpack.c.h.b16 %v3834
    %v4492 = vunpack.c.l.b16 %v3835
    %v4493 = vunpack.c.h.b16 %v3835
    %v4494 = vunpack.c.l.b16 %v3836
    %v4495 = vunpack.c.h.b16 %v3836
    %v4496 = vunpack.c.l.b16 %v3837
    %v4497 = vunpack.c.h.b16 %v3837
    %v4498 = vunpack.c.l.b16 %v3838
    %v4499 = vunpack.c.h.b16 %v3838
    %v4500 = vunpack.c.l.b16 %v3839
    %v4501 = vunpack.c.h.b16 %v3839
    %v4502 = vunpack.c.l.b16 %v3840
    %v4503 = vunpack.c.h.b16 %v3840
    %v4504 = vunpack.c.l.b16 %v3841
    %v4505 = vunpack.c.h.b16 %v3841
    %v4506 = vunpack.c.l.b16 %v3842
    %v4507 = vunpack.c.h.b16 %v3842
    %v4508 = vunpack.c.l.b16 %v3843
    %v4509 = vunpack.c.h.b16 %v3843
    %v4510 = vunpack.c.l.b16 %v3844
    %v4511 = vunpack.c.h.b16 %v3844
    %v4512 = vunpack.c.l.b16 %v3845
    %v4513 = vunpack.c.h.b16 %v3845
    %v4514 = vunpack.c.l.b16 %v3846
    %v4515 = vunpack.c.h.b16 %v3846
    %v4516 = vunpack.c.l.b16 %v3847
    %v4517 = vunpack.c.h.b16 %v3847
    %v4518 = vunpack.c.l.b16 %v3848
    %v4519 = vunpack.c.h.b16 %v3848
    %v4520 = vunpack.c.l.b16 %v3849
    %v4521 = vunpack.c.h.b16 %v3849
    %v4522 = vunpack.c.l.b16 %v3850
    %v4523 = vunpack.c.h.b16 %v3850
    %v4524 = vunpack.c.l.b16 %v3851
    %v4525 = vunpack.c.h.b16 %v3851
    %v4526 = vunpack.c.l.b16 %v3852
    %v4527 = vunpack.c.h.b16 %v3852
    %v4528 = vunpack.c.l.b16 %v3853
    %v4529 = vunpack.c.h.b16 %v3853
    %v4530 = vunpack.c.l.b16 %v3854
    %v4531 = vunpack.c.h.b16 %v3854
    %v4532 = vunpack.c.l.b16 %v3855
    %v4533 = vunpack.c.h.b16 %v3855
    %v4534 = vunpack.c.l.b16 %v3856
    %v4535 = vunpack.c.h.b16 %v3856
    %v4536 = vunpack.c.l.b16 %v3857
    %v4537 = vunpack.c.h.b16 %v3857
    %v4538 = vunpack.c.l.b16 %v3858
    %v4539 = vunpack.c.h.b16 %v3858
    %v4540 = vunpack.c.l.b16 %v3859
    %v4541 = vunpack.c.h.b16 %v3859
    %v4542 = vunpack.c.l.b16 %v3860
    %v4543 = vunpack.c.h.b16 %v3860
    %v4544 = vunpack.c.l.b16 %v3861
    %v4545 = vunpack.c.h.b16 %v3861
    %v4546 = vunpack.c.l.b16 %v3862
    %v4547 = vunpack.c.h.b16 %v3862
    %v4548 = vunpack.c.l.b16 %v3863
    %v4549 = vunpack.c.h.b16 %v3863
    %v4550 = vunpack.c.l.b16 %v3864
    %v4551 = vunpack.c.h.b16 %v3864
    %v4552 = vunpack.c.l.b16 %v3865
    %v4553 = vunpack.c.h.b16 %v3865
    %v4554 = vunpack.c.l.b16 %v3866
    %v4555 = vunpack.c.h.b16 %v3866
    %v4556 = vunpack.c.l.b16 %v3867
    %v4557 = vunpack.c.h.b16 %v3867
    %v4558 = vunpack.c.l.b16 %v3868
    %v4559 = vunpack.c.h.b16 %v3868
    %v4560 = vunpack.c.l.b16 %v3869
    %v4561 = vunpack.c.h.b16 %v3869
    %v4562 = vunpack.c.l.b16 %v3870
    %v4563 = vunpack.c.h.b16 %v3870
    %v4564 = vunpack.c.l.b16 %v3871
    %v4565 = vunpack.c.h.b16 %v3871
    %v4566 = vunpack.c.l.b16 %v3872
    %v4567 = vunpack.c.h.b16 %v3872
    %v4568 = vunpack.c.l.b16 %v3873
    %v4569 = vunpack.c.h.b16 %v3873
    %v4570 = vunpack.c.l.b16 %v3874
    %v4571 = vunpack.c.h.b16 %v3874
    %v4572 = vunpack.c.l.b16 %v3875
    %v4573 = vunpack.c.h.b16 %v3875
    %v4574 = vunpack.c.l.b16 %v3876
    %v4575 = vunpack.c.h.b16 %v3876
    %v4576 = vunpack.c.l.b16 %v3877
    %v4577 = vunpack.c.h.b16 %v3877
    %v4578 = vunpack.c.l.b16 %v3878
    %v4579 = vunpack.c.h.b16 %v3878
    %v4580 = vunpack.c.l.b16 %v3879
    %v4581 = vunpack.c.h.b16 %v3879
    %v4582 = vunpack.c.l.b16 %v3880
    %v4583 = vunpack.c.h.b16 %v3880
    %v4584 = vunpack.c.l.b16 %v3881
    %v4585 = vunpack.c.h.b16 %v3881
    %v4586 = vunpack.c.l.b16 %v3882
    %v4587 = vunpack.c.h.b16 %v3882
    %v4588 = vunpack.c.l.b16 %v3883
    %v4589 = vunpack.c.h.b16 %v3883
    %v4590 = vunpack.c.l.b16 %v3884
    %v4591 = vunpack.c.h.b16 %v3884
    %v4592 = vunpack.c.l.b16 %v3885
    %v4593 = vunpack.c.h.b16 %v3885
    %v4594 = vunpack.c.l.b16 %v3886
    %v4595 = vunpack.c.h.b16 %v3886
    %v4596 = vunpack.c.l.b16 %v3887
    %v4597 = vunpack.c.h.b16 %v3887
    %v4598 = vunpack.c.l.b16 %v3888
    %v4599 = vunpack.c.h.b16 %v3888
    %v4600 = vunpack.c.l.b16 %v3889
    %v4601 = vunpack.c.h.b16 %v3889
    %v4602 = vunpack.c.l.b16 %v3890
    %v4603 = vunpack.c.h.b16 %v3890
    %v4604 = vunpack.c.l.b16 %v3891
    %v4605 = vunpack.c.h.b16 %v3891
    %v4606 = vunpack.c.l.b16 %v3892
    %v4607 = vunpack.c.h.b16 %v3892
    %v4608 = vunpack.c.l.b16 %v3893
    %v4609 = vunpack.c.h.b16 %v3893
    %v4610 = vunpack.c.l.b16 %v3894
    %v4611 = vunpack.c.h.b16 %v3894
    %v4612 = vunpack.c.l.b16 %v3895
    %v4613 = vunpack.c.h.b16 %v3895
    %v4614 = vunpack.c.l.b16 %v3896
    %v4615 = vunpack.c.h.b16 %v3896
    %v4616 = vunpack.c.l.b16 %v3897
    %v4617 = vunpack.c.h.b16 %v3897
    %v4618 = vunpack.c.l.b16 %v3898
    %v4619 = vunpack.c.h.b16 %v3898
    %v4620 = vunpack.c.l.b16 %v3899
    %v4621 = vunpack.c.h.b16 %v3899
    %v4622 = vunpack.c.l.b16 %v3900
    %v4623 = vunpack.c.h.b16 %v3900
    %v4624 = vunpack.c.l.b16 %v3901
    %v4625 = vunpack.c.h.b16 %v3901
    %v4626 = vunpack.c.l.b16 %v3902
    %v4627 = vunpack.c.h.b16 %v3902
    %v4628 = vunpack.c.l.b16 %v3903
    %v4629 = vunpack.c.h.b16 %v3903
    %v4630 = vunpack.c.l.b16 %v3904
    %v4631 = vunpack.c.h.b16 %v3904
    %v4632 = vunpack.c.l.b16 %v3905
    %v4633 = vunpack.c.h.b16 %v3905
    %v4634 = vunpack.c.l.b16 %v3906
    %v4635 = vunpack.c.h.b16 %v3906
    %v4636 = vunpack.c.l.b16 %v3907
    %v4637 = vunpack.c.h.b16 %v3907
    %v4638 = vunpack.c.l.b16 %v3908
    %v4639 = vunpack.c.h.b16 %v3908
    %v4640 = vunpack.c.l.b16 %v3909
    %v4641 = vunpack.c.h.b16 %v3909
    %v4642 = vunpack.c.l.b16 %v3910
    %v4643 = vunpack.c.h.b16 %v3910
    %v4644 = vunpack.c.l.b16 %v3911
    %v4645 = vunpack.c.h.b16 %v3911
    %v4646 = vunpack.c.l.b16 %v3912
    %v4647 = vunpack.c.h.b16 %v3912
    %v4648 = vunpack.c.l.b16 %v3913
    %v4649 = vunpack.c.h.b16 %v3913
    %v4650 = vunpack.c.l.b16 %v3914
    %v4651 = vunpack.c.h.b16 %v3914
    %v4652 = vunpack.c.l.b16 %v3915
    %v4653 = vunpack.c.h.b16 %v3915
    %v4654 = vunpack.c.l.b16 %v3916
    %v4655 = vunpack.c.h.b16 %v3916
    %v4656 = vunpack.c.l.b16 %v3917
    %v4657 = vunpack.c.h.b16 %v3917
    %v4658 = vunpack.c.l.b16 %v3918
    %v4659 = vunpack.c.h.b16 %v3918
    %v4660 = vunpack.c.l.b16 %v3919
    %v4661 = vunpack.c.h.b16 %v3919
    %v4662 = vunpack.c.l.b16 %v3920
    %v4663 = vunpack.c.h.b16 %v3920
    %v4664 = vunpack.c.l.b16 %v3921
    %v4665 = vunpack.c.h.b16 %v3921
    %v4666 = vunpack.c.l.b16 %v3922
    %v4667 = vunpack.c.h.b16 %v3922
    %v4668 = vunpack.c.l.b16 %v3923
    %v4669 = vunpack.c.h.b16 %v3923
    %v4670 = vunpack.c.l.b16 %v3924
    %v4671 = vunpack.c.h.b16 %v3924
    %v4672 = vunpack.c.l.b16 %v3925
    %v4673 = vunpack.c.h.b16 %v3925
    %v4674 = vunpack.c.l.b16 %v3926
    %v4675 = vunpack.c.h.b16 %v3926
    %v4676 = vunpack.c.l.b16 %v3927
    %v4677 = vunpack.c.h.b16 %v3927
    %v4678 = vunpack.c.l.b16 %v3928
    %v4679 = vunpack.c.h.b16 %v3928
    %v4680 = vunpack.c.l.b16 %v3929
    %v4681 = vunpack.c.h.b16 %v3929
    %v4682 = vunpack.c.l.b16 %v3930
    %v4683 = vunpack.c.h.b16 %v3930
    %v4684 = vunpack.c.l.b16 %v3931
    %v4685 = vunpack.c.h.b16 %v3931
    %v4686 = vunpack.c.l.b16 %v3932
    %v4687 = vunpack.c.h.b16 %v3932
    %v4688 = vunpack.c.l.b16 %v3933
    %v4689 = vunpack.c.h.b16 %v3933
    %v4690 = vunpack.c.l.b16 %v3934
    %v4691 = vunpack.c.h.b16 %v3934
    %v4692 = vunpack.c.l.b16 %v3935
    %v4693 = vunpack.c.h.b16 %v3935
    %v4694 = vunpack.c.l.b16 %v3936
    %v4695 = vunpack.c.h.b16 %v3936
    %v4696 = vunpack.c.l.b16 %v3937
    %v4697 = vunpack.c.h.b16 %v3937
    %v4698 = vunpack.c.l.b16 %v3938
    %v4699 = vunpack.c.h.b16 %v3938
    %v4700 = vunpack.c.l.b16 %v3939
    %v4701 = vunpack.c.h.b16 %v3939
    %v4702 = vunpack.c.l.b16 %v3940
    %v4703 = vunpack.c.h.b16 %v3940
    %v4704 = vunpack.c.l.b16 %v3941
    %v4705 = vunpack.c.h.b16 %v3941
    %v4706 = vunpack.c.l.b16 %v3942
    %v4707 = vunpack.c.h.b16 %v3942
    %v4708 = vunpack.c.l.b16 %v3943
    %v4709 = vunpack.c.h.b16 %v3943
    %v4710 = vunpack.c.l.b16 %v3944
    %v4711 = vunpack.c.h.b16 %v3944
    %v4712 = vunpack.c.l.b16 %v3945
    %v4713 = vunpack.c.h.b16 %v3945
    %v4714 = vunpack.c.l.b16 %v3946
    %v4715 = vunpack.c.h.b16 %v3946
    %v4716 = vunpack.c.l.b16 %v3947
    %v4717 = vunpack.c.h.b16 %v3947
    %v4718 = vunpack.c.l.b16 %v3948
    %v4719 = vunpack.c.h.b16 %v3948
    %v4720 = vunpack.c.l.b16 %v3949
    %v4721 = vunpack.c.h.b16 %v3949
    %v4722 = vunpack.c.l.b16 %v3950
    %v4723 = vunpack.c.h.b16 %v3950
    %v4724 = vunpack.c.l.b16 %v3951
    %v4725 = vunpack.c.h.b16 %v3951
    %v4726 = vunpack.c.l.b16 %v3952
    %v4727 = vunpack.c.h.b16 %v3952
    %v4728 = vunpack.c.l.b16 %v3953
    %v4729 = vunpack.c.h.b16 %v3953
    %v4730 = vunpack.c.l.b16 %v3954
    %v4731 = vunpack.c.h.b16 %v3954
    %v4732 = vunpack.c.l.b16 %v3955
    %v4733 = vunpack.c.h.b16 %v3955
    %v4734 = vunpack.c.l.b16 %v3956
    %v4735 = vunpack.c.h.b16 %v3956
    %v4736 = vunpack.c.l.b16 %v3957
    %v4737 = vunpack.c.h.b16 %v3957
    %v4738 = vunpack.c.l.b16 %v3958
    %v4739 = vunpack.c.h.b16 %v3958
    %v4740 = vunpack.c.l.b16 %v3959
    %v4741 = vunpack.c.h.b16 %v3959
    %v4742 = vunpack.c.l.b16 %v3960
    %v4743 = vunpack.c.h.b16 %v3960
    %v4744 = vunpack.c.l.b16 %v3961
    %v4745 = vunpack.c.h.b16 %v3961
    %v4746 = vunpack.c.l.b16 %v3962
    %v4747 = vunpack.c.h.b16 %v3962
    %v4748 = vunpack.c.l.b16 %v3963
    %v4749 = vunpack.c.h.b16 %v3963
    %v4750 = vunpack.c.l.b16 %v3964
    %v4751 = vunpack.c.h.b16 %v3964
    %v4752 = vunpack.c.l.b16 %v3965
    %v4753 = vunpack.c.h.b16 %v3965
    %v4754 = vunpack.c.l.b16 %v3966
    %v4755 = vunpack.c.h.b16 %v3966
    %v4756 = vunpack.c.l.b16 %v3967
    %v4757 = vunpack.c.h.b16 %v3967
    %v4758 = vpack.c.b16 %v4250, %v4246
    %v4759 = vpack.c.b16 %v4251, %v4247
    %v4760 = vpack.c.b16 %v4252, %v4248
    %v4761 = vpack.c.b16 %v4253, %v4249
    %v4762 = vpack.c.b16 %v4258, %v4254
    %v4763 = vpack.c.b16 %v4259, %v4255
    %v4764 = vpack.c.b16 %v4260, %v4256
    %v4765 = vpack.c.b16 %v4261, %v4257
    %v4766 = vpack.c.b16 %v4266, %v4262
    %v4767 = vpack.c.b16 %v4267, %v4263
    %v4768 = vpack.c.b16 %v4268, %v4264
    %v4769 = vpack.c.b16 %v4269, %v4265
    %v4770 = vpack.c.b16 %v4274, %v4270
    %v4771 = vpack.c.b16 %v4275, %v4271
    %v4772 = vpack.c.b16 %v4276, %v4272
    %v4773 = vpack.c.b16 %v4277, %v4273
    %v4774 = vpack.c.b16 %v4282, %v4278
    %v4775 = vpack.c.b16 %v4283, %v4279
    %v4776 = vpack.c.b16 %v4284, %v4280
    %v4777 = vpack.c.b16 %v4285, %v4281
    %v4778 = vpack.c.b16 %v4290, %v4286
    %v4779 = vpack.c.b16 %v4291, %v4287
    %v4780 = vpack.c.b16 %v4292, %v4288
    %v4781 = vpack.c.b16 %v4293, %v4289
    %v4782 = vpack.c.b16 %v4298, %v4294
    %v4783 = vpack.c.b16 %v4299, %v4295
    %v4784 = vpack.c.b16 %v4300, %v4296
    %v4785 = vpack.c.b16 %v4301, %v4297
    %v4786 = vpack.c.b16 %v4306, %v4302
    %v4787 = vpack.c.b16 %v4307, %v4303
    %v4788 = vpack.c.b16 %v4308, %v4304
    %v4789 = vpack.c.b16 %v4309, %v4305
    %v4790 = vpack.c.b16 %v4314, %v4310
    %v4791 = vpack.c.b16 %v4315, %v4311
    %v4792 = vpack.c.b16 %v4316, %v4312
    %v4793 = vpack.c.b16 %v4317, %v4313
    %v4794 = vpack.c.b16 %v4322, %v4318
    %v4795 = vpack.c.b16 %v4323, %v4319
    %v4796 = vpack.c.b16 %v4324, %v4320
    %v4797 = vpack.c.b16 %v4325, %v4321
    %v4798 = vpack.c.b16 %v4330, %v4326
    %v4799 = vpack.c.b16 %v4331, %v4327
    %v4800 = vpack.c.b16 %v4332, %v4328
    %v4801 = vpack.c.b16 %v4333, %v4329
    %v4802 = vpack.c.b16 %v4338, %v4334
    %v4803 = vpack.c.b16 %v4339, %v4335
    %v4804 = vpack.c.b16 %v4340, %v4336
    %v4805 = vpack.c.b16 %v4341, %v4337
    %v4806 = vpack.c.b16 %v4346, %v4342
    %v4807 = vpack.c.b16 %v4347, %v4343
    %v4808 = vpack.c.b16 %v4348, %v4344
    %v4809 = vpack.c.b16 %v4349, %v4345
    %v4810 = vpack.c.b16 %v4354, %v4350
    %v4811 = vpack.c.b16 %v4355, %v4351
    %v4812 = vpack.c.b16 %v4356, %v4352
    %v4813 = vpack.c.b16 %v4357, %v4353
    %v4814 = vpack.c.b16 %v4362, %v4358
    %v4815 = vpack.c.b16 %v4363, %v4359
    %v4816 = vpack.c.b16 %v4364, %v4360
    %v4817 = vpack.c.b16 %v4365, %v4361
    %v4818 = vpack.c.b16 %v4370, %v4366
    %v4819 = vpack.c.b16 %v4371, %v4367
    %v4820 = vpack.c.b16 %v4372, %v4368
    %v4821 = vpack.c.b16 %v4373, %v4369
    %v4822 = vpack.c.b16 %v4378, %v4374
    %v4823 = vpack.c.b16 %v4379, %v4375
    %v4824 = vpack.c.b16 %v4380, %v4376
    %v4825 = vpack.c.b16 %v4381, %v4377
    %v4826 = vpack.c.b16 %v4386, %v4382
    %v4827 = vpack.c.b16 %v4387, %v4383
    %v4828 = vpack.c.b16 %v4388, %v4384
    %v4829 = vpack.c.b16 %v4389, %v4385
    %v4830 = vpack.c.b16 %v4394, %v4390
    %v4831 = vpack.c.b16 %v4395, %v4391
    %v4832 = vpack.c.b16 %v4396, %v4392
    %v4833 = vpack.c.b16 %v4397, %v4393
    %v4834 = vpack.c.b16 %v4402, %v4398
    %v4835 = vpack.c.b16 %v4403, %v4399
    %v4836 = vpack.c.b16 %v4404, %v4400
    %v4837 = vpack.c.b16 %v4405, %v4401
    %v4838 = vpack.c.b16 %v4410, %v4406
    %v4839 = vpack.c.b16 %v4411, %v4407
    %v4840 = vpack.c.b16 %v4412, %v4408
    %v4841 = vpack.c.b16 %v4413, %v4409
    %v4842 = vpack.c.b16 %v4418, %v4414
    %v4843 = vpack.c.b16 %v4419, %v4415
    %v4844 = vpack.c.b16 %v4420, %v4416
    %v4845 = vpack.c.b16 %v4421, %v4417
    %v4846 = vpack.c.b16 %v4426, %v4422
    %v4847 = vpack.c.b16 %v4427, %v4423
    %v4848 = vpack.c.b16 %v4428, %v4424
    %v4849 = vpack.c.b16 %v4429, %v4425
    %v4850 = vpack.c.b16 %v4434, %v4430
    %v4851 = vpack.c.b16 %v4435, %v4431
    %v4852 = vpack.c.b16 %v4436, %v4432
    %v4853 = vpack.c.b16 %v4437, %v4433
    %v4854 = vpack.c.b16 %v4442, %v4438
    %v4855 = vpack.c.b16 %v4443, %v4439
    %v4856 = vpack.c.b16 %v4444, %v4440
    %v4857 = vpack.c.b16 %v4445, %v4441
    %v4858 = vpack.c.b16 %v4450, %v4446
    %v4859 = vpack.c.b16 %v4451, %v4447
    %v4860 = vpack.c.b16 %v4452, %v4448
    %v4861 = vpack.c.b16 %v4453, %v4449
    %v4862 = vpack.c.b16 %v4458, %v4454
    %v4863 = vpack.c.b16 %v4459, %v4455
    %v4864 = vpack.c.b16 %v4460, %v4456
    %v4865 = vpack.c.b16 %v4461, %v4457
    %v4866 = vpack.c.b16 %v4466, %v4462
    %v4867 = vpack.c.b16 %v4467, %v4463
    %v4868 = vpack.c.b16 %v4468, %v4464
    %v4869 = vpack.c.b16 %v4469, %v4465
    %v4870 = vpack.c.b16 %v4474, %v4470
    %v4871 = vpack.c.b16 %v4475, %v4471
    %v4872 = vpack.c.b16 %v4476, %v4472
    %v4873 = vpack.c.b16 %v4477, %v4473
    %v4874 = vpack.c.b16 %v4482, %v4478
    %v4875 = vpack.c.b16 %v4483, %v4479
    %v4876 = vpack.c.b16 %v4484, %v4480
    %v4877 = vpack.c.b16 %v4485, %v4481
    %v4878 = vpack.c.b16 %v4490, %v4486
    %v4879 = vpack.c.b16 %v4491, %v4487
    %v4880 = vpack.c.b16 %v4492, %v4488
    %v4881 = vpack.c.b16 %v4493, %v4489
    %v4882 = vpack.c.b16 %v4498, %v4494
    %v4883 = vpack.c.b16 %v4499, %v4495
    %v4884 = vpack.c.b16 %v4500, %v4496
    %v4885 = vpack.c.b16 %v4501, %v4497
    %v4886 = vpack.c.b16 %v4506, %v4502
    %v4887 = vpack.c.b16 %v4507, %v4503
    %v4888 = vpack.c.b16 %v4508, %v4504
    %v4889 = vpack.c.b16 %v4509, %v4505
    %v4890 = vpack.c.b16 %v4514, %v4510
    %v4891 = vpack.c.b16 %v4515, %v4511
    %v4892 = vpack.c.b16 %v4516, %v4512
    %v4893 = vpack.c.b16 %v4517, %v4513
    %v4894 = vpack.c.b16 %v4522, %v4518
    %v4895 = vpack.c.b16 %v4523, %v4519
    %v4896 = vpack.c.b16 %v4524, %v4520
    %v4897 = vpack.c.b16 %v4525, %v4521
    %v4898 = vpack.c.b16 %v4530, %v4526
    %v4899 = vpack.c.b16 %v4531, %v4527
    %v4900 = vpack.c.b16 %v4532, %v4528
    %v4901 = vpack.c.b16 %v4533, %v4529
    %v4902 = vpack.c.b16 %v4538, %v4534
    %v4903 = vpack.c.b16 %v4539, %v4535
    %v4904 = vpack.c.b16 %v4540, %v4536
    %v4905 = vpack.c.b16 %v4541, %v4537
    %v4906 = vpack.c.b16 %v4546, %v4542
    %v4907 = vpack.c.b16 %v4547, %v4543
    %v4908 = vpack.c.b16 %v4548, %v4544
    %v4909 = vpack.c.b16 %v4549, %v4545
    %v4910 = vpack.c.b16 %v4554, %v4550
    %v4911 = vpack.c.b16 %v4555, %v4551
    %v4912 = vpack.c.b16 %v4556, %v4552
    %v4913 = vpack.c.b16 %v4557, %v4553
    %v4914 = vpack.c.b16 %v4562, %v4558
    %v4915 = vpack.c.b16 %v4563, %v4559
    %v4916 = vpack.c.b16 %v4564, %v4560
    %v4917 = vpack.c.b16 %v4565, %v4561
    %v4918 = vpack.c.b16 %v4570, %v4566
    %v4919 = vpack.c.b16 %v4571, %v4567
    %v4920 = vpack.c.b16 %v4572, %v4568
    %v4921 = vpack.c.b16 %v4573, %v4569
    %v4922 = vpack.c.b16 %v4578, %v4574
    %v4923 = vpack.c.b16 %v4579, %v4575
    %v4924 = vpack.c.b16 %v4580, %v4576
    %v4925 = vpack.c.b16 %v4581, %v4577
    %v4926 = vpack.c.b16 %v4586, %v4582
    %v4927 = vpack.c.b16 %v4587, %v4583
    %v4928 = vpack.c.b16 %v4588, %v4584
    %v4929 = vpack.c.b16 %v4589, %v4585
    %v4930 = vpack.c.b16 %v4594, %v4590
    %v4931 = vpack.c.b16 %v4595, %v4591
    %v4932 = vpack.c.b16 %v4596, %v4592
    %v4933 = vpack.c.b16 %v4597, %v4593
    %v4934 = vpack.c.b16 %v4602, %v4598
    %v4935 = vpack.c.b16 %v4603, %v4599
    %v4936 = vpack.c.b16 %v4604, %v4600
    %v4937 = vpack.c.b16 %v4605, %v4601
    %v4938 = vpack.c.b16 %v4610, %v4606
    %v4939 = vpack.c.b16 %v4611, %v4607
    %v4940 = vpack.c.b16 %v4612, %v4608
    %v4941 = vpack.c.b16 %v4613, %v4609
    %v4942 = vpack.c.b16 %v4618, %v4614
    %v4943 = vpack.c.b16 %v4619, %v4615
    %v4944 = vpack.c.b16 %v4620, %v4616
    %v4945 = vpack.c.b16 %v4621, %v4617
    %v4946 = vpack.c.b16 %v4626, %v4622
    %v4947 = vpack.c.b16 %v4627, %v4623
    %v4948 = vpack.c.b16 %v4628, %v4624
    %v4949 = vpack.c.b16 %v4629, %v4625
    %v4950 = vpack.c.b16 %v4634, %v4630
    %v4951 = vpack.c.b16 %v4635, %v4631
    %v4952 = vpack.c.b16 %v4636, %v4632
    %v4953 = vpack.c.b16 %v4637, %v4633
    %v4954 = vpack.c.b16 %v4642, %v4638
    %v4955 = vpack.c.b16 %v4643, %v4639
    %v4956 = vpack.c.b16 %v4644, %v4640
    %v4957 = vpack.c.b16 %v4645, %v4641
    %v4958 = vpack.c.b16 %v4650, %v4646
    %v4959 = vpack.c.b16 %v4651, %v4647
    %v4960 = vpack.c.b16 %v4652, %v4648
    %v4961 = vpack.c.b16 %v4653, %v4649
    %v4962 = vpack.c.b16 %v4658, %v4654
    %v4963 = vpack.c.b16 %v4659, %v4655
    %v4964 = vpack.c.b16 %v4660, %v4656
    %v4965 = vpack.c.b16 %v4661, %v4657
    %v4966 = vpack.c.b16 %v4666, %v4662
    %v4967 = vpack.c.b16 %v4667, %v4663
    %v4968 = vpack.c.b16 %v4668, %v4664
    %v4969 = vpack.c.b16 %v4669, %v4665
    %v4970 = vpack.c.b16 %v4674, %v4670
    %v4971 = vpack.c.b16 %v4675, %v4671
    %v4972 = vpack.c.b16 %v4676, %v4672
    %v4973 = vpack.c.b16 %v4677, %v4673
    %v4974 = vpack.c.b16 %v4682, %v4678
    %v4975 = vpack.c.b16 %v4683, %v4679
    %v4976 = vpack.c.b16 %v4684, %v4680
    %v4977 = vpack.c.b16 %v4685, %v4681
    %v4978 = vpack.c.b16 %v4690, %v4686
    %v4979 = vpack.c.b16 %v4691, %v4687
    %v4980 = vpack.c.b16 %v4692, %v4688
    %v4981 = vpack.c.b16 %v4693, %v4689
    %v4982 = vpack.c.b16 %v4698, %v4694
    %v4983 = vpack.c.b16 %v4699, %v4695
    %v4984 = vpack.c.b16 %v4700, %v4696
    %v4985 = vpack.c.b16 %v4701, %v4697
    %v4986 = vpack.c.b16 %v4706, %v4702
    %v4987 = vpack.c.b16 %v4707, %v4703
    %v4988 = vpack.c.b16 %v4708, %v4704
    %v4989 = vpack.c.b16 %v4709, %v4705
    %v4990 = vpack.c.b16 %v4714, %v4710
    %v4991 = vpack.c.b16 %v4715, %v4711
    %v4992 = vpack.c.b16 %v4716, %v4712
    %v4993 = vpack.c.b16 %v4717, %v4713
    %v4994 = vpack.c.b16 %v4722, %v4718
    %v4995 = vpack.c.b16 %v4723, %v4719
    %v4996 = vpack.c.b16 %v4724, %v4720
    %v4997 = vpack.c.b16 %v4725, %v4721
    %v4998 = vpack.c.b16 %v4730, %v4726
    %v4999 = vpack.c.b16 %v4731, %v4727
    %v5000 = vpack.c.b16 %v4732, %v4728
    %v5001 = vpack.c.b16 %v4733, %v4729
    %v5002 = vpack.c.b16 %v4738, %v4734
    %v5003 = vpack.c.b16 %v4739, %v4735
    %v5004 = vpack.c.b16 %v4740, %v4736
    %v5005 = vpack.c.b16 %v4741, %v4737
    %v5006 = vpack.c.b16 %v4746, %v4742
    %v5007 = vpack.c.b16 %v4747, %v4743
    %v5008 = vpack.c.b16 %v4748, %v4744
    %v5009 = vpack.c.b16 %v4749, %v4745
    %v5010 = vpack.c.b16 %v4754, %v4750
    %v5011 = vpack.c.b16 %v4755, %v4751
    %v5012 = vpack.c.b16 %v4756, %v4752
    %v5013 = vpack.c.b16 %v4757, %v4753
    %5270 = vmatprep.subr.bf16.mxu0 %v4759
    %5271 = vmatpush1.bf16.msra.mxu0 %v4758
    %5272 = vmatprep.subr.bf16.mxu0 %v4763
    %5273 = vmatpush1.bf16.msra.mxu0 %v4762
    %5274 = vmatprep.subr.bf16.mxu0 %v4767
    %5275 = vmatpush1.bf16.msra.mxu0 %v4766
    %5276 = vmatprep.subr.bf16.mxu0 %v4771
    %5277 = vmatpush1.bf16.msra.mxu0 %v4770
    %5278 = vmatprep.subr.bf16.mxu0 %v4775
    %5279 = vmatpush1.bf16.msra.mxu0 %v4774
    %5280 = vmatprep.subr.bf16.mxu0 %v4779
    %5281 = vmatpush1.bf16.msra.mxu0 %v4778
    %5282 = vmatprep.subr.bf16.mxu0 %v4783
    %5283 = vmatpush1.bf16.msra.mxu0 %v4782
    %5284 = vmatprep.subr.bf16.mxu0 %v4787
    %5285 = vmatpush1.bf16.msra.mxu0 %v4786
    %5286 = vmatprep.subr.bf16.mxu0 %v4791
    %5287 = vmatpush1.bf16.msra.mxu0 %v4790
    %5288 = vmatprep.subr.bf16.mxu0 %v4795
    %5289 = vmatpush1.bf16.msra.mxu0 %v4794
    %5290 = vmatprep.subr.bf16.mxu0 %v4799
    %5291 = vmatpush1.bf16.msra.mxu0 %v4798
    %5292 = vmatprep.subr.bf16.mxu0 %v4803
    %5293 = vmatpush1.bf16.msra.mxu0 %v4802
    %5294 = vmatprep.subr.bf16.mxu0 %v4807
    %5295 = vmatpush1.bf16.msra.mxu0 %v4806
    %5296 = vmatprep.subr.bf16.mxu0 %v4811
    %5297 = vmatpush1.bf16.msra.mxu0 %v4810
    %5298 = vmatprep.subr.bf16.mxu0 %v4815
    %5299 = vmatpush1.bf16.msra.mxu0 %v4814
    %5300 = vmatprep.subr.bf16.mxu0 %v4819
    %5301 = vmatpush1.bf16.msra.mxu0 %v4818
    %5302 = vmatprep.mubr.bf16.mxu0 %v3705
    %5303 = vmatmul.mubr.bf16.gmra.mrb[0].mxu0 %v3704
    %v5304 = vpop.f32.mrb[0].mxu0
    %v5305 = vadd.f32 %v3973, %v5304
    %v5306 = vpop.f32.mrb[0].mxu0
    %v5307 = vadd.f32 %v3977, %v5306
    %v5308 = vpop.f32.mrb[0].mxu0
    %v5309 = vadd.f32 %v3973, %v5308
    %v5310 = vpop.f32.mrb[0].mxu0
    %v5311 = vadd.f32 %v3977, %v5310
    %5312 = vdwg.mxu0
    %5313 = vmatprep.subr.bf16.mxu0 %v4823
    %5314 = vmatpush1.bf16.msra.mxu0 %v4822
    %5315 = vmatprep.subr.bf16.mxu0 %v4827
    %5316 = vmatpush1.bf16.msra.mxu0 %v4826
    %5317 = vmatprep.subr.bf16.mxu0 %v4831
    %5318 = vmatpush1.bf16.msra.mxu0 %v4830
    %5319 = vmatprep.subr.bf16.mxu0 %v4835
    %5320 = vmatpush1.bf16.msra.mxu0 %v4834
    %5321 = vmatprep.subr.bf16.mxu0 %v4839
    %5322 = vmatpush1.bf16.msra.mxu0 %v4838
    %5323 = vmatprep.subr.bf16.mxu0 %v4843
    %5324 = vmatpush1.bf16.msra.mxu0 %v4842
    %5325 = vmatprep.subr.bf16.mxu0 %v4847
    %5326 = vmatpush1.bf16.msra.mxu0 %v4846
    %5327 = vmatprep.subr.bf16.mxu0 %v4851
    %5328 = vmatpush1.bf16.msra.mxu0 %v4850
    %5329 = vmatprep.subr.bf16.mxu0 %v4855
    %5330 = vmatpush1.bf16.msra.mxu0 %v4854
    %5331 = vmatprep.subr.bf16.mxu0 %v4859
    %5332 = vmatpush1.bf16.msra.mxu0 %v4858
    %5333 = vmatprep.subr.bf16.mxu0 %v4863
    %5334 = vmatpush1.bf16.msra.mxu0 %v4862
    %5335 = vmatprep.subr.bf16.mxu0 %v4867
    %5336 = vmatpush1.bf16.msra.mxu0 %v4866
    %5337 = vmatprep.subr.bf16.mxu0 %v4871
    %5338 = vmatpush1.bf16.msra.mxu0 %v4870
    %5339 = vmatprep.subr.bf16.mxu0 %v4875
    %5340 = vmatpush1.bf16.msra.mxu0 %v4874
    %5341 = vmatprep.subr.bf16.mxu0 %v4879
    %5342 = vmatpush1.bf16.msra.mxu0 %v4878
    %5343 = vmatprep.subr.bf16.mxu0 %v4883
    %5344 = vmatpush1.bf16.msra.mxu0 %v4882
    %5345 = vmatprep.mubr.bf16.mxu0 %v3707
    %5346 = vmatmul.mubr.bf16.gmra.mrb[0].mxu0 %v3706
    %v5347 = vpop.f32.mrb[0].mxu0
    %v5348 = vadd.f32 %v5305, %v5347
    %v5349 = vpop.f32.mrb[0].mxu0
    %v5350 = vadd.f32 %v5307, %v5349
    %v5351 = vpop.f32.mrb[0].mxu0
    %v5352 = vadd.f32 %v5309, %v5351
    %v5353 = vpop.f32.mrb[0].mxu0
    %v5354 = vadd.f32 %v5311, %v5353
    %5355 = vdwg.mxu0
    %5356 = vmatprep.subr.bf16.mxu0 %v4887
    %5357 = vmatpush1.bf16.msra.mxu0 %v4886
    %5358 = vmatprep.subr.bf16.mxu0 %v4891
    %5359 = vmatpush1.bf16.msra.mxu0 %v4890
    %5360 = vmatprep.subr.bf16.mxu0 %v4895
    %5361 = vmatpush1.bf16.msra.mxu0 %v4894
    %5362 = vmatprep.subr.bf16.mxu0 %v4899
    %5363 = vmatpush1.bf16.msra.mxu0 %v4898
    %5364 = vmatprep.subr.bf16.mxu0 %v4903
    %5365 = vmatpush1.bf16.msra.mxu0 %v4902
    %5366 = vmatprep.subr.bf16.mxu0 %v4907
    %5367 = vmatpush1.bf16.msra.mxu0 %v4906
    %5368 = vmatprep.subr.bf16.mxu0 %v4911
    %5369 = vmatpush1.bf16.msra.mxu0 %v4910
    %5370 = vmatprep.subr.bf16.mxu0 %v4915
    %5371 = vmatpush1.bf16.msra.mxu0 %v4914
    %5372 = vmatprep.subr.bf16.mxu0 %v4919
    %5373 = vmatpush1.bf16.msra.mxu0 %v4918
    %5374 = vmatprep.subr.bf16.mxu0 %v4923
    %5375 = vmatpush1.bf16.msra.mxu0 %v4922
    %5376 = vmatprep.subr.bf16.mxu0 %v4927
    %5377 = vmatpush1.bf16.msra.mxu0 %v4926
    %5378 = vmatprep.subr.bf16.mxu0 %v4931
    %5379 = vmatpush1.bf16.msra.mxu0 %v4930
    %5380 = vmatprep.subr.bf16.mxu0 %v4935
    %5381 = vmatpush1.bf16.msra.mxu0 %v4934
    %5382 = vmatprep.subr.bf16.mxu0 %v4939
    %5383 = vmatpush1.bf16.msra.mxu0 %v4938
    %5384 = vmatprep.subr.bf16.mxu0 %v4943
    %5385 = vmatpush1.bf16.msra.mxu0 %v4942
    %5386 = vmatprep.subr.bf16.mxu0 %v4947
    %5387 = vmatpush1.bf16.msra.mxu0 %v4946
    %5388 = vmatprep.mubr.bf16.mxu0 %v3709
    %5389 = vmatmul.mubr.bf16.gmra.mrb[0].mxu0 %v3708
    %v5390 = vpop.f32.mrb[0].mxu0
    %v5391 = vadd.f32 %v5348, %v5390
    %v5392 = vpop.f32.mrb[0].mxu0
    %v5393 = vadd.f32 %v5350, %v5392
    %v5394 = vpop.f32.mrb[0].mxu0
    %v5395 = vadd.f32 %v5352, %v5394
    %v5396 = vpop.f32.mrb[0].mxu0
    %v5397 = vadd.f32 %v5354, %v5396
    %5398 = vdwg.mxu0
    %5399 = vmatprep.subr.bf16.mxu0 %v4951
    %5400 = vmatpush1.bf16.msra.mxu0 %v4950
    %5401 = vmatprep.subr.bf16.mxu0 %v4955
    %5402 = vmatpush1.bf16.msra.mxu0 %v4954
    %5403 = vmatprep.subr.bf16.mxu0 %v4959
    %5404 = vmatpush1.bf16.msra.mxu0 %v4958
    %5405 = vmatprep.subr.bf16.mxu0 %v4963
    %5406 = vmatpush1.bf16.msra.mxu0 %v4962
    %5407 = vmatprep.subr.bf16.mxu0 %v4967
    %5408 = vmatpush1.bf16.msra.mxu0 %v4966
    %5409 = vmatprep.subr.bf16.mxu0 %v4971
    %5410 = vmatpush1.bf16.msra.mxu0 %v4970
    %5411 = vmatprep.subr.bf16.mxu0 %v4975
    %5412 = vmatpush1.bf16.msra.mxu0 %v4974
    %5413 = vmatprep.subr.bf16.mxu0 %v4979
    %5414 = vmatpush1.bf16.msra.mxu0 %v4978
    %5415 = vmatprep.subr.bf16.mxu0 %v4983
    %5416 = vmatpush1.bf16.msra.mxu0 %v4982
    %5417 = vmatprep.subr.bf16.mxu0 %v4987
    %5418 = vmatpush1.bf16.msra.mxu0 %v4986
    %5419 = vmatprep.subr.bf16.mxu0 %v4991
    %5420 = vmatpush1.bf16.msra.mxu0 %v4990
    %5421 = vmatprep.subr.bf16.mxu0 %v4995
    %5422 = vmatpush1.bf16.msra.mxu0 %v4994
    %5423 = vmatprep.subr.bf16.mxu0 %v4999
    %5424 = vmatpush1.bf16.msra.mxu0 %v4998
    %5425 = vmatprep.subr.bf16.mxu0 %v5003
    %5426 = vmatpush1.bf16.msra.mxu0 %v5002
    %5427 = vmatprep.subr.bf16.mxu0 %v5007
    %5428 = vmatpush1.bf16.msra.mxu0 %v5006
    %5429 = vmatprep.subr.bf16.mxu0 %v5011
    %5430 = vmatpush1.bf16.msra.mxu0 %v5010
    %5431 = vmatprep.mubr.bf16.mxu0 %v3711
    %5432 = vmatmul.mubr.bf16.gmra.mrb[0].mxu0 %v3710
    %v5433 = vpop.f32.mrb[0].mxu0
    %v5434 = vadd.f32 %v5391, %v5433
    %v5435 = vpop.f32.mrb[0].mxu0
    %v5436 = vadd.f32 %v5393, %v5435
    %v5437 = vpop.f32.mrb[0].mxu0
    %v5438 = vadd.f32 %v5395, %v5437
    %v5439 = vpop.f32.mrb[0].mxu0
    %v5440 = vadd.f32 %v5397, %v5439
    %5441 = vdwg.mxu0
    %5442 = vmatprep.subr.bf16.mxu0 %v4761
    %5443 = vmatpush1.bf16.msra.mxu0 %v4760
    %5444 = vmatprep.subr.bf16.mxu0 %v4765
    %5445 = vmatpush1.bf16.msra.mxu0 %v4764
    %5446 = vmatprep.subr.bf16.mxu0 %v4769
    %5447 = vmatpush1.bf16.msra.mxu0 %v4768
    %5448 = vmatprep.subr.bf16.mxu0 %v4773
    %5449 = vmatpush1.bf16.msra.mxu0 %v4772
    %5450 = vmatprep.subr.bf16.mxu0 %v4777
    %5451 = vmatpush1.bf16.msra.mxu0 %v4776
    %5452 = vmatprep.subr.bf16.mxu0 %v4781
    %5453 = vmatpush1.bf16.msra.mxu0 %v4780
    %5454 = vmatprep.subr.bf16.mxu0 %v4785
    %5455 = vmatpush1.bf16.msra.mxu0 %v4784
    %5456 = vmatprep.subr.bf16.mxu0 %v4789
    %5457 = vmatpush1.bf16.msra.mxu0 %v4788
    %5458 = vmatprep.subr.bf16.mxu0 %v4793
    %5459 = vmatpush1.bf16.msra.mxu0 %v4792
    %5460 = vmatprep.subr.bf16.mxu0 %v4797
    %5461 = vmatpush1.bf16.msra.mxu0 %v4796
    %5462 = vmatprep.subr.bf16.mxu0 %v4801
    %5463 = vmatpush1.bf16.msra.mxu0 %v4800
    %5464 = vmatprep.subr.bf16.mxu0 %v4805
    %5465 = vmatpush1.bf16.msra.mxu0 %v4804
    %5466 = vmatprep.subr.bf16.mxu0 %v4809
    %5467 = vmatpush1.bf16.msra.mxu0 %v4808
    %5468 = vmatprep.subr.bf16.mxu0 %v4813
    %5469 = vmatpush1.bf16.msra.mxu0 %v4812
    %5470 = vmatprep.subr.bf16.mxu0 %v4817
    %5471 = vmatpush1.bf16.msra.mxu0 %v4816
    %5472 = vmatprep.subr.bf16.mxu0 %v4821
    %5473 = vmatpush1.bf16.msra.mxu0 %v4820
    %5474 = vmatprep.mubr.bf16.mxu0 %v3705
    %5475 = vmatmul.mubr.bf16.gmra.mrb[0].mxu0 %v3704
    %v5476 = vpop.f32.mrb[0].mxu0
    %v5477 = vadd.f32 %v3981, %v5476
    %v5478 = vpop.f32.mrb[0].mxu0
    %v5479 = vadd.f32 %v3985, %v5478
    %v5480 = vpop.f32.mrb[0].mxu0
    %v5481 = vadd.f32 %v3981, %v5480
    %v5482 = vpop.f32.mrb[0].mxu0
    %v5483 = vadd.f32 %v3985, %v5482
    %5484 = vdwg.mxu0
    %5485 = vmatprep.subr.bf16.mxu0 %v4825
    %5486 = vmatpush1.bf16.msra.mxu0 %v4824
    %5487 = vmatprep.subr.bf16.mxu0 %v4829
    %5488 = vmatpush1.bf16.msra.mxu0 %v4828
    %5489 = vmatprep.subr.bf16.mxu0 %v4833
    %5490 = vmatpush1.bf16.msra.mxu0 %v4832
    %5491 = vmatprep.subr.bf16.mxu0 %v4837
    %5492 = vmatpush1.bf16.msra.mxu0 %v4836
    %5493 = vmatprep.subr.bf16.mxu0 %v4841
    %5494 = vmatpush1.bf16.msra.mxu0 %v4840
    %5495 = vmatprep.subr.bf16.mxu0 %v4845
    %5496 = vmatpush1.bf16.msra.mxu0 %v4844
    %5497 = vmatprep.subr.bf16.mxu0 %v4849
    %5498 = vmatpush1.bf16.msra.mxu0 %v4848
    %5499 = vmatprep.subr.bf16.mxu0 %v4853
    %5500 = vmatpush1.bf16.msra.mxu0 %v4852
    %5501 = vmatprep.subr.bf16.mxu0 %v4857
    %5502 = vmatpush1.bf16.msra.mxu0 %v4856
    %5503 = vmatprep.subr.bf16.mxu0 %v4861
    %5504 = vmatpush1.bf16.msra.mxu0 %v4860
    %5505 = vmatprep.subr.bf16.mxu0 %v4865
    %5506 = vmatpush1.bf16.msra.mxu0 %v4864
    %5507 = vmatprep.subr.bf16.mxu0 %v4869
    %5508 = vmatpush1.bf16.msra.mxu0 %v4868
    %5509 = vmatprep.subr.bf16.mxu0 %v4873
    %5510 = vmatpush1.bf16.msra.mxu0 %v4872
    %5511 = vmatprep.subr.bf16.mxu0 %v4877
    %5512 = vmatpush1.bf16.msra.mxu0 %v4876
    %5513 = vmatprep.subr.bf16.mxu0 %v4881
    %5514 = vmatpush1.bf16.msra.mxu0 %v4880
    %5515 = vmatprep.subr.bf16.mxu0 %v4885
    %5516 = vmatpush1.bf16.msra.mxu0 %v4884
    %5517 = vmatprep.mubr.bf16.mxu0 %v3707
    %5518 = vmatmul.mubr.bf16.gmra.mrb[0].mxu0 %v3706
    %v5519 = vpop.f32.mrb[0].mxu0
    %v5520 = vadd.f32 %v5477, %v5519
    %v5521 = vpop.f32.mrb[0].mxu0
    %v5522 = vadd.f32 %v5479, %v5521
    %v5523 = vpop.f32.mrb[0].mxu0
    %v5524 = vadd.f32 %v5481, %v5523
    %v5525 = vpop.f32.mrb[0].mxu0
    %v5526 = vadd.f32 %v5483, %v5525
    %5527 = vdwg.mxu0
    %5528 = vmatprep.subr.bf16.mxu0 %v4889
    %5529 = vmatpush1.bf16.msra.mxu0 %v4888
    %5530 = vmatprep.subr.bf16.mxu0 %v4893
    %5531 = vmatpush1.bf16.msra.mxu0 %v4892
    %5532 = vmatprep.subr.bf16.mxu0 %v4897
    %5533 = vmatpush1.bf16.msra.mxu0 %v4896
    %5534 = vmatprep.subr.bf16.mxu0 %v4901
    %5535 = vmatpush1.bf16.msra.mxu0 %v4900
    %5536 = vmatprep.subr.bf16.mxu0 %v4905
    %5537 = vmatpush1.bf16.msra.mxu0 %v4904
    %5538 = vmatprep.subr.bf16.mxu0 %v4909
    %5539 = vmatpush1.bf16.msra.mxu0 %v4908
    %5540 = vmatprep.subr.bf16.mxu0 %v4913
    %5541 = vmatpush1.bf16.msra.mxu0 %v4912
    %5542 = vmatprep.subr.bf16.mxu0 %v4917
    %5543 = vmatpush1.bf16.msra.mxu0 %v4916
    %5544 = vmatprep.subr.bf16.mxu0 %v4921
    %5545 = vmatpush1.bf16.msra.mxu0 %v4920
    %5546 = vmatprep.subr.bf16.mxu0 %v4925
    %5547 = vmatpush1.bf16.msra.mxu0 %v4924
    %5548 = vmatprep.subr.bf16.mxu0 %v4929
    %5549 = vmatpush1.bf16.msra.mxu0 %v4928
    %5550 = vmatprep.subr.bf16.mxu0 %v4933
    %5551 = vmatpush1.bf16.msra.mxu0 %v4932
    %5552 = vmatprep.subr.bf16.mxu0 %v4937
    %5553 = vmatpush1.bf16.msra.mxu0 %v4936
    %5554 = vmatprep.subr.bf16.mxu0 %v4941
    %5555 = vmatpush1.bf16.msra.mxu0 %v4940
    %5556 = vmatprep.subr.bf16.mxu0 %v4945
    %5557 = vmatpush1.bf16.msra.mxu0 %v4944
    %5558 = vmatprep.subr.bf16.mxu0 %v4949
    %5559 = vmatpush1.bf16.msra.mxu0 %v4948
    %5560 = vmatprep.mubr.bf16.mxu0 %v3709
    %5561 = vmatmul.mubr.bf16.gmra.mrb[0].mxu0 %v3708
    %v5562 = vpop.f32.mrb[0].mxu0
    %v5563 = vadd.f32 %v5520, %v5562
    %v5564 = vpop.f32.mrb[0].mxu0
    %v5565 = vadd.f32 %v5522, %v5564
    %v5566 = vpop.f32.mrb[0].mxu0
    %v5567 = vadd.f32 %v5524, %v5566
    %v5568 = vpop.f32.mrb[0].mxu0
    %v5569 = vadd.f32 %v5526, %v5568
    %5570 = vdwg.mxu0
    %5571 = vmatprep.subr.bf16.mxu0 %v4953
    %5572 = vmatpush1.bf16.msra.mxu0 %v4952
    %5573 = vmatprep.subr.bf16.mxu0 %v4957
    %5574 = vmatpush1.bf16.msra.mxu0 %v4956
    %5575 = vmatprep.subr.bf16.mxu0 %v4961
    %5576 = vmatpush1.bf16.msra.mxu0 %v4960
    %5577 = vmatprep.subr.bf16.mxu0 %v4965
    %5578 = vmatpush1.bf16.msra.mxu0 %v4964
    %5579 = vmatprep.subr.bf16.mxu0 %v4969
    %5580 = vmatpush1.bf16.msra.mxu0 %v4968
    %5581 = vmatprep.subr.bf16.mxu0 %v4973
    %5582 = vmatpush1.bf16.msra.mxu0 %v4972
    %5583 = vmatprep.subr.bf16.mxu0 %v4977
    %5584 = vmatpush1.bf16.msra.mxu0 %v4976
    %5585 = vmatprep.subr.bf16.mxu0 %v4981
    %5586 = vmatpush1.bf16.msra.mxu0 %v4980
    %5587 = vmatprep.subr.bf16.mxu0 %v4985
    %5588 = vmatpush1.bf16.msra.mxu0 %v4984
    %5589 = vmatprep.subr.bf16.mxu0 %v4989
    %5590 = vmatpush1.bf16.msra.mxu0 %v4988
    %5591 = vmatprep.subr.bf16.mxu0 %v4993
    %5592 = vmatpush1.bf16.msra.mxu0 %v4992
    %5593 = vmatprep.subr.bf16.mxu0 %v4997
    %5594 = vmatpush1.bf16.msra.mxu0 %v4996
    %5595 = vmatprep.subr.bf16.mxu0 %v5001
    %5596 = vmatpush1.bf16.msra.mxu0 %v5000
    %5597 = vmatprep.subr.bf16.mxu0 %v5005
    %5598 = vmatpush1.bf16.msra.mxu0 %v5004
    %5599 = vmatprep.subr.bf16.mxu0 %v5009
    %5600 = vmatpush1.bf16.msra.mxu0 %v5008
    %5601 = vmatprep.subr.bf16.mxu0 %v5013
    %5602 = vmatpush1.bf16.msra.mxu0 %v5012
    %5603 = vmatprep.mubr.bf16.mxu0 %v3711
    %5604 = vmatmul.mubr.bf16.gmra.mrb[0].mxu0 %v3710
    %v5605 = vpop.f32.mrb[0].mxu0
    %v5606 = vadd.f32 %v5563, %v5605
    %v5607 = vpop.f32.mrb[0].mxu0
    %v5608 = vadd.f32 %v5565, %v5607
    %v5609 = vpop.f32.mrb[0].mxu0
    %v5610 = vadd.f32 %v5567, %v5609
    %v5611 = vpop.f32.mrb[0].mxu0
    %v5612 = vadd.f32 %v5569, %v5611
    %5613 = vdwg.mxu0
    %vm5614 = vcmp.gt.f32.partialorder %v5434, 0.0
    %vm5615 = vcmp.gt.f32.partialorder %v5436, 0.0
    %vm5616 = vcmp.gt.f32.partialorder %v5606, 0.0
    %vm5617 = vcmp.gt.f32.partialorder %v5608, 0.0
    %vm5618 = vcmp.gt.f32.partialorder %v5438, 0.0
    %vm5619 = vcmp.gt.f32.partialorder %v5440, 0.0
    %vm5620 = vcmp.gt.f32.partialorder %v5610, 0.0
    %vm5621 = vcmp.gt.f32.partialorder %v5612, 0.0
    %v5622 = vmul.f32 %v5434, 0.2
    %v5623 = vmul.f32 %v5436, 0.2
    %v5624 = vmul.f32 %v5606, 0.2
    %v5625 = vmul.f32 %v5608, 0.2
    %v5626 = vmul.f32 %v5438, 0.2
    %v5627 = vmul.f32 %v5440, 0.2
    %v5628 = vmul.f32 %v5610, 0.2
    %v5629 = vmul.f32 %v5612, 0.2
    %v5630 = vsel %vm5614, %v5434, %v5622
    %v5631 = vsel %vm5615, %v5436, %v5623
    %v5632 = vsel %vm5616, %v5606, %v5624
    %v5633 = vsel %vm5617, %v5608, %v5625
    %v5634 = vsel %vm5618, %v5438, %v5626
    %v5635 = vsel %vm5619, %v5440, %v5627
    %v5636 = vsel %vm5620, %v5610, %v5628
    %v5637 = vsel %vm5621, %v5612, %v5629
    %v5638 = vpack.c.bf16 %v5634, %v5630
    %v5639 = vpack.c.bf16 %v5635, %v5631
    %v5640 = vpack.c.bf16 %v5636, %v5632
    %v5641 = vpack.c.bf16 %v5637, %v5633
    %v5642 = vld [vmem:[#allocation10] sm:$0xff]
    %v5643 = vld [vmem:[#allocation10 + $0x8] sm:$0xff]
    %v5644 = vld [vmem:[#allocation10 + $0x10] sm:$0xff]
    %v5645 = vld [vmem:[#allocation10 + $0x18] sm:$0xff]
    %v5646 = vld [vmem:[#allocation10 + $0x20] sm:$0xff]
    %v5647 = vld [vmem:[#allocation10 + $0x28] sm:$0xff]
    %v5648 = vld [vmem:[#allocation10 + $0x30] sm:$0xff]
    %v5649 = vld [vmem:[#allocation10 + $0x38] sm:$0xff]
    %v5650 = vld [vmem:[#allocation10 + $0x40] sm:$0xff]
    %v5651 = vld [vmem:[#allocation10 + $0x48] sm:$0xff]
    %v5652 = vld [vmem:[#allocation10 + $0x50] sm:$0xff]
    %v5653 = vld [vmem:[#allocation10 + $0x58] sm:$0xff]
    %v5654 = vld [vmem:[#allocation10 + $0x60] sm:$0xff]
    %v5655 = vld [vmem:[#allocation10 + $0x68] sm:$0xff]
    %v5656 = vld [vmem:[#allocation10 + $0x70] sm:$0xff]
    %v5657 = vld [vmem:[#allocation10 + $0x78] sm:$0xff]
    %v5658 = vld [vmem:[#allocation10 + $0x80] sm:$0xff]
    %v5659 = vld [vmem:[#allocation10 + $0x88] sm:$0xff]
    %v5660 = vld [vmem:[#allocation10 + $0x90] sm:$0xff]
    %v5661 = vld [vmem:[#allocation10 + $0x98] sm:$0xff]
    %v5662 = vld [vmem:[#allocation10 + $0xa0] sm:$0xff]
    %v5663 = vld [vmem:[#allocation10 + $0xa8] sm:$0xff]
    %v5664 = vld [vmem:[#allocation10 + $0xb0] sm:$0xff]
    %v5665 = vld [vmem:[#allocation10 + $0xb8] sm:$0xff]
    %v5666 = vld [vmem:[#allocation10 + $0xc0] sm:$0xff]
    %v5667 = vld [vmem:[#allocation10 + $0xc8] sm:$0xff]
    %v5668 = vld [vmem:[#allocation10 + $0xd0] sm:$0xff]
    %v5669 = vld [vmem:[#allocation10 + $0xd8] sm:$0xff]
    %v5670 = vld [vmem:[#allocation10 + $0xe0] sm:$0xff]
    %v5671 = vld [vmem:[#allocation10 + $0xe8] sm:$0xff]
    %v5672 = vld [vmem:[#allocation10 + $0xf0] sm:$0xff]
    %v5673 = vld [vmem:[#allocation10 + $0xf8] sm:$0xff]
    %v5674 = vld [vmem:[#allocation10 + $0x100] sm:$0xff]
    %v5675 = vld [vmem:[#allocation10 + $0x108] sm:$0xff]
    %v5676 = vld [vmem:[#allocation10 + $0x110] sm:$0xff]
    %v5677 = vld [vmem:[#allocation10 + $0x118] sm:$0xff]
    %v5678 = vld [vmem:[#allocation10 + $0x120] sm:$0xff]
    %v5679 = vld [vmem:[#allocation10 + $0x128] sm:$0xff]
    %v5680 = vld [vmem:[#allocation10 + $0x130] sm:$0xff]
    %v5681 = vld [vmem:[#allocation10 + $0x138] sm:$0xff]
    %v5682 = vld [vmem:[#allocation10 + $0x140] sm:$0xff]
    %v5683 = vld [vmem:[#allocation10 + $0x148] sm:$0xff]
    %v5684 = vld [vmem:[#allocation10 + $0x150] sm:$0xff]
    %v5685 = vld [vmem:[#allocation10 + $0x158] sm:$0xff]
    %v5686 = vld [vmem:[#allocation10 + $0x160] sm:$0xff]
    %v5687 = vld [vmem:[#allocation10 + $0x168] sm:$0xff]
    %v5688 = vld [vmem:[#allocation10 + $0x170] sm:$0xff]
    %v5689 = vld [vmem:[#allocation10 + $0x178] sm:$0xff]
    %v5690 = vld [vmem:[#allocation10 + $0x180] sm:$0xff]
    %v5691 = vld [vmem:[#allocation10 + $0x188] sm:$0xff]
    %v5692 = vld [vmem:[#allocation10 + $0x190] sm:$0xff]
    %v5693 = vld [vmem:[#allocation10 + $0x198] sm:$0xff]
    %v5694 = vld [vmem:[#allocation10 + $0x1a0] sm:$0xff]
    %v5695 = vld [vmem:[#allocation10 + $0x1a8] sm:$0xff]
    %v5696 = vld [vmem:[#allocation10 + $0x1b0] sm:$0xff]
    %v5697 = vld [vmem:[#allocation10 + $0x1b8] sm:$0xff]
    %v5698 = vld [vmem:[#allocation10 + $0x1c0] sm:$0xff]
    %v5699 = vld [vmem:[#allocation10 + $0x1c8] sm:$0xff]
    %v5700 = vld [vmem:[#allocation10 + $0x1d0] sm:$0xff]
    %v5701 = vld [vmem:[#allocation10 + $0x1d8] sm:$0xff]
    %v5702 = vld [vmem:[#allocation10 + $0x1e0] sm:$0xff]
    %v5703 = vld [vmem:[#allocation10 + $0x1e8] sm:$0xff]
    %v5704 = vld [vmem:[#allocation10 + $0x1f0] sm:$0xff]
    %v5705 = vld [vmem:[#allocation10 + $0x1f8] sm:$0xff]
    %v5706 = vld [vmem:[#allocation12] sm:$0x3]
    %v5708 = vlaneseq
    %v5709 = vshrl.u32 %v5708, 7
    %v5710 = vsub.s32 0, %v5709
    %v5711 = vrot.slane %v5706, %v5710
    %v5712 = vlaneseq
    %v5713 = vshrl.u32 %v5712, 7
    %v5714 = vsub.s32 1, %v5713
    %v5715 = vrot.slane %v5706, %v5714
    %v5782 = vunpack.c.l.b16 %v5642
    %v5783 = vunpack.c.h.b16 %v5642
    %v5784 = vunpack.c.l.b16 %v5643
    %v5785 = vunpack.c.h.b16 %v5643
    %v5786 = vunpack.c.l.b16 %v5644
    %v5787 = vunpack.c.h.b16 %v5644
    %v5788 = vunpack.c.l.b16 %v5645
    %v5789 = vunpack.c.h.b16 %v5645
    %v5790 = vunpack.c.l.b16 %v5646
    %v5791 = vunpack.c.h.b16 %v5646
    %v5792 = vunpack.c.l.b16 %v5647
    %v5793 = vunpack.c.h.b16 %v5647
    %v5794 = vunpack.c.l.b16 %v5648
    %v5795 = vunpack.c.h.b16 %v5648
    %v5796 = vunpack.c.l.b16 %v5649
    %v5797 = vunpack.c.h.b16 %v5649
    %v5798 = vunpack.c.l.b16 %v5650
    %v5799 = vunpack.c.h.b16 %v5650
    %v5800 = vunpack.c.l.b16 %v5651
    %v5801 = vunpack.c.h.b16 %v5651
    %v5802 = vunpack.c.l.b16 %v5652
    %v5803 = vunpack.c.h.b16 %v5652
    %v5804 = vunpack.c.l.b16 %v5653
    %v5805 = vunpack.c.h.b16 %v5653
    %v5806 = vunpack.c.l.b16 %v5654
    %v5807 = vunpack.c.h.b16 %v5654
    %v5808 = vunpack.c.l.b16 %v5655
    %v5809 = vunpack.c.h.b16 %v5655
    %v5810 = vunpack.c.l.b16 %v5656
    %v5811 = vunpack.c.h.b16 %v5656
    %v5812 = vunpack.c.l.b16 %v5657
    %v5813 = vunpack.c.h.b16 %v5657
    %v5814 = vunpack.c.l.b16 %v5658
    %v5815 = vunpack.c.h.b16 %v5658
    %v5816 = vunpack.c.l.b16 %v5659
    %v5817 = vunpack.c.h.b16 %v5659
    %v5818 = vunpack.c.l.b16 %v5660
    %v5819 = vunpack.c.h.b16 %v5660
    %v5820 = vunpack.c.l.b16 %v5661
    %v5821 = vunpack.c.h.b16 %v5661
    %v5822 = vunpack.c.l.b16 %v5662
    %v5823 = vunpack.c.h.b16 %v5662
    %v5824 = vunpack.c.l.b16 %v5663
    %v5825 = vunpack.c.h.b16 %v5663
    %v5826 = vunpack.c.l.b16 %v5664
    %v5827 = vunpack.c.h.b16 %v5664
    %v5828 = vunpack.c.l.b16 %v5665
    %v5829 = vunpack.c.h.b16 %v5665
    %v5830 = vunpack.c.l.b16 %v5666
    %v5831 = vunpack.c.h.b16 %v5666
    %v5832 = vunpack.c.l.b16 %v5667
    %v5833 = vunpack.c.h.b16 %v5667
    %v5834 = vunpack.c.l.b16 %v5668
    %v5835 = vunpack.c.h.b16 %v5668
    %v5836 = vunpack.c.l.b16 %v5669
    %v5837 = vunpack.c.h.b16 %v5669
    %v5838 = vunpack.c.l.b16 %v5670
    %v5839 = vunpack.c.h.b16 %v5670
    %v5840 = vunpack.c.l.b16 %v5671
    %v5841 = vunpack.c.h.b16 %v5671
    %v5842 = vunpack.c.l.b16 %v5672
    %v5843 = vunpack.c.h.b16 %v5672
    %v5844 = vunpack.c.l.b16 %v5673
    %v5845 = vunpack.c.h.b16 %v5673
    %v5846 = vunpack.c.l.b16 %v5674
    %v5847 = vunpack.c.h.b16 %v5674
    %v5848 = vunpack.c.l.b16 %v5675
    %v5849 = vunpack.c.h.b16 %v5675
    %v5850 = vunpack.c.l.b16 %v5676
    %v5851 = vunpack.c.h.b16 %v5676
    %v5852 = vunpack.c.l.b16 %v5677
    %v5853 = vunpack.c.h.b16 %v5677
    %v5854 = vunpack.c.l.b16 %v5678
    %v5855 = vunpack.c.h.b16 %v5678
    %v5856 = vunpack.c.l.b16 %v5679
    %v5857 = vunpack.c.h.b16 %v5679
    %v5858 = vunpack.c.l.b16 %v5680
    %v5859 = vunpack.c.h.b16 %v5680
    %v5860 = vunpack.c.l.b16 %v5681
    %v5861 = vunpack.c.h.b16 %v5681
    %v5862 = vunpack.c.l.b16 %v5682
    %v5863 = vunpack.c.h.b16 %v5682
    %v5864 = vunpack.c.l.b16 %v5683
    %v5865 = vunpack.c.h.b16 %v5683
    %v5866 = vunpack.c.l.b16 %v5684
    %v5867 = vunpack.c.h.b16 %v5684
    %v5868 = vunpack.c.l.b16 %v5685
    %v5869 = vunpack.c.h.b16 %v5685
    %v5870 = vunpack.c.l.b16 %v5686
    %v5871 = vunpack.c.h.b16 %v5686
    %v5872 = vunpack.c.l.b16 %v5687
    %v5873 = vunpack.c.h.b16 %v5687
    %v5874 = vunpack.c.l.b16 %v5688
    %v5875 = vunpack.c.h.b16 %v5688
    %v5876 = vunpack.c.l.b16 %v5689
    %v5877 = vunpack.c.h.b16 %v5689
    %v5878 = vunpack.c.l.b16 %v5690
    %v5879 = vunpack.c.h.b16 %v5690
    %v5880 = vunpack.c.l.b16 %v5691
    %v5881 = vunpack.c.h.b16 %v5691
    %v5882 = vunpack.c.l.b16 %v5692
    %v5883 = vunpack.c.h.b16 %v5692
    %v5884 = vunpack.c.l.b16 %v5693
    %v5885 = vunpack.c.h.b16 %v5693
    %v5886 = vunpack.c.l.b16 %v5694
    %v5887 = vunpack.c.h.b16 %v5694
    %v5888 = vunpack.c.l.b16 %v5695
    %v5889 = vunpack.c.h.b16 %v5695
    %v5890 = vunpack.c.l.b16 %v5696
    %v5891 = vunpack.c.h.b16 %v5696
    %v5892 = vunpack.c.l.b16 %v5697
    %v5893 = vunpack.c.h.b16 %v5697
    %v5894 = vunpack.c.l.b16 %v5698
    %v5895 = vunpack.c.h.b16 %v5698
    %v5896 = vunpack.c.l.b16 %v5699
    %v5897 = vunpack.c.h.b16 %v5699
    %v5898 = vunpack.c.l.b16 %v5700
    %v5899 = vunpack.c.h.b16 %v5700
    %v5900 = vunpack.c.l.b16 %v5701
    %v5901 = vunpack.c.h.b16 %v5701
    %v5902 = vunpack.c.l.b16 %v5702
    %v5903 = vunpack.c.h.b16 %v5702
    %v5904 = vunpack.c.l.b16 %v5703
    %v5905 = vunpack.c.h.b16 %v5703
    %v5906 = vunpack.c.l.b16 %v5704
    %v5907 = vunpack.c.h.b16 %v5704
    %v5908 = vunpack.c.l.b16 %v5705
    %v5909 = vunpack.c.h.b16 %v5705
    %v5910 = vpack.c.b16 %v5784, %v5782
    %v5911 = vpack.c.b16 %v5785, %v5783
    %v5912 = vpack.c.b16 %v5788, %v5786
    %v5913 = vpack.c.b16 %v5789, %v5787
    %v5914 = vpack.c.b16 %v5792, %v5790
    %v5915 = vpack.c.b16 %v5793, %v5791
    %v5916 = vpack.c.b16 %v5796, %v5794
    %v5917 = vpack.c.b16 %v5797, %v5795
    %v5918 = vpack.c.b16 %v5800, %v5798
    %v5919 = vpack.c.b16 %v5801, %v5799
    %v5920 = vpack.c.b16 %v5804, %v5802
    %v5921 = vpack.c.b16 %v5805, %v5803
    %v5922 = vpack.c.b16 %v5808, %v5806
    %v5923 = vpack.c.b16 %v5809, %v5807
    %v5924 = vpack.c.b16 %v5812, %v5810
    %v5925 = vpack.c.b16 %v5813, %v5811
    %v5926 = vpack.c.b16 %v5816, %v5814
    %v5927 = vpack.c.b16 %v5817, %v5815
    %v5928 = vpack.c.b16 %v5820, %v5818
    %v5929 = vpack.c.b16 %v5821, %v5819
    %v5930 = vpack.c.b16 %v5824, %v5822
    %v5931 = vpack.c.b16 %v5825, %v5823
    %v5932 = vpack.c.b16 %v5828, %v5826
    %v5933 = vpack.c.b16 %v5829, %v5827
    %v5934 = vpack.c.b16 %v5832, %v5830
    %v5935 = vpack.c.b16 %v5833, %v5831
    %v5936 = vpack.c.b16 %v5836, %v5834
    %v5937 = vpack.c.b16 %v5837, %v5835
    %v5938 = vpack.c.b16 %v5840, %v5838
    %v5939 = vpack.c.b16 %v5841, %v5839
    %v5940 = vpack.c.b16 %v5844, %v5842
    %v5941 = vpack.c.b16 %v5845, %v5843
    %v5942 = vpack.c.b16 %v5848, %v5846
    %v5943 = vpack.c.b16 %v5849, %v5847
    %v5944 = vpack.c.b16 %v5852, %v5850
    %v5945 = vpack.c.b16 %v5853, %v5851
    %v5946 = vpack.c.b16 %v5856, %v5854
    %v5947 = vpack.c.b16 %v5857, %v5855
    %v5948 = vpack.c.b16 %v5860, %v5858
    %v5949 = vpack.c.b16 %v5861, %v5859
    %v5950 = vpack.c.b16 %v5864, %v5862
    %v5951 = vpack.c.b16 %v5865, %v5863
    %v5952 = vpack.c.b16 %v5868, %v5866
    %v5953 = vpack.c.b16 %v5869, %v5867
    %v5954 = vpack.c.b16 %v5872, %v5870
    %v5955 = vpack.c.b16 %v5873, %v5871
    %v5956 = vpack.c.b16 %v5876, %v5874
    %v5957 = vpack.c.b16 %v5877, %v5875
    %v5958 = vpack.c.b16 %v5880, %v5878
    %v5959 = vpack.c.b16 %v5881, %v5879
    %v5960 = vpack.c.b16 %v5884, %v5882
    %v5961 = vpack.c.b16 %v5885, %v5883
    %v5962 = vpack.c.b16 %v5888, %v5886
    %v5963 = vpack.c.b16 %v5889, %v5887
    %v5964 = vpack.c.b16 %v5892, %v5890
    %v5965 = vpack.c.b16 %v5893, %v5891
    %v5966 = vpack.c.b16 %v5896, %v5894
    %v5967 = vpack.c.b16 %v5897, %v5895
    %v5968 = vpack.c.b16 %v5900, %v5898
    %v5969 = vpack.c.b16 %v5901, %v5899
    %v5970 = vpack.c.b16 %v5904, %v5902
    %v5971 = vpack.c.b16 %v5905, %v5903
    %v5972 = vpack.c.b16 %v5908, %v5906
    %v5973 = vpack.c.b16 %v5909, %v5907
    %6038 = vmatprep.subr.bf16.mxu0 %v5911
    %6039 = vmatpush1.bf16.msra.mxu0 %v5910
    %6040 = vmatprep.subr.bf16.mxu0 %v5913
    %6041 = vmatpush1.bf16.msra.mxu0 %v5912
    %6042 = vmatprep.subr.bf16.mxu0 %v5915
    %6043 = vmatpush1.bf16.msra.mxu0 %v5914
    %6044 = vmatprep.subr.bf16.mxu0 %v5917
    %6045 = vmatpush1.bf16.msra.mxu0 %v5916
    %6046 = vmatprep.subr.bf16.mxu0 %v5919
    %6047 = vmatpush1.bf16.msra.mxu0 %v5918
    %6048 = vmatprep.subr.bf16.mxu0 %v5921
    %6049 = vmatpush1.bf16.msra.mxu0 %v5920
    %6050 = vmatprep.subr.bf16.mxu0 %v5923
    %6051 = vmatpush1.bf16.msra.mxu0 %v5922
    %6052 = vmatprep.subr.bf16.mxu0 %v5925
    %6053 = vmatpush1.bf16.msra.mxu0 %v5924
    %6054 = vmatprep.subr.bf16.mxu0 %v5927
    %6055 = vmatpush1.bf16.msra.mxu0 %v5926
    %6056 = vmatprep.subr.bf16.mxu0 %v5929
    %6057 = vmatpush1.bf16.msra.mxu0 %v5928
    %6058 = vmatprep.subr.bf16.mxu0 %v5931
    %6059 = vmatpush1.bf16.msra.mxu0 %v5930
    %6060 = vmatprep.subr.bf16.mxu0 %v5933
    %6061 = vmatpush1.bf16.msra.mxu0 %v5932
    %6062 = vmatprep.subr.bf16.mxu0 %v5935
    %6063 = vmatpush1.bf16.msra.mxu0 %v5934
    %6064 = vmatprep.subr.bf16.mxu0 %v5937
    %6065 = vmatpush1.bf16.msra.mxu0 %v5936
    %6066 = vmatprep.subr.bf16.mxu0 %v5939
    %6067 = vmatpush1.bf16.msra.mxu0 %v5938
    %6068 = vmatprep.subr.bf16.mxu0 %v5941
    %6069 = vmatpush1.bf16.msra.mxu0 %v5940
    %6070 = vmatprep.mubr.bf16.mxu0 %v5639
    %6071 = vmatmul.mubr.bf16.gmra.mrb[0].mxu0 %v5638
    %v6072 = vpop.f32.mrb[0].mxu0
    %v6073 = vadd.f32 %v5711, %v6072
    %v6074 = vpop.f32.mrb[0].mxu0
    %v6075 = vadd.f32 %v5715, %v6074
    %v6076 = vpop.f32.mrb[0].mxu0
    %v6077 = vadd.f32 %v5711, %v6076
    %v6078 = vpop.f32.mrb[0].mxu0
    %v6079 = vadd.f32 %v5715, %v6078
    %6080 = vdwg.mxu0
    %6081 = vmatprep.subr.bf16.mxu0 %v5943
    %6082 = vmatpush1.bf16.msra.mxu0 %v5942
    %6083 = vmatprep.subr.bf16.mxu0 %v5945
    %6084 = vmatpush1.bf16.msra.mxu0 %v5944
    %6085 = vmatprep.subr.bf16.mxu0 %v5947
    %6086 = vmatpush1.bf16.msra.mxu0 %v5946
    %6087 = vmatprep.subr.bf16.mxu0 %v5949
    %6088 = vmatpush1.bf16.msra.mxu0 %v5948
    %6089 = vmatprep.subr.bf16.mxu0 %v5951
    %6090 = vmatpush1.bf16.msra.mxu0 %v5950
    %6091 = vmatprep.subr.bf16.mxu0 %v5953
    %6092 = vmatpush1.bf16.msra.mxu0 %v5952
    %6093 = vmatprep.subr.bf16.mxu0 %v5955
    %6094 = vmatpush1.bf16.msra.mxu0 %v5954
    %6095 = vmatprep.subr.bf16.mxu0 %v5957
    %6096 = vmatpush1.bf16.msra.mxu0 %v5956
    %6097 = vmatprep.subr.bf16.mxu0 %v5959
    %6098 = vmatpush1.bf16.msra.mxu0 %v5958
    %6099 = vmatprep.subr.bf16.mxu0 %v5961
    %6100 = vmatpush1.bf16.msra.mxu0 %v5960
    %6101 = vmatprep.subr.bf16.mxu0 %v5963
    %6102 = vmatpush1.bf16.msra.mxu0 %v5962
    %6103 = vmatprep.subr.bf16.mxu0 %v5965
    %6104 = vmatpush1.bf16.msra.mxu0 %v5964
    %6105 = vmatprep.subr.bf16.mxu0 %v5967
    %6106 = vmatpush1.bf16.msra.mxu0 %v5966
    %6107 = vmatprep.subr.bf16.mxu0 %v5969
    %6108 = vmatpush1.bf16.msra.mxu0 %v5968
    %6109 = vmatprep.subr.bf16.mxu0 %v5971
    %6110 = vmatpush1.bf16.msra.mxu0 %v5970
    %6111 = vmatprep.subr.bf16.mxu0 %v5973
    %6112 = vmatpush1.bf16.msra.mxu0 %v5972
    %6113 = vmatprep.mubr.bf16.mxu0 %v5641
    %6114 = vmatmul.mubr.bf16.gmra.mrb[0].mxu0 %v5640
    %v6115 = vpop.f32.mrb[0].mxu0
    %v6116 = vadd.f32 %v6073, %v6115
    %v6117 = vpop.f32.mrb[0].mxu0
    %v6118 = vadd.f32 %v6075, %v6117
    %v6119 = vpop.f32.mrb[0].mxu0
    %v6120 = vadd.f32 %v6077, %v6119
    %v6121 = vpop.f32.mrb[0].mxu0
    %v6122 = vadd.f32 %v6079, %v6121
    %6123 = vdwg.mxu0
    %vm6124 = vcmp.gt.f32.partialorder %v6116, 0.0
    %vm6125 = vcmp.gt.f32.partialorder %v6118, 0.0
    %vm6126 = vcmp.gt.f32.partialorder %v6120, 0.0
    %vm6127 = vcmp.gt.f32.partialorder %v6122, 0.0
    %v6128 = vmul.f32 %v6116, 0.2
    %v6129 = vmul.f32 %v6118, 0.2
    %v6130 = vmul.f32 %v6120, 0.2
    %v6131 = vmul.f32 %v6122, 0.2
    %v6132 = vsel %vm6124, %v6116, %v6128
    %v6133 = vsel %vm6125, %v6118, %v6129
    %v6134 = vsel %vm6126, %v6120, %v6130
    %v6135 = vsel %vm6127, %v6122, %v6131
    %v6136 = vpack.c.bf16 %v6134, %v6132
    %v6137 = vpack.c.bf16 %v6135, %v6133
    %v6138 = vld [vmem:[#allocation13] sm:$0xf]
    %v6139 = vld [vmem:[#allocation13 + $0x4] sm:$0xf]
    %v6140 = vld [vmem:[#allocation13 + $0x8] sm:$0xf]
    %v6141 = vld [vmem:[#allocation13 + $0xc] sm:$0xf]
    %v6142 = vld [vmem:[#allocation13 + $0x10] sm:$0xf]
    %v6143 = vld [vmem:[#allocation13 + $0x14] sm:$0xf]
    %v6144 = vld [vmem:[#allocation13 + $0x18] sm:$0xf]
    %v6145 = vld [vmem:[#allocation13 + $0x1c] sm:$0xf]
    %v6146 = vld [vmem:[#allocation13 + $0x20] sm:$0xf]
    %v6147 = vld [vmem:[#allocation13 + $0x24] sm:$0xf]
    %v6148 = vld [vmem:[#allocation13 + $0x28] sm:$0xf]
    %v6149 = vld [vmem:[#allocation13 + $0x2c] sm:$0xf]
    %v6150 = vld [vmem:[#allocation13 + $0x30] sm:$0xf]
    %v6151 = vld [vmem:[#allocation13 + $0x34] sm:$0xf]
    %v6152 = vld [vmem:[#allocation13 + $0x38] sm:$0xf]
    %v6153 = vld [vmem:[#allocation13 + $0x3c] sm:$0xf]
    %v6154 = vld [vmem:[#allocation13 + $0x40] sm:$0xf]
    %v6155 = vld [vmem:[#allocation13 + $0x44] sm:$0xf]
    %v6156 = vld [vmem:[#allocation13 + $0x48] sm:$0xf]
    %v6157 = vld [vmem:[#allocation13 + $0x4c] sm:$0xf]
    %v6158 = vld [vmem:[#allocation13 + $0x50] sm:$0xf]
    %v6159 = vld [vmem:[#allocation13 + $0x54] sm:$0xf]
    %v6160 = vld [vmem:[#allocation13 + $0x58] sm:$0xf]
    %v6161 = vld [vmem:[#allocation13 + $0x5c] sm:$0xf]
    %v6162 = vld [vmem:[#allocation13 + $0x60] sm:$0xf]
    %v6163 = vld [vmem:[#allocation13 + $0x64] sm:$0xf]
    %v6164 = vld [vmem:[#allocation13 + $0x68] sm:$0xf]
    %v6165 = vld [vmem:[#allocation13 + $0x6c] sm:$0xf]
    %v6166 = vld [vmem:[#allocation13 + $0x70] sm:$0xf]
    %v6167 = vld [vmem:[#allocation13 + $0x74] sm:$0xf]
    %v6168 = vld [vmem:[#allocation13 + $0x78] sm:$0xf]
    %v6169 = vld [vmem:[#allocation13 + $0x7c] sm:$0xf]
    %v6170 = vld [vmem:[#allocation15] sm:$0x1]
    %v6172 = vlaneseq
    %v6173 = vshrl.u32 %v6172, 7
    %v6174 = vsub.s32 0, %v6173
    %v6175 = vrot.slane %v6170, %v6174
    %v6209 = vunpack.c.l.b16 %v6138
    %v6210 = vunpack.c.l.b16 %v6139
    %v6211 = vunpack.c.l.b16 %v6140
    %v6212 = vunpack.c.l.b16 %v6141
    %v6213 = vunpack.c.l.b16 %v6142
    %v6214 = vunpack.c.l.b16 %v6143
    %v6215 = vunpack.c.l.b16 %v6144
    %v6216 = vunpack.c.l.b16 %v6145
    %v6217 = vunpack.c.l.b16 %v6146
    %v6218 = vunpack.c.l.b16 %v6147
    %v6219 = vunpack.c.l.b16 %v6148
    %v6220 = vunpack.c.l.b16 %v6149
    %v6221 = vunpack.c.l.b16 %v6150
    %v6222 = vunpack.c.l.b16 %v6151
    %v6223 = vunpack.c.l.b16 %v6152
    %v6224 = vunpack.c.l.b16 %v6153
    %v6225 = vunpack.c.l.b16 %v6154
    %v6226 = vunpack.c.l.b16 %v6155
    %v6227 = vunpack.c.l.b16 %v6156
    %v6228 = vunpack.c.l.b16 %v6157
    %v6229 = vunpack.c.l.b16 %v6158
    %v6230 = vunpack.c.l.b16 %v6159
    %v6231 = vunpack.c.l.b16 %v6160
    %v6232 = vunpack.c.l.b16 %v6161
    %v6233 = vunpack.c.l.b16 %v6162
    %v6234 = vunpack.c.l.b16 %v6163
    %v6235 = vunpack.c.l.b16 %v6164
    %v6236 = vunpack.c.l.b16 %v6165
    %v6237 = vunpack.c.l.b16 %v6166
    %v6238 = vunpack.c.l.b16 %v6167
    %v6239 = vunpack.c.l.b16 %v6168
    %v6240 = vunpack.c.l.b16 %v6169
    %v6241 = vpack.c.b16 %v6210, %v6209
    %v6242 = vpack.c.b16 %v6212, %v6211
    %v6243 = vpack.c.b16 %v6214, %v6213
    %v6244 = vpack.c.b16 %v6216, %v6215
    %v6245 = vpack.c.b16 %v6218, %v6217
    %v6246 = vpack.c.b16 %v6220, %v6219
    %v6247 = vpack.c.b16 %v6222, %v6221
    %v6248 = vpack.c.b16 %v6224, %v6223
    %v6249 = vpack.c.b16 %v6226, %v6225
    %v6250 = vpack.c.b16 %v6228, %v6227
    %v6251 = vpack.c.b16 %v6230, %v6229
    %v6252 = vpack.c.b16 %v6232, %v6231
    %v6253 = vpack.c.b16 %v6234, %v6233
    %v6254 = vpack.c.b16 %v6236, %v6235
    %v6255 = vpack.c.b16 %v6238, %v6237
    %v6256 = vpack.c.b16 %v6240, %v6239
    %6273 = vmatprep.subr.bf16.mxu0 0
    %6274 = vmatpush1.bf16.msra.mxu0 %v6241
    %6275 = vmatprep.subr.bf16.mxu0 0
    %6276 = vmatpush1.bf16.msra.mxu0 %v6242
    %6277 = vmatprep.subr.bf16.mxu0 0
    %6278 = vmatpush1.bf16.msra.mxu0 %v6243
    %6279 = vmatprep.subr.bf16.mxu0 0
    %6280 = vmatpush1.bf16.msra.mxu0 %v6244
    %6281 = vmatprep.subr.bf16.mxu0 0
    %6282 = vmatpush1.bf16.msra.mxu0 %v6245
    %6283 = vmatprep.subr.bf16.mxu0 0
    %6284 = vmatpush1.bf16.msra.mxu0 %v6246
    %6285 = vmatprep.subr.bf16.mxu0 0
    %6286 = vmatpush1.bf16.msra.mxu0 %v6247
    %6287 = vmatprep.subr.bf16.mxu0 0
    %6288 = vmatpush1.bf16.msra.mxu0 %v6248
    %6289 = vmatprep.subr.bf16.mxu0 0
    %6290 = vmatpush1.bf16.msra.mxu0 %v6249
    %6291 = vmatprep.subr.bf16.mxu0 0
    %6292 = vmatpush1.bf16.msra.mxu0 %v6250
    %6293 = vmatprep.subr.bf16.mxu0 0
    %6294 = vmatpush1.bf16.msra.mxu0 %v6251
    %6295 = vmatprep.subr.bf16.mxu0 0
    %6296 = vmatpush1.bf16.msra.mxu0 %v6252
    %6297 = vmatprep.subr.bf16.mxu0 0
    %6298 = vmatpush1.bf16.msra.mxu0 %v6253
    %6299 = vmatprep.subr.bf16.mxu0 0
    %6300 = vmatpush1.bf16.msra.mxu0 %v6254
    %6301 = vmatprep.subr.bf16.mxu0 0
    %6302 = vmatpush1.bf16.msra.mxu0 %v6255
    %6303 = vmatprep.subr.bf16.mxu0 0
    %6304 = vmatpush1.bf16.msra.mxu0 %v6256
    %6305 = vmatprep.mubr.bf16.mxu0 %v6137
    %6306 = vmatmul.mubr.bf16.gmra.mrb[0].mxu0 %v6136
    %v6307 = vpop.f32.mrb[0].mxu0
    %v6308 = vadd.f32 %v6175, %v6307
    %v6309 = vpop.f32.mrb[0].mxu0
    %v6310 = vpop.f32.mrb[0].mxu0
    %v6311 = vadd.f32 %v6175, %v6310
    %v6312 = vpop.f32.mrb[0].mxu0
    %6313 = vdwg.mxu0
    %v6314 = vsub.f32 0.0, %v6308
    %v6315 = vsub.f32 0.0, %v6311
    %v6316 = vmul.f32 %v6314, 1.442695
    %v6317 = vpow.pop %v6316
    %v6318 = vmul.f32 %v6315, 1.442695
    %v6319 = vpow.pop %v6318
    %v6320 = vadd.f32 %v6317, 1.0
    %v6321 = vadd.f32 %v6319, 1.0
    %v6322 = vrcp.pop %v6320
    %v6323 = vrcp.pop %v6321
    %6324 = vst [vmem:[%s11] sm:$0xff] %v6322
    %6325 = vst [vmem:[%s11 + $0x8] sm:$0xff] %v6323
    // Predicated region
    $region82: #{discriminator_forward.1} parent=1 // pred_check
      _
    $region83: #{discriminator_forward.1} parent=1 // pred_check_branch
      %6327 = sbr.rel (0) target = $region85
    $region84: #{discriminator_forward.1} parent=1 // pred_region
      _
    $region85: #{discriminator_forward.1} parent=1 // pred_fallthru
      _
    // Predicated region
    $region86: #{discriminator_forward.1} parent=1 // pred_check
      _
    $region87: #{discriminator_forward.1} parent=1 // pred_check_branch
      %6329 = sbr.rel (0) target = $region89
    $region88: #{discriminator_forward.1} parent=1 // pred_region
      _
    $region89: #{discriminator_forward.1} parent=1 // pred_fallthru
      _
    %6330 = vsyncpa [#allocation3], 1
    %6331 = vsyncpa [#allocation5], 1
    %6332 = vsyncpa [#allocation8], 1
    %6333 = vsyncpa [#allocation11], 1
    %6334 = vsyncpa [#allocation14], 1

// kernel: discriminator_forward.1
$region0: #{discriminator_forward.1}
  #allocation0 [shape = 'u32[]', space=smem, size = 0x4, offset = 0x4, fixed_abs, tag = 'smem constant byte address 0x4 - core index']
  #allocation1 [shape = 'u32[144,128]{1,0:T(1,128)}', space=vmem, size = 0x12000, scoped, tag = 'internal scratch']
  %s0 = inlined_call_operand.vmem [shape: bf16[16,784], index: 0, kind: input, shape index: {}]
  %s1 = inlined_call_operand.vmem [shape: f32[16,10], index: 1, kind: input, shape index: {}]
  %s2 = inlined_call_operand.hbm [shape: bf16[784,1024], index: 2, kind: input, shape index: {}]
  %s3 = inlined_call_operand.hbm [shape: f32[10,1024], index: 3, kind: input, shape index: {}]
  %s4 = inlined_call_operand.hbm [shape: f32[1,1024], index: 4, kind: input, shape index: {}]
  %s5 = inlined_call_operand.hbm [shape: bf16[1024,512], index: 5, kind: input, shape index: {}]
  %s6 = inlined_call_operand.hbm [shape: f32[1,512], index: 6, kind: input, shape index: {}]
  %s7 = inlined_call_operand.hbm [shape: bf16[512,256], index: 7, kind: input, shape index: {}]
  %s8 = inlined_call_operand.hbm [shape: f32[1,256], index: 8, kind: input, shape index: {}]
  %s9 = inlined_call_operand.hbm [shape: bf16[256,128], index: 9, kind: input, shape index: {}]
  %s10 = inlined_call_operand.hbm [shape: f32[1,128], index: 10, kind: input, shape index: {}]
  %s11 = inlined_call_operand.vmem [shape: f32[16,128], index: 11, kind: output, shape index: {}]
  %s12 = sld [smem:[#allocation0]]
  $region90: #{discriminator_forward.1} parent=0
    _
  %s14 = ssub.s32 1, %s12
  %s15 = scalar_select 0, %s14, %s12
  $region1: #{discriminator_forward.1} parent=0
    #allocation2 [shape = 'u8[1605632]{0}', space=vmem, size = 0x188000, scoped, tag = 'input window, operand 2, single buffered']
    #allocation3 [shape = 's32[1]{0}', space=sflag, size = 0x4, scoped, tag = 'scoped memory for discriminator_forward.1']
    #allocation4 [shape = 'u8[65536]{0}', space=vmem, size = 0x10000, scoped, tag = 'input window, operand 3, single buffered']
    #allocation5 [shape = 's32[1]{0}', space=sflag, size = 0x4, scoped, tag = 'scoped memory for discriminator_forward.1']
    #allocation6 [shape = 'u8[4096]{0}', space=vmem, size = 0x1000, scoped, tag = 'input window, operand 4, single buffered']
    #allocation7 [shape = 'u8[1048576]{0}', space=vmem, size = 0x100000, scoped, tag = 'input window, operand 5, single buffered']
    #allocation8 [shape = 's32[1]{0}', space=sflag, size = 0x4, scoped, tag = 'scoped memory for discriminator_forward.1']
    #allocation9 [shape = 'u8[2048]{0}', space=vmem, size = 0x800, scoped, tag = 'input window, operand 6, single buffered']
    #allocation10 [shape = 'u8[262144]{0}', space=vmem, size = 0x40000, scoped, tag = 'input window, operand 7, single buffered']
    #allocation11 [shape = 's32[1]{0}', space=sflag, size = 0x4, scoped, tag = 'scoped memory for discriminator_forward.1']
    #allocation12 [shape = 'u8[1024]{0}', space=vmem, size = 0x400, scoped, tag = 'input window, operand 8, single buffered']
    #allocation13 [shape = 'u8[65536]{0}', space=vmem, size = 0x10000, scoped, tag = 'input window, operand 9, single buffered']
    #allocation14 [shape = 's32[1]{0}', space=sflag, size = 0x4, scoped, tag = 'scoped memory for discriminator_forward.1']
    #allocation15 [shape = 'u8[512]{0}', space=vmem, size = 0x400, scoped, tag = 'input window, operand 10, single buffered']
    %16 = vsyncpa [#allocation3], 0
    %17 = vsyncpa [#allocation5], 0
    %18 = vsyncpa [#allocation8], 0
    %19 = vsyncpa [#allocation11], 0
    %20 = vsyncpa [#allocation14], 0
    // Predicated region
    $region2: #{discriminator_forward.1} parent=1 // pred_check
      _
    $region3: #{discriminator_forward.1} parent=1 // pred_check_branch
      %22 = sbr.rel (0) target = $region5
    $region4: #{discriminator_forward.1} parent=1 // pred_region
      _
    $region5: #{discriminator_forward.1} parent=1 // pred_fallthru
      _
    // Predicated region
    $region6: #{discriminator_forward.1} parent=1 // pred_check
      _
    $region7: #{discriminator_forward.1} parent=1 // pred_check_branch
      %24 = sbr.rel (0) target = $region9
    $region8: #{discriminator_forward.1} parent=1 // pred_region
      _
    $region9: #{discriminator_forward.1} parent=1 // pred_fallthru
      _
    // Predicated region
    $region10: #{discriminator_forward.1} parent=1 // pred_check
      _
    $region11: #{discriminator_forward.1} parent=1 // pred_check_branch
      %26 = sbr.rel (0) target = $region13
    $region12: #{discriminator_forward.1} parent=1 // pred_region
      %s28 = ssub.s32 50176, 50176
      %29 = vsyncadd [#allocation3], %s28
      %s30 = sshll.u32 [#allocation2], 4
      %s31 = int_to_ptr.vmem [resolvable:$true] %s30
      %36 = dma.hbm_to_vmem [thread:$0]  %s2, 50176, %s31, [#allocation3], 512, 512, 32
    $region13: #{discriminator_forward.1} parent=1 // pred_fallthru
      _
    // Predicated region
    $region14: #{discriminator_forward.1} parent=1 // pred_check
      _
    $region15: #{discriminator_forward.1} parent=1 // pred_check_branch
      %38 = sbr.rel (0) target = $region17
    $region16: #{discriminator_forward.1} parent=1 // pred_region
      %s40 = ssub.s32 2048, 2048
      %41 = vsyncadd [#allocation5], %s40
      %s42 = sshll.u32 [#allocation4], 4
      %s43 = int_to_ptr.vmem [resolvable:$true] %s42
      %48 = dma.hbm_to_vmem [thread:$0]  %s3, 2048, %s43, [#allocation5], 1024, 1024, 64
    $region17: #{discriminator_forward.1} parent=1 // pred_fallthru
      _
    // Predicated region
    $region18: #{discriminator_forward.1} parent=1 // pred_check
      _
    $region19: #{discriminator_forward.1} parent=1 // pred_check_branch
      %50 = sbr.rel (0) target = $region21
    $region20: #{discriminator_forward.1} parent=1 // pred_region
      %s52 = ssub.s32 128, 128
      %53 = vsyncadd [#allocation5], %s52
      %s55 = sshll.u32 [#allocation6], 4
      %s56 = int_to_ptr.vmem [resolvable:$true] %s55
      %58 = dma.hbm_to_vmem [thread:$0]  %s4, 128, %s56, [#allocation5]
    $region21: #{discriminator_forward.1} parent=1 // pred_fallthru
      _
    // Predicated region
    $region22: #{discriminator_forward.1} parent=1 // pred_check
      _
    $region23: #{discriminator_forward.1} parent=1 // pred_check_branch
      %60 = sbr.rel (0) target = $region25
    $region24: #{discriminator_forward.1} parent=1 // pred_region
      %s62 = ssub.s32 32768, 32768
      %63 = vsyncadd [#allocation8], %s62
      %s64 = sshll.u32 [#allocation7], 4
      %s65 = int_to_ptr.vmem [resolvable:$true] %s64
      %70 = dma.hbm_to_vmem [thread:$0]  %s5, 32768, %s65, [#allocation8], 256, 256, 16
    $region25: #{discriminator_forward.1} parent=1 // pred_fallthru
      _
    // Predicated region
    $region26: #{discriminator_forward.1} parent=1 // pred_check
      _
    $region27: #{discriminator_forward.1} parent=1 // pred_check_branch
      %72 = sbr.rel (0) target = $region29
    $region28: #{discriminator_forward.1} parent=1 // pred_region
      %s74 = ssub.s32 64, 64
      %75 = vsyncadd [#allocation8], %s74
      %s77 = sshll.u32 [#allocation9], 4
      %s78 = int_to_ptr.vmem [resolvable:$true] %s77
      %80 = dma.hbm_to_vmem [thread:$0]  %s6, 64, %s78, [#allocation8]
    $region29: #{discriminator_forward.1} parent=1 // pred_fallthru
      _
    // Predicated region
    $region30: #{discriminator_forward.1} parent=1 // pred_check
      _
    $region31: #{discriminator_forward.1} parent=1 // pred_check_branch
      %82 = sbr.rel (0) target = $region33
    $region32: #{discriminator_forward.1} parent=1 // pred_region
      %s84 = ssub.s32 8192, 8192
      %85 = vsyncadd [#allocation11], %s84
      %s86 = sshll.u32 [#allocation10], 4
      %s87 = int_to_ptr.vmem [resolvable:$true] %s86
      %92 = dma.hbm_to_vmem [thread:$0]  %s7, 8192, %s87, [#allocation11], 128, 128, 8
    $region33: #{discriminator_forward.1} parent=1 // pred_fallthru
      _
    // Predicated region
    $region34: #{discriminator_forward.1} parent=1 // pred_check
      _
    $region35: #{discriminator_forward.1} parent=1 // pred_check_branch
      %94 = sbr.rel (0) target = $region37
    $region36: #{discriminator_forward.1} parent=1 // pred_region
      %s96 = ssub.s32 32, 32
      %97 = vsyncadd [#allocation11], %s96
      %s99 = sshll.u32 [#allocation12], 4
      %s100 = int_to_ptr.vmem [resolvable:$true] %s99
      %102 = dma.hbm_to_vmem [thread:$0]  %s8, 32, %s100, [#allocation11]
    $region37: #{discriminator_forward.1} parent=1 // pred_fallthru
      _
    // Predicated region
    $region38: #{discriminator_forward.1} parent=1 // pred_check
      _
    $region39: #{discriminator_forward.1} parent=1 // pred_check_branch
      %104 = sbr.rel (0) target = $region41
    $region40: #{discriminator_forward.1} parent=1 // pred_region
      %s106 = ssub.s32 2048, 2048
      %107 = vsyncadd [#allocation14], %s106
      %s108 = sshll.u32 [#allocation13], 4
      %s109 = int_to_ptr.vmem [resolvable:$true] %s108
      %114 = dma.hbm_to_vmem [thread:$0]  %s9, 2048, %s109, [#allocation14], 64, 64, 4
    $region41: #{discriminator_forward.1} parent=1 // pred_fallthru
      _
    // Predicated region
    $region42: #{discriminator_forward.1} parent=1 // pred_check
      _
    $region43: #{discriminator_forward.1} parent=1 // pred_check_branch
      %116 = sbr.rel (0) target = $region45
    $region44: #{discriminator_forward.1} parent=1 // pred_region
      %s118 = ssub.s32 16, 16
      %119 = vsyncadd [#allocation14], %s118
      %s121 = sshll.u32 [#allocation15], 4
      %s122 = int_to_ptr.vmem [resolvable:$true] %s121
      %124 = dma.hbm_to_vmem [thread:$0]  %s10, 16, %s122, [#allocation14]
    $region45: #{discriminator_forward.1} parent=1 // pred_fallthru
      _
    // Predicated region
    $region46: #{discriminator_forward.1} parent=1 // pred_check
      _
    $region47: #{discriminator_forward.1} parent=1 // pred_check_branch
      %126 = sbr.rel (0) target = $region49
    $region48: #{discriminator_forward.1} parent=1 // pred_region
      %127 = dma.done [#allocation3], 50176
    $region49: #{discriminator_forward.1} parent=1 // pred_fallthru
      _
    // Predicated region
    $region50: #{discriminator_forward.1} parent=1 // pred_check
      _
    $region51: #{discriminator_forward.1} parent=1 // pred_check_branch
      %129 = sbr.rel (0) target = $region53
    $region52: #{discriminator_forward.1} parent=1 // pred_region
      %130 = dma.done [#allocation5], 2048
    $region53: #{discriminator_forward.1} parent=1 // pred_fallthru
      _
    // Predicated region
    $region54: #{discriminator_forward.1} parent=1 // pred_check
      _
    $region55: #{discriminator_forward.1} parent=1 // pred_check_branch
      %132 = sbr.rel (0) target = $region57
    $region56: #{discriminator_forward.1} parent=1 // pred_region
      %133 = dma.done [#allocation5], 128
    $region57: #{discriminator_forward.1} parent=1 // pred_fallthru
      _
    // Predicated region
    $region58: #{discriminator_forward.1} parent=1 // pred_check
      _
    $region59: #{discriminator_forward.1} parent=1 // pred_check_branch
      %135 = sbr.rel (0) target = $region61
    $region60: #{discriminator_forward.1} parent=1 // pred_region
      %136 = dma.done [#allocation8], 32768
    $region61: #{discriminator_forward.1} parent=1 // pred_fallthru
      _
    // Predicated region
    $region62: #{discriminator_forward.1} parent=1 // pred_check
      _
    $region63: #{discriminator_forward.1} parent=1 // pred_check_branch
      %138 = sbr.rel (0) target = $region65
    $region64: #{discriminator_forward.1} parent=1 // pred_region
      %139 = dma.done [#allocation8], 64
    $region65: #{discriminator_forward.1} parent=1 // pred_fallthru
      _
    // Predicated region
    $region66: #{discriminator_forward.1} parent=1 // pred_check
      _
    $region67: #{discriminator_forward.1} parent=1 // pred_check_branch
      %141 = sbr.rel (0) target = $region69
    $region68: #{discriminator_forward.1} parent=1 // pred_region
      %142 = dma.done [#allocation11], 8192
    $region69: #{discriminator_forward.1} parent=1 // pred_fallthru
      _
    // Predicated region
    $region70: #{discriminator_forward.1} parent=1 // pred_check
      _
    $region71: #{discriminator_forward.1} parent=1 // pred_check_branch
      %144 = sbr.rel (0) target = $region73
    $region72: #{discriminator_forward.1} parent=1 // pred_region
      %145 = dma.done [#allocation11], 32
    $region73: #{discriminator_forward.1} parent=1 // pred_fallthru
      _
    // Predicated region
    $region74: #{discriminator_forward.1} parent=1 // pred_check
      _
    $region75: #{discriminator_forward.1} parent=1 // pred_check_branch
      %147 = sbr.rel (0) target = $region77
    $region76: #{discriminator_forward.1} parent=1 // pred_region
      %148 = dma.done [#allocation14], 2048
    $region77: #{discriminator_forward.1} parent=1 // pred_fallthru
      _
    // Predicated region
    $region78: #{discriminator_forward.1} parent=1 // pred_check
      _
    $region79: #{discriminator_forward.1} parent=1 // pred_check_branch
      %150 = sbr.rel (0) target = $region81
    $region80: #{discriminator_forward.1} parent=1 // pred_region
      %151 = dma.done [#allocation14], 16
    $region81: #{discriminator_forward.1} parent=1 // pred_fallthru
      _
    %v153 = vld [vmem:[%s0] sm:$0xff]
    %v154 = vld [vmem:[%s0 + $0x8] sm:$0xff]
    %v155 = vld [vmem:[%s0 + $0x10] sm:$0xff]
    %v156 = vld [vmem:[%s0 + $0x18] sm:$0xf]
    %v157 = vld [vmem:[%s0 + $0x1c] sm:$0xff]
    %v158 = vld [vmem:[%s0 + $0x24] sm:$0xff]
    %v159 = vld [vmem:[%s0 + $0x2c] sm:$0xff]
    %v160 = vld [vmem:[%s0 + $0x34] sm:$0xf]
    %v161 = vld [vmem:[#allocation2] sm:$0xff]
    %v162 = vld [vmem:[#allocation2 + $0x8] sm:$0xff]
    %v163 = vld [vmem:[#allocation2 + $0x10] sm:$0xff]
    %v164 = vld [vmem:[#allocation2 + $0x18] sm:$0xff]
    %v165 = vld [vmem:[#allocation2 + $0x20] sm:$0xff]
    %v166 = vld [vmem:[#allocation2 + $0x28] sm:$0xff]
    %v167 = vld [vmem:[#allocation2 + $0x30] sm:$0xff]
    %v168 = vld [vmem:[#allocation2 + $0x38] sm:$0xff]
    %v169 = vld [vmem:[#allocation2 + $0x40] sm:$0xff]
    %v170 = vld [vmem:[#allocation2 + $0x48] sm:$0xff]
    %v171 = vld [vmem:[#allocation2 + $0x50] sm:$0xff]
    %v172 = vld [vmem:[#allocation2 + $0x58] sm:$0xff]
    %v173 = vld [vmem:[#allocation2 + $0x60] sm:$0xff]
    %v174 = vld [vmem:[#allocation2 + $0x68] sm:$0xff]
    %v175 = vld [vmem:[#allocation2 + $0x70] sm:$0xff]
    %v176 = vld [vmem:[#allocation2 + $0x78] sm:$0xff]
    %v177 = vld [vmem:[#allocation2 + $0x80] sm:$0xff]
    %v178 = vld [vmem:[#allocation2 + $0x88] sm:$0xff]
    %v179 = vld [vmem:[#allocation2 + $0x90] sm:$0xff]
    %v180 = vld [vmem:[#allocation2 + $0x98] sm:$0xff]
    %v181 = vld [vmem:[#allocation2 + $0xa0] sm:$0xff]
    %v182 = vld [vmem:[#allocation2 + $0xa8] sm:$0xff]
    %v183 = vld [vmem:[#allocation2 + $0xb0] sm:$0xff]
    %v184 = vld [vmem:[#allocation2 + $0xb8] sm:$0xff]
    %v185 = vld [vmem:[#allocation2 + $0xc0] sm:$0xff]
    %v186 = vld [vmem:[#allocation2 + $0xc8] sm:$0xff]
    %v187 = vld [vmem:[#allocation2 + $0xd0] sm:$0xff]
    %v188 = vld [vmem:[#allocation2 + $0xd8] sm:$0xff]
    %v189 = vld [vmem:[#allocation2 + $0xe0] sm:$0xff]
    %v190 = vld [vmem:[#allocation2 + $0xe8] sm:$0xff]
    %v191 = vld [vmem:[#allocation2 + $0xf0] sm:$0xff]
    %v192 = vld [vmem:[#allocation2 + $0xf8] sm:$0xff]
    %v193 = vld [vmem:[#allocation2 + $0x100] sm:$0xff]
    %v194 = vld [vmem:[#allocation2 + $0x108] sm:$0xff]
    %v195 = vld [vmem:[#allocation2 + $0x110] sm:$0xff]
    %v196 = vld [vmem:[#allocation2 + $0x118] sm:$0xff]
    %v197 = vld [vmem:[#allocation2 + $0x120] sm:$0xff]
    %v198 = vld [vmem:[#allocation2 + $0x128] sm:$0xff]
    %v199 = vld [vmem:[#allocation2 + $0x130] sm:$0xff]
    %v200 = vld [vmem:[#allocation2 + $0x138] sm:$0xff]
    %v201 = vld [vmem:[#allocation2 + $0x140] sm:$0xff]
    %v202 = vld [vmem:[#allocation2 + $0x148] sm:$0xff]
    %v203 = vld [vmem:[#allocation2 + $0x150] sm:$0xff]
    %v204 = vld [vmem:[#allocation2 + $0x158] sm:$0xff]
    %v205 = vld [vmem:[#allocation2 + $0x160] sm:$0xff]
    %v206 = vld [vmem:[#allocation2 + $0x168] sm:$0xff]
    %v207 = vld [vmem:[#allocation2 + $0x170] sm:$0xff]
    %v208 = vld [vmem:[#allocation2 + $0x178] sm:$0xff]
    %v209 = vld [vmem:[#allocation2 + $0x180] sm:$0xff]
    %v210 = vld [vmem:[#allocation2 + $0x188] sm:$0xff]
    %v211 = vld [vmem:[#allocation2 + $0x190] sm:$0xff]
    %v212 = vld [vmem:[#allocation2 + $0x198] sm:$0xff]
    %v213 = vld [vmem:[#allocation2 + $0x1a0] sm:$0xff]
    %v214 = vld [vmem:[#allocation2 + $0x1a8] sm:$0xff]
    %v215 = vld [vmem:[#allocation2 + $0x1b0] sm:$0xff]
    %v216 = vld [vmem:[#allocation2 + $0x1b8] sm:$0xff]
    %v217 = vld [vmem:[#allocation2 + $0x1c0] sm:$0xff]
    %v218 = vld [vmem:[#allocation2 + $0x1c8] sm:$0xff]
    %v219 = vld [vmem:[#allocation2 + $0x1d0] sm:$0xff]
    %v220 = vld [vmem:[#allocation2 + $0x1d8] sm:$0xff]
    %v221 = vld [vmem:[#allocation2 + $0x1e0] sm:$0xff]
    %v222 = vld [vmem:[#allocation2 + $0x1e8] sm:$0xff]
    %v223 = vld [vmem:[#allocation2 + $0x1f0] sm:$0xff]
    %v224 = vld [vmem:[#allocation2 + $0x1f8] sm:$0xff]
    %v225 = vld [vmem:[#allocation2 + $0x200] sm:$0xff]
    %v226 = vld [vmem:[#allocation2 + $0x208] sm:$0xff]
    %v227 = vld [vmem:[#allocation2 + $0x210] sm:$0xff]
    %v228 = vld [vmem:[#allocation2 + $0x218] sm:$0xff]
    %v229 = vld [vmem:[#allocation2 + $0x220] sm:$0xff]
    %v230 = vld [vmem:[#allocation2 + $0x228] sm:$0xff]
    %v231 = vld [vmem:[#allocation2 + $0x230] sm:$0xff]
    %v232 = vld [vmem:[#allocation2 + $0x238] sm:$0xff]
    %v233 = vld [vmem:[#allocation2 + $0x240] sm:$0xff]
    %v234 = vld [vmem:[#allocation2 + $0x248] sm:$0xff]
    %v235 = vld [vmem:[#allocation2 + $0x250] sm:$0xff]
    %v236 = vld [vmem:[#allocation2 + $0x258] sm:$0xff]
    %v237 = vld [vmem:[#allocation2 + $0x260] sm:$0xff]
    %v238 = vld [vmem:[#allocation2 + $0x268] sm:$0xff]
    %v239 = vld [vmem:[#allocation2 + $0x270] sm:$0xff]
    %v240 = vld [vmem:[#allocation2 + $0x278] sm:$0xff]
    %v241 = vld [vmem:[#allocation2 + $0x280] sm:$0xff]
    %v242 = vld [vmem:[#allocation2 + $0x288] sm:$0xff]
    %v243 = vld [vmem:[#allocation2 + $0x290] sm:$0xff]
    %v244 = vld [vmem:[#allocation2 + $0x298] sm:$0xff]
    %v245 = vld [vmem:[#allocation2 + $0x2a0] sm:$0xff]
    %v246 = vld [vmem:[#allocation2 + $0x2a8] sm:$0xff]
    %v247 = vld [vmem:[#allocation2 + $0x2b0] sm:$0xff]
    %v248 = vld [vmem:[#allocation2 + $0x2b8] sm:$0xff]
    %v249 = vld [vmem:[#allocation2 + $0x2c0] sm:$0xff]
    %v250 = vld [vmem:[#allocation2 + $0x2c8] sm:$0xff]
    %v251 = vld [vmem:[#allocation2 + $0x2d0] sm:$0xff]
    %v252 = vld [vmem:[#allocation2 + $0x2d8] sm:$0xff]
    %v253 = vld [vmem:[#allocation2 + $0x2e0] sm:$0xff]
    %v254 = vld [vmem:[#allocation2 + $0x2e8] sm:$0xff]
    %v255 = vld [vmem:[#allocation2 + $0x2f0] sm:$0xff]
    %v256 = vld [vmem:[#allocation2 + $0x2f8] sm:$0xff]
    %v257 = vld [vmem:[#allocation2 + $0x300] sm:$0xff]
    %v258 = vld [vmem:[#allocation2 + $0x308] sm:$0xff]
    %v259 = vld [vmem:[#allocation2 + $0x310] sm:$0xff]
    %v260 = vld [vmem:[#allocation2 + $0x318] sm:$0xff]
    %v261 = vld [vmem:[#allocation2 + $0x320] sm:$0xff]
    %v262 = vld [vmem:[#allocation2 + $0x328] sm:$0xff]
    %v263 = vld [vmem:[#allocation2 + $0x330] sm:$0xff]
    %v264 = vld [vmem:[#allocation2 + $0x338] sm:$0xff]
    %v265 = vld [vmem:[#allocation2 + $0x340] sm:$0xff]
    %v266 = vld [vmem:[#allocation2 + $0x348] sm:$0xff]
    %v267 = vld [vmem:[#allocation2 + $0x350] sm:$0xff]
    %v268 = vld [vmem:[#allocation2 + $0x358] sm:$0xff]
    %v269 = vld [vmem:[#allocation2 + $0x360] sm:$0xff]
    %v270 = vld [vmem:[#allocation2 + $0x368] sm:$0xff]
    %v271 = vld [vmem:[#allocation2 + $0x370] sm:$0xff]
    %v272 = vld [vmem:[#allocation2 + $0x378] sm:$0xff]
    %v273 = vld [vmem:[#allocation2 + $0x380] sm:$0xff]
    %v274 = vld [vmem:[#allocation2 + $0x388] sm:$0xff]
    %v275 = vld [vmem:[#allocation2 + $0x390] sm:$0xff]
    %v276 = vld [vmem:[#allocation2 + $0x398] sm:$0xff]
    %v277 = vld [vmem:[#allocation2 + $0x3a0] sm:$0xff]
    %v278 = vld [vmem:[#allocation2 + $0x3a8] sm:$0xff]
    %v279 = vld [vmem:[#allocation2 + $0x3b0] sm:$0xff]
    %v280 = vld [vmem:[#allocation2 + $0x3b8] sm:$0xff]
    %v281 = vld [vmem:[#allocation2 + $0x3c0] sm:$0xff]
    %v282 = vld [vmem:[#allocation2 + $0x3c8] sm:$0xff]
    %v283 = vld [vmem:[#allocation2 + $0x3d0] sm:$0xff]
    %v284 = vld [vmem:[#allocation2 + $0x3d8] sm:$0xff]
    %v285 = vld [vmem:[#allocation2 + $0x3e0] sm:$0xff]
    %v286 = vld [vmem:[#allocation2 + $0x3e8] sm:$0xff]
    %v287 = vld [vmem:[#allocation2 + $0x3f0] sm:$0xff]
    %v288 = vld [vmem:[#allocation2 + $0x3f8] sm:$0xff]
    %v289 = vld [vmem:[#allocation2 + $0x400] sm:$0xff]
    %v290 = vld [vmem:[#allocation2 + $0x408] sm:$0xff]
    %v291 = vld [vmem:[#allocation2 + $0x410] sm:$0xff]
    %v292 = vld [vmem:[#allocation2 + $0x418] sm:$0xff]
    %v293 = vld [vmem:[#allocation2 + $0x420] sm:$0xff]
    %v294 = vld [vmem:[#allocation2 + $0x428] sm:$0xff]
    %v295 = vld [vmem:[#allocation2 + $0x430] sm:$0xff]
    %v296 = vld [vmem:[#allocation2 + $0x438] sm:$0xff]
    %v297 = vld [vmem:[#allocation2 + $0x440] sm:$0xff]
    %v298 = vld [vmem:[#allocation2 + $0x448] sm:$0xff]
    %v299 = vld [vmem:[#allocation2 + $0x450] sm:$0xff]
    %v300 = vld [vmem:[#allocation2 + $0x458] sm:$0xff]
    %v301 = vld [vmem:[#allocation2 + $0x460] sm:$0xff]
    %v302 = vld [vmem:[#allocation2 + $0x468] sm:$0xff]
    %v303 = vld [vmem:[#allocation2 + $0x470] sm:$0xff]
    %v304 = vld [vmem:[#allocation2 + $0x478] sm:$0xff]
    %v305 = vld [vmem:[#allocation2 + $0x480] sm:$0xff]
    %v306 = vld [vmem:[#allocation2 + $0x488] sm:$0xff]
    %v307 = vld [vmem:[#allocation2 + $0x490] sm:$0xff]
    %v308 = vld [vmem:[#allocation2 + $0x498] sm:$0xff]
    %v309 = vld [vmem:[#allocation2 + $0x4a0] sm:$0xff]
    %v310 = vld [vmem:[#allocation2 + $0x4a8] sm:$0xff]
    %v311 = vld [vmem:[#allocation2 + $0x4b0] sm:$0xff]
    %v312 = vld [vmem:[#allocation2 + $0x4b8] sm:$0xff]
    %v313 = vld [vmem:[#allocation2 + $0x4c0] sm:$0xff]
    %v314 = vld [vmem:[#allocation2 + $0x4c8] sm:$0xff]
    %v315 = vld [vmem:[#allocation2 + $0x4d0] sm:$0xff]
    %v316 = vld [vmem:[#allocation2 + $0x4d8] sm:$0xff]
    %v317 = vld [vmem:[#allocation2 + $0x4e0] sm:$0xff]
    %v318 = vld [vmem:[#allocation2 + $0x4e8] sm:$0xff]
    %v319 = vld [vmem:[#allocation2 + $0x4f0] sm:$0xff]
    %v320 = vld [vmem:[#allocation2 + $0x4f8] sm:$0xff]
    %v321 = vld [vmem:[#allocation2 + $0x500] sm:$0xff]
    %v322 = vld [vmem:[#allocation2 + $0x508] sm:$0xff]
    %v323 = vld [vmem:[#allocation2 + $0x510] sm:$0xff]
    %v324 = vld [vmem:[#allocation2 + $0x518] sm:$0xff]
    %v325 = vld [vmem:[#allocation2 + $0x520] sm:$0xff]
    %v326 = vld [vmem:[#allocation2 + $0x528] sm:$0xff]
    %v327 = vld [vmem:[#allocation2 + $0x530] sm:$0xff]
    %v328 = vld [vmem:[#allocation2 + $0x538] sm:$0xff]
    %v329 = vld [vmem:[#allocation2 + $0x540] sm:$0xff]
    %v330 = vld [vmem:[#allocation2 + $0x548] sm:$0xff]
    %v331 = vld [vmem:[#allocation2 + $0x550] sm:$0xff]
    %v332 = vld [vmem:[#allocation2 + $0x558] sm:$0xff]
    %v333 = vld [vmem:[#allocation2 + $0x560] sm:$0xff]
    %v334 = vld [vmem:[#allocation2 + $0x568] sm:$0xff]
    %v335 = vld [vmem:[#allocation2 + $0x570] sm:$0xff]
    %v336 = vld [vmem:[#allocation2 + $0x578] sm:$0xff]
    %v337 = vld [vmem:[#allocation2 + $0x580] sm:$0xff]
    %v338 = vld [vmem:[#allocation2 + $0x588] sm:$0xff]
    %v339 = vld [vmem:[#allocation2 + $0x590] sm:$0xff]
    %v340 = vld [vmem:[#allocation2 + $0x598] sm:$0xff]
    %v341 = vld [vmem:[#allocation2 + $0x5a0] sm:$0xff]
    %v342 = vld [vmem:[#allocation2 + $0x5a8] sm:$0xff]
    %v343 = vld [vmem:[#allocation2 + $0x5b0] sm:$0xff]
    %v344 = vld [vmem:[#allocation2 + $0x5b8] sm:$0xff]
    %v345 = vld [vmem:[#allocation2 + $0x5c0] sm:$0xff]
    %v346 = vld [vmem:[#allocation2 + $0x5c8] sm:$0xff]
    %v347 = vld [vmem:[#allocation2 + $0x5d0] sm:$0xff]
    %v348 = vld [vmem:[#allocation2 + $0x5d8] sm:$0xff]
    %v349 = vld [vmem:[#allocation2 + $0x5e0] sm:$0xff]
    %v350 = vld [vmem:[#allocation2 + $0x5e8] sm:$0xff]
    %v351 = vld [vmem:[#allocation2 + $0x5f0] sm:$0xff]
    %v352 = vld [vmem:[#allocation2 + $0x5f8] sm:$0xff]
    %v353 = vld [vmem:[#allocation2 + $0x600] sm:$0xff]
    %v354 = vld [vmem:[#allocation2 + $0x608] sm:$0xff]
    %v355 = vld [vmem:[#allocation2 + $0x610] sm:$0xff]
    %v356 = vld [vmem:[#allocation2 + $0x618] sm:$0xff]
    %v357 = vld [vmem:[#allocation2 + $0x620] sm:$0xff]
    %v358 = vld [vmem:[#allocation2 + $0x628] sm:$0xff]
    %v359 = vld [vmem:[#allocation2 + $0x630] sm:$0xff]
    %v360 = vld [vmem:[#allocation2 + $0x638] sm:$0xff]
    %v361 = vld [vmem:[#allocation2 + $0x640] sm:$0xff]
    %v362 = vld [vmem:[#allocation2 + $0x648] sm:$0xff]
    %v363 = vld [vmem:[#allocation2 + $0x650] sm:$0xff]
    %v364 = vld [vmem:[#allocation2 + $0x658] sm:$0xff]
    %v365 = vld [vmem:[#allocation2 + $0x660] sm:$0xff]
    %v366 = vld [vmem:[#allocation2 + $0x668] sm:$0xff]
    %v367 = vld [vmem:[#allocation2 + $0x670] sm:$0xff]
    %v368 = vld [vmem:[#allocation2 + $0x678] sm:$0xff]
    %v369 = vld [vmem:[#allocation2 + $0x680] sm:$0xff]
    %v370 = vld [vmem:[#allocation2 + $0x688] sm:$0xff]
    %v371 = vld [vmem:[#allocation2 + $0x690] sm:$0xff]
    %v372 = vld [vmem:[#allocation2 + $0x698] sm:$0xff]
    %v373 = vld [vmem:[#allocation2 + $0x6a0] sm:$0xff]
    %v374 = vld [vmem:[#allocation2 + $0x6a8] sm:$0xff]
    %v375 = vld [vmem:[#allocation2 + $0x6b0] sm:$0xff]
    %v376 = vld [vmem:[#allocation2 + $0x6b8] sm:$0xff]
    %v377 = vld [vmem:[#allocation2 + $0x6c0] sm:$0xff]
    %v378 = vld [vmem:[#allocation2 + $0x6c8] sm:$0xff]
    %v379 = vld [vmem:[#allocation2 + $0x6d0] sm:$0xff]
    %v380 = vld [vmem:[#allocation2 + $0x6d8] sm:$0xff]
    %v381 = vld [vmem:[#allocation2 + $0x6e0] sm:$0xff]
    %v382 = vld [vmem:[#allocation2 + $0x6e8] sm:$0xff]
    %v383 = vld [vmem:[#allocation2 + $0x6f0] sm:$0xff]
    %v384 = vld [vmem:[#allocation2 + $0x6f8] sm:$0xff]
    %v385 = vld [vmem:[#allocation2 + $0x700] sm:$0xff]
    %v386 = vld [vmem:[#allocation2 + $0x708] sm:$0xff]
    %v387 = vld [vmem:[#allocation2 + $0x710] sm:$0xff]
    %v388 = vld [vmem:[#allocation2 + $0x718] sm:$0xff]
    %v389 = vld [vmem:[#allocation2 + $0x720] sm:$0xff]
    %v390 = vld [vmem:[#allocation2 + $0x728] sm:$0xff]
    %v391 = vld [vmem:[#allocation2 + $0x730] sm:$0xff]
    %v392 = vld [vmem:[#allocation2 + $0x738] sm:$0xff]
    %v393 = vld [vmem:[#allocation2 + $0x740] sm:$0xff]
    %v394 = vld [vmem:[#allocation2 + $0x748] sm:$0xff]
    %v395 = vld [vmem:[#allocation2 + $0x750] sm:$0xff]
    %v396 = vld [vmem:[#allocation2 + $0x758] sm:$0xff]
    %v397 = vld [vmem:[#allocation2 + $0x760] sm:$0xff]
    %v398 = vld [vmem:[#allocation2 + $0x768] sm:$0xff]
    %v399 = vld [vmem:[#allocation2 + $0x770] sm:$0xff]
    %v400 = vld [vmem:[#allocation2 + $0x778] sm:$0xff]
    %v401 = vld [vmem:[#allocation2 + $0x780] sm:$0xff]
    %v402 = vld [vmem:[#allocation2 + $0x788] sm:$0xff]
    %v403 = vld [vmem:[#allocation2 + $0x790] sm:$0xff]
    %v404 = vld [vmem:[#allocation2 + $0x798] sm:$0xff]
    %v405 = vld [vmem:[#allocation2 + $0x7a0] sm:$0xff]
    %v406 = vld [vmem:[#allocation2 + $0x7a8] sm:$0xff]
    %v407 = vld [vmem:[#allocation2 + $0x7b0] sm:$0xff]
    %v408 = vld [vmem:[#allocation2 + $0x7b8] sm:$0xff]
    %v409 = vld [vmem:[#allocation2 + $0x7c0] sm:$0xff]
    %v410 = vld [vmem:[#allocation2 + $0x7c8] sm:$0xff]
    %v411 = vld [vmem:[#allocation2 + $0x7d0] sm:$0xff]
    %v412 = vld [vmem:[#allocation2 + $0x7d8] sm:$0xff]
    %v413 = vld [vmem:[#allocation2 + $0x7e0] sm:$0xff]
    %v414 = vld [vmem:[#allocation2 + $0x7e8] sm:$0xff]
    %v415 = vld [vmem:[#allocation2 + $0x7f0] sm:$0xff]
    %v416 = vld [vmem:[#allocation2 + $0x7f8] sm:$0xff]
    %v417 = vld [vmem:[#allocation2 + $0x800] sm:$0xff]
    %v418 = vld [vmem:[#allocation2 + $0x808] sm:$0xff]
    %v419 = vld [vmem:[#allocation2 + $0x810] sm:$0xff]
    %v420 = vld [vmem:[#allocation2 + $0x818] sm:$0xff]
    %v421 = vld [vmem:[#allocation2 + $0x820] sm:$0xff]
    %v422 = vld [vmem:[#allocation2 + $0x828] sm:$0xff]
    %v423 = vld [vmem:[#allocation2 + $0x830] sm:$0xff]
    %v424 = vld [vmem:[#allocation2 + $0x838] sm:$0xff]
    %v425 = vld [vmem:[#allocation2 + $0x840] sm:$0xff]
    %v426 = vld [vmem:[#allocation2 + $0x848] sm:$0xff]
    %v427 = vld [vmem:[#allocation2 + $0x850] sm:$0xff]
    %v428 = vld [vmem:[#allocation2 + $0x858] sm:$0xff]
    %v429 = vld [vmem:[#allocation2 + $0x860] sm:$0xff]
    %v430 = vld [vmem:[#allocation2 + $0x868] sm:$0xff]
    %v431 = vld [vmem:[#allocation2 + $0x870] sm:$0xff]
    %v432 = vld [vmem:[#allocation2 + $0x878] sm:$0xff]
    %v433 = vld [vmem:[#allocation2 + $0x880] sm:$0xff]
    %v434 = vld [vmem:[#allocation2 + $0x888] sm:$0xff]
    %v435 = vld [vmem:[#allocation2 + $0x890] sm:$0xff]
    %v436 = vld [vmem:[#allocation2 + $0x898] sm:$0xff]
    %v437 = vld [vmem:[#allocation2 + $0x8a0] sm:$0xff]
    %v438 = vld [vmem:[#allocation2 + $0x8a8] sm:$0xff]
    %v439 = vld [vmem:[#allocation2 + $0x8b0] sm:$0xff]
    %v440 = vld [vmem:[#allocation2 + $0x8b8] sm:$0xff]
    %v441 = vld [vmem:[#allocation2 + $0x8c0] sm:$0xff]
    %v442 = vld [vmem:[#allocation2 + $0x8c8] sm:$0xff]
    %v443 = vld [vmem:[#allocation2 + $0x8d0] sm:$0xff]
    %v444 = vld [vmem:[#allocation2 + $0x8d8] sm:$0xff]
    %v445 = vld [vmem:[#allocation2 + $0x8e0] sm:$0xff]
    %v446 = vld [vmem:[#allocation2 + $0x8e8] sm:$0xff]
    %v447 = vld [vmem:[#allocation2 + $0x8f0] sm:$0xff]
    %v448 = vld [vmem:[#allocation2 + $0x8f8] sm:$0xff]
    %v449 = vld [vmem:[#allocation2 + $0x900] sm:$0xff]
    %v450 = vld [vmem:[#allocation2 + $0x908] sm:$0xff]
    %v451 = vld [vmem:[#allocation2 + $0x910] sm:$0xff]
    %v452 = vld [vmem:[#allocation2 + $0x918] sm:$0xff]
    %v453 = vld [vmem:[#allocation2 + $0x920] sm:$0xff]
    %v454 = vld [vmem:[#allocation2 + $0x928] sm:$0xff]
    %v455 = vld [vmem:[#allocation2 + $0x930] sm:$0xff]
    %v456 = vld [vmem:[#allocation2 + $0x938] sm:$0xff]
    %v457 = vld [vmem:[#allocation2 + $0x940] sm:$0xff]
    %v458 = vld [vmem:[#allocation2 + $0x948] sm:$0xff]
    %v459 = vld [vmem:[#allocation2 + $0x950] sm:$0xff]
    %v460 = vld [vmem:[#allocation2 + $0x958] sm:$0xff]
    %v461 = vld [vmem:[#allocation2 + $0x960] sm:$0xff]
    %v462 = vld [vmem:[#allocation2 + $0x968] sm:$0xff]
    %v463 = vld [vmem:[#allocation2 + $0x970] sm:$0xff]
    %v464 = vld [vmem:[#allocation2 + $0x978] sm:$0xff]
    %v465 = vld [vmem:[#allocation2 + $0x980] sm:$0xff]
    %v466 = vld [vmem:[#allocation2 + $0x988] sm:$0xff]
    %v467 = vld [vmem:[#allocation2 + $0x990] sm:$0xff]
    %v468 = vld [vmem:[#allocation2 + $0x998] sm:$0xff]
    %v469 = vld [vmem:[#allocation2 + $0x9a0] sm:$0xff]
    %v470 = vld [vmem:[#allocation2 + $0x9a8] sm:$0xff]
    %v471 = vld [vmem:[#allocation2 + $0x9b0] sm:$0xff]
    %v472 = vld [vmem:[#allocation2 + $0x9b8] sm:$0xff]
    %v473 = vld [vmem:[#allocation2 + $0x9c0] sm:$0xff]
    %v474 = vld [vmem:[#allocation2 + $0x9c8] sm:$0xff]
    %v475 = vld [vmem:[#allocation2 + $0x9d0] sm:$0xff]
    %v476 = vld [vmem:[#allocation2 + $0x9d8] sm:$0xff]
    %v477 = vld [vmem:[#allocation2 + $0x9e0] sm:$0xff]
    %v478 = vld [vmem:[#allocation2 + $0x9e8] sm:$0xff]
    %v479 = vld [vmem:[#allocation2 + $0x9f0] sm:$0xff]
    %v480 = vld [vmem:[#allocation2 + $0x9f8] sm:$0xff]
    %v481 = vld [vmem:[#allocation2 + $0xa00] sm:$0xff]
    %v482 = vld [vmem:[#allocation2 + $0xa08] sm:$0xff]
    %v483 = vld [vmem:[#allocation2 + $0xa10] sm:$0xff]
    %v484 = vld [vmem:[#allocation2 + $0xa18] sm:$0xff]
    %v485 = vld [vmem:[#allocation2 + $0xa20] sm:$0xff]
    %v486 = vld [vmem:[#allocation2 + $0xa28] sm:$0xff]
    %v487 = vld [vmem:[#allocation2 + $0xa30] sm:$0xff]
    %v488 = vld [vmem:[#allocation2 + $0xa38] sm:$0xff]
    %v489 = vld [vmem:[#allocation2 + $0xa40] sm:$0xff]
    %v490 = vld [vmem:[#allocation2 + $0xa48] sm:$0xff]
    %v491 = vld [vmem:[#allocation2 + $0xa50] sm:$0xff]
    %v492 = vld [vmem:[#allocation2 + $0xa58] sm:$0xff]
    %v493 = vld [vmem:[#allocation2 + $0xa60] sm:$0xff]
    %v494 = vld [vmem:[#allocation2 + $0xa68] sm:$0xff]
    %v495 = vld [vmem:[#allocation2 + $0xa70] sm:$0xff]
    %v496 = vld [vmem:[#allocation2 + $0xa78] sm:$0xff]
    %v497 = vld [vmem:[#allocation2 + $0xa80] sm:$0xff]
    %v498 = vld [vmem:[#allocation2 + $0xa88] sm:$0xff]
    %v499 = vld [vmem:[#allocation2 + $0xa90] sm:$0xff]
    %v500 = vld [vmem:[#allocation2 + $0xa98] sm:$0xff]
    %v501 = vld [vmem:[#allocation2 + $0xaa0] sm:$0xff]
    %v502 = vld [vmem:[#allocation2 + $0xaa8] sm:$0xff]
    %v503 = vld [vmem:[#allocation2 + $0xab0] sm:$0xff]
    %v504 = vld [vmem:[#allocation2 + $0xab8] sm:$0xff]
    %v505 = vld [vmem:[#allocation2 + $0xac0] sm:$0xff]
    %v506 = vld [vmem:[#allocation2 + $0xac8] sm:$0xff]
    %v507 = vld [vmem:[#allocation2 + $0xad0] sm:$0xff]
    %v508 = vld [vmem:[#allocation2 + $0xad8] sm:$0xff]
    %v509 = vld [vmem:[#allocation2 + $0xae0] sm:$0xff]
    %v510 = vld [vmem:[#allocation2 + $0xae8] sm:$0xff]
    %v511 = vld [vmem:[#allocation2 + $0xaf0] sm:$0xff]
    %v512 = vld [vmem:[#allocation2 + $0xaf8] sm:$0xff]
    %v513 = vld [vmem:[#allocation2 + $0xb00] sm:$0xff]
    %v514 = vld [vmem:[#allocation2 + $0xb08] sm:$0xff]
    %v515 = vld [vmem:[#allocation2 + $0xb10] sm:$0xff]
    %v516 = vld [vmem:[#allocation2 + $0xb18] sm:$0xff]
    %v517 = vld [vmem:[#allocation2 + $0xb20] sm:$0xff]
    %v518 = vld [vmem:[#allocation2 + $0xb28] sm:$0xff]
    %v519 = vld [vmem:[#allocation2 + $0xb30] sm:$0xff]
    %v520 = vld [vmem:[#allocation2 + $0xb38] sm:$0xff]
    %v521 = vld [vmem:[#allocation2 + $0xb40] sm:$0xff]
    %v522 = vld [vmem:[#allocation2 + $0xb48] sm:$0xff]
    %v523 = vld [vmem:[#allocation2 + $0xb50] sm:$0xff]
    %v524 = vld [vmem:[#allocation2 + $0xb58] sm:$0xff]
    %v525 = vld [vmem:[#allocation2 + $0xb60] sm:$0xff]
    %v526 = vld [vmem:[#allocation2 + $0xb68] sm:$0xff]
    %v527 = vld [vmem:[#allocation2 + $0xb70] sm:$0xff]
    %v528 = vld [vmem:[#allocation2 + $0xb78] sm:$0xff]
    %v529 = vld [vmem:[#allocation2 + $0xb80] sm:$0xff]
    %v530 = vld [vmem:[#allocation2 + $0xb88] sm:$0xff]
    %v531 = vld [vmem:[#allocation2 + $0xb90] sm:$0xff]
    %v532 = vld [vmem:[#allocation2 + $0xb98] sm:$0xff]
    %v533 = vld [vmem:[#allocation2 + $0xba0] sm:$0xff]
    %v534 = vld [vmem:[#allocation2 + $0xba8] sm:$0xff]
    %v535 = vld [vmem:[#allocation2 + $0xbb0] sm:$0xff]
    %v536 = vld [vmem:[#allocation2 + $0xbb8] sm:$0xff]
    %v537 = vld [vmem:[#allocation2 + $0xbc0] sm:$0xff]
    %v538 = vld [vmem:[#allocation2 + $0xbc8] sm:$0xff]
    %v539 = vld [vmem:[#allocation2 + $0xbd0] sm:$0xff]
    %v540 = vld [vmem:[#allocation2 + $0xbd8] sm:$0xff]
    %v541 = vld [vmem:[#allocation2 + $0xbe0] sm:$0xff]
    %v542 = vld [vmem:[#allocation2 + $0xbe8] sm:$0xff]
    %v543 = vld [vmem:[#allocation2 + $0xbf0] sm:$0xff]
    %v544 = vld [vmem:[#allocation2 + $0xbf8] sm:$0xff]
    %v545 = vld [vmem:[#allocation2 + $0xc00] sm:$0xff]
    %v546 = vld [vmem:[#allocation2 + $0xc08] sm:$0xff]
    %v547 = vld [vmem:[#allocation2 + $0xc10] sm:$0xff]
    %v548 = vld [vmem:[#allocation2 + $0xc18] sm:$0xff]
    %v549 = vld [vmem:[#allocation2 + $0xc20] sm:$0xff]
    %v550 = vld [vmem:[#allocation2 + $0xc28] sm:$0xff]
    %v551 = vld [vmem:[#allocation2 + $0xc30] sm:$0xff]
    %v552 = vld [vmem:[#allocation2 + $0xc38] sm:$0xff]
    %v553 = vld [vmem:[%s1] sm:$0xff]
    %v554 = vld [vmem:[%s1 + $0x8] sm:$0xff]
    %v555 = vld [vmem:[#allocation4] sm:$0xff]
    %v556 = vld [vmem:[#allocation4 + $0x8] sm:$0xff]
    %v557 = vld [vmem:[#allocation4 + $0x10] sm:$0xff]
    %v558 = vld [vmem:[#allocation4 + $0x18] sm:$0xff]
    %v559 = vld [vmem:[#allocation4 + $0x20] sm:$0xff]
    %v560 = vld [vmem:[#allocation4 + $0x28] sm:$0xff]
    %v561 = vld [vmem:[#allocation4 + $0x30] sm:$0xff]
    %v562 = vld [vmem:[#allocation4 + $0x38] sm:$0xff]
    %v563 = vld [vmem:[#allocation4 + $0x40] sm:$0x3]
    %v564 = vld [vmem:[#allocation4 + $0x48] sm:$0x3]
    %v565 = vld [vmem:[#allocation4 + $0x50] sm:$0x3]
    %v566 = vld [vmem:[#allocation4 + $0x58] sm:$0x3]
    %v567 = vld [vmem:[#allocation4 + $0x60] sm:$0x3]
    %v568 = vld [vmem:[#allocation4 + $0x68] sm:$0x3]
    %v569 = vld [vmem:[#allocation4 + $0x70] sm:$0x3]
    %v570 = vld [vmem:[#allocation4 + $0x78] sm:$0x3]
    %vm571 = vcmask 80896
    %v573 = vsel %vm571, %v553, 0
    %v576 = vsel %vm571, %v554, 0
    %vm578 = vcmask 1041408
    %v580 = vsel %vm578, %v563, 0
    %v583 = vsel %vm578, %v564, 0
    %v586 = vsel %vm578, %v565, 0
    %v589 = vsel %vm578, %v566, 0
    %v592 = vsel %vm578, %v567, 0
    %v595 = vsel %vm578, %v568, 0
    %v598 = vsel %vm578, %v569, 0
    %v601 = vsel %vm578, %v570, 0
    %603 = vmatprep.subr.mxu0 %v556
    %604 = vmatpush1.msra.mxu0 %v555
    %605 = vmatprep.subr.mxu0 %v583
    %606 = vmatpush1.msra.mxu0 %v580
    %607 = vmatprep.subr.mxu0 0.0
    %608 = vmatpush1.msra.mxu0 0.0
    %609 = vmatprep.subr.mxu0 0.0
    %610 = vmatpush1.msra.mxu0 0.0
    %611 = vmatprep.subr.mxu0 0.0
    %612 = vmatpush1.msra.mxu0 0.0
    %613 = vmatprep.subr.mxu0 0.0
    %614 = vmatpush1.msra.mxu0 0.0
    %615 = vmatprep.subr.mxu0 0.0
    %616 = vmatpush1.msra.mxu0 0.0
    %617 = vmatprep.subr.mxu0 0.0
    %618 = vmatpush1.msra.mxu0 0.0
    %619 = vmatprep.subr.mxu0 0.0
    %620 = vmatpush1.msra.mxu0 0.0
    %621 = vmatprep.subr.mxu0 0.0
    %622 = vmatpush1.msra.mxu0 0.0
    %623 = vmatprep.subr.mxu0 0.0
    %624 = vmatpush1.msra.mxu0 0.0
    %625 = vmatprep.subr.mxu0 0.0
    %626 = vmatpush1.msra.mxu0 0.0
    %627 = vmatprep.subr.mxu0 0.0
    %628 = vmatpush1.msra.mxu0 0.0
    %629 = vmatprep.subr.mxu0 0.0
    %630 = vmatpush1.msra.mxu0 0.0
    %631 = vmatprep.subr.mxu0 0.0
    %632 = vmatpush1.msra.mxu0 0.0
    %633 = vmatprep.subr.mxu0 0.0
    %634 = vmatpush1.msra.mxu0 0.0
    %635 = vmatprep.subr.mxu0 0.0
    %636 = vmatpush1.msra.mxu0 0.0
    %637 = vmatprep.subr.mxu0 0.0
    %638 = vmatpush1.msra.mxu0 0.0
    %639 = vmatprep.subr.mxu0 0.0
    %640 = vmatpush1.msra.mxu0 0.0
    %641 = vmatprep.subr.mxu0 0.0
    %642 = vmatpush1.msra.mxu0 0.0
    %643 = vmatprep.subr.mxu0 0.0
    %644 = vmatpush1.msra.mxu0 0.0
    %645 = vmatprep.subr.mxu0 0.0
    %646 = vmatpush1.msra.mxu0 0.0
    %647 = vmatprep.subr.mxu0 0.0
    %648 = vmatpush1.msra.mxu0 0.0
    %649 = vmatprep.subr.mxu0 0.0
    %650 = vmatpush1.msra.mxu0 0.0
    %651 = vmatprep.subr.mxu0 0.0
    %652 = vmatpush1.msra.mxu0 0.0
    %653 = vmatprep.subr.mxu0 0.0
    %654 = vmatpush1.msra.mxu0 0.0
    %655 = vmatprep.subr.mxu0 0.0
    %656 = vmatpush1.msra.mxu0 0.0
    %657 = vmatprep.subr.mxu0 0.0
    %658 = vmatpush1.msra.mxu0 0.0
    %659 = vmatprep.subr.mxu0 0.0
    %660 = vmatpush1.msra.mxu0 0.0
    %661 = vmatprep.subr.mxu0 0.0
    %662 = vmatpush1.msra.mxu0 0.0
    %663 = vmatprep.subr.mxu0 0.0
    %664 = vmatpush1.msra.mxu0 0.0
    %665 = vmatprep.subr.mxu0 0.0
    %666 = vmatpush1.msra.mxu0 0.0
    %667 = vmatprep.mubr.f32.mxu0 0.0
    %668 = vmatmul.mubr.f32.gmra.mrb[0].mxu0 %v573
    %v669 = vpop.f32.mrb[0].mxu0
    %v670 = vadd.f32 0.0, %v669
    %v671 = vpop.f32.mrb[0].mxu0
    %v672 = vadd.f32 0.0, %v671
    %673 = vmatprep.mubr.f32.mxu0 0.0
    %674 = vmatmul.mubr.f32.gmra.mrb[0].mxu0 %v576
    %v675 = vpop.f32.mrb[0].mxu0
    %v676 = vadd.f32 0.0, %v675
    %v677 = vpop.f32.mrb[0].mxu0
    %v678 = vadd.f32 0.0, %v677
    %679 = vdwg.mxu0
    %680 = vmatprep.subr.mxu0 %v558
    %681 = vmatpush1.msra.mxu0 %v557
    %682 = vmatprep.subr.mxu0 %v589
    %683 = vmatpush1.msra.mxu0 %v586
    %684 = vmatprep.subr.mxu0 0.0
    %685 = vmatpush1.msra.mxu0 0.0
    %686 = vmatprep.subr.mxu0 0.0
    %687 = vmatpush1.msra.mxu0 0.0
    %688 = vmatprep.subr.mxu0 0.0
    %689 = vmatpush1.msra.mxu0 0.0
    %690 = vmatprep.subr.mxu0 0.0
    %691 = vmatpush1.msra.mxu0 0.0
    %692 = vmatprep.subr.mxu0 0.0
    %693 = vmatpush1.msra.mxu0 0.0
    %694 = vmatprep.subr.mxu0 0.0
    %695 = vmatpush1.msra.mxu0 0.0
    %696 = vmatprep.subr.mxu0 0.0
    %697 = vmatpush1.msra.mxu0 0.0
    %698 = vmatprep.subr.mxu0 0.0
    %699 = vmatpush1.msra.mxu0 0.0
    %700 = vmatprep.subr.mxu0 0.0
    %701 = vmatpush1.msra.mxu0 0.0
    %702 = vmatprep.subr.mxu0 0.0
    %703 = vmatpush1.msra.mxu0 0.0
    %704 = vmatprep.subr.mxu0 0.0
    %705 = vmatpush1.msra.mxu0 0.0
    %706 = vmatprep.subr.mxu0 0.0
    %707 = vmatpush1.msra.mxu0 0.0
    %708 = vmatprep.subr.mxu0 0.0
    %709 = vmatpush1.msra.mxu0 0.0
    %710 = vmatprep.subr.mxu0 0.0
    %711 = vmatpush1.msra.mxu0 0.0
    %712 = vmatprep.subr.mxu0 0.0
    %713 = vmatpush1.msra.mxu0 0.0
    %714 = vmatprep.subr.mxu0 0.0
    %715 = vmatpush1.msra.mxu0 0.0
    %716 = vmatprep.subr.mxu0 0.0
    %717 = vmatpush1.msra.mxu0 0.0
    %718 = vmatprep.subr.mxu0 0.0
    %719 = vmatpush1.msra.mxu0 0.0
    %720 = vmatprep.subr.mxu0 0.0
    %721 = vmatpush1.msra.mxu0 0.0
    %722 = vmatprep.subr.mxu0 0.0
    %723 = vmatpush1.msra.mxu0 0.0
    %724 = vmatprep.subr.mxu0 0.0
    %725 = vmatpush1.msra.mxu0 0.0
    %726 = vmatprep.subr.mxu0 0.0
    %727 = vmatpush1.msra.mxu0 0.0
    %728 = vmatprep.subr.mxu0 0.0
    %729 = vmatpush1.msra.mxu0 0.0
    %730 = vmatprep.subr.mxu0 0.0
    %731 = vmatpush1.msra.mxu0 0.0
    %732 = vmatprep.subr.mxu0 0.0
    %733 = vmatpush1.msra.mxu0 0.0
    %734 = vmatprep.subr.mxu0 0.0
    %735 = vmatpush1.msra.mxu0 0.0
    %736 = vmatprep.subr.mxu0 0.0
    %737 = vmatpush1.msra.mxu0 0.0
    %738 = vmatprep.subr.mxu0 0.0
    %739 = vmatpush1.msra.mxu0 0.0
    %740 = vmatprep.subr.mxu0 0.0
    %741 = vmatpush1.msra.mxu0 0.0
    %742 = vmatprep.subr.mxu0 0.0
    %743 = vmatpush1.msra.mxu0 0.0
    %744 = vmatprep.mubr.f32.mxu0 0.0
    %745 = vmatmul.mubr.f32.gmra.mrb[0].mxu0 %v573
    %v746 = vpop.f32.mrb[0].mxu0
    %v747 = vadd.f32 0.0, %v746
    %v748 = vpop.f32.mrb[0].mxu0
    %v749 = vadd.f32 0.0, %v748
    %750 = vmatprep.mubr.f32.mxu0 0.0
    %751 = vmatmul.mubr.f32.gmra.mrb[0].mxu0 %v576
    %v752 = vpop.f32.mrb[0].mxu0
    %v753 = vadd.f32 0.0, %v752
    %v754 = vpop.f32.mrb[0].mxu0
    %v755 = vadd.f32 0.0, %v754
    %756 = vdwg.mxu0
    %757 = vmatprep.subr.mxu0 %v560
    %758 = vmatpush1.msra.mxu0 %v559
    %759 = vmatprep.subr.mxu0 %v595
    %760 = vmatpush1.msra.mxu0 %v592
    %761 = vmatprep.subr.mxu0 0.0
    %762 = vmatpush1.msra.mxu0 0.0
    %763 = vmatprep.subr.mxu0 0.0
    %764 = vmatpush1.msra.mxu0 0.0
    %765 = vmatprep.subr.mxu0 0.0
    %766 = vmatpush1.msra.mxu0 0.0
    %767 = vmatprep.subr.mxu0 0.0
    %768 = vmatpush1.msra.mxu0 0.0
    %769 = vmatprep.subr.mxu0 0.0
    %770 = vmatpush1.msra.mxu0 0.0
    %771 = vmatprep.subr.mxu0 0.0
    %772 = vmatpush1.msra.mxu0 0.0
    %773 = vmatprep.subr.mxu0 0.0
    %774 = vmatpush1.msra.mxu0 0.0
    %775 = vmatprep.subr.mxu0 0.0
    %776 = vmatpush1.msra.mxu0 0.0
    %777 = vmatprep.subr.mxu0 0.0
    %778 = vmatpush1.msra.mxu0 0.0
    %779 = vmatprep.subr.mxu0 0.0
    %780 = vmatpush1.msra.mxu0 0.0
    %781 = vmatprep.subr.mxu0 0.0
    %782 = vmatpush1.msra.mxu0 0.0
    %783 = vmatprep.subr.mxu0 0.0
    %784 = vmatpush1.msra.mxu0 0.0
    %785 = vmatprep.subr.mxu0 0.0
    %786 = vmatpush1.msra.mxu0 0.0
    %787 = vmatprep.subr.mxu0 0.0
    %788 = vmatpush1.msra.mxu0 0.0
    %789 = vmatprep.subr.mxu0 0.0
    %790 = vmatpush1.msra.mxu0 0.0
    %791 = vmatprep.subr.mxu0 0.0
    %792 = vmatpush1.msra.mxu0 0.0
    %793 = vmatprep.subr.mxu0 0.0
    %794 = vmatpush1.msra.mxu0 0.0
    %795 = vmatprep.subr.mxu0 0.0
    %796 = vmatpush1.msra.mxu0 0.0
    %797 = vmatprep.subr.mxu0 0.0
    %798 = vmatpush1.msra.mxu0 0.0
    %799 = vmatprep.subr.mxu0 0.0
    %800 = vmatpush1.msra.mxu0 0.0
    %801 = vmatprep.subr.mxu0 0.0
    %802 = vmatpush1.msra.mxu0 0.0
    %803 = vmatprep.subr.mxu0 0.0
    %804 = vmatpush1.msra.mxu0 0.0
    %805 = vmatprep.subr.mxu0 0.0
    %806 = vmatpush1.msra.mxu0 0.0
    %807 = vmatprep.subr.mxu0 0.0
    %808 = vmatpush1.msra.mxu0 0.0
    %809 = vmatprep.subr.mxu0 0.0
    %810 = vmatpush1.msra.mxu0 0.0
    %811 = vmatprep.subr.mxu0 0.0
    %812 = vmatpush1.msra.mxu0 0.0
    %813 = vmatprep.subr.mxu0 0.0
    %814 = vmatpush1.msra.mxu0 0.0
    %815 = vmatprep.subr.mxu0 0.0
    %816 = vmatpush1.msra.mxu0 0.0
    %817 = vmatprep.subr.mxu0 0.0
    %818 = vmatpush1.msra.mxu0 0.0
    %819 = vmatprep.subr.mxu0 0.0
    %820 = vmatpush1.msra.mxu0 0.0
    %821 = vmatprep.mubr.f32.mxu0 0.0
    %822 = vmatmul.mubr.f32.gmra.mrb[0].mxu0 %v573
    %v823 = vpop.f32.mrb[0].mxu0
    %v824 = vadd.f32 0.0, %v823
    %v825 = vpop.f32.mrb[0].mxu0
    %v826 = vadd.f32 0.0, %v825
    %827 = vmatprep.mubr.f32.mxu0 0.0
    %828 = vmatmul.mubr.f32.gmra.mrb[0].mxu0 %v576
    %v829 = vpop.f32.mrb[0].mxu0
    %v830 = vadd.f32 0.0, %v829
    %v831 = vpop.f32.mrb[0].mxu0
    %v832 = vadd.f32 0.0, %v831
    %833 = vdwg.mxu0
    %834 = vmatprep.subr.mxu0 %v562
    %835 = vmatpush1.msra.mxu0 %v561
    %836 = vmatprep.subr.mxu0 %v601
    %837 = vmatpush1.msra.mxu0 %v598
    %838 = vmatprep.subr.mxu0 0.0
    %839 = vmatpush1.msra.mxu0 0.0
    %840 = vmatprep.subr.mxu0 0.0
    %841 = vmatpush1.msra.mxu0 0.0
    %842 = vmatprep.subr.mxu0 0.0
    %843 = vmatpush1.msra.mxu0 0.0
    %844 = vmatprep.subr.mxu0 0.0
    %845 = vmatpush1.msra.mxu0 0.0
    %846 = vmatprep.subr.mxu0 0.0
    %847 = vmatpush1.msra.mxu0 0.0
    %848 = vmatprep.subr.mxu0 0.0
    %849 = vmatpush1.msra.mxu0 0.0
    %850 = vmatprep.subr.mxu0 0.0
    %851 = vmatpush1.msra.mxu0 0.0
    %852 = vmatprep.subr.mxu0 0.0
    %853 = vmatpush1.msra.mxu0 0.0
    %854 = vmatprep.subr.mxu0 0.0
    %855 = vmatpush1.msra.mxu0 0.0
    %856 = vmatprep.subr.mxu0 0.0
    %857 = vmatpush1.msra.mxu0 0.0
    %858 = vmatprep.subr.mxu0 0.0
    %859 = vmatpush1.msra.mxu0 0.0
    %860 = vmatprep.subr.mxu0 0.0
    %861 = vmatpush1.msra.mxu0 0.0
    %862 = vmatprep.subr.mxu0 0.0
    %863 = vmatpush1.msra.mxu0 0.0
    %864 = vmatprep.subr.mxu0 0.0
    %865 = vmatpush1.msra.mxu0 0.0
    %866 = vmatprep.subr.mxu0 0.0
    %867 = vmatpush1.msra.mxu0 0.0
    %868 = vmatprep.subr.mxu0 0.0
    %869 = vmatpush1.msra.mxu0 0.0
    %870 = vmatprep.subr.mxu0 0.0
    %871 = vmatpush1.msra.mxu0 0.0
    %872 = vmatprep.subr.mxu0 0.0
    %873 = vmatpush1.msra.mxu0 0.0
    %874 = vmatprep.subr.mxu0 0.0
    %875 = vmatpush1.msra.mxu0 0.0
    %876 = vmatprep.subr.mxu0 0.0
    %877 = vmatpush1.msra.mxu0 0.0
    %878 = vmatprep.subr.mxu0 0.0
    %879 = vmatpush1.msra.mxu0 0.0
    %880 = vmatprep.subr.mxu0 0.0
    %881 = vmatpush1.msra.mxu0 0.0
    %882 = vmatprep.subr.mxu0 0.0
    %883 = vmatpush1.msra.mxu0 0.0
    %884 = vmatprep.subr.mxu0 0.0
    %885 = vmatpush1.msra.mxu0 0.0
    %886 = vmatprep.subr.mxu0 0.0
    %887 = vmatpush1.msra.mxu0 0.0
    %888 = vmatprep.subr.mxu0 0.0
    %889 = vmatpush1.msra.mxu0 0.0
    %890 = vmatprep.subr.mxu0 0.0
    %891 = vmatpush1.msra.mxu0 0.0
    %892 = vmatprep.subr.mxu0 0.0
    %893 = vmatpush1.msra.mxu0 0.0
    %894 = vmatprep.subr.mxu0 0.0
    %895 = vmatpush1.msra.mxu0 0.0
    %896 = vmatprep.subr.mxu0 0.0
    %897 = vmatpush1.msra.mxu0 0.0
    %898 = vmatprep.mubr.f32.mxu0 0.0
    %899 = vmatmul.mubr.f32.gmra.mrb[0].mxu0 %v573
    %v900 = vpop.f32.mrb[0].mxu0
    %v901 = vadd.f32 0.0, %v900
    %v902 = vpop.f32.mrb[0].mxu0
    %v903 = vadd.f32 0.0, %v902
    %904 = vmatprep.mubr.f32.mxu0 0.0
    %905 = vmatmul.mubr.f32.gmra.mrb[0].mxu0 %v576
    %v906 = vpop.f32.mrb[0].mxu0
    %v907 = vadd.f32 0.0, %v906
    %v908 = vpop.f32.mrb[0].mxu0
    %v909 = vadd.f32 0.0, %v908
    %910 = vdwg.mxu0
    %v919 = vunpack.c.l.b16 %v153
    %v920 = vunpack.c.h.b16 %v153
    %v921 = vunpack.c.l.b16 %v154
    %v922 = vunpack.c.h.b16 %v154
    %v923 = vunpack.c.l.b16 %v155
    %v924 = vunpack.c.h.b16 %v155
    %v925 = vunpack.c.l.b16 %v156
    %v926 = vunpack.c.l.b16 %v157
    %v927 = vunpack.c.h.b16 %v157
    %v928 = vunpack.c.l.b16 %v158
    %v929 = vunpack.c.h.b16 %v158
    %v930 = vunpack.c.l.b16 %v159
    %v931 = vunpack.c.h.b16 %v159
    %v932 = vunpack.c.l.b16 %v160
    %v933 = vpack.c.b16 %v926, %v919
    %v934 = vpack.c.b16 %v927, %v920
    %v935 = vpack.c.b16 %v928, %v921
    %v936 = vpack.c.b16 %v929, %v922
    %v937 = vpack.c.b16 %v930, %v923
    %v938 = vpack.c.b16 %v931, %v924
    %v939 = vpack.c.b16 %v932, %v925
    %v1338 = vunpack.c.l.b16 %v161
    %v1339 = vunpack.c.h.b16 %v161
    %v1340 = vunpack.c.l.b16 %v162
    %v1341 = vunpack.c.h.b16 %v162
    %v1342 = vunpack.c.l.b16 %v163
    %v1343 = vunpack.c.h.b16 %v163
    %v1344 = vunpack.c.l.b16 %v164
    %v1345 = vunpack.c.h.b16 %v164
    %v1346 = vunpack.c.l.b16 %v165
    %v1347 = vunpack.c.h.b16 %v165
    %v1348 = vunpack.c.l.b16 %v166
    %v1349 = vunpack.c.h.b16 %v166
    %v1350 = vunpack.c.l.b16 %v167
    %v1351 = vunpack.c.h.b16 %v167
    %v1352 = vunpack.c.l.b16 %v168
    %v1353 = vunpack.c.h.b16 %v168
    %v1354 = vunpack.c.l.b16 %v169
    %v1355 = vunpack.c.h.b16 %v169
    %v1356 = vunpack.c.l.b16 %v170
    %v1357 = vunpack.c.h.b16 %v170
    %v1358 = vunpack.c.l.b16 %v171
    %v1359 = vunpack.c.h.b16 %v171
    %v1360 = vunpack.c.l.b16 %v172
    %v1361 = vunpack.c.h.b16 %v172
    %v1362 = vunpack.c.l.b16 %v173
    %v1363 = vunpack.c.h.b16 %v173
    %v1364 = vunpack.c.l.b16 %v174
    %v1365 = vunpack.c.h.b16 %v174
    %v1366 = vunpack.c.l.b16 %v175
    %v1367 = vunpack.c.h.b16 %v175
    %v1368 = vunpack.c.l.b16 %v176
    %v1369 = vunpack.c.h.b16 %v176
    %v1370 = vunpack.c.l.b16 %v177
    %v1371 = vunpack.c.h.b16 %v177
    %v1372 = vunpack.c.l.b16 %v178
    %v1373 = vunpack.c.h.b16 %v178
    %v1374 = vunpack.c.l.b16 %v179
    %v1375 = vunpack.c.h.b16 %v179
    %v1376 = vunpack.c.l.b16 %v180
    %v1377 = vunpack.c.h.b16 %v180
    %v1378 = vunpack.c.l.b16 %v181
    %v1379 = vunpack.c.h.b16 %v181
    %v1380 = vunpack.c.l.b16 %v182
    %v1381 = vunpack.c.h.b16 %v182
    %v1382 = vunpack.c.l.b16 %v183
    %v1383 = vunpack.c.h.b16 %v183
    %v1384 = vunpack.c.l.b16 %v184
    %v1385 = vunpack.c.h.b16 %v184
    %v1386 = vunpack.c.l.b16 %v185
    %v1387 = vunpack.c.h.b16 %v185
    %v1388 = vunpack.c.l.b16 %v186
    %v1389 = vunpack.c.h.b16 %v186
    %v1390 = vunpack.c.l.b16 %v187
    %v1391 = vunpack.c.h.b16 %v187
    %v1392 = vunpack.c.l.b16 %v188
    %v1393 = vunpack.c.h.b16 %v188
    %v1394 = vunpack.c.l.b16 %v189
    %v1395 = vunpack.c.h.b16 %v189
    %v1396 = vunpack.c.l.b16 %v190
    %v1397 = vunpack.c.h.b16 %v190
    %v1398 = vunpack.c.l.b16 %v191
    %v1399 = vunpack.c.h.b16 %v191
    %v1400 = vunpack.c.l.b16 %v192
    %v1401 = vunpack.c.h.b16 %v192
    %v1402 = vunpack.c.l.b16 %v193
    %v1403 = vunpack.c.h.b16 %v193
    %v1404 = vunpack.c.l.b16 %v194
    %v1405 = vunpack.c.h.b16 %v194
    %v1406 = vunpack.c.l.b16 %v195
    %v1407 = vunpack.c.h.b16 %v195
    %v1408 = vunpack.c.l.b16 %v196
    %v1409 = vunpack.c.h.b16 %v196
    %v1410 = vunpack.c.l.b16 %v197
    %v1411 = vunpack.c.h.b16 %v197
    %v1412 = vunpack.c.l.b16 %v198
    %v1413 = vunpack.c.h.b16 %v198
    %v1414 = vunpack.c.l.b16 %v199
    %v1415 = vunpack.c.h.b16 %v199
    %v1416 = vunpack.c.l.b16 %v200
    %v1417 = vunpack.c.h.b16 %v200
    %v1418 = vunpack.c.l.b16 %v201
    %v1419 = vunpack.c.h.b16 %v201
    %v1420 = vunpack.c.l.b16 %v202
    %v1421 = vunpack.c.h.b16 %v202
    %v1422 = vunpack.c.l.b16 %v203
    %v1423 = vunpack.c.h.b16 %v203
    %v1424 = vunpack.c.l.b16 %v204
    %v1425 = vunpack.c.h.b16 %v204
    %v1426 = vunpack.c.l.b16 %v205
    %v1427 = vunpack.c.h.b16 %v205
    %v1428 = vunpack.c.l.b16 %v206
    %v1429 = vunpack.c.h.b16 %v206
    %v1430 = vunpack.c.l.b16 %v207
    %v1431 = vunpack.c.h.b16 %v207
    %v1432 = vunpack.c.l.b16 %v208
    %v1433 = vunpack.c.h.b16 %v208
    %v1434 = vunpack.c.l.b16 %v209
    %v1435 = vunpack.c.h.b16 %v209
    %v1436 = vunpack.c.l.b16 %v210
    %v1437 = vunpack.c.h.b16 %v210
    %v1438 = vunpack.c.l.b16 %v211
    %v1439 = vunpack.c.h.b16 %v211
    %v1440 = vunpack.c.l.b16 %v212
    %v1441 = vunpack.c.h.b16 %v212
    %v1442 = vunpack.c.l.b16 %v213
    %v1443 = vunpack.c.h.b16 %v213
    %v1444 = vunpack.c.l.b16 %v214
    %v1445 = vunpack.c.h.b16 %v214
    %v1446 = vunpack.c.l.b16 %v215
    %v1447 = vunpack.c.h.b16 %v215
    %v1448 = vunpack.c.l.b16 %v216
    %v1449 = vunpack.c.h.b16 %v216
    %v1450 = vunpack.c.l.b16 %v217
    %v1451 = vunpack.c.h.b16 %v217
    %v1452 = vunpack.c.l.b16 %v218
    %v1453 = vunpack.c.h.b16 %v218
    %v1454 = vunpack.c.l.b16 %v219
    %v1455 = vunpack.c.h.b16 %v219
    %v1456 = vunpack.c.l.b16 %v220
    %v1457 = vunpack.c.h.b16 %v220
    %v1458 = vunpack.c.l.b16 %v221
    %v1459 = vunpack.c.h.b16 %v221
    %v1460 = vunpack.c.l.b16 %v222
    %v1461 = vunpack.c.h.b16 %v222
    %v1462 = vunpack.c.l.b16 %v223
    %v1463 = vunpack.c.h.b16 %v223
    %v1464 = vunpack.c.l.b16 %v224
    %v1465 = vunpack.c.h.b16 %v224
    %v1466 = vunpack.c.l.b16 %v225
    %v1467 = vunpack.c.h.b16 %v225
    %v1468 = vunpack.c.l.b16 %v226
    %v1469 = vunpack.c.h.b16 %v226
    %v1470 = vunpack.c.l.b16 %v227
    %v1471 = vunpack.c.h.b16 %v227
    %v1472 = vunpack.c.l.b16 %v228
    %v1473 = vunpack.c.h.b16 %v228
    %v1474 = vunpack.c.l.b16 %v229
    %v1475 = vunpack.c.h.b16 %v229
    %v1476 = vunpack.c.l.b16 %v230
    %v1477 = vunpack.c.h.b16 %v230
    %v1478 = vunpack.c.l.b16 %v231
    %v1479 = vunpack.c.h.b16 %v231
    %v1480 = vunpack.c.l.b16 %v232
    %v1481 = vunpack.c.h.b16 %v232
    %v1482 = vunpack.c.l.b16 %v233
    %v1483 = vunpack.c.h.b16 %v233
    %v1484 = vunpack.c.l.b16 %v234
    %v1485 = vunpack.c.h.b16 %v234
    %v1486 = vunpack.c.l.b16 %v235
    %v1487 = vunpack.c.h.b16 %v235
    %v1488 = vunpack.c.l.b16 %v236
    %v1489 = vunpack.c.h.b16 %v236
    %v1490 = vunpack.c.l.b16 %v237
    %v1491 = vunpack.c.h.b16 %v237
    %v1492 = vunpack.c.l.b16 %v238
    %v1493 = vunpack.c.h.b16 %v238
    %v1494 = vunpack.c.l.b16 %v239
    %v1495 = vunpack.c.h.b16 %v239
    %v1496 = vunpack.c.l.b16 %v240
    %v1497 = vunpack.c.h.b16 %v240
    %v1498 = vunpack.c.l.b16 %v241
    %v1499 = vunpack.c.h.b16 %v241
    %v1500 = vunpack.c.l.b16 %v242
    %v1501 = vunpack.c.h.b16 %v242
    %v1502 = vunpack.c.l.b16 %v243
    %v1503 = vunpack.c.h.b16 %v243
    %v1504 = vunpack.c.l.b16 %v244
    %v1505 = vunpack.c.h.b16 %v244
    %v1506 = vunpack.c.l.b16 %v245
    %v1507 = vunpack.c.h.b16 %v245
    %v1508 = vunpack.c.l.b16 %v246
    %v1509 = vunpack.c.h.b16 %v246
    %v1510 = vunpack.c.l.b16 %v247
    %v1511 = vunpack.c.h.b16 %v247
    %v1512 = vunpack.c.l.b16 %v248
    %v1513 = vunpack.c.h.b16 %v248
    %v1514 = vunpack.c.l.b16 %v249
    %v1515 = vunpack.c.h.b16 %v249
    %v1516 = vunpack.c.l.b16 %v250
    %v1517 = vunpack.c.h.b16 %v250
    %v1518 = vunpack.c.l.b16 %v251
    %v1519 = vunpack.c.h.b16 %v251
    %v1520 = vunpack.c.l.b16 %v252
    %v1521 = vunpack.c.h.b16 %v252
    %v1522 = vunpack.c.l.b16 %v253
    %v1523 = vunpack.c.h.b16 %v253
    %v1524 = vunpack.c.l.b16 %v254
    %v1525 = vunpack.c.h.b16 %v254
    %v1526 = vunpack.c.l.b16 %v255
    %v1527 = vunpack.c.h.b16 %v255
    %v1528 = vunpack.c.l.b16 %v256
    %v1529 = vunpack.c.h.b16 %v256
    %v1530 = vunpack.c.l.b16 %v257
    %v1531 = vunpack.c.h.b16 %v257
    %v1532 = vunpack.c.l.b16 %v258
    %v1533 = vunpack.c.h.b16 %v258
    %v1534 = vunpack.c.l.b16 %v259
    %v1535 = vunpack.c.h.b16 %v259
    %v1536 = vunpack.c.l.b16 %v260
    %v1537 = vunpack.c.h.b16 %v260
    %v1538 = vunpack.c.l.b16 %v261
    %v1539 = vunpack.c.h.b16 %v261
    %v1540 = vunpack.c.l.b16 %v262
    %v1541 = vunpack.c.h.b16 %v262
    %v1542 = vunpack.c.l.b16 %v263
    %v1543 = vunpack.c.h.b16 %v263
    %v1544 = vunpack.c.l.b16 %v264
    %v1545 = vunpack.c.h.b16 %v264
    %v1546 = vunpack.c.l.b16 %v265
    %v1547 = vunpack.c.h.b16 %v265
    %v1548 = vunpack.c.l.b16 %v266
    %v1549 = vunpack.c.h.b16 %v266
    %v1550 = vunpack.c.l.b16 %v267
    %v1551 = vunpack.c.h.b16 %v267
    %v1552 = vunpack.c.l.b16 %v268
    %v1553 = vunpack.c.h.b16 %v268
    %v1554 = vunpack.c.l.b16 %v269
    %v1555 = vunpack.c.h.b16 %v269
    %v1556 = vunpack.c.l.b16 %v270
    %v1557 = vunpack.c.h.b16 %v270
    %v1558 = vunpack.c.l.b16 %v271
    %v1559 = vunpack.c.h.b16 %v271
    %v1560 = vunpack.c.l.b16 %v272
    %v1561 = vunpack.c.h.b16 %v272
    %v1562 = vunpack.c.l.b16 %v273
    %v1563 = vunpack.c.h.b16 %v273
    %v1564 = vunpack.c.l.b16 %v274
    %v1565 = vunpack.c.h.b16 %v274
    %v1566 = vunpack.c.l.b16 %v275
    %v1567 = vunpack.c.h.b16 %v275
    %v1568 = vunpack.c.l.b16 %v276
    %v1569 = vunpack.c.h.b16 %v276
    %v1570 = vunpack.c.l.b16 %v277
    %v1571 = vunpack.c.h.b16 %v277
    %v1572 = vunpack.c.l.b16 %v278
    %v1573 = vunpack.c.h.b16 %v278
    %v1574 = vunpack.c.l.b16 %v279
    %v1575 = vunpack.c.h.b16 %v279
    %v1576 = vunpack.c.l.b16 %v280
    %v1577 = vunpack.c.h.b16 %v280
    %v1578 = vunpack.c.l.b16 %v281
    %v1579 = vunpack.c.h.b16 %v281
    %v1580 = vunpack.c.l.b16 %v282
    %v1581 = vunpack.c.h.b16 %v282
    %v1582 = vunpack.c.l.b16 %v283
    %v1583 = vunpack.c.h.b16 %v283
    %v1584 = vunpack.c.l.b16 %v284
    %v1585 = vunpack.c.h.b16 %v284
    %v1586 = vunpack.c.l.b16 %v285
    %v1587 = vunpack.c.h.b16 %v285
    %v1588 = vunpack.c.l.b16 %v286
    %v1589 = vunpack.c.h.b16 %v286
    %v1590 = vunpack.c.l.b16 %v287
    %v1591 = vunpack.c.h.b16 %v287
    %v1592 = vunpack.c.l.b16 %v288
    %v1593 = vunpack.c.h.b16 %v288
    %v1594 = vunpack.c.l.b16 %v289
    %v1595 = vunpack.c.h.b16 %v289
    %v1596 = vunpack.c.l.b16 %v290
    %v1597 = vunpack.c.h.b16 %v290
    %v1598 = vunpack.c.l.b16 %v291
    %v1599 = vunpack.c.h.b16 %v291
    %v1600 = vunpack.c.l.b16 %v292
    %v1601 = vunpack.c.h.b16 %v292
    %v1602 = vunpack.c.l.b16 %v293
    %v1603 = vunpack.c.h.b16 %v293
    %v1604 = vunpack.c.l.b16 %v294
    %v1605 = vunpack.c.h.b16 %v294
    %v1606 = vunpack.c.l.b16 %v295
    %v1607 = vunpack.c.h.b16 %v295
    %v1608 = vunpack.c.l.b16 %v296
    %v1609 = vunpack.c.h.b16 %v296
    %v1610 = vunpack.c.l.b16 %v297
    %v1611 = vunpack.c.h.b16 %v297
    %v1612 = vunpack.c.l.b16 %v298
    %v1613 = vunpack.c.h.b16 %v298
    %v1614 = vunpack.c.l.b16 %v299
    %v1615 = vunpack.c.h.b16 %v299
    %v1616 = vunpack.c.l.b16 %v300
    %v1617 = vunpack.c.h.b16 %v300
    %v1618 = vunpack.c.l.b16 %v301
    %v1619 = vunpack.c.h.b16 %v301
    %v1620 = vunpack.c.l.b16 %v302
    %v1621 = vunpack.c.h.b16 %v302
    %v1622 = vunpack.c.l.b16 %v303
    %v1623 = vunpack.c.h.b16 %v303
    %v1624 = vunpack.c.l.b16 %v304
    %v1625 = vunpack.c.h.b16 %v304
    %v1626 = vunpack.c.l.b16 %v305
    %v1627 = vunpack.c.h.b16 %v305
    %v1628 = vunpack.c.l.b16 %v306
    %v1629 = vunpack.c.h.b16 %v306
    %v1630 = vunpack.c.l.b16 %v307
    %v1631 = vunpack.c.h.b16 %v307
    %v1632 = vunpack.c.l.b16 %v308
    %v1633 = vunpack.c.h.b16 %v308
    %v1634 = vunpack.c.l.b16 %v309
    %v1635 = vunpack.c.h.b16 %v309
    %v1636 = vunpack.c.l.b16 %v310
    %v1637 = vunpack.c.h.b16 %v310
    %v1638 = vunpack.c.l.b16 %v311
    %v1639 = vunpack.c.h.b16 %v311
    %v1640 = vunpack.c.l.b16 %v312
    %v1641 = vunpack.c.h.b16 %v312
    %v1642 = vunpack.c.l.b16 %v313
    %v1643 = vunpack.c.h.b16 %v313
    %v1644 = vunpack.c.l.b16 %v314
    %v1645 = vunpack.c.h.b16 %v314
    %v1646 = vunpack.c.l.b16 %v315
    %v1647 = vunpack.c.h.b16 %v315
    %v1648 = vunpack.c.l.b16 %v316
    %v1649 = vunpack.c.h.b16 %v316
    %v1650 = vunpack.c.l.b16 %v317
    %v1651 = vunpack.c.h.b16 %v317
    %v1652 = vunpack.c.l.b16 %v318
    %v1653 = vunpack.c.h.b16 %v318
    %v1654 = vunpack.c.l.b16 %v319
    %v1655 = vunpack.c.h.b16 %v319
    %v1656 = vunpack.c.l.b16 %v320
    %v1657 = vunpack.c.h.b16 %v320
    %v1658 = vunpack.c.l.b16 %v321
    %v1659 = vunpack.c.h.b16 %v321
    %v1660 = vunpack.c.l.b16 %v322
    %v1661 = vunpack.c.h.b16 %v322
    %v1662 = vunpack.c.l.b16 %v323
    %v1663 = vunpack.c.h.b16 %v323
    %v1664 = vunpack.c.l.b16 %v324
    %v1665 = vunpack.c.h.b16 %v324
    %v1666 = vunpack.c.l.b16 %v325
    %v1667 = vunpack.c.h.b16 %v325
    %v1668 = vunpack.c.l.b16 %v326
    %v1669 = vunpack.c.h.b16 %v326
    %v1670 = vunpack.c.l.b16 %v327
    %v1671 = vunpack.c.h.b16 %v327
    %v1672 = vunpack.c.l.b16 %v328
    %v1673 = vunpack.c.h.b16 %v328
    %v1674 = vunpack.c.l.b16 %v329
    %v1675 = vunpack.c.h.b16 %v329
    %v1676 = vunpack.c.l.b16 %v330
    %v1677 = vunpack.c.h.b16 %v330
    %v1678 = vunpack.c.l.b16 %v331
    %v1679 = vunpack.c.h.b16 %v331
    %v1680 = vunpack.c.l.b16 %v332
    %v1681 = vunpack.c.h.b16 %v332
    %v1682 = vunpack.c.l.b16 %v333
    %v1683 = vunpack.c.h.b16 %v333
    %v1684 = vunpack.c.l.b16 %v334
    %v1685 = vunpack.c.h.b16 %v334
    %v1686 = vunpack.c.l.b16 %v335
    %v1687 = vunpack.c.h.b16 %v335
    %v1688 = vunpack.c.l.b16 %v336
    %v1689 = vunpack.c.h.b16 %v336
    %v1690 = vunpack.c.l.b16 %v337
    %v1691 = vunpack.c.h.b16 %v337
    %v1692 = vunpack.c.l.b16 %v338
    %v1693 = vunpack.c.h.b16 %v338
    %v1694 = vunpack.c.l.b16 %v339
    %v1695 = vunpack.c.h.b16 %v339
    %v1696 = vunpack.c.l.b16 %v340
    %v1697 = vunpack.c.h.b16 %v340
    %v1698 = vunpack.c.l.b16 %v341
    %v1699 = vunpack.c.h.b16 %v341
    %v1700 = vunpack.c.l.b16 %v342
    %v1701 = vunpack.c.h.b16 %v342
    %v1702 = vunpack.c.l.b16 %v343
    %v1703 = vunpack.c.h.b16 %v343
    %v1704 = vunpack.c.l.b16 %v344
    %v1705 = vunpack.c.h.b16 %v344
    %v1706 = vunpack.c.l.b16 %v345
    %v1707 = vunpack.c.h.b16 %v345
    %v1708 = vunpack.c.l.b16 %v346
    %v1709 = vunpack.c.h.b16 %v346
    %v1710 = vunpack.c.l.b16 %v347
    %v1711 = vunpack.c.h.b16 %v347
    %v1712 = vunpack.c.l.b16 %v348
    %v1713 = vunpack.c.h.b16 %v348
    %v1714 = vunpack.c.l.b16 %v349
    %v1715 = vunpack.c.h.b16 %v349
    %v1716 = vunpack.c.l.b16 %v350
    %v1717 = vunpack.c.h.b16 %v350
    %v1718 = vunpack.c.l.b16 %v351
    %v1719 = vunpack.c.h.b16 %v351
    %v1720 = vunpack.c.l.b16 %v352
    %v1721 = vunpack.c.h.b16 %v352
    %v1722 = vunpack.c.l.b16 %v353
    %v1723 = vunpack.c.h.b16 %v353
    %v1724 = vunpack.c.l.b16 %v354
    %v1725 = vunpack.c.h.b16 %v354
    %v1726 = vunpack.c.l.b16 %v355
    %v1727 = vunpack.c.h.b16 %v355
    %v1728 = vunpack.c.l.b16 %v356
    %v1729 = vunpack.c.h.b16 %v356
    %v1730 = vunpack.c.l.b16 %v357
    %v1731 = vunpack.c.h.b16 %v357
    %v1732 = vunpack.c.l.b16 %v358
    %v1733 = vunpack.c.h.b16 %v358
    %v1734 = vunpack.c.l.b16 %v359
    %v1735 = vunpack.c.h.b16 %v359
    %v1736 = vunpack.c.l.b16 %v360
    %v1737 = vunpack.c.h.b16 %v360
    %v1738 = vunpack.c.l.b16 %v361
    %v1739 = vunpack.c.h.b16 %v361
    %v1740 = vunpack.c.l.b16 %v362
    %v1741 = vunpack.c.h.b16 %v362
    %v1742 = vunpack.c.l.b16 %v363
    %v1743 = vunpack.c.h.b16 %v363
    %v1744 = vunpack.c.l.b16 %v364
    %v1745 = vunpack.c.h.b16 %v364
    %v1746 = vunpack.c.l.b16 %v365
    %v1747 = vunpack.c.h.b16 %v365
    %v1748 = vunpack.c.l.b16 %v366
    %v1749 = vunpack.c.h.b16 %v366
    %v1750 = vunpack.c.l.b16 %v367
    %v1751 = vunpack.c.h.b16 %v367
    %v1752 = vunpack.c.l.b16 %v368
    %v1753 = vunpack.c.h.b16 %v368
    %v1754 = vunpack.c.l.b16 %v369
    %v1755 = vunpack.c.h.b16 %v369
    %v1756 = vunpack.c.l.b16 %v370
    %v1757 = vunpack.c.h.b16 %v370
    %v1758 = vunpack.c.l.b16 %v371
    %v1759 = vunpack.c.h.b16 %v371
    %v1760 = vunpack.c.l.b16 %v372
    %v1761 = vunpack.c.h.b16 %v372
    %v1762 = vunpack.c.l.b16 %v373
    %v1763 = vunpack.c.h.b16 %v373
    %v1764 = vunpack.c.l.b16 %v374
    %v1765 = vunpack.c.h.b16 %v374
    %v1766 = vunpack.c.l.b16 %v375
    %v1767 = vunpack.c.h.b16 %v375
    %v1768 = vunpack.c.l.b16 %v376
    %v1769 = vunpack.c.h.b16 %v376
    %v1770 = vunpack.c.l.b16 %v377
    %v1771 = vunpack.c.h.b16 %v377
    %v1772 = vunpack.c.l.b16 %v378
    %v1773 = vunpack.c.h.b16 %v378
    %v1774 = vunpack.c.l.b16 %v379
    %v1775 = vunpack.c.h.b16 %v379
    %v1776 = vunpack.c.l.b16 %v380
    %v1777 = vunpack.c.h.b16 %v380
    %v1778 = vunpack.c.l.b16 %v381
    %v1779 = vunpack.c.h.b16 %v381
    %v1780 = vunpack.c.l.b16 %v382
    %v1781 = vunpack.c.h.b16 %v382
    %v1782 = vunpack.c.l.b16 %v383
    %v1783 = vunpack.c.h.b16 %v383
    %v1784 = vunpack.c.l.b16 %v384
    %v1785 = vunpack.c.h.b16 %v384
    %v1786 = vunpack.c.l.b16 %v385
    %v1787 = vunpack.c.h.b16 %v385
    %v1788 = vunpack.c.l.b16 %v386
    %v1789 = vunpack.c.h.b16 %v386
    %v1790 = vunpack.c.l.b16 %v387
    %v1791 = vunpack.c.h.b16 %v387
    %v1792 = vunpack.c.l.b16 %v388
    %v1793 = vunpack.c.h.b16 %v388
    %v1794 = vunpack.c.l.b16 %v389
    %v1795 = vunpack.c.h.b16 %v389
    %v1796 = vunpack.c.l.b16 %v390
    %v1797 = vunpack.c.h.b16 %v390
    %v1798 = vunpack.c.l.b16 %v391
    %v1799 = vunpack.c.h.b16 %v391
    %v1800 = vunpack.c.l.b16 %v392
    %v1801 = vunpack.c.h.b16 %v392
    %v1802 = vunpack.c.l.b16 %v393
    %v1803 = vunpack.c.h.b16 %v393
    %v1804 = vunpack.c.l.b16 %v394
    %v1805 = vunpack.c.h.b16 %v394
    %v1806 = vunpack.c.l.b16 %v395
    %v1807 = vunpack.c.h.b16 %v395
    %v1808 = vunpack.c.l.b16 %v396
    %v1809 = vunpack.c.h.b16 %v396
    %v1810 = vunpack.c.l.b16 %v397
    %v1811 = vunpack.c.h.b16 %v397
    %v1812 = vunpack.c.l.b16 %v398
    %v1813 = vunpack.c.h.b16 %v398
    %v1814 = vunpack.c.l.b16 %v399
    %v1815 = vunpack.c.h.b16 %v399
    %v1816 = vunpack.c.l.b16 %v400
    %v1817 = vunpack.c.h.b16 %v400
    %v1818 = vunpack.c.l.b16 %v401
    %v1819 = vunpack.c.h.b16 %v401
    %v1820 = vunpack.c.l.b16 %v402
    %v1821 = vunpack.c.h.b16 %v402
    %v1822 = vunpack.c.l.b16 %v403
    %v1823 = vunpack.c.h.b16 %v403
    %v1824 = vunpack.c.l.b16 %v404
    %v1825 = vunpack.c.h.b16 %v404
    %v1826 = vunpack.c.l.b16 %v405
    %v1827 = vunpack.c.h.b16 %v405
    %v1828 = vunpack.c.l.b16 %v406
    %v1829 = vunpack.c.h.b16 %v406
    %v1830 = vunpack.c.l.b16 %v407
    %v1831 = vunpack.c.h.b16 %v407
    %v1832 = vunpack.c.l.b16 %v408
    %v1833 = vunpack.c.h.b16 %v408
    %v1834 = vunpack.c.l.b16 %v409
    %v1835 = vunpack.c.h.b16 %v409
    %v1836 = vunpack.c.l.b16 %v410
    %v1837 = vunpack.c.h.b16 %v410
    %v1838 = vunpack.c.l.b16 %v411
    %v1839 = vunpack.c.h.b16 %v411
    %v1840 = vunpack.c.l.b16 %v412
    %v1841 = vunpack.c.h.b16 %v412
    %v1842 = vunpack.c.l.b16 %v413
    %v1843 = vunpack.c.h.b16 %v413
    %v1844 = vunpack.c.l.b16 %v414
    %v1845 = vunpack.c.h.b16 %v414
    %v1846 = vunpack.c.l.b16 %v415
    %v1847 = vunpack.c.h.b16 %v415
    %v1848 = vunpack.c.l.b16 %v416
    %v1849 = vunpack.c.h.b16 %v416
    %v1850 = vunpack.c.l.b16 %v417
    %v1851 = vunpack.c.h.b16 %v417
    %v1852 = vunpack.c.l.b16 %v418
    %v1853 = vunpack.c.h.b16 %v418
    %v1854 = vunpack.c.l.b16 %v419
    %v1855 = vunpack.c.h.b16 %v419
    %v1856 = vunpack.c.l.b16 %v420
    %v1857 = vunpack.c.h.b16 %v420
    %v1858 = vunpack.c.l.b16 %v421
    %v1859 = vunpack.c.h.b16 %v421
    %v1860 = vunpack.c.l.b16 %v422
    %v1861 = vunpack.c.h.b16 %v422
    %v1862 = vunpack.c.l.b16 %v423
    %v1863 = vunpack.c.h.b16 %v423
    %v1864 = vunpack.c.l.b16 %v424
    %v1865 = vunpack.c.h.b16 %v424
    %v1866 = vunpack.c.l.b16 %v425
    %v1867 = vunpack.c.h.b16 %v425
    %v1868 = vunpack.c.l.b16 %v426
    %v1869 = vunpack.c.h.b16 %v426
    %v1870 = vunpack.c.l.b16 %v427
    %v1871 = vunpack.c.h.b16 %v427
    %v1872 = vunpack.c.l.b16 %v428
    %v1873 = vunpack.c.h.b16 %v428
    %v1874 = vunpack.c.l.b16 %v429
    %v1875 = vunpack.c.h.b16 %v429
    %v1876 = vunpack.c.l.b16 %v430
    %v1877 = vunpack.c.h.b16 %v430
    %v1878 = vunpack.c.l.b16 %v431
    %v1879 = vunpack.c.h.b16 %v431
    %v1880 = vunpack.c.l.b16 %v432
    %v1881 = vunpack.c.h.b16 %v432
    %v1882 = vunpack.c.l.b16 %v433
    %v1883 = vunpack.c.h.b16 %v433
    %v1884 = vunpack.c.l.b16 %v434
    %v1885 = vunpack.c.h.b16 %v434
    %v1886 = vunpack.c.l.b16 %v435
    %v1887 = vunpack.c.h.b16 %v435
    %v1888 = vunpack.c.l.b16 %v436
    %v1889 = vunpack.c.h.b16 %v436
    %v1890 = vunpack.c.l.b16 %v437
    %v1891 = vunpack.c.h.b16 %v437
    %v1892 = vunpack.c.l.b16 %v438
    %v1893 = vunpack.c.h.b16 %v438
    %v1894 = vunpack.c.l.b16 %v439
    %v1895 = vunpack.c.h.b16 %v439
    %v1896 = vunpack.c.l.b16 %v440
    %v1897 = vunpack.c.h.b16 %v440
    %v1898 = vunpack.c.l.b16 %v441
    %v1899 = vunpack.c.h.b16 %v441
    %v1900 = vunpack.c.l.b16 %v442
    %v1901 = vunpack.c.h.b16 %v442
    %v1902 = vunpack.c.l.b16 %v443
    %v1903 = vunpack.c.h.b16 %v443
    %v1904 = vunpack.c.l.b16 %v444
    %v1905 = vunpack.c.h.b16 %v444
    %v1906 = vunpack.c.l.b16 %v445
    %v1907 = vunpack.c.h.b16 %v445
    %v1908 = vunpack.c.l.b16 %v446
    %v1909 = vunpack.c.h.b16 %v446
    %v1910 = vunpack.c.l.b16 %v447
    %v1911 = vunpack.c.h.b16 %v447
    %v1912 = vunpack.c.l.b16 %v448
    %v1913 = vunpack.c.h.b16 %v448
    %v1914 = vunpack.c.l.b16 %v449
    %v1915 = vunpack.c.h.b16 %v449
    %v1916 = vunpack.c.l.b16 %v450
    %v1917 = vunpack.c.h.b16 %v450
    %v1918 = vunpack.c.l.b16 %v451
    %v1919 = vunpack.c.h.b16 %v451
    %v1920 = vunpack.c.l.b16 %v452
    %v1921 = vunpack.c.h.b16 %v452
    %v1922 = vunpack.c.l.b16 %v453
    %v1923 = vunpack.c.h.b16 %v453
    %v1924 = vunpack.c.l.b16 %v454
    %v1925 = vunpack.c.h.b16 %v454
    %v1926 = vunpack.c.l.b16 %v455
    %v1927 = vunpack.c.h.b16 %v455
    %v1928 = vunpack.c.l.b16 %v456
    %v1929 = vunpack.c.h.b16 %v456
    %v1930 = vunpack.c.l.b16 %v457
    %v1931 = vunpack.c.h.b16 %v457
    %v1932 = vunpack.c.l.b16 %v458
    %v1933 = vunpack.c.h.b16 %v458
    %v1934 = vunpack.c.l.b16 %v459
    %v1935 = vunpack.c.h.b16 %v459
    %v1936 = vunpack.c.l.b16 %v460
    %v1937 = vunpack.c.h.b16 %v460
    %v1938 = vunpack.c.l.b16 %v461
    %v1939 = vunpack.c.h.b16 %v461
    %v1940 = vunpack.c.l.b16 %v462
    %v1941 = vunpack.c.h.b16 %v462
    %v1942 = vunpack.c.l.b16 %v463
    %v1943 = vunpack.c.h.b16 %v463
    %v1944 = vunpack.c.l.b16 %v464
    %v1945 = vunpack.c.h.b16 %v464
    %v1946 = vunpack.c.l.b16 %v465
    %v1947 = vunpack.c.h.b16 %v465
    %v1948 = vunpack.c.l.b16 %v466
    %v1949 = vunpack.c.h.b16 %v466
    %v1950 = vunpack.c.l.b16 %v467
    %v1951 = vunpack.c.h.b16 %v467
    %v1952 = vunpack.c.l.b16 %v468
    %v1953 = vunpack.c.h.b16 %v468
    %v1954 = vunpack.c.l.b16 %v469
    %v1955 = vunpack.c.h.b16 %v469
    %v1956 = vunpack.c.l.b16 %v470
    %v1957 = vunpack.c.h.b16 %v470
    %v1958 = vunpack.c.l.b16 %v471
    %v1959 = vunpack.c.h.b16 %v471
    %v1960 = vunpack.c.l.b16 %v472
    %v1961 = vunpack.c.h.b16 %v472
    %v1962 = vunpack.c.l.b16 %v473
    %v1963 = vunpack.c.h.b16 %v473
    %v1964 = vunpack.c.l.b16 %v474
    %v1965 = vunpack.c.h.b16 %v474
    %v1966 = vunpack.c.l.b16 %v475
    %v1967 = vunpack.c.h.b16 %v475
    %v1968 = vunpack.c.l.b16 %v476
    %v1969 = vunpack.c.h.b16 %v476
    %v1970 = vunpack.c.l.b16 %v477
    %v1971 = vunpack.c.h.b16 %v477
    %v1972 = vunpack.c.l.b16 %v478
    %v1973 = vunpack.c.h.b16 %v478
    %v1974 = vunpack.c.l.b16 %v479
    %v1975 = vunpack.c.h.b16 %v479
    %v1976 = vunpack.c.l.b16 %v480
    %v1977 = vunpack.c.h.b16 %v480
    %v1978 = vunpack.c.l.b16 %v481
    %v1979 = vunpack.c.h.b16 %v481
    %v1980 = vunpack.c.l.b16 %v482
    %v1981 = vunpack.c.h.b16 %v482
    %v1982 = vunpack.c.l.b16 %v483
    %v1983 = vunpack.c.h.b16 %v483
    %v1984 = vunpack.c.l.b16 %v484
    %v1985 = vunpack.c.h.b16 %v484
    %v1986 = vunpack.c.l.b16 %v485
    %v1987 = vunpack.c.h.b16 %v485
    %v1988 = vunpack.c.l.b16 %v486
    %v1989 = vunpack.c.h.b16 %v486
    %v1990 = vunpack.c.l.b16 %v487
    %v1991 = vunpack.c.h.b16 %v487
    %v1992 = vunpack.c.l.b16 %v488
    %v1993 = vunpack.c.h.b16 %v488
    %v1994 = vunpack.c.l.b16 %v489
    %v1995 = vunpack.c.h.b16 %v489
    %v1996 = vunpack.c.l.b16 %v490
    %v1997 = vunpack.c.h.b16 %v490
    %v1998 = vunpack.c.l.b16 %v491
    %v1999 = vunpack.c.h.b16 %v491
    %v2000 = vunpack.c.l.b16 %v492
    %v2001 = vunpack.c.h.b16 %v492
    %v2002 = vunpack.c.l.b16 %v493
    %v2003 = vunpack.c.h.b16 %v493
    %v2004 = vunpack.c.l.b16 %v494
    %v2005 = vunpack.c.h.b16 %v494
    %v2006 = vunpack.c.l.b16 %v495
    %v2007 = vunpack.c.h.b16 %v495
    %v2008 = vunpack.c.l.b16 %v496
    %v2009 = vunpack.c.h.b16 %v496
    %v2010 = vunpack.c.l.b16 %v497
    %v2011 = vunpack.c.h.b16 %v497
    %v2012 = vunpack.c.l.b16 %v498
    %v2013 = vunpack.c.h.b16 %v498
    %v2014 = vunpack.c.l.b16 %v499
    %v2015 = vunpack.c.h.b16 %v499
    %v2016 = vunpack.c.l.b16 %v500
    %v2017 = vunpack.c.h.b16 %v500
    %v2018 = vunpack.c.l.b16 %v501
    %v2019 = vunpack.c.h.b16 %v501
    %v2020 = vunpack.c.l.b16 %v502
    %v2021 = vunpack.c.h.b16 %v502
    %v2022 = vunpack.c.l.b16 %v503
    %v2023 = vunpack.c.h.b16 %v503
    %v2024 = vunpack.c.l.b16 %v504
    %v2025 = vunpack.c.h.b16 %v504
    %v2026 = vunpack.c.l.b16 %v505
    %v2027 = vunpack.c.h.b16 %v505
    %v2028 = vunpack.c.l.b16 %v506
    %v2029 = vunpack.c.h.b16 %v506
    %v2030 = vunpack.c.l.b16 %v507
    %v2031 = vunpack.c.h.b16 %v507
    %v2032 = vunpack.c.l.b16 %v508
    %v2033 = vunpack.c.h.b16 %v508
    %v2034 = vunpack.c.l.b16 %v509
    %v2035 = vunpack.c.h.b16 %v509
    %v2036 = vunpack.c.l.b16 %v510
    %v2037 = vunpack.c.h.b16 %v510
    %v2038 = vunpack.c.l.b16 %v511
    %v2039 = vunpack.c.h.b16 %v511
    %v2040 = vunpack.c.l.b16 %v512
    %v2041 = vunpack.c.h.b16 %v512
    %v2042 = vunpack.c.l.b16 %v513
    %v2043 = vunpack.c.h.b16 %v513
    %v2044 = vunpack.c.l.b16 %v514
    %v2045 = vunpack.c.h.b16 %v514
    %v2046 = vunpack.c.l.b16 %v515
    %v2047 = vunpack.c.h.b16 %v515
    %v2048 = vunpack.c.l.b16 %v516
    %v2049 = vunpack.c.h.b16 %v516
    %v2050 = vunpack.c.l.b16 %v517
    %v2051 = vunpack.c.h.b16 %v517
    %v2052 = vunpack.c.l.b16 %v518
    %v2053 = vunpack.c.h.b16 %v518
    %v2054 = vunpack.c.l.b16 %v519
    %v2055 = vunpack.c.h.b16 %v519
    %v2056 = vunpack.c.l.b16 %v520
    %v2057 = vunpack.c.h.b16 %v520
    %v2058 = vunpack.c.l.b16 %v521
    %v2059 = vunpack.c.h.b16 %v521
    %v2060 = vunpack.c.l.b16 %v522
    %v2061 = vunpack.c.h.b16 %v522
    %v2062 = vunpack.c.l.b16 %v523
    %v2063 = vunpack.c.h.b16 %v523
    %v2064 = vunpack.c.l.b16 %v524
    %v2065 = vunpack.c.h.b16 %v524
    %v2066 = vunpack.c.l.b16 %v525
    %v2067 = vunpack.c.h.b16 %v525
    %v2068 = vunpack.c.l.b16 %v526
    %v2069 = vunpack.c.h.b16 %v526
    %v2070 = vunpack.c.l.b16 %v527
    %v2071 = vunpack.c.h.b16 %v527
    %v2072 = vunpack.c.l.b16 %v528
    %v2073 = vunpack.c.h.b16 %v528
    %v2074 = vunpack.c.l.b16 %v529
    %v2075 = vunpack.c.h.b16 %v529
    %v2076 = vunpack.c.l.b16 %v530
    %v2077 = vunpack.c.h.b16 %v530
    %v2078 = vunpack.c.l.b16 %v531
    %v2079 = vunpack.c.h.b16 %v531
    %v2080 = vunpack.c.l.b16 %v532
    %v2081 = vunpack.c.h.b16 %v532
    %v2082 = vunpack.c.l.b16 %v533
    %v2083 = vunpack.c.h.b16 %v533
    %v2084 = vunpack.c.l.b16 %v534
    %v2085 = vunpack.c.h.b16 %v534
    %v2086 = vunpack.c.l.b16 %v535
    %v2087 = vunpack.c.h.b16 %v535
    %v2088 = vunpack.c.l.b16 %v536
    %v2089 = vunpack.c.h.b16 %v536
    %v2090 = vunpack.c.l.b16 %v537
    %v2091 = vunpack.c.h.b16 %v537
    %v2092 = vunpack.c.l.b16 %v538
    %v2093 = vunpack.c.h.b16 %v538
    %v2094 = vunpack.c.l.b16 %v539
    %v2095 = vunpack.c.h.b16 %v539
    %v2096 = vunpack.c.l.b16 %v540
    %v2097 = vunpack.c.h.b16 %v540
    %v2098 = vunpack.c.l.b16 %v541
    %v2099 = vunpack.c.h.b16 %v541
    %v2100 = vunpack.c.l.b16 %v542
    %v2101 = vunpack.c.h.b16 %v542
    %v2102 = vunpack.c.l.b16 %v543
    %v2103 = vunpack.c.h.b16 %v543
    %v2104 = vunpack.c.l.b16 %v544
    %v2105 = vunpack.c.h.b16 %v544
    %v2106 = vunpack.c.l.b16 %v545
    %v2107 = vunpack.c.h.b16 %v545
    %v2108 = vunpack.c.l.b16 %v546
    %v2109 = vunpack.c.h.b16 %v546
    %v2110 = vunpack.c.l.b16 %v547
    %v2111 = vunpack.c.h.b16 %v547
    %v2112 = vunpack.c.l.b16 %v548
    %v2113 = vunpack.c.h.b16 %v548
    %v2114 = vunpack.c.l.b16 %v549
    %v2115 = vunpack.c.h.b16 %v549
    %v2116 = vunpack.c.l.b16 %v550
    %v2117 = vunpack.c.h.b16 %v550
    %v2118 = vunpack.c.l.b16 %v551
    %v2119 = vunpack.c.h.b16 %v551
    %v2120 = vunpack.c.l.b16 %v552
    %v2121 = vunpack.c.h.b16 %v552
    %v2122 = vpack.c.b16 %v1346, %v1338
    %v2123 = vpack.c.b16 %v1347, %v1339
    %v2124 = vpack.c.b16 %v1348, %v1340
    %v2125 = vpack.c.b16 %v1349, %v1341
    %v2126 = vpack.c.b16 %v1350, %v1342
    %v2127 = vpack.c.b16 %v1351, %v1343
    %v2128 = vpack.c.b16 %v1352, %v1344
    %v2129 = vpack.c.b16 %v1353, %v1345
    %v2130 = vpack.c.b16 %v1362, %v1354
    %v2131 = vpack.c.b16 %v1363, %v1355
    %v2132 = vpack.c.b16 %v1364, %v1356
    %v2133 = vpack.c.b16 %v1365, %v1357
    %v2134 = vpack.c.b16 %v1366, %v1358
    %v2135 = vpack.c.b16 %v1367, %v1359
    %v2136 = vpack.c.b16 %v1368, %v1360
    %v2137 = vpack.c.b16 %v1369, %v1361
    %v2138 = vpack.c.b16 %v1378, %v1370
    %v2139 = vpack.c.b16 %v1379, %v1371
    %v2140 = vpack.c.b16 %v1380, %v1372
    %v2141 = vpack.c.b16 %v1381, %v1373
    %v2142 = vpack.c.b16 %v1382, %v1374
    %v2143 = vpack.c.b16 %v1383, %v1375
    %v2144 = vpack.c.b16 %v1384, %v1376
    %v2145 = vpack.c.b16 %v1385, %v1377
    %v2146 = vpack.c.b16 %v1394, %v1386
    %v2147 = vpack.c.b16 %v1395, %v1387
    %v2148 = vpack.c.b16 %v1396, %v1388
    %v2149 = vpack.c.b16 %v1397, %v1389
    %v2150 = vpack.c.b16 %v1398, %v1390
    %v2151 = vpack.c.b16 %v1399, %v1391
    %v2152 = vpack.c.b16 %v1400, %v1392
    %v2153 = vpack.c.b16 %v1401, %v1393
    %v2154 = vpack.c.b16 %v1410, %v1402
    %v2155 = vpack.c.b16 %v1411, %v1403
    %v2156 = vpack.c.b16 %v1412, %v1404
    %v2157 = vpack.c.b16 %v1413, %v1405
    %v2158 = vpack.c.b16 %v1414, %v1406
    %v2159 = vpack.c.b16 %v1415, %v1407
    %v2160 = vpack.c.b16 %v1416, %v1408
    %v2161 = vpack.c.b16 %v1417, %v1409
    %v2162 = vpack.c.b16 %v1426, %v1418
    %v2163 = vpack.c.b16 %v1427, %v1419
    %v2164 = vpack.c.b16 %v1428, %v1420
    %v2165 = vpack.c.b16 %v1429, %v1421
    %v2166 = vpack.c.b16 %v1430, %v1422
    %v2167 = vpack.c.b16 %v1431, %v1423
    %v2168 = vpack.c.b16 %v1432, %v1424
    %v2169 = vpack.c.b16 %v1433, %v1425
    %v2170 = vpack.c.b16 %v1442, %v1434
    %v2171 = vpack.c.b16 %v1443, %v1435
    %v2172 = vpack.c.b16 %v1444, %v1436
    %v2173 = vpack.c.b16 %v1445, %v1437
    %v2174 = vpack.c.b16 %v1446, %v1438
    %v2175 = vpack.c.b16 %v1447, %v1439
    %v2176 = vpack.c.b16 %v1448, %v1440
    %v2177 = vpack.c.b16 %v1449, %v1441
    %v2178 = vpack.c.b16 %v1458, %v1450
    %v2179 = vpack.c.b16 %v1459, %v1451
    %v2180 = vpack.c.b16 %v1460, %v1452
    %v2181 = vpack.c.b16 %v1461, %v1453
    %v2182 = vpack.c.b16 %v1462, %v1454
    %v2183 = vpack.c.b16 %v1463, %v1455
    %v2184 = vpack.c.b16 %v1464, %v1456
    %v2185 = vpack.c.b16 %v1465, %v1457
    %v2186 = vpack.c.b16 %v1474, %v1466
    %v2187 = vpack.c.b16 %v1475, %v1467
    %v2188 = vpack.c.b16 %v1476, %v1468
    %v2189 = vpack.c.b16 %v1477, %v1469
    %v2190 = vpack.c.b16 %v1478, %v1470
    %v2191 = vpack.c.b16 %v1479, %v1471
    %v2192 = vpack.c.b16 %v1480, %v1472
    %v2193 = vpack.c.b16 %v1481, %v1473
    %v2194 = vpack.c.b16 %v1490, %v1482
    %v2195 = vpack.c.b16 %v1491, %v1483
    %v2196 = vpack.c.b16 %v1492, %v1484
    %v2197 = vpack.c.b16 %v1493, %v1485
    %v2198 = vpack.c.b16 %v1494, %v1486
    %v2199 = vpack.c.b16 %v1495, %v1487
    %v2200 = vpack.c.b16 %v1496, %v1488
    %v2201 = vpack.c.b16 %v1497, %v1489
    %v2202 = vpack.c.b16 %v1506, %v1498
    %v2203 = vpack.c.b16 %v1507, %v1499
    %v2204 = vpack.c.b16 %v1508, %v1500
    %v2205 = vpack.c.b16 %v1509, %v1501
    %v2206 = vpack.c.b16 %v1510, %v1502
    %v2207 = vpack.c.b16 %v1511, %v1503
    %v2208 = vpack.c.b16 %v1512, %v1504
    %v2209 = vpack.c.b16 %v1513, %v1505
    %v2210 = vpack.c.b16 %v1522, %v1514
    %v2211 = vpack.c.b16 %v1523, %v1515
    %v2212 = vpack.c.b16 %v1524, %v1516
    %v2213 = vpack.c.b16 %v1525, %v1517
    %v2214 = vpack.c.b16 %v1526, %v1518
    %v2215 = vpack.c.b16 %v1527, %v1519
    %v2216 = vpack.c.b16 %v1528, %v1520
    %v2217 = vpack.c.b16 %v1529, %v1521
    %v2218 = vpack.c.b16 %v1538, %v1530
    %v2219 = vpack.c.b16 %v1539, %v1531
    %v2220 = vpack.c.b16 %v1540, %v1532
    %v2221 = vpack.c.b16 %v1541, %v1533
    %v2222 = vpack.c.b16 %v1542, %v1534
    %v2223 = vpack.c.b16 %v1543, %v1535
    %v2224 = vpack.c.b16 %v1544, %v1536
    %v2225 = vpack.c.b16 %v1545, %v1537
    %v2226 = vpack.c.b16 %v1554, %v1546
    %v2227 = vpack.c.b16 %v1555, %v1547
    %v2228 = vpack.c.b16 %v1556, %v1548
    %v2229 = vpack.c.b16 %v1557, %v1549
    %v2230 = vpack.c.b16 %v1558, %v1550
    %v2231 = vpack.c.b16 %v1559, %v1551
    %v2232 = vpack.c.b16 %v1560, %v1552
    %v2233 = vpack.c.b16 %v1561, %v1553
    %v2234 = vpack.c.b16 %v1570, %v1562
    %v2235 = vpack.c.b16 %v1571, %v1563
    %v2236 = vpack.c.b16 %v1572, %v1564
    %v2237 = vpack.c.b16 %v1573, %v1565
    %v2238 = vpack.c.b16 %v1574, %v1566
    %v2239 = vpack.c.b16 %v1575, %v1567
    %v2240 = vpack.c.b16 %v1576, %v1568
    %v2241 = vpack.c.b16 %v1577, %v1569
    %v2242 = vpack.c.b16 %v1586, %v1578
    %v2243 = vpack.c.b16 %v1587, %v1579
    %v2244 = vpack.c.b16 %v1588, %v1580
    %v2245 = vpack.c.b16 %v1589, %v1581
    %v2246 = vpack.c.b16 %v1590, %v1582
    %v2247 = vpack.c.b16 %v1591, %v1583
    %v2248 = vpack.c.b16 %v1592, %v1584
    %v2249 = vpack.c.b16 %v1593, %v1585
    %v2250 = vpack.c.b16 %v1602, %v1594
    %v2251 = vpack.c.b16 %v1603, %v1595
    %v2252 = vpack.c.b16 %v1604, %v1596
    %v2253 = vpack.c.b16 %v1605, %v1597
    %v2254 = vpack.c.b16 %v1606, %v1598
    %v2255 = vpack.c.b16 %v1607, %v1599
    %v2256 = vpack.c.b16 %v1608, %v1600
    %v2257 = vpack.c.b16 %v1609, %v1601
    %v2258 = vpack.c.b16 %v1618, %v1610
    %v2259 = vpack.c.b16 %v1619, %v1611
    %v2260 = vpack.c.b16 %v1620, %v1612
    %v2261 = vpack.c.b16 %v1621, %v1613
    %v2262 = vpack.c.b16 %v1622, %v1614
    %v2263 = vpack.c.b16 %v1623, %v1615
    %v2264 = vpack.c.b16 %v1624, %v1616
    %v2265 = vpack.c.b16 %v1625, %v1617
    %v2266 = vpack.c.b16 %v1634, %v1626
    %v2267 = vpack.c.b16 %v1635, %v1627
    %v2268 = vpack.c.b16 %v1636, %v1628
    %v2269 = vpack.c.b16 %v1637, %v1629
    %v2270 = vpack.c.b16 %v1638, %v1630
    %v2271 = vpack.c.b16 %v1639, %v1631
    %v2272 = vpack.c.b16 %v1640, %v1632
    %v2273 = vpack.c.b16 %v1641, %v1633
    %v2274 = vpack.c.b16 %v1650, %v1642
    %v2275 = vpack.c.b16 %v1651, %v1643
    %v2276 = vpack.c.b16 %v1652, %v1644
    %v2277 = vpack.c.b16 %v1653, %v1645
    %v2278 = vpack.c.b16 %v1654, %v1646
    %v2279 = vpack.c.b16 %v1655, %v1647
    %v2280 = vpack.c.b16 %v1656, %v1648
    %v2281 = vpack.c.b16 %v1657, %v1649
    %v2282 = vpack.c.b16 %v1666, %v1658
    %v2283 = vpack.c.b16 %v1667, %v1659
    %v2284 = vpack.c.b16 %v1668, %v1660
    %v2285 = vpack.c.b16 %v1669, %v1661
    %v2286 = vpack.c.b16 %v1670, %v1662
    %v2287 = vpack.c.b16 %v1671, %v1663
    %v2288 = vpack.c.b16 %v1672, %v1664
    %v2289 = vpack.c.b16 %v1673, %v1665
    %v2290 = vpack.c.b16 %v1682, %v1674
    %v2291 = vpack.c.b16 %v1683, %v1675
    %v2292 = vpack.c.b16 %v1684, %v1676
    %v2293 = vpack.c.b16 %v1685, %v1677
    %v2294 = vpack.c.b16 %v1686, %v1678
    %v2295 = vpack.c.b16 %v1687, %v1679
    %v2296 = vpack.c.b16 %v1688, %v1680
    %v2297 = vpack.c.b16 %v1689, %v1681
    %v2298 = vpack.c.b16 %v1698, %v1690
    %v2299 = vpack.c.b16 %v1699, %v1691
    %v2300 = vpack.c.b16 %v1700, %v1692
    %v2301 = vpack.c.b16 %v1701, %v1693
    %v2302 = vpack.c.b16 %v1702, %v1694
    %v2303 = vpack.c.b16 %v1703, %v1695
    %v2304 = vpack.c.b16 %v1704, %v1696
    %v2305 = vpack.c.b16 %v1705, %v1697
    %v2306 = vpack.c.b16 %v1714, %v1706
    %v2307 = vpack.c.b16 %v1715, %v1707
    %v2308 = vpack.c.b16 %v1716, %v1708
    %v2309 = vpack.c.b16 %v1717, %v1709
    %v2310 = vpack.c.b16 %v1718, %v1710
    %v2311 = vpack.c.b16 %v1719, %v1711
    %v2312 = vpack.c.b16 %v1720, %v1712
    %v2313 = vpack.c.b16 %v1721, %v1713
    %v2314 = vpack.c.b16 %v1730, %v1722
    %v2315 = vpack.c.b16 %v1731, %v1723
    %v2316 = vpack.c.b16 %v1732, %v1724
    %v2317 = vpack.c.b16 %v1733, %v1725
    %v2318 = vpack.c.b16 %v1734, %v1726
    %v2319 = vpack.c.b16 %v1735, %v1727
    %v2320 = vpack.c.b16 %v1736, %v1728
    %v2321 = vpack.c.b16 %v1737, %v1729
    %v2322 = vpack.c.b16 %v1746, %v1738
    %v2323 = vpack.c.b16 %v1747, %v1739
    %v2324 = vpack.c.b16 %v1748, %v1740
    %v2325 = vpack.c.b16 %v1749, %v1741
    %v2326 = vpack.c.b16 %v1750, %v1742
    %v2327 = vpack.c.b16 %v1751, %v1743
    %v2328 = vpack.c.b16 %v1752, %v1744
    %v2329 = vpack.c.b16 %v1753, %v1745
    %v2330 = vpack.c.b16 %v1762, %v1754
    %v2331 = vpack.c.b16 %v1763, %v1755
    %v2332 = vpack.c.b16 %v1764, %v1756
    %v2333 = vpack.c.b16 %v1765, %v1757
    %v2334 = vpack.c.b16 %v1766, %v1758
    %v2335 = vpack.c.b16 %v1767, %v1759
    %v2336 = vpack.c.b16 %v1768, %v1760
    %v2337 = vpack.c.b16 %v1769, %v1761
    %v2338 = vpack.c.b16 %v1778, %v1770
    %v2339 = vpack.c.b16 %v1779, %v1771
    %v2340 = vpack.c.b16 %v1780, %v1772
    %v2341 = vpack.c.b16 %v1781, %v1773
    %v2342 = vpack.c.b16 %v1782, %v1774
    %v2343 = vpack.c.b16 %v1783, %v1775
    %v2344 = vpack.c.b16 %v1784, %v1776
    %v2345 = vpack.c.b16 %v1785, %v1777
    %v2346 = vpack.c.b16 %v1794, %v1786
    %v2347 = vpack.c.b16 %v1795, %v1787
    %v2348 = vpack.c.b16 %v1796, %v1788
    %v2349 = vpack.c.b16 %v1797, %v1789
    %v2350 = vpack.c.b16 %v1798, %v1790
    %v2351 = vpack.c.b16 %v1799, %v1791
    %v2352 = vpack.c.b16 %v1800, %v1792
    %v2353 = vpack.c.b16 %v1801, %v1793
    %v2354 = vpack.c.b16 %v1810, %v1802
    %v2355 = vpack.c.b16 %v1811, %v1803
    %v2356 = vpack.c.b16 %v1812, %v1804
    %v2357 = vpack.c.b16 %v1813, %v1805
    %v2358 = vpack.c.b16 %v1814, %v1806
    %v2359 = vpack.c.b16 %v1815, %v1807
    %v2360 = vpack.c.b16 %v1816, %v1808
    %v2361 = vpack.c.b16 %v1817, %v1809
    %v2362 = vpack.c.b16 %v1826, %v1818
    %v2363 = vpack.c.b16 %v1827, %v1819
    %v2364 = vpack.c.b16 %v1828, %v1820
    %v2365 = vpack.c.b16 %v1829, %v1821
    %v2366 = vpack.c.b16 %v1830, %v1822
    %v2367 = vpack.c.b16 %v1831, %v1823
    %v2368 = vpack.c.b16 %v1832, %v1824
    %v2369 = vpack.c.b16 %v1833, %v1825
    %v2370 = vpack.c.b16 %v1842, %v1834
    %v2371 = vpack.c.b16 %v1843, %v1835
    %v2372 = vpack.c.b16 %v1844, %v1836
    %v2373 = vpack.c.b16 %v1845, %v1837
    %v2374 = vpack.c.b16 %v1846, %v1838
    %v2375 = vpack.c.b16 %v1847, %v1839
    %v2376 = vpack.c.b16 %v1848, %v1840
    %v2377 = vpack.c.b16 %v1849, %v1841
    %v2378 = vpack.c.b16 %v1858, %v1850
    %v2379 = vpack.c.b16 %v1859, %v1851
    %v2380 = vpack.c.b16 %v1860, %v1852
    %v2381 = vpack.c.b16 %v1861, %v1853
    %v2382 = vpack.c.b16 %v1862, %v1854
    %v2383 = vpack.c.b16 %v1863, %v1855
    %v2384 = vpack.c.b16 %v1864, %v1856
    %v2385 = vpack.c.b16 %v1865, %v1857
    %v2386 = vpack.c.b16 %v1874, %v1866
    %v2387 = vpack.c.b16 %v1875, %v1867
    %v2388 = vpack.c.b16 %v1876, %v1868
    %v2389 = vpack.c.b16 %v1877, %v1869
    %v2390 = vpack.c.b16 %v1878, %v1870
    %v2391 = vpack.c.b16 %v1879, %v1871
    %v2392 = vpack.c.b16 %v1880, %v1872
    %v2393 = vpack.c.b16 %v1881, %v1873
    %v2394 = vpack.c.b16 %v1890, %v1882
    %v2395 = vpack.c.b16 %v1891, %v1883
    %v2396 = vpack.c.b16 %v1892, %v1884
    %v2397 = vpack.c.b16 %v1893, %v1885
    %v2398 = vpack.c.b16 %v1894, %v1886
    %v2399 = vpack.c.b16 %v1895, %v1887
    %v2400 = vpack.c.b16 %v1896, %v1888
    %v2401 = vpack.c.b16 %v1897, %v1889
    %v2402 = vpack.c.b16 %v1906, %v1898
    %v2403 = vpack.c.b16 %v1907, %v1899
    %v2404 = vpack.c.b16 %v1908, %v1900
    %v2405 = vpack.c.b16 %v1909, %v1901
    %v2406 = vpack.c.b16 %v1910, %v1902
    %v2407 = vpack.c.b16 %v1911, %v1903
    %v2408 = vpack.c.b16 %v1912, %v1904
    %v2409 = vpack.c.b16 %v1913, %v1905
    %v2410 = vpack.c.b16 %v1922, %v1914
    %v2411 = vpack.c.b16 %v1923, %v1915
    %v2412 = vpack.c.b16 %v1924, %v1916
    %v2413 = vpack.c.b16 %v1925, %v1917
    %v2414 = vpack.c.b16 %v1926, %v1918
    %v2415 = vpack.c.b16 %v1927, %v1919
    %v2416 = vpack.c.b16 %v1928, %v1920
    %v2417 = vpack.c.b16 %v1929, %v1921
    %v2418 = vpack.c.b16 %v1938, %v1930
    %v2419 = vpack.c.b16 %v1939, %v1931
    %v2420 = vpack.c.b16 %v1940, %v1932
    %v2421 = vpack.c.b16 %v1941, %v1933
    %v2422 = vpack.c.b16 %v1942, %v1934
    %v2423 = vpack.c.b16 %v1943, %v1935
    %v2424 = vpack.c.b16 %v1944, %v1936
    %v2425 = vpack.c.b16 %v1945, %v1937
    %v2426 = vpack.c.b16 %v1954, %v1946
    %v2427 = vpack.c.b16 %v1955, %v1947
    %v2428 = vpack.c.b16 %v1956, %v1948
    %v2429 = vpack.c.b16 %v1957, %v1949
    %v2430 = vpack.c.b16 %v1958, %v1950
    %v2431 = vpack.c.b16 %v1959, %v1951
    %v2432 = vpack.c.b16 %v1960, %v1952
    %v2433 = vpack.c.b16 %v1961, %v1953
    %v2434 = vpack.c.b16 %v1970, %v1962
    %v2435 = vpack.c.b16 %v1971, %v1963
    %v2436 = vpack.c.b16 %v1972, %v1964
    %v2437 = vpack.c.b16 %v1973, %v1965
    %v2438 = vpack.c.b16 %v1974, %v1966
    %v2439 = vpack.c.b16 %v1975, %v1967
    %v2440 = vpack.c.b16 %v1976, %v1968
    %v2441 = vpack.c.b16 %v1977, %v1969
    %v2442 = vpack.c.b16 %v1986, %v1978
    %v2443 = vpack.c.b16 %v1987, %v1979
    %v2444 = vpack.c.b16 %v1988, %v1980
    %v2445 = vpack.c.b16 %v1989, %v1981
    %v2446 = vpack.c.b16 %v1990, %v1982
    %v2447 = vpack.c.b16 %v1991, %v1983
    %v2448 = vpack.c.b16 %v1992, %v1984
    %v2449 = vpack.c.b16 %v1993, %v1985
    %v2450 = vpack.c.b16 %v2002, %v1994
    %v2451 = vpack.c.b16 %v2003, %v1995
    %v2452 = vpack.c.b16 %v2004, %v1996
    %v2453 = vpack.c.b16 %v2005, %v1997
    %v2454 = vpack.c.b16 %v2006, %v1998
    %v2455 = vpack.c.b16 %v2007, %v1999
    %v2456 = vpack.c.b16 %v2008, %v2000
    %v2457 = vpack.c.b16 %v2009, %v2001
    %v2458 = vpack.c.b16 %v2018, %v2010
    %v2459 = vpack.c.b16 %v2019, %v2011
    %v2460 = vpack.c.b16 %v2020, %v2012
    %v2461 = vpack.c.b16 %v2021, %v2013
    %v2462 = vpack.c.b16 %v2022, %v2014
    %v2463 = vpack.c.b16 %v2023, %v2015
    %v2464 = vpack.c.b16 %v2024, %v2016
    %v2465 = vpack.c.b16 %v2025, %v2017
    %v2466 = vpack.c.b16 %v2034, %v2026
    %v2467 = vpack.c.b16 %v2035, %v2027
    %v2468 = vpack.c.b16 %v2036, %v2028
    %v2469 = vpack.c.b16 %v2037, %v2029
    %v2470 = vpack.c.b16 %v2038, %v2030
    %v2471 = vpack.c.b16 %v2039, %v2031
    %v2472 = vpack.c.b16 %v2040, %v2032
    %v2473 = vpack.c.b16 %v2041, %v2033
    %v2474 = vpack.c.b16 %v2050, %v2042
    %v2475 = vpack.c.b16 %v2051, %v2043
    %v2476 = vpack.c.b16 %v2052, %v2044
    %v2477 = vpack.c.b16 %v2053, %v2045
    %v2478 = vpack.c.b16 %v2054, %v2046
    %v2479 = vpack.c.b16 %v2055, %v2047
    %v2480 = vpack.c.b16 %v2056, %v2048
    %v2481 = vpack.c.b16 %v2057, %v2049
    %v2482 = vpack.c.b16 %v2066, %v2058
    %v2483 = vpack.c.b16 %v2067, %v2059
    %v2484 = vpack.c.b16 %v2068, %v2060
    %v2485 = vpack.c.b16 %v2069, %v2061
    %v2486 = vpack.c.b16 %v2070, %v2062
    %v2487 = vpack.c.b16 %v2071, %v2063
    %v2488 = vpack.c.b16 %v2072, %v2064
    %v2489 = vpack.c.b16 %v2073, %v2065
    %v2490 = vpack.c.b16 %v2082, %v2074
    %v2491 = vpack.c.b16 %v2083, %v2075
    %v2492 = vpack.c.b16 %v2084, %v2076
    %v2493 = vpack.c.b16 %v2085, %v2077
    %v2494 = vpack.c.b16 %v2086, %v2078
    %v2495 = vpack.c.b16 %v2087, %v2079
    %v2496 = vpack.c.b16 %v2088, %v2080
    %v2497 = vpack.c.b16 %v2089, %v2081
    %v2498 = vpack.c.b16 %v2098, %v2090
    %v2499 = vpack.c.b16 %v2099, %v2091
    %v2500 = vpack.c.b16 %v2100, %v2092
    %v2501 = vpack.c.b16 %v2101, %v2093
    %v2502 = vpack.c.b16 %v2102, %v2094
    %v2503 = vpack.c.b16 %v2103, %v2095
    %v2504 = vpack.c.b16 %v2104, %v2096
    %v2505 = vpack.c.b16 %v2105, %v2097
    %v2506 = vpack.c.b16 %v2114, %v2106
    %v2507 = vpack.c.b16 %v2115, %v2107
    %v2508 = vpack.c.b16 %v2116, %v2108
    %v2509 = vpack.c.b16 %v2117, %v2109
    %v2510 = vpack.c.b16 %v2118, %v2110
    %v2511 = vpack.c.b16 %v2119, %v2111
    %v2512 = vpack.c.b16 %v2120, %v2112
    %v2513 = vpack.c.b16 %v2121, %v2113
    %vm2906 = vcmask 130048
    %v2908 = vsel %vm2906, %v939, 0
    %2910 = vmatprep.subr.bf16.mxu0 %v2123
    %2911 = vmatpush1.bf16.msra.mxu0 %v2122
    %2912 = vmatprep.subr.bf16.mxu0 %v2131
    %2913 = vmatpush1.bf16.msra.mxu0 %v2130
    %2914 = vmatprep.subr.bf16.mxu0 %v2139
    %2915 = vmatpush1.bf16.msra.mxu0 %v2138
    %2916 = vmatprep.subr.bf16.mxu0 %v2147
    %2917 = vmatpush1.bf16.msra.mxu0 %v2146
    %2918 = vmatprep.subr.bf16.mxu0 %v2155
    %2919 = vmatpush1.bf16.msra.mxu0 %v2154
    %2920 = vmatprep.subr.bf16.mxu0 %v2163
    %2921 = vmatpush1.bf16.msra.mxu0 %v2162
    %2922 = vmatprep.subr.bf16.mxu0 %v2171
    %2923 = vmatpush1.bf16.msra.mxu0 %v2170
    %2924 = vmatprep.subr.bf16.mxu0 %v2179
    %2925 = vmatpush1.bf16.msra.mxu0 %v2178
    %2926 = vmatprep.subr.bf16.mxu0 %v2187
    %2927 = vmatpush1.bf16.msra.mxu0 %v2186
    %2928 = vmatprep.subr.bf16.mxu0 %v2195
    %2929 = vmatpush1.bf16.msra.mxu0 %v2194
    %2930 = vmatprep.subr.bf16.mxu0 %v2203
    %2931 = vmatpush1.bf16.msra.mxu0 %v2202
    %2932 = vmatprep.subr.bf16.mxu0 %v2211
    %2933 = vmatpush1.bf16.msra.mxu0 %v2210
    %2934 = vmatprep.subr.bf16.mxu0 %v2219
    %2935 = vmatpush1.bf16.msra.mxu0 %v2218
    %2936 = vmatprep.subr.bf16.mxu0 %v2227
    %2937 = vmatpush1.bf16.msra.mxu0 %v2226
    %2938 = vmatprep.subr.bf16.mxu0 %v2235
    %2939 = vmatpush1.bf16.msra.mxu0 %v2234
    %2940 = vmatprep.subr.bf16.mxu0 %v2243
    %2941 = vmatpush1.bf16.msra.mxu0 %v2242
    %2942 = vmatprep.mubr.bf16.mxu0 %v934
    %2943 = vmatmul.mubr.bf16.gmra.mrb[0].mxu0 %v933
    %v2944 = vpop.f32.mrb[0].mxu0
    %v2945 = vadd.f32 %v670, %v2944
    %v2946 = vpop.f32.mrb[0].mxu0
    %v2947 = vadd.f32 %v672, %v2946
    %v2948 = vpop.f32.mrb[0].mxu0
    %v2949 = vadd.f32 %v676, %v2948
    %v2950 = vpop.f32.mrb[0].mxu0
    %v2951 = vadd.f32 %v678, %v2950
    %2952 = vdwg.mxu0
    %2953 = vmatprep.subr.bf16.mxu0 %v2251
    %2954 = vmatpush1.bf16.msra.mxu0 %v2250
    %2955 = vmatprep.subr.bf16.mxu0 %v2259
    %2956 = vmatpush1.bf16.msra.mxu0 %v2258
    %2957 = vmatprep.subr.bf16.mxu0 %v2267
    %2958 = vmatpush1.bf16.msra.mxu0 %v2266
    %2959 = vmatprep.subr.bf16.mxu0 %v2275
    %2960 = vmatpush1.bf16.msra.mxu0 %v2274
    %2961 = vmatprep.subr.bf16.mxu0 %v2283
    %2962 = vmatpush1.bf16.msra.mxu0 %v2282
    %2963 = vmatprep.subr.bf16.mxu0 %v2291
    %2964 = vmatpush1.bf16.msra.mxu0 %v2290
    %2965 = vmatprep.subr.bf16.mxu0 %v2299
    %2966 = vmatpush1.bf16.msra.mxu0 %v2298
    %2967 = vmatprep.subr.bf16.mxu0 %v2307
    %2968 = vmatpush1.bf16.msra.mxu0 %v2306
    %2969 = vmatprep.subr.bf16.mxu0 %v2315
    %2970 = vmatpush1.bf16.msra.mxu0 %v2314
    %2971 = vmatprep.subr.bf16.mxu0 %v2323
    %2972 = vmatpush1.bf16.msra.mxu0 %v2322
    %2973 = vmatprep.subr.bf16.mxu0 %v2331
    %2974 = vmatpush1.bf16.msra.mxu0 %v2330
    %2975 = vmatprep.subr.bf16.mxu0 %v2339
    %2976 = vmatpush1.bf16.msra.mxu0 %v2338
    %2977 = vmatprep.subr.bf16.mxu0 %v2347
    %2978 = vmatpush1.bf16.msra.mxu0 %v2346
    %2979 = vmatprep.subr.bf16.mxu0 %v2355
    %2980 = vmatpush1.bf16.msra.mxu0 %v2354
    %2981 = vmatprep.subr.bf16.mxu0 %v2363
    %2982 = vmatpush1.bf16.msra.mxu0 %v2362
    %2983 = vmatprep.subr.bf16.mxu0 %v2371
    %2984 = vmatpush1.bf16.msra.mxu0 %v2370
    %2985 = vmatprep.mubr.bf16.mxu0 %v936
    %2986 = vmatmul.mubr.bf16.gmra.mrb[0].mxu0 %v935
    %v2987 = vpop.f32.mrb[0].mxu0
    %v2988 = vadd.f32 %v2945, %v2987
    %v2989 = vpop.f32.mrb[0].mxu0
    %v2990 = vadd.f32 %v2947, %v2989
    %v2991 = vpop.f32.mrb[0].mxu0
    %v2992 = vadd.f32 %v2949, %v2991
    %v2993 = vpop.f32.mrb[0].mxu0
    %v2994 = vadd.f32 %v2951, %v2993
    %2995 = vdwg.mxu0
    %2996 = vmatprep.subr.bf16.mxu0 %v2379
    %2997 = vmatpush1.bf16.msra.mxu0 %v2378
    %2998 = vmatprep.subr.bf16.mxu0 %v2387
    %2999 = vmatpush1.bf16.msra.mxu0 %v2386
    %3000 = vmatprep.subr.bf16.mxu0 %v2395
    %3001 = vmatpush1.bf16.msra.mxu0 %v2394
    %3002 = vmatprep.subr.bf16.mxu0 %v2403
    %3003 = vmatpush1.bf16.msra.mxu0 %v2402
    %3004 = vmatprep.subr.bf16.mxu0 %v2411
    %3005 = vmatpush1.bf16.msra.mxu0 %v2410
    %3006 = vmatprep.subr.bf16.mxu0 %v2419
    %3007 = vmatpush1.bf16.msra.mxu0 %v2418
    %3008 = vmatprep.subr.bf16.mxu0 %v2427
    %3009 = vmatpush1.bf16.msra.mxu0 %v2426
    %3010 = vmatprep.subr.bf16.mxu0 %v2435
    %3011 = vmatpush1.bf16.msra.mxu0 %v2434
    %3012 = vmatprep.subr.bf16.mxu0 %v2443
    %3013 = vmatpush1.bf16.msra.mxu0 %v2442
    %3014 = vmatprep.subr.bf16.mxu0 %v2451
    %3015 = vmatpush1.bf16.msra.mxu0 %v2450
    %3016 = vmatprep.subr.bf16.mxu0 %v2459
    %3017 = vmatpush1.bf16.msra.mxu0 %v2458
    %3018 = vmatprep.subr.bf16.mxu0 %v2467
    %3019 = vmatpush1.bf16.msra.mxu0 %v2466
    %3020 = vmatprep.subr.bf16.mxu0 %v2475
    %3021 = vmatpush1.bf16.msra.mxu0 %v2474
    %3022 = vmatprep.subr.bf16.mxu0 %v2483
    %3023 = vmatpush1.bf16.msra.mxu0 %v2482
    %3024 = vmatprep.subr.bf16.mxu0 %v2491
    %3025 = vmatpush1.bf16.msra.mxu0 %v2490
    %3026 = vmatprep.subr.bf16.mxu0 %v2499
    %3027 = vmatpush1.bf16.msra.mxu0 %v2498
    %3028 = vmatprep.mubr.bf16.mxu0 %v938
    %3029 = vmatmul.mubr.bf16.gmra.mrb[0].mxu0 %v937
    %v3030 = vpop.f32.mrb[0].mxu0
    %v3031 = vadd.f32 %v2988, %v3030
    %v3032 = vpop.f32.mrb[0].mxu0
    %v3033 = vadd.f32 %v2990, %v3032
    %v3034 = vpop.f32.mrb[0].mxu0
    %v3035 = vadd.f32 %v2992, %v3034
    %v3036 = vpop.f32.mrb[0].mxu0
    %v3037 = vadd.f32 %v2994, %v3036
    %3038 = vdwg.mxu0
    %3039 = vmatprep.subr.bf16.mxu0 %v2507
    %3040 = vmatpush1.bf16.msra.mxu0 %v2506
    %3041 = vmatprep.subr.bf16.mxu0 0
    %3042 = vmatpush1.bf16.msra.mxu0 0
    %3043 = vmatprep.subr.bf16.mxu0 0
    %3044 = vmatpush1.bf16.msra.mxu0 0
    %3045 = vmatprep.subr.bf16.mxu0 0
    %3046 = vmatpush1.bf16.msra.mxu0 0
    %3047 = vmatprep.subr.bf16.mxu0 0
    %3048 = vmatpush1.bf16.msra.mxu0 0
    %3049 = vmatprep.subr.bf16.mxu0 0
    %3050 = vmatpush1.bf16.msra.mxu0 0
    %3051 = vmatprep.subr.bf16.mxu0 0
    %3052 = vmatpush1.bf16.msra.mxu0 0
    %3053 = vmatprep.subr.bf16.mxu0 0
    %3054 = vmatpush1.bf16.msra.mxu0 0
    %3055 = vmatprep.subr.bf16.mxu0 0
    %3056 = vmatpush1.bf16.msra.mxu0 0
    %3057 = vmatprep.subr.bf16.mxu0 0
    %3058 = vmatpush1.bf16.msra.mxu0 0
    %3059 = vmatprep.subr.bf16.mxu0 0
    %3060 = vmatpush1.bf16.msra.mxu0 0
    %3061 = vmatprep.subr.bf16.mxu0 0
    %3062 = vmatpush1.bf16.msra.mxu0 0
    %3063 = vmatprep.subr.bf16.mxu0 0
    %3064 = vmatpush1.bf16.msra.mxu0 0
    %3065 = vmatprep.subr.bf16.mxu0 0
    %3066 = vmatpush1.bf16.msra.mxu0 0
    %3067 = vmatprep.subr.bf16.mxu0 0
    %3068 = vmatpush1.bf16.msra.mxu0 0
    %3069 = vmatprep.subr.bf16.mxu0 0
    %3070 = vmatpush1.bf16.msra.mxu0 0
    %3071 = vmatprep.mubr.bf16.mxu0 0
    %3072 = vmatmul.mubr.bf16.gmra.mrb[0].mxu0 %v2908
    %v3073 = vpop.f32.mrb[0].mxu0
    %v3074 = vadd.f32 %v3031, %v3073
    %v3075 = vpop.f32.mrb[0].mxu0
    %v3076 = vadd.f32 %v3033, %v3075
    %v3077 = vpop.f32.mrb[0].mxu0
    %v3078 = vadd.f32 %v3035, %v3077
    %v3079 = vpop.f32.mrb[0].mxu0
    %v3080 = vadd.f32 %v3037, %v3079
    %3081 = vdwg.mxu0
    %3082 = vmatprep.subr.bf16.mxu0 %v2125
    %3083 = vmatpush1.bf16.msra.mxu0 %v2124
    %3084 = vmatprep.subr.bf16.mxu0 %v2133
    %3085 = vmatpush1.bf16.msra.mxu0 %v2132
    %3086 = vmatprep.subr.bf16.mxu0 %v2141
    %3087 = vmatpush1.bf16.msra.mxu0 %v2140
    %3088 = vmatprep.subr.bf16.mxu0 %v2149
    %3089 = vmatpush1.bf16.msra.mxu0 %v2148
    %3090 = vmatprep.subr.bf16.mxu0 %v2157
    %3091 = vmatpush1.bf16.msra.mxu0 %v2156
    %3092 = vmatprep.subr.bf16.mxu0 %v2165
    %3093 = vmatpush1.bf16.msra.mxu0 %v2164
    %3094 = vmatprep.subr.bf16.mxu0 %v2173
    %3095 = vmatpush1.bf16.msra.mxu0 %v2172
    %3096 = vmatprep.subr.bf16.mxu0 %v2181
    %3097 = vmatpush1.bf16.msra.mxu0 %v2180
    %3098 = vmatprep.subr.bf16.mxu0 %v2189
    %3099 = vmatpush1.bf16.msra.mxu0 %v2188
    %3100 = vmatprep.subr.bf16.mxu0 %v2197
    %3101 = vmatpush1.bf16.msra.mxu0 %v2196
    %3102 = vmatprep.subr.bf16.mxu0 %v2205
    %3103 = vmatpush1.bf16.msra.mxu0 %v2204
    %3104 = vmatprep.subr.bf16.mxu0 %v2213
    %3105 = vmatpush1.bf16.msra.mxu0 %v2212
    %3106 = vmatprep.subr.bf16.mxu0 %v2221
    %3107 = vmatpush1.bf16.msra.mxu0 %v2220
    %3108 = vmatprep.subr.bf16.mxu0 %v2229
    %3109 = vmatpush1.bf16.msra.mxu0 %v2228
    %3110 = vmatprep.subr.bf16.mxu0 %v2237
    %3111 = vmatpush1.bf16.msra.mxu0 %v2236
    %3112 = vmatprep.subr.bf16.mxu0 %v2245
    %3113 = vmatpush1.bf16.msra.mxu0 %v2244
    %3114 = vmatprep.mubr.bf16.mxu0 %v934
    %3115 = vmatmul.mubr.bf16.gmra.mrb[0].mxu0 %v933
    %v3116 = vpop.f32.mrb[0].mxu0
    %v3117 = vadd.f32 %v747, %v3116
    %v3118 = vpop.f32.mrb[0].mxu0
    %v3119 = vadd.f32 %v749, %v3118
    %v3120 = vpop.f32.mrb[0].mxu0
    %v3121 = vadd.f32 %v753, %v3120
    %v3122 = vpop.f32.mrb[0].mxu0
    %v3123 = vadd.f32 %v755, %v3122
    %3124 = vdwg.mxu0
    %3125 = vmatprep.subr.bf16.mxu0 %v2253
    %3126 = vmatpush1.bf16.msra.mxu0 %v2252
    %3127 = vmatprep.subr.bf16.mxu0 %v2261
    %3128 = vmatpush1.bf16.msra.mxu0 %v2260
    %3129 = vmatprep.subr.bf16.mxu0 %v2269
    %3130 = vmatpush1.bf16.msra.mxu0 %v2268
    %3131 = vmatprep.subr.bf16.mxu0 %v2277
    %3132 = vmatpush1.bf16.msra.mxu0 %v2276
    %3133 = vmatprep.subr.bf16.mxu0 %v2285
    %3134 = vmatpush1.bf16.msra.mxu0 %v2284
    %3135 = vmatprep.subr.bf16.mxu0 %v2293
    %3136 = vmatpush1.bf16.msra.mxu0 %v2292
    %3137 = vmatprep.subr.bf16.mxu0 %v2301
    %3138 = vmatpush1.bf16.msra.mxu0 %v2300
    %3139 = vmatprep.subr.bf16.mxu0 %v2309
    %3140 = vmatpush1.bf16.msra.mxu0 %v2308
    %3141 = vmatprep.subr.bf16.mxu0 %v2317
    %3142 = vmatpush1.bf16.msra.mxu0 %v2316
    %3143 = vmatprep.subr.bf16.mxu0 %v2325
    %3144 = vmatpush1.bf16.msra.mxu0 %v2324
    %3145 = vmatprep.subr.bf16.mxu0 %v2333
    %3146 = vmatpush1.bf16.msra.mxu0 %v2332
    %3147 = vmatprep.subr.bf16.mxu0 %v2341
    %3148 = vmatpush1.bf16.msra.mxu0 %v2340
    %3149 = vmatprep.subr.bf16.mxu0 %v2349
    %3150 = vmatpush1.bf16.msra.mxu0 %v2348
    %3151 = vmatprep.subr.bf16.mxu0 %v2357
    %3152 = vmatpush1.bf16.msra.mxu0 %v2356
    %3153 = vmatprep.subr.bf16.mxu0 %v2365
    %3154 = vmatpush1.bf16.msra.mxu0 %v2364
    %3155 = vmatprep.subr.bf16.mxu0 %v2373
    %3156 = vmatpush1.bf16.msra.mxu0 %v2372
    %3157 = vmatprep.mubr.bf16.mxu0 %v936
    %3158 = vmatmul.mubr.bf16.gmra.mrb[0].mxu0 %v935
    %v3159 = vpop.f32.mrb[0].mxu0
    %v3160 = vadd.f32 %v3117, %v3159
    %v3161 = vpop.f32.mrb[0].mxu0
    %v3162 = vadd.f32 %v3119, %v3161
    %v3163 = vpop.f32.mrb[0].mxu0
    %v3164 = vadd.f32 %v3121, %v3163
    %v3165 = vpop.f32.mrb[0].mxu0
    %v3166 = vadd.f32 %v3123, %v3165
    %3167 = vdwg.mxu0
    %3168 = vmatprep.subr.bf16.mxu0 %v2381
    %3169 = vmatpush1.bf16.msra.mxu0 %v2380
    %3170 = vmatprep.subr.bf16.mxu0 %v2389
    %3171 = vmatpush1.bf16.msra.mxu0 %v2388
    %3172 = vmatprep.subr.bf16.mxu0 %v2397
    %3173 = vmatpush1.bf16.msra.mxu0 %v2396
    %3174 = vmatprep.subr.bf16.mxu0 %v2405
    %3175 = vmatpush1.bf16.msra.mxu0 %v2404
    %3176 = vmatprep.subr.bf16.mxu0 %v2413
    %3177 = vmatpush1.bf16.msra.mxu0 %v2412
    %3178 = vmatprep.subr.bf16.mxu0 %v2421
    %3179 = vmatpush1.bf16.msra.mxu0 %v2420
    %3180 = vmatprep.subr.bf16.mxu0 %v2429
    %3181 = vmatpush1.bf16.msra.mxu0 %v2428
    %3182 = vmatprep.subr.bf16.mxu0 %v2437
    %3183 = vmatpush1.bf16.msra.mxu0 %v2436
    %3184 = vmatprep.subr.bf16.mxu0 %v2445
    %3185 = vmatpush1.bf16.msra.mxu0 %v2444
    %3186 = vmatprep.subr.bf16.mxu0 %v2453
    %3187 = vmatpush1.bf16.msra.mxu0 %v2452
    %3188 = vmatprep.subr.bf16.mxu0 %v2461
    %3189 = vmatpush1.bf16.msra.mxu0 %v2460
    %3190 = vmatprep.subr.bf16.mxu0 %v2469
    %3191 = vmatpush1.bf16.msra.mxu0 %v2468
    %3192 = vmatprep.subr.bf16.mxu0 %v2477
    %3193 = vmatpush1.bf16.msra.mxu0 %v2476
    %3194 = vmatprep.subr.bf16.mxu0 %v2485
    %3195 = vmatpush1.bf16.msra.mxu0 %v2484
    %3196 = vmatprep.subr.bf16.mxu0 %v2493
    %3197 = vmatpush1.bf16.msra.mxu0 %v2492
    %3198 = vmatprep.subr.bf16.mxu0 %v2501
    %3199 = vmatpush1.bf16.msra.mxu0 %v2500
    %3200 = vmatprep.mubr.bf16.mxu0 %v938
    %3201 = vmatmul.mubr.bf16.gmra.mrb[0].mxu0 %v937
    %v3202 = vpop.f32.mrb[0].mxu0
    %v3203 = vadd.f32 %v3160, %v3202
    %v3204 = vpop.f32.mrb[0].mxu0
    %v3205 = vadd.f32 %v3162, %v3204
    %v3206 = vpop.f32.mrb[0].mxu0
    %v3207 = vadd.f32 %v3164, %v3206
    %v3208 = vpop.f32.mrb[0].mxu0
    %v3209 = vadd.f32 %v3166, %v3208
    %3210 = vdwg.mxu0
    %3211 = vmatprep.subr.bf16.mxu0 %v2509
    %3212 = vmatpush1.bf16.msra.mxu0 %v2508
    %3213 = vmatprep.subr.bf16.mxu0 0
    %3214 = vmatpush1.bf16.msra.mxu0 0
    %3215 = vmatprep.subr.bf16.mxu0 0
    %3216 = vmatpush1.bf16.msra.mxu0 0
    %3217 = vmatprep.subr.bf16.mxu0 0
    %3218 = vmatpush1.bf16.msra.mxu0 0
    %3219 = vmatprep.subr.bf16.mxu0 0
    %3220 = vmatpush1.bf16.msra.mxu0 0
    %3221 = vmatprep.subr.bf16.mxu0 0
    %3222 = vmatpush1.bf16.msra.mxu0 0
    %3223 = vmatprep.subr.bf16.mxu0 0
    %3224 = vmatpush1.bf16.msra.mxu0 0
    %3225 = vmatprep.subr.bf16.mxu0 0
    %3226 = vmatpush1.bf16.msra.mxu0 0
    %3227 = vmatprep.subr.bf16.mxu0 0
    %3228 = vmatpush1.bf16.msra.mxu0 0
    %3229 = vmatprep.subr.bf16.mxu0 0
    %3230 = vmatpush1.bf16.msra.mxu0 0
    %3231 = vmatprep.subr.bf16.mxu0 0
    %3232 = vmatpush1.bf16.msra.mxu0 0
    %3233 = vmatprep.subr.bf16.mxu0 0
    %3234 = vmatpush1.bf16.msra.mxu0 0
    %3235 = vmatprep.subr.bf16.mxu0 0
    %3236 = vmatpush1.bf16.msra.mxu0 0
    %3237 = vmatprep.subr.bf16.mxu0 0
    %3238 = vmatpush1.bf16.msra.mxu0 0
    %3239 = vmatprep.subr.bf16.mxu0 0
    %3240 = vmatpush1.bf16.msra.mxu0 0
    %3241 = vmatprep.subr.bf16.mxu0 0
    %3242 = vmatpush1.bf16.msra.mxu0 0
    %3243 = vmatprep.mubr.bf16.mxu0 0
    %3244 = vmatmul.mubr.bf16.gmra.mrb[0].mxu0 %v2908
    %v3245 = vpop.f32.mrb[0].mxu0
    %v3246 = vadd.f32 %v3203, %v3245
    %v3247 = vpop.f32.mrb[0].mxu0
    %v3248 = vadd.f32 %v3205, %v3247
    %v3249 = vpop.f32.mrb[0].mxu0
    %v3250 = vadd.f32 %v3207, %v3249
    %v3251 = vpop.f32.mrb[0].mxu0
    %v3252 = vadd.f32 %v3209, %v3251
    %3253 = vdwg.mxu0
    %3254 = vmatprep.subr.bf16.mxu0 %v2127
    %3255 = vmatpush1.bf16.msra.mxu0 %v2126
    %3256 = vmatprep.subr.bf16.mxu0 %v2135
    %3257 = vmatpush1.bf16.msra.mxu0 %v2134
    %3258 = vmatprep.subr.bf16.mxu0 %v2143
    %3259 = vmatpush1.bf16.msra.mxu0 %v2142
    %3260 = vmatprep.subr.bf16.mxu0 %v2151
    %3261 = vmatpush1.bf16.msra.mxu0 %v2150
    %3262 = vmatprep.subr.bf16.mxu0 %v2159
    %3263 = vmatpush1.bf16.msra.mxu0 %v2158
    %3264 = vmatprep.subr.bf16.mxu0 %v2167
    %3265 = vmatpush1.bf16.msra.mxu0 %v2166
    %3266 = vmatprep.subr.bf16.mxu0 %v2175
    %3267 = vmatpush1.bf16.msra.mxu0 %v2174
    %3268 = vmatprep.subr.bf16.mxu0 %v2183
    %3269 = vmatpush1.bf16.msra.mxu0 %v2182
    %3270 = vmatprep.subr.bf16.mxu0 %v2191
    %3271 = vmatpush1.bf16.msra.mxu0 %v2190
    %3272 = vmatprep.subr.bf16.mxu0 %v2199
    %3273 = vmatpush1.bf16.msra.mxu0 %v2198
    %3274 = vmatprep.subr.bf16.mxu0 %v2207
    %3275 = vmatpush1.bf16.msra.mxu0 %v2206
    %3276 = vmatprep.subr.bf16.mxu0 %v2215
    %3277 = vmatpush1.bf16.msra.mxu0 %v2214
    %3278 = vmatprep.subr.bf16.mxu0 %v2223
    %3279 = vmatpush1.bf16.msra.mxu0 %v2222
    %3280 = vmatprep.subr.bf16.mxu0 %v2231
    %3281 = vmatpush1.bf16.msra.mxu0 %v2230
    %3282 = vmatprep.subr.bf16.mxu0 %v2239
    %3283 = vmatpush1.bf16.msra.mxu0 %v2238
    %3284 = vmatprep.subr.bf16.mxu0 %v2247
    %3285 = vmatpush1.bf16.msra.mxu0 %v2246
    %3286 = vmatprep.mubr.bf16.mxu0 %v934
    %3287 = vmatmul.mubr.bf16.gmra.mrb[0].mxu0 %v933
    %v3288 = vpop.f32.mrb[0].mxu0
    %v3289 = vadd.f32 %v824, %v3288
    %v3290 = vpop.f32.mrb[0].mxu0
    %v3291 = vadd.f32 %v826, %v3290
    %v3292 = vpop.f32.mrb[0].mxu0
    %v3293 = vadd.f32 %v830, %v3292
    %v3294 = vpop.f32.mrb[0].mxu0
    %v3295 = vadd.f32 %v832, %v3294
    %3296 = vdwg.mxu0
    %3297 = vmatprep.subr.bf16.mxu0 %v2255
    %3298 = vmatpush1.bf16.msra.mxu0 %v2254
    %3299 = vmatprep.subr.bf16.mxu0 %v2263
    %3300 = vmatpush1.bf16.msra.mxu0 %v2262
    %3301 = vmatprep.subr.bf16.mxu0 %v2271
    %3302 = vmatpush1.bf16.msra.mxu0 %v2270
    %3303 = vmatprep.subr.bf16.mxu0 %v2279
    %3304 = vmatpush1.bf16.msra.mxu0 %v2278
    %3305 = vmatprep.subr.bf16.mxu0 %v2287
    %3306 = vmatpush1.bf16.msra.mxu0 %v2286
    %3307 = vmatprep.subr.bf16.mxu0 %v2295
    %3308 = vmatpush1.bf16.msra.mxu0 %v2294
    %3309 = vmatprep.subr.bf16.mxu0 %v2303
    %3310 = vmatpush1.bf16.msra.mxu0 %v2302
    %3311 = vmatprep.subr.bf16.mxu0 %v2311
    %3312 = vmatpush1.bf16.msra.mxu0 %v2310
    %3313 = vmatprep.subr.bf16.mxu0 %v2319
    %3314 = vmatpush1.bf16.msra.mxu0 %v2318
    %3315 = vmatprep.subr.bf16.mxu0 %v2327
    %3316 = vmatpush1.bf16.msra.mxu0 %v2326
    %3317 = vmatprep.subr.bf16.mxu0 %v2335
    %3318 = vmatpush1.bf16.msra.mxu0 %v2334
    %3319 = vmatprep.subr.bf16.mxu0 %v2343
    %3320 = vmatpush1.bf16.msra.mxu0 %v2342
    %3321 = vmatprep.subr.bf16.mxu0 %v2351
    %3322 = vmatpush1.bf16.msra.mxu0 %v2350
    %3323 = vmatprep.subr.bf16.mxu0 %v2359
    %3324 = vmatpush1.bf16.msra.mxu0 %v2358
    %3325 = vmatprep.subr.bf16.mxu0 %v2367
    %3326 = vmatpush1.bf16.msra.mxu0 %v2366
    %3327 = vmatprep.subr.bf16.mxu0 %v2375
    %3328 = vmatpush1.bf16.msra.mxu0 %v2374
    %3329 = vmatprep.mubr.bf16.mxu0 %v936
    %3330 = vmatmul.mubr.bf16.gmra.mrb[0].mxu0 %v935
    %v3331 = vpop.f32.mrb[0].mxu0
    %v3332 = vadd.f32 %v3289, %v3331
    %v3333 = vpop.f32.mrb[0].mxu0
    %v3334 = vadd.f32 %v3291, %v3333
    %v3335 = vpop.f32.mrb[0].mxu0
    %v3336 = vadd.f32 %v3293, %v3335
    %v3337 = vpop.f32.mrb[0].mxu0
    %v3338 = vadd.f32 %v3295, %v3337
    %3339 = vdwg.mxu0
    %3340 = vmatprep.subr.bf16.mxu0 %v2383
    %3341 = vmatpush1.bf16.msra.mxu0 %v2382
    %3342 = vmatprep.subr.bf16.mxu0 %v2391
    %3343 = vmatpush1.bf16.msra.mxu0 %v2390
    %3344 = vmatprep.subr.bf16.mxu0 %v2399
    %3345 = vmatpush1.bf16.msra.mxu0 %v2398
    %3346 = vmatprep.subr.bf16.mxu0 %v2407
    %3347 = vmatpush1.bf16.msra.mxu0 %v2406
    %3348 = vmatprep.subr.bf16.mxu0 %v2415
    %3349 = vmatpush1.bf16.msra.mxu0 %v2414
    %3350 = vmatprep.subr.bf16.mxu0 %v2423
    %3351 = vmatpush1.bf16.msra.mxu0 %v2422
    %3352 = vmatprep.subr.bf16.mxu0 %v2431
    %3353 = vmatpush1.bf16.msra.mxu0 %v2430
    %3354 = vmatprep.subr.bf16.mxu0 %v2439
    %3355 = vmatpush1.bf16.msra.mxu0 %v2438
    %3356 = vmatprep.subr.bf16.mxu0 %v2447
    %3357 = vmatpush1.bf16.msra.mxu0 %v2446
    %3358 = vmatprep.subr.bf16.mxu0 %v2455
    %3359 = vmatpush1.bf16.msra.mxu0 %v2454
    %3360 = vmatprep.subr.bf16.mxu0 %v2463
    %3361 = vmatpush1.bf16.msra.mxu0 %v2462
    %3362 = vmatprep.subr.bf16.mxu0 %v2471
    %3363 = vmatpush1.bf16.msra.mxu0 %v2470
    %3364 = vmatprep.subr.bf16.mxu0 %v2479
    %3365 = vmatpush1.bf16.msra.mxu0 %v2478
    %3366 = vmatprep.subr.bf16.mxu0 %v2487
    %3367 = vmatpush1.bf16.msra.mxu0 %v2486
    %3368 = vmatprep.subr.bf16.mxu0 %v2495
    %3369 = vmatpush1.bf16.msra.mxu0 %v2494
    %3370 = vmatprep.subr.bf16.mxu0 %v2503
    %3371 = vmatpush1.bf16.msra.mxu0 %v2502
    %3372 = vmatprep.mubr.bf16.mxu0 %v938
    %3373 = vmatmul.mubr.bf16.gmra.mrb[0].mxu0 %v937
    %v3374 = vpop.f32.mrb[0].mxu0
    %v3375 = vadd.f32 %v3332, %v3374
    %v3376 = vpop.f32.mrb[0].mxu0
    %v3377 = vadd.f32 %v3334, %v3376
    %v3378 = vpop.f32.mrb[0].mxu0
    %v3379 = vadd.f32 %v3336, %v3378
    %v3380 = vpop.f32.mrb[0].mxu0
    %v3381 = vadd.f32 %v3338, %v3380
    %3382 = vdwg.mxu0
    %3383 = vmatprep.subr.bf16.mxu0 %v2511
    %3384 = vmatpush1.bf16.msra.mxu0 %v2510
    %3385 = vmatprep.subr.bf16.mxu0 0
    %3386 = vmatpush1.bf16.msra.mxu0 0
    %3387 = vmatprep.subr.bf16.mxu0 0
    %3388 = vmatpush1.bf16.msra.mxu0 0
    %3389 = vmatprep.subr.bf16.mxu0 0
    %3390 = vmatpush1.bf16.msra.mxu0 0
    %3391 = vmatprep.subr.bf16.mxu0 0
    %3392 = vmatpush1.bf16.msra.mxu0 0
    %3393 = vmatprep.subr.bf16.mxu0 0
    %3394 = vmatpush1.bf16.msra.mxu0 0
    %3395 = vmatprep.subr.bf16.mxu0 0
    %3396 = vmatpush1.bf16.msra.mxu0 0
    %3397 = vmatprep.subr.bf16.mxu0 0
    %3398 = vmatpush1.bf16.msra.mxu0 0
    %3399 = vmatprep.subr.bf16.mxu0 0
    %3400 = vmatpush1.bf16.msra.mxu0 0
    %3401 = vmatprep.subr.bf16.mxu0 0
    %3402 = vmatpush1.bf16.msra.mxu0 0
    %3403 = vmatprep.subr.bf16.mxu0 0
    %3404 = vmatpush1.bf16.msra.mxu0 0
    %3405 = vmatprep.subr.bf16.mxu0 0
    %3406 = vmatpush1.bf16.msra.mxu0 0
    %3407 = vmatprep.subr.bf16.mxu0 0
    %3408 = vmatpush1.bf16.msra.mxu0 0
    %3409 = vmatprep.subr.bf16.mxu0 0
    %3410 = vmatpush1.bf16.msra.mxu0 0
    %3411 = vmatprep.subr.bf16.mxu0 0
    %3412 = vmatpush1.bf16.msra.mxu0 0
    %3413 = vmatprep.subr.bf16.mxu0 0
    %3414 = vmatpush1.bf16.msra.mxu0 0
    %3415 = vmatprep.mubr.bf16.mxu0 0
    %3416 = vmatmul.mubr.bf16.gmra.mrb[0].mxu0 %v2908
    %v3417 = vpop.f32.mrb[0].mxu0
    %v3418 = vadd.f32 %v3375, %v3417
    %v3419 = vpop.f32.mrb[0].mxu0
    %v3420 = vadd.f32 %v3377, %v3419
    %v3421 = vpop.f32.mrb[0].mxu0
    %v3422 = vadd.f32 %v3379, %v3421
    %v3423 = vpop.f32.mrb[0].mxu0
    %v3424 = vadd.f32 %v3381, %v3423
    %3425 = vdwg.mxu0
    %3426 = vmatprep.subr.bf16.mxu0 %v2129
    %3427 = vmatpush1.bf16.msra.mxu0 %v2128
    %3428 = vmatprep.subr.bf16.mxu0 %v2137
    %3429 = vmatpush1.bf16.msra.mxu0 %v2136
    %3430 = vmatprep.subr.bf16.mxu0 %v2145
    %3431 = vmatpush1.bf16.msra.mxu0 %v2144
    %3432 = vmatprep.subr.bf16.mxu0 %v2153
    %3433 = vmatpush1.bf16.msra.mxu0 %v2152
    %3434 = vmatprep.subr.bf16.mxu0 %v2161
    %3435 = vmatpush1.bf16.msra.mxu0 %v2160
    %3436 = vmatprep.subr.bf16.mxu0 %v2169
    %3437 = vmatpush1.bf16.msra.mxu0 %v2168
    %3438 = vmatprep.subr.bf16.mxu0 %v2177
    %3439 = vmatpush1.bf16.msra.mxu0 %v2176
    %3440 = vmatprep.subr.bf16.mxu0 %v2185
    %3441 = vmatpush1.bf16.msra.mxu0 %v2184
    %3442 = vmatprep.subr.bf16.mxu0 %v2193
    %3443 = vmatpush1.bf16.msra.mxu0 %v2192
    %3444 = vmatprep.subr.bf16.mxu0 %v2201
    %3445 = vmatpush1.bf16.msra.mxu0 %v2200
    %3446 = vmatprep.subr.bf16.mxu0 %v2209
    %3447 = vmatpush1.bf16.msra.mxu0 %v2208
    %3448 = vmatprep.subr.bf16.mxu0 %v2217
    %3449 = vmatpush1.bf16.msra.mxu0 %v2216
    %3450 = vmatprep.subr.bf16.mxu0 %v2225
    %3451 = vmatpush1.bf16.msra.mxu0 %v2224
    %3452 = vmatprep.subr.bf16.mxu0 %v2233
    %3453 = vmatpush1.bf16.msra.mxu0 %v2232
    %3454 = vmatprep.subr.bf16.mxu0 %v2241
    %3455 = vmatpush1.bf16.msra.mxu0 %v2240
    %3456 = vmatprep.subr.bf16.mxu0 %v2249
    %3457 = vmatpush1.bf16.msra.mxu0 %v2248
    %3458 = vmatprep.mubr.bf16.mxu0 %v934
    %3459 = vmatmul.mubr.bf16.gmra.mrb[0].mxu0 %v933
    %v3460 = vpop.f32.mrb[0].mxu0
    %v3461 = vadd.f32 %v901, %v3460
    %v3462 = vpop.f32.mrb[0].mxu0
    %v3463 = vadd.f32 %v903, %v3462
    %v3464 = vpop.f32.mrb[0].mxu0
    %v3465 = vadd.f32 %v907, %v3464
    %v3466 = vpop.f32.mrb[0].mxu0
    %v3467 = vadd.f32 %v909, %v3466
    %3468 = vdwg.mxu0
    %3469 = vmatprep.subr.bf16.mxu0 %v2257
    %3470 = vmatpush1.bf16.msra.mxu0 %v2256
    %3471 = vmatprep.subr.bf16.mxu0 %v2265
    %3472 = vmatpush1.bf16.msra.mxu0 %v2264
    %3473 = vmatprep.subr.bf16.mxu0 %v2273
    %3474 = vmatpush1.bf16.msra.mxu0 %v2272
    %3475 = vmatprep.subr.bf16.mxu0 %v2281
    %3476 = vmatpush1.bf16.msra.mxu0 %v2280
    %3477 = vmatprep.subr.bf16.mxu0 %v2289
    %3478 = vmatpush1.bf16.msra.mxu0 %v2288
    %3479 = vmatprep.subr.bf16.mxu0 %v2297
    %3480 = vmatpush1.bf16.msra.mxu0 %v2296
    %3481 = vmatprep.subr.bf16.mxu0 %v2305
    %3482 = vmatpush1.bf16.msra.mxu0 %v2304
    %3483 = vmatprep.subr.bf16.mxu0 %v2313
    %3484 = vmatpush1.bf16.msra.mxu0 %v2312
    %3485 = vmatprep.subr.bf16.mxu0 %v2321
    %3486 = vmatpush1.bf16.msra.mxu0 %v2320
    %3487 = vmatprep.subr.bf16.mxu0 %v2329
    %3488 = vmatpush1.bf16.msra.mxu0 %v2328
    %3489 = vmatprep.subr.bf16.mxu0 %v2337
    %3490 = vmatpush1.bf16.msra.mxu0 %v2336
    %3491 = vmatprep.subr.bf16.mxu0 %v2345
    %3492 = vmatpush1.bf16.msra.mxu0 %v2344
    %3493 = vmatprep.subr.bf16.mxu0 %v2353
    %3494 = vmatpush1.bf16.msra.mxu0 %v2352
    %3495 = vmatprep.subr.bf16.mxu0 %v2361
    %3496 = vmatpush1.bf16.msra.mxu0 %v2360
    %3497 = vmatprep.subr.bf16.mxu0 %v2369
    %3498 = vmatpush1.bf16.msra.mxu0 %v2368
    %3499 = vmatprep.subr.bf16.mxu0 %v2377
    %3500 = vmatpush1.bf16.msra.mxu0 %v2376
    %3501 = vmatprep.mubr.bf16.mxu0 %v936
    %3502 = vmatmul.mubr.bf16.gmra.mrb[0].mxu0 %v935
    %v3503 = vpop.f32.mrb[0].mxu0
    %v3504 = vadd.f32 %v3461, %v3503
    %v3505 = vpop.f32.mrb[0].mxu0
    %v3506 = vadd.f32 %v3463, %v3505
    %v3507 = vpop.f32.mrb[0].mxu0
    %v3508 = vadd.f32 %v3465, %v3507
    %v3509 = vpop.f32.mrb[0].mxu0
    %v3510 = vadd.f32 %v3467, %v3509
    %3511 = vdwg.mxu0
    %3512 = vmatprep.subr.bf16.mxu0 %v2385
    %3513 = vmatpush1.bf16.msra.mxu0 %v2384
    %3514 = vmatprep.subr.bf16.mxu0 %v2393
    %3515 = vmatpush1.bf16.msra.mxu0 %v2392
    %3516 = vmatprep.subr.bf16.mxu0 %v2401
    %3517 = vmatpush1.bf16.msra.mxu0 %v2400
    %3518 = vmatprep.subr.bf16.mxu0 %v2409
    %3519 = vmatpush1.bf16.msra.mxu0 %v2408
    %3520 = vmatprep.subr.bf16.mxu0 %v2417
    %3521 = vmatpush1.bf16.msra.mxu0 %v2416
    %3522 = vmatprep.subr.bf16.mxu0 %v2425
    %3523 = vmatpush1.bf16.msra.mxu0 %v2424
    %3524 = vmatprep.subr.bf16.mxu0 %v2433
    %3525 = vmatpush1.bf16.msra.mxu0 %v2432
    %3526 = vmatprep.subr.bf16.mxu0 %v2441
    %3527 = vmatpush1.bf16.msra.mxu0 %v2440
    %3528 = vmatprep.subr.bf16.mxu0 %v2449
    %3529 = vmatpush1.bf16.msra.mxu0 %v2448
    %3530 = vmatprep.subr.bf16.mxu0 %v2457
    %3531 = vmatpush1.bf16.msra.mxu0 %v2456
    %3532 = vmatprep.subr.bf16.mxu0 %v2465
    %3533 = vmatpush1.bf16.msra.mxu0 %v2464
    %3534 = vmatprep.subr.bf16.mxu0 %v2473
    %3535 = vmatpush1.bf16.msra.mxu0 %v2472
    %3536 = vmatprep.subr.bf16.mxu0 %v2481
    %3537 = vmatpush1.bf16.msra.mxu0 %v2480
    %3538 = vmatprep.subr.bf16.mxu0 %v2489
    %3539 = vmatpush1.bf16.msra.mxu0 %v2488
    %3540 = vmatprep.subr.bf16.mxu0 %v2497
    %3541 = vmatpush1.bf16.msra.mxu0 %v2496
    %3542 = vmatprep.subr.bf16.mxu0 %v2505
    %3543 = vmatpush1.bf16.msra.mxu0 %v2504
    %3544 = vmatprep.mubr.bf16.mxu0 %v938
    %3545 = vmatmul.mubr.bf16.gmra.mrb[0].mxu0 %v937
    %v3546 = vpop.f32.mrb[0].mxu0
    %v3547 = vadd.f32 %v3504, %v3546
    %v3548 = vpop.f32.mrb[0].mxu0
    %v3549 = vadd.f32 %v3506, %v3548
    %v3550 = vpop.f32.mrb[0].mxu0
    %v3551 = vadd.f32 %v3508, %v3550
    %v3552 = vpop.f32.mrb[0].mxu0
    %v3553 = vadd.f32 %v3510, %v3552
    %3554 = vdwg.mxu0
    %3555 = vmatprep.subr.bf16.mxu0 %v2513
    %3556 = vmatpush1.bf16.msra.mxu0 %v2512
    %3557 = vmatprep.subr.bf16.mxu0 0
    %3558 = vmatpush1.bf16.msra.mxu0 0
    %3559 = vmatprep.subr.bf16.mxu0 0
    %3560 = vmatpush1.bf16.msra.mxu0 0
    %3561 = vmatprep.subr.bf16.mxu0 0
    %3562 = vmatpush1.bf16.msra.mxu0 0
    %3563 = vmatprep.subr.bf16.mxu0 0
    %3564 = vmatpush1.bf16.msra.mxu0 0
    %3565 = vmatprep.subr.bf16.mxu0 0
    %3566 = vmatpush1.bf16.msra.mxu0 0
    %3567 = vmatprep.subr.bf16.mxu0 0
    %3568 = vmatpush1.bf16.msra.mxu0 0
    %3569 = vmatprep.subr.bf16.mxu0 0
    %3570 = vmatpush1.bf16.msra.mxu0 0
    %3571 = vmatprep.subr.bf16.mxu0 0
    %3572 = vmatpush1.bf16.msra.mxu0 0
    %3573 = vmatprep.subr.bf16.mxu0 0
    %3574 = vmatpush1.bf16.msra.mxu0 0
    %3575 = vmatprep.subr.bf16.mxu0 0
    %3576 = vmatpush1.bf16.msra.mxu0 0
    %3577 = vmatprep.subr.bf16.mxu0 0
    %3578 = vmatpush1.bf16.msra.mxu0 0
    %3579 = vmatprep.subr.bf16.mxu0 0
    %3580 = vmatpush1.bf16.msra.mxu0 0
    %3581 = vmatprep.subr.bf16.mxu0 0
    %3582 = vmatpush1.bf16.msra.mxu0 0
    %3583 = vmatprep.subr.bf16.mxu0 0
    %3584 = vmatpush1.bf16.msra.mxu0 0
    %3585 = vmatprep.subr.bf16.mxu0 0
    %3586 = vmatpush1.bf16.msra.mxu0 0
    %3587 = vmatprep.mubr.bf16.mxu0 0
    %3588 = vmatmul.mubr.bf16.gmra.mrb[0].mxu0 %v2908
    %v3589 = vpop.f32.mrb[0].mxu0
    %v3590 = vadd.f32 %v3547, %v3589
    %v3591 = vpop.f32.mrb[0].mxu0
    %v3592 = vadd.f32 %v3549, %v3591
    %v3593 = vpop.f32.mrb[0].mxu0
    %v3594 = vadd.f32 %v3551, %v3593
    %v3595 = vpop.f32.mrb[0].mxu0
    %v3596 = vadd.f32 %v3553, %v3595
    %3597 = vdwg.mxu0
    %v3598 = vld [vmem:[#allocation6] sm:$0xff]
    %v3600 = vlaneseq
    %v3601 = vshrl.u32 %v3600, 7
    %v3602 = vsub.s32 0, %v3601
    %v3603 = vrot.slane %v3598, %v3602
    %v3604 = vlaneseq
    %v3605 = vshrl.u32 %v3604, 7
    %v3606 = vsub.s32 1, %v3605
    %v3607 = vrot.slane %v3598, %v3606
    %v3608 = vlaneseq
    %v3609 = vshrl.u32 %v3608, 7
    %v3610 = vsub.s32 2, %v3609
    %v3611 = vrot.slane %v3598, %v3610
    %v3612 = vlaneseq
    %v3613 = vshrl.u32 %v3612, 7
    %v3614 = vsub.s32 3, %v3613
    %v3615 = vrot.slane %v3598, %v3614
    %v3616 = vlaneseq
    %v3617 = vshrl.u32 %v3616, 7
    %v3618 = vsub.s32 4, %v3617
    %v3619 = vrot.slane %v3598, %v3618
    %v3620 = vlaneseq
    %v3621 = vshrl.u32 %v3620, 7
    %v3622 = vsub.s32 5, %v3621
    %v3623 = vrot.slane %v3598, %v3622
    %v3624 = vlaneseq
    %v3625 = vshrl.u32 %v3624, 7
    %v3626 = vsub.s32 6, %v3625
    %v3627 = vrot.slane %v3598, %v3626
    %v3628 = vlaneseq
    %v3629 = vshrl.u32 %v3628, 7
    %v3630 = vsub.s32 7, %v3629
    %v3631 = vrot.slane %v3598, %v3630
    %v3640 = vadd.f32 %v3074, %v3603
    %v3641 = vadd.f32 %v3076, %v3607
    %v3642 = vadd.f32 %v3246, %v3611
    %v3643 = vadd.f32 %v3248, %v3615
    %v3644 = vadd.f32 %v3418, %v3619
    %v3645 = vadd.f32 %v3420, %v3623
    %v3646 = vadd.f32 %v3590, %v3627
    %v3647 = vadd.f32 %v3592, %v3631
    %v3648 = vadd.f32 %v3078, %v3603
    %v3649 = vadd.f32 %v3080, %v3607
    %v3650 = vadd.f32 %v3250, %v3611
    %v3651 = vadd.f32 %v3252, %v3615
    %v3652 = vadd.f32 %v3422, %v3619
    %v3653 = vadd.f32 %v3424, %v3623
    %v3654 = vadd.f32 %v3594, %v3627
    %v3655 = vadd.f32 %v3596, %v3631
    %vm3656 = vcmp.gt.f32.partialorder %v3640, 0.0
    %vm3657 = vcmp.gt.f32.partialorder %v3641, 0.0
    %vm3658 = vcmp.gt.f32.partialorder %v3642, 0.0
    %vm3659 = vcmp.gt.f32.partialorder %v3643, 0.0
    %vm3660 = vcmp.gt.f32.partialorder %v3644, 0.0
    %vm3661 = vcmp.gt.f32.partialorder %v3645, 0.0
    %vm3662 = vcmp.gt.f32.partialorder %v3646, 0.0
    %vm3663 = vcmp.gt.f32.partialorder %v3647, 0.0
    %vm3664 = vcmp.gt.f32.partialorder %v3648, 0.0
    %vm3665 = vcmp.gt.f32.partialorder %v3649, 0.0
    %vm3666 = vcmp.gt.f32.partialorder %v3650, 0.0
    %vm3667 = vcmp.gt.f32.partialorder %v3651, 0.0
    %vm3668 = vcmp.gt.f32.partialorder %v3652, 0.0
    %vm3669 = vcmp.gt.f32.partialorder %v3653, 0.0
    %vm3670 = vcmp.gt.f32.partialorder %v3654, 0.0
    %vm3671 = vcmp.gt.f32.partialorder %v3655, 0.0
    %v3672 = vmul.f32 %v3640, 0.2
    %v3673 = vmul.f32 %v3641, 0.2
    %v3674 = vmul.f32 %v3642, 0.2
    %v3675 = vmul.f32 %v3643, 0.2
    %v3676 = vmul.f32 %v3644, 0.2
    %v3677 = vmul.f32 %v3645, 0.2
    %v3678 = vmul.f32 %v3646, 0.2
    %v3679 = vmul.f32 %v3647, 0.2
    %v3680 = vmul.f32 %v3648, 0.2
    %v3681 = vmul.f32 %v3649, 0.2
    %v3682 = vmul.f32 %v3650, 0.2
    %v3683 = vmul.f32 %v3651, 0.2
    %v3684 = vmul.f32 %v3652, 0.2
    %v3685 = vmul.f32 %v3653, 0.2
    %v3686 = vmul.f32 %v3654, 0.2
    %v3687 = vmul.f32 %v3655, 0.2
    %v3688 = vsel %vm3656, %v3640, %v3672
    %v3689 = vsel %vm3657, %v3641, %v3673
    %v3690 = vsel %vm3658, %v3642, %v3674
    %v3691 = vsel %vm3659, %v3643, %v3675
    %v3692 = vsel %vm3660, %v3644, %v3676
    %v3693 = vsel %vm3661, %v3645, %v3677
    %v3694 = vsel %vm3662, %v3646, %v3678
    %v3695 = vsel %vm3663, %v3647, %v3679
    %v3696 = vsel %vm3664, %v3648, %v3680
    %v3697 = vsel %vm3665, %v3649, %v3681
    %v3698 = vsel %vm3666, %v3650, %v3682
    %v3699 = vsel %vm3667, %v3651, %v3683
    %v3700 = vsel %vm3668, %v3652, %v3684
    %v3701 = vsel %vm3669, %v3653, %v3685
    %v3702 = vsel %vm3670, %v3654, %v3686
    %v3703 = vsel %vm3671, %v3655, %v3687
    %v3704 = vpack.c.bf16 %v3696, %v3688
    %v3705 = vpack.c.bf16 %v3697, %v3689
    %v3706 = vpack.c.bf16 %v3698, %v3690
    %v3707 = vpack.c.bf16 %v3699, %v3691
    %v3708 = vpack.c.bf16 %v3700, %v3692
    %v3709 = vpack.c.bf16 %v3701, %v3693
    %v3710 = vpack.c.bf16 %v3702, %v3694
    %v3711 = vpack.c.bf16 %v3703, %v3695
    %v3712 = vld [vmem:[#allocation7] sm:$0xff]
    %v3713 = vld [vmem:[#allocation7 + $0x8] sm:$0xff]
    %v3714 = vld [vmem:[#allocation7 + $0x10] sm:$0xff]
    %v3715 = vld [vmem:[#allocation7 + $0x18] sm:$0xff]
    %v3716 = vld [vmem:[#allocation7 + $0x20] sm:$0xff]
    %v3717 = vld [vmem:[#allocation7 + $0x28] sm:$0xff]
    %v3718 = vld [vmem:[#allocation7 + $0x30] sm:$0xff]
    %v3719 = vld [vmem:[#allocation7 + $0x38] sm:$0xff]
    %v3720 = vld [vmem:[#allocation7 + $0x40] sm:$0xff]
    %v3721 = vld [vmem:[#allocation7 + $0x48] sm:$0xff]
    %v3722 = vld [vmem:[#allocation7 + $0x50] sm:$0xff]
    %v3723 = vld [vmem:[#allocation7 + $0x58] sm:$0xff]
    %v3724 = vld [vmem:[#allocation7 + $0x60] sm:$0xff]
    %v3725 = vld [vmem:[#allocation7 + $0x68] sm:$0xff]
    %v3726 = vld [vmem:[#allocation7 + $0x70] sm:$0xff]
    %v3727 = vld [vmem:[#allocation7 + $0x78] sm:$0xff]
    %v3728 = vld [vmem:[#allocation7 + $0x80] sm:$0xff]
    %v3729 = vld [vmem:[#allocation7 + $0x88] sm:$0xff]
    %v3730 = vld [vmem:[#allocation7 + $0x90] sm:$0xff]
    %v3731 = vld [vmem:[#allocation7 + $0x98] sm:$0xff]
    %v3732 = vld [vmem:[#allocation7 + $0xa0] sm:$0xff]
    %v3733 = vld [vmem:[#allocation7 + $0xa8] sm:$0xff]
    %v3734 = vld [vmem:[#allocation7 + $0xb0] sm:$0xff]
    %v3735 = vld [vmem:[#allocation7 + $0xb8] sm:$0xff]
    %v3736 = vld [vmem:[#allocation7 + $0xc0] sm:$0xff]
    %v3737 = vld [vmem:[#allocation7 + $0xc8] sm:$0xff]
    %v3738 = vld [vmem:[#allocation7 + $0xd0] sm:$0xff]
    %v3739 = vld [vmem:[#allocation7 + $0xd8] sm:$0xff]
    %v3740 = vld [vmem:[#allocation7 + $0xe0] sm:$0xff]
    %v3741 = vld [vmem:[#allocation7 + $0xe8] sm:$0xff]
    %v3742 = vld [vmem:[#allocation7 + $0xf0] sm:$0xff]
    %v3743 = vld [vmem:[#allocation7 + $0xf8] sm:$0xff]
    %v3744 = vld [vmem:[#allocation7 + $0x100] sm:$0xff]
    %v3745 = vld [vmem:[#allocation7 + $0x108] sm:$0xff]
    %v3746 = vld [vmem:[#allocation7 + $0x110] sm:$0xff]
    %v3747 = vld [vmem:[#allocation7 + $0x118] sm:$0xff]
    %v3748 = vld [vmem:[#allocation7 + $0x120] sm:$0xff]
    %v3749 = vld [vmem:[#allocation7 + $0x128] sm:$0xff]
    %v3750 = vld [vmem:[#allocation7 + $0x130] sm:$0xff]
    %v3751 = vld [vmem:[#allocation7 + $0x138] sm:$0xff]
    %v3752 = vld [vmem:[#allocation7 + $0x140] sm:$0xff]
    %v3753 = vld [vmem:[#allocation7 + $0x148] sm:$0xff]
    %v3754 = vld [vmem:[#allocation7 + $0x150] sm:$0xff]
    %v3755 = vld [vmem:[#allocation7 + $0x158] sm:$0xff]
    %v3756 = vld [vmem:[#allocation7 + $0x160] sm:$0xff]
    %v3757 = vld [vmem:[#allocation7 + $0x168] sm:$0xff]
    %v3758 = vld [vmem:[#allocation7 + $0x170] sm:$0xff]
    %v3759 = vld [vmem:[#allocation7 + $0x178] sm:$0xff]
    %v3760 = vld [vmem:[#allocation7 + $0x180] sm:$0xff]
    %v3761 = vld [vmem:[#allocation7 + $0x188] sm:$0xff]
    %v3762 = vld [vmem:[#allocation7 + $0x190] sm:$0xff]
    %v3763 = vld [vmem:[#allocation7 + $0x198] sm:$0xff]
    %v3764 = vld [vmem:[#allocation7 + $0x1a0] sm:$0xff]
    %v3765 = vld [vmem:[#allocation7 + $0x1a8] sm:$0xff]
    %v3766 = vld [vmem:[#allocation7 + $0x1b0] sm:$0xff]
    %v3767 = vld [vmem:[#allocation7 + $0x1b8] sm:$0xff]
    %v3768 = vld [vmem:[#allocation7 + $0x1c0] sm:$0xff]
    %v3769 = vld [vmem:[#allocation7 + $0x1c8] sm:$0xff]
    %v3770 = vld [vmem:[#allocation7 + $0x1d0] sm:$0xff]
    %v3771 = vld [vmem:[#allocation7 + $0x1d8] sm:$0xff]
    %v3772 = vld [vmem:[#allocation7 + $0x1e0] sm:$0xff]
    %v3773 = vld [vmem:[#allocation7 + $0x1e8] sm:$0xff]
    %v3774 = vld [vmem:[#allocation7 + $0x1f0] sm:$0xff]
    %v3775 = vld [vmem:[#allocation7 + $0x1f8] sm:$0xff]
    %v3776 = vld [vmem:[#allocation7 + $0x200] sm:$0xff]
    %v3777 = vld [vmem:[#allocation7 + $0x208] sm:$0xff]
    %v3778 = vld [vmem:[#allocation7 + $0x210] sm:$0xff]
    %v3779 = vld [vmem:[#allocation7 + $0x218] sm:$0xff]
    %v3780 = vld [vmem:[#allocation7 + $0x220] sm:$0xff]
    %v3781 = vld [vmem:[#allocation7 + $0x228] sm:$0xff]
    %v3782 = vld [vmem:[#allocation7 + $0x230] sm:$0xff]
    %v3783 = vld [vmem:[#allocation7 + $0x238] sm:$0xff]
    %v3784 = vld [vmem:[#allocation7 + $0x240] sm:$0xff]
    %v3785 = vld [vmem:[#allocation7 + $0x248] sm:$0xff]
    %v3786 = vld [vmem:[#allocation7 + $0x250] sm:$0xff]
    %v3787 = vld [vmem:[#allocation7 + $0x258] sm:$0xff]
    %v3788 = vld [vmem:[#allocation7 + $0x260] sm:$0xff]
    %v3789 = vld [vmem:[#allocation7 + $0x268] sm:$0xff]
    %v3790 = vld [vmem:[#allocation7 + $0x270] sm:$0xff]
    %v3791 = vld [vmem:[#allocation7 + $0x278] sm:$0xff]
    %v3792 = vld [vmem:[#allocation7 + $0x280] sm:$0xff]
    %v3793 = vld [vmem:[#allocation7 + $0x288] sm:$0xff]
    %v3794 = vld [vmem:[#allocation7 + $0x290] sm:$0xff]
    %v3795 = vld [vmem:[#allocation7 + $0x298] sm:$0xff]
    %v3796 = vld [vmem:[#allocation7 + $0x2a0] sm:$0xff]
    %v3797 = vld [vmem:[#allocation7 + $0x2a8] sm:$0xff]
    %v3798 = vld [vmem:[#allocation7 + $0x2b0] sm:$0xff]
    %v3799 = vld [vmem:[#allocation7 + $0x2b8] sm:$0xff]
    %v3800 = vld [vmem:[#allocation7 + $0x2c0] sm:$0xff]
    %v3801 = vld [vmem:[#allocation7 + $0x2c8] sm:$0xff]
    %v3802 = vld [vmem:[#allocation7 + $0x2d0] sm:$0xff]
    %v3803 = vld [vmem:[#allocation7 + $0x2d8] sm:$0xff]
    %v3804 = vld [vmem:[#allocation7 + $0x2e0] sm:$0xff]
    %v3805 = vld [vmem:[#allocation7 + $0x2e8] sm:$0xff]
    %v3806 = vld [vmem:[#allocation7 + $0x2f0] sm:$0xff]
    %v3807 = vld [vmem:[#allocation7 + $0x2f8] sm:$0xff]
    %v3808 = vld [vmem:[#allocation7 + $0x300] sm:$0xff]
    %v3809 = vld [vmem:[#allocation7 + $0x308] sm:$0xff]
    %v3810 = vld [vmem:[#allocation7 + $0x310] sm:$0xff]
    %v3811 = vld [vmem:[#allocation7 + $0x318] sm:$0xff]
    %v3812 = vld [vmem:[#allocation7 + $0x320] sm:$0xff]
    %v3813 = vld [vmem:[#allocation7 + $0x328] sm:$0xff]
    %v3814 = vld [vmem:[#allocation7 + $0x330] sm:$0xff]
    %v3815 = vld [vmem:[#allocation7 + $0x338] sm:$0xff]
    %v3816 = vld [vmem:[#allocation7 + $0x340] sm:$0xff]
    %v3817 = vld [vmem:[#allocation7 + $0x348] sm:$0xff]
    %v3818 = vld [vmem:[#allocation7 + $0x350] sm:$0xff]
    %v3819 = vld [vmem:[#allocation7 + $0x358] sm:$0xff]
    %v3820 = vld [vmem:[#allocation7 + $0x360] sm:$0xff]
    %v3821 = vld [vmem:[#allocation7 + $0x368] sm:$0xff]
    %v3822 = vld [vmem:[#allocation7 + $0x370] sm:$0xff]
    %v3823 = vld [vmem:[#allocation7 + $0x378] sm:$0xff]
    %v3824 = vld [vmem:[#allocation7 + $0x380] sm:$0xff]
    %v3825 = vld [vmem:[#allocation7 + $0x388] sm:$0xff]
    %v3826 = vld [vmem:[#allocation7 + $0x390] sm:$0xff]
    %v3827 = vld [vmem:[#allocation7 + $0x398] sm:$0xff]
    %v3828 = vld [vmem:[#allocation7 + $0x3a0] sm:$0xff]
    %v3829 = vld [vmem:[#allocation7 + $0x3a8] sm:$0xff]
    %v3830 = vld [vmem:[#allocation7 + $0x3b0] sm:$0xff]
    %v3831 = vld [vmem:[#allocation7 + $0x3b8] sm:$0xff]
    %v3832 = vld [vmem:[#allocation7 + $0x3c0] sm:$0xff]
    %v3833 = vld [vmem:[#allocation7 + $0x3c8] sm:$0xff]
    %v3834 = vld [vmem:[#allocation7 + $0x3d0] sm:$0xff]
    %v3835 = vld [vmem:[#allocation7 + $0x3d8] sm:$0xff]
    %v3836 = vld [vmem:[#allocation7 + $0x3e0] sm:$0xff]
    %v3837 = vld [vmem:[#allocation7 + $0x3e8] sm:$0xff]
    %v3838 = vld [vmem:[#allocation7 + $0x3f0] sm:$0xff]
    %v3839 = vld [vmem:[#allocation7 + $0x3f8] sm:$0xff]
    %v3840 = vld [vmem:[#allocation7 + $0x400] sm:$0xff]
    %v3841 = vld [vmem:[#allocation7 + $0x408] sm:$0xff]
    %v3842 = vld [vmem:[#allocation7 + $0x410] sm:$0xff]
    %v3843 = vld [vmem:[#allocation7 + $0x418] sm:$0xff]
    %v3844 = vld [vmem:[#allocation7 + $0x420] sm:$0xff]
    %v3845 = vld [vmem:[#allocation7 + $0x428] sm:$0xff]
    %v3846 = vld [vmem:[#allocation7 + $0x430] sm:$0xff]
    %v3847 = vld [vmem:[#allocation7 + $0x438] sm:$0xff]
    %v3848 = vld [vmem:[#allocation7 + $0x440] sm:$0xff]
    %v3849 = vld [vmem:[#allocation7 + $0x448] sm:$0xff]
    %v3850 = vld [vmem:[#allocation7 + $0x450] sm:$0xff]
    %v3851 = vld [vmem:[#allocation7 + $0x458] sm:$0xff]
    %v3852 = vld [vmem:[#allocation7 + $0x460] sm:$0xff]
    %v3853 = vld [vmem:[#allocation7 + $0x468] sm:$0xff]
    %v3854 = vld [vmem:[#allocation7 + $0x470] sm:$0xff]
    %v3855 = vld [vmem:[#allocation7 + $0x478] sm:$0xff]
    %v3856 = vld [vmem:[#allocation7 + $0x480] sm:$0xff]
    %v3857 = vld [vmem:[#allocation7 + $0x488] sm:$0xff]
    %v3858 = vld [vmem:[#allocation7 + $0x490] sm:$0xff]
    %v3859 = vld [vmem:[#allocation7 + $0x498] sm:$0xff]
    %v3860 = vld [vmem:[#allocation7 + $0x4a0] sm:$0xff]
    %v3861 = vld [vmem:[#allocation7 + $0x4a8] sm:$0xff]
    %v3862 = vld [vmem:[#allocation7 + $0x4b0] sm:$0xff]
    %v3863 = vld [vmem:[#allocation7 + $0x4b8] sm:$0xff]
    %v3864 = vld [vmem:[#allocation7 + $0x4c0] sm:$0xff]
    %v3865 = vld [vmem:[#allocation7 + $0x4c8] sm:$0xff]
    %v3866 = vld [vmem:[#allocation7 + $0x4d0] sm:$0xff]
    %v3867 = vld [vmem:[#allocation7 + $0x4d8] sm:$0xff]
    %v3868 = vld [vmem:[#allocation7 + $0x4e0] sm:$0xff]
    %v3869 = vld [vmem:[#allocation7 + $0x4e8] sm:$0xff]
    %v3870 = vld [vmem:[#allocation7 + $0x4f0] sm:$0xff]
    %v3871 = vld [vmem:[#allocation7 + $0x4f8] sm:$0xff]
    %v3872 = vld [vmem:[#allocation7 + $0x500] sm:$0xff]
    %v3873 = vld [vmem:[#allocation7 + $0x508] sm:$0xff]
    %v3874 = vld [vmem:[#allocation7 + $0x510] sm:$0xff]
    %v3875 = vld [vmem:[#allocation7 + $0x518] sm:$0xff]
    %v3876 = vld [vmem:[#allocation7 + $0x520] sm:$0xff]
    %v3877 = vld [vmem:[#allocation7 + $0x528] sm:$0xff]
    %v3878 = vld [vmem:[#allocation7 + $0x530] sm:$0xff]
    %v3879 = vld [vmem:[#allocation7 + $0x538] sm:$0xff]
    %v3880 = vld [vmem:[#allocation7 + $0x540] sm:$0xff]
    %v3881 = vld [vmem:[#allocation7 + $0x548] sm:$0xff]
    %v3882 = vld [vmem:[#allocation7 + $0x550] sm:$0xff]
    %v3883 = vld [vmem:[#allocation7 + $0x558] sm:$0xff]
    %v3884 = vld [vmem:[#allocation7 + $0x560] sm:$0xff]
    %v3885 = vld [vmem:[#allocation7 + $0x568] sm:$0xff]
    %v3886 = vld [vmem:[#allocation7 + $0x570] sm:$0xff]
    %v3887 = vld [vmem:[#allocation7 + $0x578] sm:$0xff]
    %v3888 = vld [vmem:[#allocation7 + $0x580] sm:$0xff]
    %v3889 = vld [vmem:[#allocation7 + $0x588] sm:$0xff]
    %v3890 = vld [vmem:[#allocation7 + $0x590] sm:$0xff]
    %v3891 = vld [vmem:[#allocation7 + $0x598] sm:$0xff]
    %v3892 = vld [vmem:[#allocation7 + $0x5a0] sm:$0xff]
    %v3893 = vld [vmem:[#allocation7 + $0x5a8] sm:$0xff]
    %v3894 = vld [vmem:[#allocation7 + $0x5b0] sm:$0xff]
    %v3895 = vld [vmem:[#allocation7 + $0x5b8] sm:$0xff]
    %v3896 = vld [vmem:[#allocation7 + $0x5c0] sm:$0xff]
    %v3897 = vld [vmem:[#allocation7 + $0x5c8] sm:$0xff]
    %v3898 = vld [vmem:[#allocation7 + $0x5d0] sm:$0xff]
    %v3899 = vld [vmem:[#allocation7 + $0x5d8] sm:$0xff]
    %v3900 = vld [vmem:[#allocation7 + $0x5e0] sm:$0xff]
    %v3901 = vld [vmem:[#allocation7 + $0x5e8] sm:$0xff]
    %v3902 = vld [vmem:[#allocation7 + $0x5f0] sm:$0xff]
    %v3903 = vld [vmem:[#allocation7 + $0x5f8] sm:$0xff]
    %v3904 = vld [vmem:[#allocation7 + $0x600] sm:$0xff]
    %v3905 = vld [vmem:[#allocation7 + $0x608] sm:$0xff]
    %v3906 = vld [vmem:[#allocation7 + $0x610] sm:$0xff]
    %v3907 = vld [vmem:[#allocation7 + $0x618] sm:$0xff]
    %v3908 = vld [vmem:[#allocation7 + $0x620] sm:$0xff]
    %v3909 = vld [vmem:[#allocation7 + $0x628] sm:$0xff]
    %v3910 = vld [vmem:[#allocation7 + $0x630] sm:$0xff]
    %v3911 = vld [vmem:[#allocation7 + $0x638] sm:$0xff]
    %v3912 = vld [vmem:[#allocation7 + $0x640] sm:$0xff]
    %v3913 = vld [vmem:[#allocation7 + $0x648] sm:$0xff]
    %v3914 = vld [vmem:[#allocation7 + $0x650] sm:$0xff]
    %v3915 = vld [vmem:[#allocation7 + $0x658] sm:$0xff]
    %v3916 = vld [vmem:[#allocation7 + $0x660] sm:$0xff]
    %v3917 = vld [vmem:[#allocation7 + $0x668] sm:$0xff]
    %v3918 = vld [vmem:[#allocation7 + $0x670] sm:$0xff]
    %v3919 = vld [vmem:[#allocation7 + $0x678] sm:$0xff]
    %v3920 = vld [vmem:[#allocation7 + $0x680] sm:$0xff]
    %v3921 = vld [vmem:[#allocation7 + $0x688] sm:$0xff]
    %v3922 = vld [vmem:[#allocation7 + $0x690] sm:$0xff]
    %v3923 = vld [vmem:[#allocation7 + $0x698] sm:$0xff]
    %v3924 = vld [vmem:[#allocation7 + $0x6a0] sm:$0xff]
    %v3925 = vld [vmem:[#allocation7 + $0x6a8] sm:$0xff]
    %v3926 = vld [vmem:[#allocation7 + $0x6b0] sm:$0xff]
    %v3927 = vld [vmem:[#allocation7 + $0x6b8] sm:$0xff]
    %v3928 = vld [vmem:[#allocation7 + $0x6c0] sm:$0xff]
    %v3929 = vld [vmem:[#allocation7 + $0x6c8] sm:$0xff]
    %v3930 = vld [vmem:[#allocation7 + $0x6d0] sm:$0xff]
    %v3931 = vld [vmem:[#allocation7 + $0x6d8] sm:$0xff]
    %v3932 = vld [vmem:[#allocation7 + $0x6e0] sm:$0xff]
    %v3933 = vld [vmem:[#allocation7 + $0x6e8] sm:$0xff]
    %v3934 = vld [vmem:[#allocation7 + $0x6f0] sm:$0xff]
    %v3935 = vld [vmem:[#allocation7 + $0x6f8] sm:$0xff]
    %v3936 = vld [vmem:[#allocation7 + $0x700] sm:$0xff]
    %v3937 = vld [vmem:[#allocation7 + $0x708] sm:$0xff]
    %v3938 = vld [vmem:[#allocation7 + $0x710] sm:$0xff]
    %v3939 = vld [vmem:[#allocation7 + $0x718] sm:$0xff]
    %v3940 = vld [vmem:[#allocation7 + $0x720] sm:$0xff]
    %v3941 = vld [vmem:[#allocation7 + $0x728] sm:$0xff]
    %v3942 = vld [vmem:[#allocation7 + $0x730] sm:$0xff]
    %v3943 = vld [vmem:[#allocation7 + $0x738] sm:$0xff]
    %v3944 = vld [vmem:[#allocation7 + $0x740] sm:$0xff]
    %v3945 = vld [vmem:[#allocation7 + $0x748] sm:$0xff]
    %v3946 = vld [vmem:[#allocation7 + $0x750] sm:$0xff]
    %v3947 = vld [vmem:[#allocation7 + $0x758] sm:$0xff]
    %v3948 = vld [vmem:[#allocation7 + $0x760] sm:$0xff]
    %v3949 = vld [vmem:[#allocation7 + $0x768] sm:$0xff]
    %v3950 = vld [vmem:[#allocation7 + $0x770] sm:$0xff]
    %v3951 = vld [vmem:[#allocation7 + $0x778] sm:$0xff]
    %v3952 = vld [vmem:[#allocation7 + $0x780] sm:$0xff]
    %v3953 = vld [vmem:[#allocation7 + $0x788] sm:$0xff]
    %v3954 = vld [vmem:[#allocation7 + $0x790] sm:$0xff]
    %v3955 = vld [vmem:[#allocation7 + $0x798] sm:$0xff]
    %v3956 = vld [vmem:[#allocation7 + $0x7a0] sm:$0xff]
    %v3957 = vld [vmem:[#allocation7 + $0x7a8] sm:$0xff]
    %v3958 = vld [vmem:[#allocation7 + $0x7b0] sm:$0xff]
    %v3959 = vld [vmem:[#allocation7 + $0x7b8] sm:$0xff]
    %v3960 = vld [vmem:[#allocation7 + $0x7c0] sm:$0xff]
    %v3961 = vld [vmem:[#allocation7 + $0x7c8] sm:$0xff]
    %v3962 = vld [vmem:[#allocation7 + $0x7d0] sm:$0xff]
    %v3963 = vld [vmem:[#allocation7 + $0x7d8] sm:$0xff]
    %v3964 = vld [vmem:[#allocation7 + $0x7e0] sm:$0xff]
    %v3965 = vld [vmem:[#allocation7 + $0x7e8] sm:$0xff]
    %v3966 = vld [vmem:[#allocation7 + $0x7f0] sm:$0xff]
    %v3967 = vld [vmem:[#allocation7 + $0x7f8] sm:$0xff]
    %v3968 = vld [vmem:[#allocation9] sm:$0xf]
    %v3970 = vlaneseq
    %v3971 = vshrl.u32 %v3970, 7
    %v3972 = vsub.s32 0, %v3971
    %v3973 = vrot.slane %v3968, %v3972
    %v3974 = vlaneseq
    %v3975 = vshrl.u32 %v3974, 7
    %v3976 = vsub.s32 1, %v3975
    %v3977 = vrot.slane %v3968, %v3976
    %v3978 = vlaneseq
    %v3979 = vshrl.u32 %v3978, 7
    %v3980 = vsub.s32 2, %v3979
    %v3981 = vrot.slane %v3968, %v3980
    %v3982 = vlaneseq
    %v3983 = vshrl.u32 %v3982, 7
    %v3984 = vsub.s32 3, %v3983
    %v3985 = vrot.slane %v3968, %v3984
    %v4246 = vunpack.c.l.b16 %v3712
    %v4247 = vunpack.c.h.b16 %v3712
    %v4248 = vunpack.c.l.b16 %v3713
    %v4249 = vunpack.c.h.b16 %v3713
    %v4250 = vunpack.c.l.b16 %v3714
    %v4251 = vunpack.c.h.b16 %v3714
    %v4252 = vunpack.c.l.b16 %v3715
    %v4253 = vunpack.c.h.b16 %v3715
    %v4254 = vunpack.c.l.b16 %v3716
    %v4255 = vunpack.c.h.b16 %v3716
    %v4256 = vunpack.c.l.b16 %v3717
    %v4257 = vunpack.c.h.b16 %v3717
    %v4258 = vunpack.c.l.b16 %v3718
    %v4259 = vunpack.c.h.b16 %v3718
    %v4260 = vunpack.c.l.b16 %v3719
    %v4261 = vunpack.c.h.b16 %v3719
    %v4262 = vunpack.c.l.b16 %v3720
    %v4263 = vunpack.c.h.b16 %v3720
    %v4264 = vunpack.c.l.b16 %v3721
    %v4265 = vunpack.c.h.b16 %v3721
    %v4266 = vunpack.c.l.b16 %v3722
    %v4267 = vunpack.c.h.b16 %v3722
    %v4268 = vunpack.c.l.b16 %v3723
    %v4269 = vunpack.c.h.b16 %v3723
    %v4270 = vunpack.c.l.b16 %v3724
    %v4271 = vunpack.c.h.b16 %v3724
    %v4272 = vunpack.c.l.b16 %v3725
    %v4273 = vunpack.c.h.b16 %v3725
    %v4274 = vunpack.c.l.b16 %v3726
    %v4275 = vunpack.c.h.b16 %v3726
    %v4276 = vunpack.c.l.b16 %v3727
    %v4277 = vunpack.c.h.b16 %v3727
    %v4278 = vunpack.c.l.b16 %v3728
    %v4279 = vunpack.c.h.b16 %v3728
    %v4280 = vunpack.c.l.b16 %v3729
    %v4281 = vunpack.c.h.b16 %v3729
    %v4282 = vunpack.c.l.b16 %v3730
    %v4283 = vunpack.c.h.b16 %v3730
    %v4284 = vunpack.c.l.b16 %v3731
    %v4285 = vunpack.c.h.b16 %v3731
    %v4286 = vunpack.c.l.b16 %v3732
    %v4287 = vunpack.c.h.b16 %v3732
    %v4288 = vunpack.c.l.b16 %v3733
    %v4289 = vunpack.c.h.b16 %v3733
    %v4290 = vunpack.c.l.b16 %v3734
    %v4291 = vunpack.c.h.b16 %v3734
    %v4292 = vunpack.c.l.b16 %v3735
    %v4293 = vunpack.c.h.b16 %v3735
    %v4294 = vunpack.c.l.b16 %v3736
    %v4295 = vunpack.c.h.b16 %v3736
    %v4296 = vunpack.c.l.b16 %v3737
    %v4297 = vunpack.c.h.b16 %v3737
    %v4298 = vunpack.c.l.b16 %v3738
    %v4299 = vunpack.c.h.b16 %v3738
    %v4300 = vunpack.c.l.b16 %v3739
    %v4301 = vunpack.c.h.b16 %v3739
    %v4302 = vunpack.c.l.b16 %v3740
    %v4303 = vunpack.c.h.b16 %v3740
    %v4304 = vunpack.c.l.b16 %v3741
    %v4305 = vunpack.c.h.b16 %v3741
    %v4306 = vunpack.c.l.b16 %v3742
    %v4307 = vunpack.c.h.b16 %v3742
    %v4308 = vunpack.c.l.b16 %v3743
    %v4309 = vunpack.c.h.b16 %v3743
    %v4310 = vunpack.c.l.b16 %v3744
    %v4311 = vunpack.c.h.b16 %v3744
    %v4312 = vunpack.c.l.b16 %v3745
    %v4313 = vunpack.c.h.b16 %v3745
    %v4314 = vunpack.c.l.b16 %v3746
    %v4315 = vunpack.c.h.b16 %v3746
    %v4316 = vunpack.c.l.b16 %v3747
    %v4317 = vunpack.c.h.b16 %v3747
    %v4318 = vunpack.c.l.b16 %v3748
    %v4319 = vunpack.c.h.b16 %v3748
    %v4320 = vunpack.c.l.b16 %v3749
    %v4321 = vunpack.c.h.b16 %v3749
    %v4322 = vunpack.c.l.b16 %v3750
    %v4323 = vunpack.c.h.b16 %v3750
    %v4324 = vunpack.c.l.b16 %v3751
    %v4325 = vunpack.c.h.b16 %v3751
    %v4326 = vunpack.c.l.b16 %v3752
    %v4327 = vunpack.c.h.b16 %v3752
    %v4328 = vunpack.c.l.b16 %v3753
    %v4329 = vunpack.c.h.b16 %v3753
    %v4330 = vunpack.c.l.b16 %v3754
    %v4331 = vunpack.c.h.b16 %v3754
    %v4332 = vunpack.c.l.b16 %v3755
    %v4333 = vunpack.c.h.b16 %v3755
    %v4334 = vunpack.c.l.b16 %v3756
    %v4335 = vunpack.c.h.b16 %v3756
    %v4336 = vunpack.c.l.b16 %v3757
    %v4337 = vunpack.c.h.b16 %v3757
    %v4338 = vunpack.c.l.b16 %v3758
    %v4339 = vunpack.c.h.b16 %v3758
    %v4340 = vunpack.c.l.b16 %v3759
    %v4341 = vunpack.c.h.b16 %v3759
    %v4342 = vunpack.c.l.b16 %v3760
    %v4343 = vunpack.c.h.b16 %v3760
    %v4344 = vunpack.c.l.b16 %v3761
    %v4345 = vunpack.c.h.b16 %v3761
    %v4346 = vunpack.c.l.b16 %v3762
    %v4347 = vunpack.c.h.b16 %v3762
    %v4348 = vunpack.c.l.b16 %v3763
    %v4349 = vunpack.c.h.b16 %v3763
    %v4350 = vunpack.c.l.b16 %v3764
    %v4351 = vunpack.c.h.b16 %v3764
    %v4352 = vunpack.c.l.b16 %v3765
    %v4353 = vunpack.c.h.b16 %v3765
    %v4354 = vunpack.c.l.b16 %v3766
    %v4355 = vunpack.c.h.b16 %v3766
    %v4356 = vunpack.c.l.b16 %v3767
    %v4357 = vunpack.c.h.b16 %v3767
    %v4358 = vunpack.c.l.b16 %v3768
    %v4359 = vunpack.c.h.b16 %v3768
    %v4360 = vunpack.c.l.b16 %v3769
    %v4361 = vunpack.c.h.b16 %v3769
    %v4362 = vunpack.c.l.b16 %v3770
    %v4363 = vunpack.c.h.b16 %v3770
    %v4364 = vunpack.c.l.b16 %v3771
    %v4365 = vunpack.c.h.b16 %v3771
    %v4366 = vunpack.c.l.b16 %v3772
    %v4367 = vunpack.c.h.b16 %v3772
    %v4368 = vunpack.c.l.b16 %v3773
    %v4369 = vunpack.c.h.b16 %v3773
    %v4370 = vunpack.c.l.b16 %v3774
    %v4371 = vunpack.c.h.b16 %v3774
    %v4372 = vunpack.c.l.b16 %v3775
    %v4373 = vunpack.c.h.b16 %v3775
    %v4374 = vunpack.c.l.b16 %v3776
    %v4375 = vunpack.c.h.b16 %v3776
    %v4376 = vunpack.c.l.b16 %v3777
    %v4377 = vunpack.c.h.b16 %v3777
    %v4378 = vunpack.c.l.b16 %v3778
    %v4379 = vunpack.c.h.b16 %v3778
    %v4380 = vunpack.c.l.b16 %v3779
    %v4381 = vunpack.c.h.b16 %v3779
    %v4382 = vunpack.c.l.b16 %v3780
    %v4383 = vunpack.c.h.b16 %v3780
    %v4384 = vunpack.c.l.b16 %v3781
    %v4385 = vunpack.c.h.b16 %v3781
    %v4386 = vunpack.c.l.b16 %v3782
    %v4387 = vunpack.c.h.b16 %v3782
    %v4388 = vunpack.c.l.b16 %v3783
    %v4389 = vunpack.c.h.b16 %v3783
    %v4390 = vunpack.c.l.b16 %v3784
    %v4391 = vunpack.c.h.b16 %v3784
    %v4392 = vunpack.c.l.b16 %v3785
    %v4393 = vunpack.c.h.b16 %v3785
    %v4394 = vunpack.c.l.b16 %v3786
    %v4395 = vunpack.c.h.b16 %v3786
    %v4396 = vunpack.c.l.b16 %v3787
    %v4397 = vunpack.c.h.b16 %v3787
    %v4398 = vunpack.c.l.b16 %v3788
    %v4399 = vunpack.c.h.b16 %v3788
    %v4400 = vunpack.c.l.b16 %v3789
    %v4401 = vunpack.c.h.b16 %v3789
    %v4402 = vunpack.c.l.b16 %v3790
    %v4403 = vunpack.c.h.b16 %v3790
    %v4404 = vunpack.c.l.b16 %v3791
    %v4405 = vunpack.c.h.b16 %v3791
    %v4406 = vunpack.c.l.b16 %v3792
    %v4407 = vunpack.c.h.b16 %v3792
    %v4408 = vunpack.c.l.b16 %v3793
    %v4409 = vunpack.c.h.b16 %v3793
    %v4410 = vunpack.c.l.b16 %v3794
    %v4411 = vunpack.c.h.b16 %v3794
    %v4412 = vunpack.c.l.b16 %v3795
    %v4413 = vunpack.c.h.b16 %v3795
    %v4414 = vunpack.c.l.b16 %v3796
    %v4415 = vunpack.c.h.b16 %v3796
    %v4416 = vunpack.c.l.b16 %v3797
    %v4417 = vunpack.c.h.b16 %v3797
    %v4418 = vunpack.c.l.b16 %v3798
    %v4419 = vunpack.c.h.b16 %v3798
    %v4420 = vunpack.c.l.b16 %v3799
    %v4421 = vunpack.c.h.b16 %v3799
    %v4422 = vunpack.c.l.b16 %v3800
    %v4423 = vunpack.c.h.b16 %v3800
    %v4424 = vunpack.c.l.b16 %v3801
    %v4425 = vunpack.c.h.b16 %v3801
    %v4426 = vunpack.c.l.b16 %v3802
    %v4427 = vunpack.c.h.b16 %v3802
    %v4428 = vunpack.c.l.b16 %v3803
    %v4429 = vunpack.c.h.b16 %v3803
    %v4430 = vunpack.c.l.b16 %v3804
    %v4431 = vunpack.c.h.b16 %v3804
    %v4432 = vunpack.c.l.b16 %v3805
    %v4433 = vunpack.c.h.b16 %v3805
    %v4434 = vunpack.c.l.b16 %v3806
    %v4435 = vunpack.c.h.b16 %v3806
    %v4436 = vunpack.c.l.b16 %v3807
    %v4437 = vunpack.c.h.b16 %v3807
    %v4438 = vunpack.c.l.b16 %v3808
    %v4439 = vunpack.c.h.b16 %v3808
    %v4440 = vunpack.c.l.b16 %v3809
    %v4441 = vunpack.c.h.b16 %v3809
    %v4442 = vunpack.c.l.b16 %v3810
    %v4443 = vunpack.c.h.b16 %v3810
    %v4444 = vunpack.c.l.b16 %v3811
    %v4445 = vunpack.c.h.b16 %v3811
    %v4446 = vunpack.c.l.b16 %v3812
    %v4447 = vunpack.c.h.b16 %v3812
    %v4448 = vunpack.c.l.b16 %v3813
    %v4449 = vunpack.c.h.b16 %v3813
    %v4450 = vunpack.c.l.b16 %v3814
    %v4451 = vunpack.c.h.b16 %v3814
    %v4452 = vunpack.c.l.b16 %v3815
    %v4453 = vunpack.c.h.b16 %v3815
    %v4454 = vunpack.c.l.b16 %v3816
    %v4455 = vunpack.c.h.b16 %v3816
    %v4456 = vunpack.c.l.b16 %v3817
    %v4457 = vunpack.c.h.b16 %v3817
    %v4458 = vunpack.c.l.b16 %v3818
    %v4459 = vunpack.c.h.b16 %v3818
    %v4460 = vunpack.c.l.b16 %v3819
    %v4461 = vunpack.c.h.b16 %v3819
    %v4462 = vunpack.c.l.b16 %v3820
    %v4463 = vunpack.c.h.b16 %v3820
    %v4464 = vunpack.c.l.b16 %v3821
    %v4465 = vunpack.c.h.b16 %v3821
    %v4466 = vunpack.c.l.b16 %v3822
    %v4467 = vunpack.c.h.b16 %v3822
    %v4468 = vunpack.c.l.b16 %v3823
    %v4469 = vunpack.c.h.b16 %v3823
    %v4470 = vunpack.c.l.b16 %v3824
    %v4471 = vunpack.c.h.b16 %v3824
    %v4472 = vunpack.c.l.b16 %v3825
    %v4473 = vunpack.c.h.b16 %v3825
    %v4474 = vunpack.c.l.b16 %v3826
    %v4475 = vunpack.c.h.b16 %v3826
    %v4476 = vunpack.c.l.b16 %v3827
    %v4477 = vunpack.c.h.b16 %v3827
    %v4478 = vunpack.c.l.b16 %v3828
    %v4479 = vunpack.c.h.b16 %v3828
    %v4480 = vunpack.c.l.b16 %v3829
    %v4481 = vunpack.c.h.b16 %v3829
    %v4482 = vunpack.c.l.b16 %v3830
    %v4483 = vunpack.c.h.b16 %v3830
    %v4484 = vunpack.c.l.b16 %v3831
    %v4485 = vunpack.c.h.b16 %v3831
    %v4486 = vunpack.c.l.b16 %v3832
    %v4487 = vunpack.c.h.b16 %v3832
    %v4488 = vunpack.c.l.b16 %v3833
    %v4489 = vunpack.c.h.b16 %v3833
    %v4490 = vunpack.c.l.b16 %v3834
    %v4491 = vunpack.c.h.b16 %v3834
    %v4492 = vunpack.c.l.b16 %v3835
    %v4493 = vunpack.c.h.b16 %v3835
    %v4494 = vunpack.c.l.b16 %v3836
    %v4495 = vunpack.c.h.b16 %v3836
    %v4496 = vunpack.c.l.b16 %v3837
    %v4497 = vunpack.c.h.b16 %v3837
    %v4498 = vunpack.c.l.b16 %v3838
    %v4499 = vunpack.c.h.b16 %v3838
    %v4500 = vunpack.c.l.b16 %v3839
    %v4501 = vunpack.c.h.b16 %v3839
    %v4502 = vunpack.c.l.b16 %v3840
    %v4503 = vunpack.c.h.b16 %v3840
    %v4504 = vunpack.c.l.b16 %v3841
    %v4505 = vunpack.c.h.b16 %v3841
    %v4506 = vunpack.c.l.b16 %v3842
    %v4507 = vunpack.c.h.b16 %v3842
    %v4508 = vunpack.c.l.b16 %v3843
    %v4509 = vunpack.c.h.b16 %v3843
    %v4510 = vunpack.c.l.b16 %v3844
    %v4511 = vunpack.c.h.b16 %v3844
    %v4512 = vunpack.c.l.b16 %v3845
    %v4513 = vunpack.c.h.b16 %v3845
    %v4514 = vunpack.c.l.b16 %v3846
    %v4515 = vunpack.c.h.b16 %v3846
    %v4516 = vunpack.c.l.b16 %v3847
    %v4517 = vunpack.c.h.b16 %v3847
    %v4518 = vunpack.c.l.b16 %v3848
    %v4519 = vunpack.c.h.b16 %v3848
    %v4520 = vunpack.c.l.b16 %v3849
    %v4521 = vunpack.c.h.b16 %v3849
    %v4522 = vunpack.c.l.b16 %v3850
    %v4523 = vunpack.c.h.b16 %v3850
    %v4524 = vunpack.c.l.b16 %v3851
    %v4525 = vunpack.c.h.b16 %v3851
    %v4526 = vunpack.c.l.b16 %v3852
    %v4527 = vunpack.c.h.b16 %v3852
    %v4528 = vunpack.c.l.b16 %v3853
    %v4529 = vunpack.c.h.b16 %v3853
    %v4530 = vunpack.c.l.b16 %v3854
    %v4531 = vunpack.c.h.b16 %v3854
    %v4532 = vunpack.c.l.b16 %v3855
    %v4533 = vunpack.c.h.b16 %v3855
    %v4534 = vunpack.c.l.b16 %v3856
    %v4535 = vunpack.c.h.b16 %v3856
    %v4536 = vunpack.c.l.b16 %v3857
    %v4537 = vunpack.c.h.b16 %v3857
    %v4538 = vunpack.c.l.b16 %v3858
    %v4539 = vunpack.c.h.b16 %v3858
    %v4540 = vunpack.c.l.b16 %v3859
    %v4541 = vunpack.c.h.b16 %v3859
    %v4542 = vunpack.c.l.b16 %v3860
    %v4543 = vunpack.c.h.b16 %v3860
    %v4544 = vunpack.c.l.b16 %v3861
    %v4545 = vunpack.c.h.b16 %v3861
    %v4546 = vunpack.c.l.b16 %v3862
    %v4547 = vunpack.c.h.b16 %v3862
    %v4548 = vunpack.c.l.b16 %v3863
    %v4549 = vunpack.c.h.b16 %v3863
    %v4550 = vunpack.c.l.b16 %v3864
    %v4551 = vunpack.c.h.b16 %v3864
    %v4552 = vunpack.c.l.b16 %v3865
    %v4553 = vunpack.c.h.b16 %v3865
    %v4554 = vunpack.c.l.b16 %v3866
    %v4555 = vunpack.c.h.b16 %v3866
    %v4556 = vunpack.c.l.b16 %v3867
    %v4557 = vunpack.c.h.b16 %v3867
    %v4558 = vunpack.c.l.b16 %v3868
    %v4559 = vunpack.c.h.b16 %v3868
    %v4560 = vunpack.c.l.b16 %v3869
    %v4561 = vunpack.c.h.b16 %v3869
    %v4562 = vunpack.c.l.b16 %v3870
    %v4563 = vunpack.c.h.b16 %v3870
    %v4564 = vunpack.c.l.b16 %v3871
    %v4565 = vunpack.c.h.b16 %v3871
    %v4566 = vunpack.c.l.b16 %v3872
    %v4567 = vunpack.c.h.b16 %v3872
    %v4568 = vunpack.c.l.b16 %v3873
    %v4569 = vunpack.c.h.b16 %v3873
    %v4570 = vunpack.c.l.b16 %v3874
    %v4571 = vunpack.c.h.b16 %v3874
    %v4572 = vunpack.c.l.b16 %v3875
    %v4573 = vunpack.c.h.b16 %v3875
    %v4574 = vunpack.c.l.b16 %v3876
    %v4575 = vunpack.c.h.b16 %v3876
    %v4576 = vunpack.c.l.b16 %v3877
    %v4577 = vunpack.c.h.b16 %v3877
    %v4578 = vunpack.c.l.b16 %v3878
    %v4579 = vunpack.c.h.b16 %v3878
    %v4580 = vunpack.c.l.b16 %v3879
    %v4581 = vunpack.c.h.b16 %v3879
    %v4582 = vunpack.c.l.b16 %v3880
    %v4583 = vunpack.c.h.b16 %v3880
    %v4584 = vunpack.c.l.b16 %v3881
    %v4585 = vunpack.c.h.b16 %v3881
    %v4586 = vunpack.c.l.b16 %v3882
    %v4587 = vunpack.c.h.b16 %v3882
    %v4588 = vunpack.c.l.b16 %v3883
    %v4589 = vunpack.c.h.b16 %v3883
    %v4590 = vunpack.c.l.b16 %v3884
    %v4591 = vunpack.c.h.b16 %v3884
    %v4592 = vunpack.c.l.b16 %v3885
    %v4593 = vunpack.c.h.b16 %v3885
    %v4594 = vunpack.c.l.b16 %v3886
    %v4595 = vunpack.c.h.b16 %v3886
    %v4596 = vunpack.c.l.b16 %v3887
    %v4597 = vunpack.c.h.b16 %v3887
    %v4598 = vunpack.c.l.b16 %v3888
    %v4599 = vunpack.c.h.b16 %v3888
    %v4600 = vunpack.c.l.b16 %v3889
    %v4601 = vunpack.c.h.b16 %v3889
    %v4602 = vunpack.c.l.b16 %v3890
    %v4603 = vunpack.c.h.b16 %v3890
    %v4604 = vunpack.c.l.b16 %v3891
    %v4605 = vunpack.c.h.b16 %v3891
    %v4606 = vunpack.c.l.b16 %v3892
    %v4607 = vunpack.c.h.b16 %v3892
    %v4608 = vunpack.c.l.b16 %v3893
    %v4609 = vunpack.c.h.b16 %v3893
    %v4610 = vunpack.c.l.b16 %v3894
    %v4611 = vunpack.c.h.b16 %v3894
    %v4612 = vunpack.c.l.b16 %v3895
    %v4613 = vunpack.c.h.b16 %v3895
    %v4614 = vunpack.c.l.b16 %v3896
    %v4615 = vunpack.c.h.b16 %v3896
    %v4616 = vunpack.c.l.b16 %v3897
    %v4617 = vunpack.c.h.b16 %v3897
    %v4618 = vunpack.c.l.b16 %v3898
    %v4619 = vunpack.c.h.b16 %v3898
    %v4620 = vunpack.c.l.b16 %v3899
    %v4621 = vunpack.c.h.b16 %v3899
    %v4622 = vunpack.c.l.b16 %v3900
    %v4623 = vunpack.c.h.b16 %v3900
    %v4624 = vunpack.c.l.b16 %v3901
    %v4625 = vunpack.c.h.b16 %v3901
    %v4626 = vunpack.c.l.b16 %v3902
    %v4627 = vunpack.c.h.b16 %v3902
    %v4628 = vunpack.c.l.b16 %v3903
    %v4629 = vunpack.c.h.b16 %v3903
    %v4630 = vunpack.c.l.b16 %v3904
    %v4631 = vunpack.c.h.b16 %v3904
    %v4632 = vunpack.c.l.b16 %v3905
    %v4633 = vunpack.c.h.b16 %v3905
    %v4634 = vunpack.c.l.b16 %v3906
    %v4635 = vunpack.c.h.b16 %v3906
    %v4636 = vunpack.c.l.b16 %v3907
    %v4637 = vunpack.c.h.b16 %v3907
    %v4638 = vunpack.c.l.b16 %v3908
    %v4639 = vunpack.c.h.b16 %v3908
    %v4640 = vunpack.c.l.b16 %v3909
    %v4641 = vunpack.c.h.b16 %v3909
    %v4642 = vunpack.c.l.b16 %v3910
    %v4643 = vunpack.c.h.b16 %v3910
    %v4644 = vunpack.c.l.b16 %v3911
    %v4645 = vunpack.c.h.b16 %v3911
    %v4646 = vunpack.c.l.b16 %v3912
    %v4647 = vunpack.c.h.b16 %v3912
    %v4648 = vunpack.c.l.b16 %v3913
    %v4649 = vunpack.c.h.b16 %v3913
    %v4650 = vunpack.c.l.b16 %v3914
    %v4651 = vunpack.c.h.b16 %v3914
    %v4652 = vunpack.c.l.b16 %v3915
    %v4653 = vunpack.c.h.b16 %v3915
    %v4654 = vunpack.c.l.b16 %v3916
    %v4655 = vunpack.c.h.b16 %v3916
    %v4656 = vunpack.c.l.b16 %v3917
    %v4657 = vunpack.c.h.b16 %v3917
    %v4658 = vunpack.c.l.b16 %v3918
    %v4659 = vunpack.c.h.b16 %v3918
    %v4660 = vunpack.c.l.b16 %v3919
    %v4661 = vunpack.c.h.b16 %v3919
    %v4662 = vunpack.c.l.b16 %v3920
    %v4663 = vunpack.c.h.b16 %v3920
    %v4664 = vunpack.c.l.b16 %v3921
    %v4665 = vunpack.c.h.b16 %v3921
    %v4666 = vunpack.c.l.b16 %v3922
    %v4667 = vunpack.c.h.b16 %v3922
    %v4668 = vunpack.c.l.b16 %v3923
    %v4669 = vunpack.c.h.b16 %v3923
    %v4670 = vunpack.c.l.b16 %v3924
    %v4671 = vunpack.c.h.b16 %v3924
    %v4672 = vunpack.c.l.b16 %v3925
    %v4673 = vunpack.c.h.b16 %v3925
    %v4674 = vunpack.c.l.b16 %v3926
    %v4675 = vunpack.c.h.b16 %v3926
    %v4676 = vunpack.c.l.b16 %v3927
    %v4677 = vunpack.c.h.b16 %v3927
    %v4678 = vunpack.c.l.b16 %v3928
    %v4679 = vunpack.c.h.b16 %v3928
    %v4680 = vunpack.c.l.b16 %v3929
    %v4681 = vunpack.c.h.b16 %v3929
    %v4682 = vunpack.c.l.b16 %v3930
    %v4683 = vunpack.c.h.b16 %v3930
    %v4684 = vunpack.c.l.b16 %v3931
    %v4685 = vunpack.c.h.b16 %v3931
    %v4686 = vunpack.c.l.b16 %v3932
    %v4687 = vunpack.c.h.b16 %v3932
    %v4688 = vunpack.c.l.b16 %v3933
    %v4689 = vunpack.c.h.b16 %v3933
    %v4690 = vunpack.c.l.b16 %v3934
    %v4691 = vunpack.c.h.b16 %v3934
    %v4692 = vunpack.c.l.b16 %v3935
    %v4693 = vunpack.c.h.b16 %v3935
    %v4694 = vunpack.c.l.b16 %v3936
    %v4695 = vunpack.c.h.b16 %v3936
    %v4696 = vunpack.c.l.b16 %v3937
    %v4697 = vunpack.c.h.b16 %v3937
    %v4698 = vunpack.c.l.b16 %v3938
    %v4699 = vunpack.c.h.b16 %v3938
    %v4700 = vunpack.c.l.b16 %v3939
    %v4701 = vunpack.c.h.b16 %v3939
    %v4702 = vunpack.c.l.b16 %v3940
    %v4703 = vunpack.c.h.b16 %v3940
    %v4704 = vunpack.c.l.b16 %v3941
    %v4705 = vunpack.c.h.b16 %v3941
    %v4706 = vunpack.c.l.b16 %v3942
    %v4707 = vunpack.c.h.b16 %v3942
    %v4708 = vunpack.c.l.b16 %v3943
    %v4709 = vunpack.c.h.b16 %v3943
    %v4710 = vunpack.c.l.b16 %v3944
    %v4711 = vunpack.c.h.b16 %v3944
    %v4712 = vunpack.c.l.b16 %v3945
    %v4713 = vunpack.c.h.b16 %v3945
    %v4714 = vunpack.c.l.b16 %v3946
    %v4715 = vunpack.c.h.b16 %v3946
    %v4716 = vunpack.c.l.b16 %v3947
    %v4717 = vunpack.c.h.b16 %v3947
    %v4718 = vunpack.c.l.b16 %v3948
    %v4719 = vunpack.c.h.b16 %v3948
    %v4720 = vunpack.c.l.b16 %v3949
    %v4721 = vunpack.c.h.b16 %v3949
    %v4722 = vunpack.c.l.b16 %v3950
    %v4723 = vunpack.c.h.b16 %v3950
    %v4724 = vunpack.c.l.b16 %v3951
    %v4725 = vunpack.c.h.b16 %v3951
    %v4726 = vunpack.c.l.b16 %v3952
    %v4727 = vunpack.c.h.b16 %v3952
    %v4728 = vunpack.c.l.b16 %v3953
    %v4729 = vunpack.c.h.b16 %v3953
    %v4730 = vunpack.c.l.b16 %v3954
    %v4731 = vunpack.c.h.b16 %v3954
    %v4732 = vunpack.c.l.b16 %v3955
    %v4733 = vunpack.c.h.b16 %v3955
    %v4734 = vunpack.c.l.b16 %v3956
    %v4735 = vunpack.c.h.b16 %v3956
    %v4736 = vunpack.c.l.b16 %v3957
    %v4737 = vunpack.c.h.b16 %v3957
    %v4738 = vunpack.c.l.b16 %v3958
    %v4739 = vunpack.c.h.b16 %v3958
    %v4740 = vunpack.c.l.b16 %v3959
    %v4741 = vunpack.c.h.b16 %v3959
    %v4742 = vunpack.c.l.b16 %v3960
    %v4743 = vunpack.c.h.b16 %v3960
    %v4744 = vunpack.c.l.b16 %v3961
    %v4745 = vunpack.c.h.b16 %v3961
    %v4746 = vunpack.c.l.b16 %v3962
    %v4747 = vunpack.c.h.b16 %v3962
    %v4748 = vunpack.c.l.b16 %v3963
    %v4749 = vunpack.c.h.b16 %v3963
    %v4750 = vunpack.c.l.b16 %v3964
    %v4751 = vunpack.c.h.b16 %v3964
    %v4752 = vunpack.c.l.b16 %v3965
    %v4753 = vunpack.c.h.b16 %v3965
    %v4754 = vunpack.c.l.b16 %v3966
    %v4755 = vunpack.c.h.b16 %v3966
    %v4756 = vunpack.c.l.b16 %v3967
    %v4757 = vunpack.c.h.b16 %v3967
    %v4758 = vpack.c.b16 %v4250, %v4246
    %v4759 = vpack.c.b16 %v4251, %v4247
    %v4760 = vpack.c.b16 %v4252, %v4248
    %v4761 = vpack.c.b16 %v4253, %v4249
    %v4762 = vpack.c.b16 %v4258, %v4254
    %v4763 = vpack.c.b16 %v4259, %v4255
    %v4764 = vpack.c.b16 %v4260, %v4256
    %v4765 = vpack.c.b16 %v4261, %v4257
    %v4766 = vpack.c.b16 %v4266, %v4262
    %v4767 = vpack.c.b16 %v4267, %v4263
    %v4768 = vpack.c.b16 %v4268, %v4264
    %v4769 = vpack.c.b16 %v4269, %v4265
    %v4770 = vpack.c.b16 %v4274, %v4270
    %v4771 = vpack.c.b16 %v4275, %v4271
    %v4772 = vpack.c.b16 %v4276, %v4272
    %v4773 = vpack.c.b16 %v4277, %v4273
    %v4774 = vpack.c.b16 %v4282, %v4278
    %v4775 = vpack.c.b16 %v4283, %v4279
    %v4776 = vpack.c.b16 %v4284, %v4280
    %v4777 = vpack.c.b16 %v4285, %v4281
    %v4778 = vpack.c.b16 %v4290, %v4286
    %v4779 = vpack.c.b16 %v4291, %v4287
    %v4780 = vpack.c.b16 %v4292, %v4288
    %v4781 = vpack.c.b16 %v4293, %v4289
    %v4782 = vpack.c.b16 %v4298, %v4294
    %v4783 = vpack.c.b16 %v4299, %v4295
    %v4784 = vpack.c.b16 %v4300, %v4296
    %v4785 = vpack.c.b16 %v4301, %v4297
    %v4786 = vpack.c.b16 %v4306, %v4302
    %v4787 = vpack.c.b16 %v4307, %v4303
    %v4788 = vpack.c.b16 %v4308, %v4304
    %v4789 = vpack.c.b16 %v4309, %v4305
    %v4790 = vpack.c.b16 %v4314, %v4310
    %v4791 = vpack.c.b16 %v4315, %v4311
    %v4792 = vpack.c.b16 %v4316, %v4312
    %v4793 = vpack.c.b16 %v4317, %v4313
    %v4794 = vpack.c.b16 %v4322, %v4318
    %v4795 = vpack.c.b16 %v4323, %v4319
    %v4796 = vpack.c.b16 %v4324, %v4320
    %v4797 = vpack.c.b16 %v4325, %v4321
    %v4798 = vpack.c.b16 %v4330, %v4326
    %v4799 = vpack.c.b16 %v4331, %v4327
    %v4800 = vpack.c.b16 %v4332, %v4328
    %v4801 = vpack.c.b16 %v4333, %v4329
    %v4802 = vpack.c.b16 %v4338, %v4334
    %v4803 = vpack.c.b16 %v4339, %v4335
    %v4804 = vpack.c.b16 %v4340, %v4336
    %v4805 = vpack.c.b16 %v4341, %v4337
    %v4806 = vpack.c.b16 %v4346, %v4342
    %v4807 = vpack.c.b16 %v4347, %v4343
    %v4808 = vpack.c.b16 %v4348, %v4344
    %v4809 = vpack.c.b16 %v4349, %v4345
    %v4810 = vpack.c.b16 %v4354, %v4350
    %v4811 = vpack.c.b16 %v4355, %v4351
    %v4812 = vpack.c.b16 %v4356, %v4352
    %v4813 = vpack.c.b16 %v4357, %v4353
    %v4814 = vpack.c.b16 %v4362, %v4358
    %v4815 = vpack.c.b16 %v4363, %v4359
    %v4816 = vpack.c.b16 %v4364, %v4360
    %v4817 = vpack.c.b16 %v4365, %v4361
    %v4818 = vpack.c.b16 %v4370, %v4366
    %v4819 = vpack.c.b16 %v4371, %v4367
    %v4820 = vpack.c.b16 %v4372, %v4368
    %v4821 = vpack.c.b16 %v4373, %v4369
    %v4822 = vpack.c.b16 %v4378, %v4374
    %v4823 = vpack.c.b16 %v4379, %v4375
    %v4824 = vpack.c.b16 %v4380, %v4376
    %v4825 = vpack.c.b16 %v4381, %v4377
    %v4826 = vpack.c.b16 %v4386, %v4382
    %v4827 = vpack.c.b16 %v4387, %v4383
    %v4828 = vpack.c.b16 %v4388, %v4384
    %v4829 = vpack.c.b16 %v4389, %v4385
    %v4830 = vpack.c.b16 %v4394, %v4390
    %v4831 = vpack.c.b16 %v4395, %v4391
    %v4832 = vpack.c.b16 %v4396, %v4392
    %v4833 = vpack.c.b16 %v4397, %v4393
    %v4834 = vpack.c.b16 %v4402, %v4398
    %v4835 = vpack.c.b16 %v4403, %v4399
    %v4836 = vpack.c.b16 %v4404, %v4400
    %v4837 = vpack.c.b16 %v4405, %v4401
    %v4838 = vpack.c.b16 %v4410, %v4406
    %v4839 = vpack.c.b16 %v4411, %v4407
    %v4840 = vpack.c.b16 %v4412, %v4408
    %v4841 = vpack.c.b16 %v4413, %v4409
    %v4842 = vpack.c.b16 %v4418, %v4414
    %v4843 = vpack.c.b16 %v4419, %v4415
    %v4844 = vpack.c.b16 %v4420, %v4416
    %v4845 = vpack.c.b16 %v4421, %v4417
    %v4846 = vpack.c.b16 %v4426, %v4422
    %v4847 = vpack.c.b16 %v4427, %v4423
    %v4848 = vpack.c.b16 %v4428, %v4424
    %v4849 = vpack.c.b16 %v4429, %v4425
    %v4850 = vpack.c.b16 %v4434, %v4430
    %v4851 = vpack.c.b16 %v4435, %v4431
    %v4852 = vpack.c.b16 %v4436, %v4432
    %v4853 = vpack.c.b16 %v4437, %v4433
    %v4854 = vpack.c.b16 %v4442, %v4438
    %v4855 = vpack.c.b16 %v4443, %v4439
    %v4856 = vpack.c.b16 %v4444, %v4440
    %v4857 = vpack.c.b16 %v4445, %v4441
    %v4858 = vpack.c.b16 %v4450, %v4446
    %v4859 = vpack.c.b16 %v4451, %v4447
    %v4860 = vpack.c.b16 %v4452, %v4448
    %v4861 = vpack.c.b16 %v4453, %v4449
    %v4862 = vpack.c.b16 %v4458, %v4454
    %v4863 = vpack.c.b16 %v4459, %v4455
    %v4864 = vpack.c.b16 %v4460, %v4456
    %v4865 = vpack.c.b16 %v4461, %v4457
    %v4866 = vpack.c.b16 %v4466, %v4462
    %v4867 = vpack.c.b16 %v4467, %v4463
    %v4868 = vpack.c.b16 %v4468, %v4464
    %v4869 = vpack.c.b16 %v4469, %v4465
    %v4870 = vpack.c.b16 %v4474, %v4470
    %v4871 = vpack.c.b16 %v4475, %v4471
    %v4872 = vpack.c.b16 %v4476, %v4472
    %v4873 = vpack.c.b16 %v4477, %v4473
    %v4874 = vpack.c.b16 %v4482, %v4478
    %v4875 = vpack.c.b16 %v4483, %v4479
    %v4876 = vpack.c.b16 %v4484, %v4480
    %v4877 = vpack.c.b16 %v4485, %v4481
    %v4878 = vpack.c.b16 %v4490, %v4486
    %v4879 = vpack.c.b16 %v4491, %v4487
    %v4880 = vpack.c.b16 %v4492, %v4488
    %v4881 = vpack.c.b16 %v4493, %v4489
    %v4882 = vpack.c.b16 %v4498, %v4494
    %v4883 = vpack.c.b16 %v4499, %v4495
    %v4884 = vpack.c.b16 %v4500, %v4496
    %v4885 = vpack.c.b16 %v4501, %v4497
    %v4886 = vpack.c.b16 %v4506, %v4502
    %v4887 = vpack.c.b16 %v4507, %v4503
    %v4888 = vpack.c.b16 %v4508, %v4504
    %v4889 = vpack.c.b16 %v4509, %v4505
    %v4890 = vpack.c.b16 %v4514, %v4510
    %v4891 = vpack.c.b16 %v4515, %v4511
    %v4892 = vpack.c.b16 %v4516, %v4512
    %v4893 = vpack.c.b16 %v4517, %v4513
    %v4894 = vpack.c.b16 %v4522, %v4518
    %v4895 = vpack.c.b16 %v4523, %v4519
    %v4896 = vpack.c.b16 %v4524, %v4520
    %v4897 = vpack.c.b16 %v4525, %v4521
    %v4898 = vpack.c.b16 %v4530, %v4526
    %v4899 = vpack.c.b16 %v4531, %v4527
    %v4900 = vpack.c.b16 %v4532, %v4528
    %v4901 = vpack.c.b16 %v4533, %v4529
    %v4902 = vpack.c.b16 %v4538, %v4534
    %v4903 = vpack.c.b16 %v4539, %v4535
    %v4904 = vpack.c.b16 %v4540, %v4536
    %v4905 = vpack.c.b16 %v4541, %v4537
    %v4906 = vpack.c.b16 %v4546, %v4542
    %v4907 = vpack.c.b16 %v4547, %v4543
    %v4908 = vpack.c.b16 %v4548, %v4544
    %v4909 = vpack.c.b16 %v4549, %v4545
    %v4910 = vpack.c.b16 %v4554, %v4550
    %v4911 = vpack.c.b16 %v4555, %v4551
    %v4912 = vpack.c.b16 %v4556, %v4552
    %v4913 = vpack.c.b16 %v4557, %v4553
    %v4914 = vpack.c.b16 %v4562, %v4558
    %v4915 = vpack.c.b16 %v4563, %v4559
    %v4916 = vpack.c.b16 %v4564, %v4560
    %v4917 = vpack.c.b16 %v4565, %v4561
    %v4918 = vpack.c.b16 %v4570, %v4566
    %v4919 = vpack.c.b16 %v4571, %v4567
    %v4920 = vpack.c.b16 %v4572, %v4568
    %v4921 = vpack.c.b16 %v4573, %v4569
    %v4922 = vpack.c.b16 %v4578, %v4574
    %v4923 = vpack.c.b16 %v4579, %v4575
    %v4924 = vpack.c.b16 %v4580, %v4576
    %v4925 = vpack.c.b16 %v4581, %v4577
    %v4926 = vpack.c.b16 %v4586, %v4582
    %v4927 = vpack.c.b16 %v4587, %v4583
    %v4928 = vpack.c.b16 %v4588, %v4584
    %v4929 = vpack.c.b16 %v4589, %v4585
    %v4930 = vpack.c.b16 %v4594, %v4590
    %v4931 = vpack.c.b16 %v4595, %v4591
    %v4932 = vpack.c.b16 %v4596, %v4592
    %v4933 = vpack.c.b16 %v4597, %v4593
    %v4934 = vpack.c.b16 %v4602, %v4598
    %v4935 = vpack.c.b16 %v4603, %v4599
    %v4936 = vpack.c.b16 %v4604, %v4600
    %v4937 = vpack.c.b16 %v4605, %v4601
    %v4938 = vpack.c.b16 %v4610, %v4606
    %v4939 = vpack.c.b16 %v4611, %v4607
    %v4940 = vpack.c.b16 %v4612, %v4608
    %v4941 = vpack.c.b16 %v4613, %v4609
    %v4942 = vpack.c.b16 %v4618, %v4614
    %v4943 = vpack.c.b16 %v4619, %v4615
    %v4944 = vpack.c.b16 %v4620, %v4616
    %v4945 = vpack.c.b16 %v4621, %v4617
    %v4946 = vpack.c.b16 %v4626, %v4622
    %v4947 = vpack.c.b16 %v4627, %v4623
    %v4948 = vpack.c.b16 %v4628, %v4624
    %v4949 = vpack.c.b16 %v4629, %v4625
    %v4950 = vpack.c.b16 %v4634, %v4630
    %v4951 = vpack.c.b16 %v4635, %v4631
    %v4952 = vpack.c.b16 %v4636, %v4632
    %v4953 = vpack.c.b16 %v4637, %v4633
    %v4954 = vpack.c.b16 %v4642, %v4638
    %v4955 = vpack.c.b16 %v4643, %v4639
    %v4956 = vpack.c.b16 %v4644, %v4640
    %v4957 = vpack.c.b16 %v4645, %v4641
    %v4958 = vpack.c.b16 %v4650, %v4646
    %v4959 = vpack.c.b16 %v4651, %v4647
    %v4960 = vpack.c.b16 %v4652, %v4648
    %v4961 = vpack.c.b16 %v4653, %v4649
    %v4962 = vpack.c.b16 %v4658, %v4654
    %v4963 = vpack.c.b16 %v4659, %v4655
    %v4964 = vpack.c.b16 %v4660, %v4656
    %v4965 = vpack.c.b16 %v4661, %v4657
    %v4966 = vpack.c.b16 %v4666, %v4662
    %v4967 = vpack.c.b16 %v4667, %v4663
    %v4968 = vpack.c.b16 %v4668, %v4664
    %v4969 = vpack.c.b16 %v4669, %v4665
    %v4970 = vpack.c.b16 %v4674, %v4670
    %v4971 = vpack.c.b16 %v4675, %v4671
    %v4972 = vpack.c.b16 %v4676, %v4672
    %v4973 = vpack.c.b16 %v4677, %v4673
    %v4974 = vpack.c.b16 %v4682, %v4678
    %v4975 = vpack.c.b16 %v4683, %v4679
    %v4976 = vpack.c.b16 %v4684, %v4680
    %v4977 = vpack.c.b16 %v4685, %v4681
    %v4978 = vpack.c.b16 %v4690, %v4686
    %v4979 = vpack.c.b16 %v4691, %v4687
    %v4980 = vpack.c.b16 %v4692, %v4688
    %v4981 = vpack.c.b16 %v4693, %v4689
    %v4982 = vpack.c.b16 %v4698, %v4694
    %v4983 = vpack.c.b16 %v4699, %v4695
    %v4984 = vpack.c.b16 %v4700, %v4696
    %v4985 = vpack.c.b16 %v4701, %v4697
    %v4986 = vpack.c.b16 %v4706, %v4702
    %v4987 = vpack.c.b16 %v4707, %v4703
    %v4988 = vpack.c.b16 %v4708, %v4704
    %v4989 = vpack.c.b16 %v4709, %v4705
    %v4990 = vpack.c.b16 %v4714, %v4710
    %v4991 = vpack.c.b16 %v4715, %v4711
    %v4992 = vpack.c.b16 %v4716, %v4712
    %v4993 = vpack.c.b16 %v4717, %v4713
    %v4994 = vpack.c.b16 %v4722, %v4718
    %v4995 = vpack.c.b16 %v4723, %v4719
    %v4996 = vpack.c.b16 %v4724, %v4720
    %v4997 = vpack.c.b16 %v4725, %v4721
    %v4998 = vpack.c.b16 %v4730, %v4726
    %v4999 = vpack.c.b16 %v4731, %v4727
    %v5000 = vpack.c.b16 %v4732, %v4728
    %v5001 = vpack.c.b16 %v4733, %v4729
    %v5002 = vpack.c.b16 %v4738, %v4734
    %v5003 = vpack.c.b16 %v4739, %v4735
    %v5004 = vpack.c.b16 %v4740, %v4736
    %v5005 = vpack.c.b16 %v4741, %v4737
    %v5006 = vpack.c.b16 %v4746, %v4742
    %v5007 = vpack.c.b16 %v4747, %v4743
    %v5008 = vpack.c.b16 %v4748, %v4744
    %v5009 = vpack.c.b16 %v4749, %v4745
    %v5010 = vpack.c.b16 %v4754, %v4750
    %v5011 = vpack.c.b16 %v4755, %v4751
    %v5012 = vpack.c.b16 %v4756, %v4752
    %v5013 = vpack.c.b16 %v4757, %v4753
    %5270 = vmatprep.subr.bf16.mxu0 %v4759
    %5271 = vmatpush1.bf16.msra.mxu0 %v4758
    %5272 = vmatprep.subr.bf16.mxu0 %v4763
    %5273 = vmatpush1.bf16.msra.mxu0 %v4762
    %5274 = vmatprep.subr.bf16.mxu0 %v4767
    %5275 = vmatpush1.bf16.msra.mxu0 %v4766
    %5276 = vmatprep.subr.bf16.mxu0 %v4771
    %5277 = vmatpush1.bf16.msra.mxu0 %v4770
    %5278 = vmatprep.subr.bf16.mxu0 %v4775
    %5279 = vmatpush1.bf16.msra.mxu0 %v4774
    %5280 = vmatprep.subr.bf16.mxu0 %v4779
    %5281 = vmatpush1.bf16.msra.mxu0 %v4778
    %5282 = vmatprep.subr.bf16.mxu0 %v4783
    %5283 = vmatpush1.bf16.msra.mxu0 %v4782
    %5284 = vmatprep.subr.bf16.mxu0 %v4787
    %5285 = vmatpush1.bf16.msra.mxu0 %v4786
    %5286 = vmatprep.subr.bf16.mxu0 %v4791
    %5287 = vmatpush1.bf16.msra.mxu0 %v4790
    %5288 = vmatprep.subr.bf16.mxu0 %v4795
    %5289 = vmatpush1.bf16.msra.mxu0 %v4794
    %5290 = vmatprep.subr.bf16.mxu0 %v4799
    %5291 = vmatpush1.bf16.msra.mxu0 %v4798
    %5292 = vmatprep.subr.bf16.mxu0 %v4803
    %5293 = vmatpush1.bf16.msra.mxu0 %v4802
    %5294 = vmatprep.subr.bf16.mxu0 %v4807
    %5295 = vmatpush1.bf16.msra.mxu0 %v4806
    %5296 = vmatprep.subr.bf16.mxu0 %v4811
    %5297 = vmatpush1.bf16.msra.mxu0 %v4810
    %5298 = vmatprep.subr.bf16.mxu0 %v4815
    %5299 = vmatpush1.bf16.msra.mxu0 %v4814
    %5300 = vmatprep.subr.bf16.mxu0 %v4819
    %5301 = vmatpush1.bf16.msra.mxu0 %v4818
    %5302 = vmatprep.mubr.bf16.mxu0 %v3705
    %5303 = vmatmul.mubr.bf16.gmra.mrb[0].mxu0 %v3704
    %v5304 = vpop.f32.mrb[0].mxu0
    %v5305 = vadd.f32 %v3973, %v5304
    %v5306 = vpop.f32.mrb[0].mxu0
    %v5307 = vadd.f32 %v3977, %v5306
    %v5308 = vpop.f32.mrb[0].mxu0
    %v5309 = vadd.f32 %v3973, %v5308
    %v5310 = vpop.f32.mrb[0].mxu0
    %v5311 = vadd.f32 %v3977, %v5310
    %5312 = vdwg.mxu0
    %5313 = vmatprep.subr.bf16.mxu0 %v4823
    %5314 = vmatpush1.bf16.msra.mxu0 %v4822
    %5315 = vmatprep.subr.bf16.mxu0 %v4827
    %5316 = vmatpush1.bf16.msra.mxu0 %v4826
    %5317 = vmatprep.subr.bf16.mxu0 %v4831
    %5318 = vmatpush1.bf16.msra.mxu0 %v4830
    %5319 = vmatprep.subr.bf16.mxu0 %v4835
    %5320 = vmatpush1.bf16.msra.mxu0 %v4834
    %5321 = vmatprep.subr.bf16.mxu0 %v4839
    %5322 = vmatpush1.bf16.msra.mxu0 %v4838
    %5323 = vmatprep.subr.bf16.mxu0 %v4843
    %5324 = vmatpush1.bf16.msra.mxu0 %v4842
    %5325 = vmatprep.subr.bf16.mxu0 %v4847
    %5326 = vmatpush1.bf16.msra.mxu0 %v4846
    %5327 = vmatprep.subr.bf16.mxu0 %v4851
    %5328 = vmatpush1.bf16.msra.mxu0 %v4850
    %5329 = vmatprep.subr.bf16.mxu0 %v4855
    %5330 = vmatpush1.bf16.msra.mxu0 %v4854
    %5331 = vmatprep.subr.bf16.mxu0 %v4859
    %5332 = vmatpush1.bf16.msra.mxu0 %v4858
    %5333 = vmatprep.subr.bf16.mxu0 %v4863
    %5334 = vmatpush1.bf16.msra.mxu0 %v4862
    %5335 = vmatprep.subr.bf16.mxu0 %v4867
    %5336 = vmatpush1.bf16.msra.mxu0 %v4866
    %5337 = vmatprep.subr.bf16.mxu0 %v4871
    %5338 = vmatpush1.bf16.msra.mxu0 %v4870
    %5339 = vmatprep.subr.bf16.mxu0 %v4875
    %5340 = vmatpush1.bf16.msra.mxu0 %v4874
    %5341 = vmatprep.subr.bf16.mxu0 %v4879
    %5342 = vmatpush1.bf16.msra.mxu0 %v4878
    %5343 = vmatprep.subr.bf16.mxu0 %v4883
    %5344 = vmatpush1.bf16.msra.mxu0 %v4882
    %5345 = vmatprep.mubr.bf16.mxu0 %v3707
    %5346 = vmatmul.mubr.bf16.gmra.mrb[0].mxu0 %v3706
    %v5347 = vpop.f32.mrb[0].mxu0
    %v5348 = vadd.f32 %v5305, %v5347
    %v5349 = vpop.f32.mrb[0].mxu0
    %v5350 = vadd.f32 %v5307, %v5349
    %v5351 = vpop.f32.mrb[0].mxu0
    %v5352 = vadd.f32 %v5309, %v5351
    %v5353 = vpop.f32.mrb[0].mxu0
    %v5354 = vadd.f32 %v5311, %v5353
    %5355 = vdwg.mxu0
    %5356 = vmatprep.subr.bf16.mxu0 %v4887
    %5357 = vmatpush1.bf16.msra.mxu0 %v4886
    %5358 = vmatprep.subr.bf16.mxu0 %v4891
    %5359 = vmatpush1.bf16.msra.mxu0 %v4890
    %5360 = vmatprep.subr.bf16.mxu0 %v4895
    %5361 = vmatpush1.bf16.msra.mxu0 %v4894
    %5362 = vmatprep.subr.bf16.mxu0 %v4899
    %5363 = vmatpush1.bf16.msra.mxu0 %v4898
    %5364 = vmatprep.subr.bf16.mxu0 %v4903
    %5365 = vmatpush1.bf16.msra.mxu0 %v4902
    %5366 = vmatprep.subr.bf16.mxu0 %v4907
    %5367 = vmatpush1.bf16.msra.mxu0 %v4906
    %5368 = vmatprep.subr.bf16.mxu0 %v4911
    %5369 = vmatpush1.bf16.msra.mxu0 %v4910
    %5370 = vmatprep.subr.bf16.mxu0 %v4915
    %5371 = vmatpush1.bf16.msra.mxu0 %v4914
    %5372 = vmatprep.subr.bf16.mxu0 %v4919
    %5373 = vmatpush1.bf16.msra.mxu0 %v4918
    %5374 = vmatprep.subr.bf16.mxu0 %v4923
    %5375 = vmatpush1.bf16.msra.mxu0 %v4922
    %5376 = vmatprep.subr.bf16.mxu0 %v4927
    %5377 = vmatpush1.bf16.msra.mxu0 %v4926
    %5378 = vmatprep.subr.bf16.mxu0 %v4931
    %5379 = vmatpush1.bf16.msra.mxu0 %v4930
    %5380 = vmatprep.subr.bf16.mxu0 %v4935
    %5381 = vmatpush1.bf16.msra.mxu0 %v4934
    %5382 = vmatprep.subr.bf16.mxu0 %v4939
    %5383 = vmatpush1.bf16.msra.mxu0 %v4938
    %5384 = vmatprep.subr.bf16.mxu0 %v4943
    %5385 = vmatpush1.bf16.msra.mxu0 %v4942
    %5386 = vmatprep.subr.bf16.mxu0 %v4947
    %5387 = vmatpush1.bf16.msra.mxu0 %v4946
    %5388 = vmatprep.mubr.bf16.mxu0 %v3709
    %5389 = vmatmul.mubr.bf16.gmra.mrb[0].mxu0 %v3708
    %v5390 = vpop.f32.mrb[0].mxu0
    %v5391 = vadd.f32 %v5348, %v5390
    %v5392 = vpop.f32.mrb[0].mxu0
    %v5393 = vadd.f32 %v5350, %v5392
    %v5394 = vpop.f32.mrb[0].mxu0
    %v5395 = vadd.f32 %v5352, %v5394
    %v5396 = vpop.f32.mrb[0].mxu0
    %v5397 = vadd.f32 %v5354, %v5396
    %5398 = vdwg.mxu0
    %5399 = vmatprep.subr.bf16.mxu0 %v4951
    %5400 = vmatpush1.bf16.msra.mxu0 %v4950
    %5401 = vmatprep.subr.bf16.mxu0 %v4955
    %5402 = vmatpush1.bf16.msra.mxu0 %v4954
    %5403 = vmatprep.subr.bf16.mxu0 %v4959
    %5404 = vmatpush1.bf16.msra.mxu0 %v4958
    %5405 = vmatprep.subr.bf16.mxu0 %v4963
    %5406 = vmatpush1.bf16.msra.mxu0 %v4962
    %5407 = vmatprep.subr.bf16.mxu0 %v4967
    %5408 = vmatpush1.bf16.msra.mxu0 %v4966
    %5409 = vmatprep.subr.bf16.mxu0 %v4971
    %5410 = vmatpush1.bf16.msra.mxu0 %v4970
    %5411 = vmatprep.subr.bf16.mxu0 %v4975
    %5412 = vmatpush1.bf16.msra.mxu0 %v4974
    %5413 = vmatprep.subr.bf16.mxu0 %v4979
    %5414 = vmatpush1.bf16.msra.mxu0 %v4978
    %5415 = vmatprep.subr.bf16.mxu0 %v4983
    %5416 = vmatpush1.bf16.msra.mxu0 %v4982
    %5417 = vmatprep.subr.bf16.mxu0 %v4987
    %5418 = vmatpush1.bf16.msra.mxu0 %v4986
    %5419 = vmatprep.subr.bf16.mxu0 %v4991
    %5420 = vmatpush1.bf16.msra.mxu0 %v4990
    %5421 = vmatprep.subr.bf16.mxu0 %v4995
    %5422 = vmatpush1.bf16.msra.mxu0 %v4994
    %5423 = vmatprep.subr.bf16.mxu0 %v4999
    %5424 = vmatpush1.bf16.msra.mxu0 %v4998
    %5425 = vmatprep.subr.bf16.mxu0 %v5003
    %5426 = vmatpush1.bf16.msra.mxu0 %v5002
    %5427 = vmatprep.subr.bf16.mxu0 %v5007
    %5428 = vmatpush1.bf16.msra.mxu0 %v5006
    %5429 = vmatprep.subr.bf16.mxu0 %v5011
    %5430 = vmatpush1.bf16.msra.mxu0 %v5010
    %5431 = vmatprep.mubr.bf16.mxu0 %v3711
    %5432 = vmatmul.mubr.bf16.gmra.mrb[0].mxu0 %v3710
    %v5433 = vpop.f32.mrb[0].mxu0
    %v5434 = vadd.f32 %v5391, %v5433
    %v5435 = vpop.f32.mrb[0].mxu0
    %v5436 = vadd.f32 %v5393, %v5435
    %v5437 = vpop.f32.mrb[0].mxu0
    %v5438 = vadd.f32 %v5395, %v5437
    %v5439 = vpop.f32.mrb[0].mxu0
    %v5440 = vadd.f32 %v5397, %v5439
    %5441 = vdwg.mxu0
    %5442 = vmatprep.subr.bf16.mxu0 %v4761
    %5443 = vmatpush1.bf16.msra.mxu0 %v4760
    %5444 = vmatprep.subr.bf16.mxu0 %v4765
    %5445 = vmatpush1.bf16.msra.mxu0 %v4764
    %5446 = vmatprep.subr.bf16.mxu0 %v4769
    %5447 = vmatpush1.bf16.msra.mxu0 %v4768
    %5448 = vmatprep.subr.bf16.mxu0 %v4773
    %5449 = vmatpush1.bf16.msra.mxu0 %v4772
    %5450 = vmatprep.subr.bf16.mxu0 %v4777
    %5451 = vmatpush1.bf16.msra.mxu0 %v4776
    %5452 = vmatprep.subr.bf16.mxu0 %v4781
    %5453 = vmatpush1.bf16.msra.mxu0 %v4780
    %5454 = vmatprep.subr.bf16.mxu0 %v4785
    %5455 = vmatpush1.bf16.msra.mxu0 %v4784
    %5456 = vmatprep.subr.bf16.mxu0 %v4789
    %5457 = vmatpush1.bf16.msra.mxu0 %v4788
    %5458 = vmatprep.subr.bf16.mxu0 %v4793
    %5459 = vmatpush1.bf16.msra.mxu0 %v4792
    %5460 = vmatprep.subr.bf16.mxu0 %v4797
    %5461 = vmatpush1.bf16.msra.mxu0 %v4796
    %5462 = vmatprep.subr.bf16.mxu0 %v4801
    %5463 = vmatpush1.bf16.msra.mxu0 %v4800
    %5464 = vmatprep.subr.bf16.mxu0 %v4805
    %5465 = vmatpush1.bf16.msra.mxu0 %v4804
    %5466 = vmatprep.subr.bf16.mxu0 %v4809
    %5467 = vmatpush1.bf16.msra.mxu0 %v4808
    %5468 = vmatprep.subr.bf16.mxu0 %v4813
    %5469 = vmatpush1.bf16.msra.mxu0 %v4812
    %5470 = vmatprep.subr.bf16.mxu0 %v4817
    %5471 = vmatpush1.bf16.msra.mxu0 %v4816
    %5472 = vmatprep.subr.bf16.mxu0 %v4821
    %5473 = vmatpush1.bf16.msra.mxu0 %v4820
    %5474 = vmatprep.mubr.bf16.mxu0 %v3705
    %5475 = vmatmul.mubr.bf16.gmra.mrb[0].mxu0 %v3704
    %v5476 = vpop.f32.mrb[0].mxu0
    %v5477 = vadd.f32 %v3981, %v5476
    %v5478 = vpop.f32.mrb[0].mxu0
    %v5479 = vadd.f32 %v3985, %v5478
    %v5480 = vpop.f32.mrb[0].mxu0
    %v5481 = vadd.f32 %v3981, %v5480
    %v5482 = vpop.f32.mrb[0].mxu0
    %v5483 = vadd.f32 %v3985, %v5482
    %5484 = vdwg.mxu0
    %5485 = vmatprep.subr.bf16.mxu0 %v4825
    %5486 = vmatpush1.bf16.msra.mxu0 %v4824
    %5487 = vmatprep.subr.bf16.mxu0 %v4829
    %5488 = vmatpush1.bf16.msra.mxu0 %v4828
    %5489 = vmatprep.subr.bf16.mxu0 %v4833
    %5490 = vmatpush1.bf16.msra.mxu0 %v4832
    %5491 = vmatprep.subr.bf16.mxu0 %v4837
    %5492 = vmatpush1.bf16.msra.mxu0 %v4836
    %5493 = vmatprep.subr.bf16.mxu0 %v4841
    %5494 = vmatpush1.bf16.msra.mxu0 %v4840
    %5495 = vmatprep.subr.bf16.mxu0 %v4845
    %5496 = vmatpush1.bf16.msra.mxu0 %v4844
    %5497 = vmatprep.subr.bf16.mxu0 %v4849
    %5498 = vmatpush1.bf16.msra.mxu0 %v4848
    %5499 = vmatprep.subr.bf16.mxu0 %v4853
    %5500 = vmatpush1.bf16.msra.mxu0 %v4852
    %5501 = vmatprep.subr.bf16.mxu0 %v4857
    %5502 = vmatpush1.bf16.msra.mxu0 %v4856
    %5503 = vmatprep.subr.bf16.mxu0 %v4861
    %5504 = vmatpush1.bf16.msra.mxu0 %v4860
    %5505 = vmatprep.subr.bf16.mxu0 %v4865
    %5506 = vmatpush1.bf16.msra.mxu0 %v4864
    %5507 = vmatprep.subr.bf16.mxu0 %v4869
    %5508 = vmatpush1.bf16.msra.mxu0 %v4868
    %5509 = vmatprep.subr.bf16.mxu0 %v4873
    %5510 = vmatpush1.bf16.msra.mxu0 %v4872
    %5511 = vmatprep.subr.bf16.mxu0 %v4877
    %5512 = vmatpush1.bf16.msra.mxu0 %v4876
    %5513 = vmatprep.subr.bf16.mxu0 %v4881
    %5514 = vmatpush1.bf16.msra.mxu0 %v4880
    %5515 = vmatprep.subr.bf16.mxu0 %v4885
    %5516 = vmatpush1.bf16.msra.mxu0 %v4884
    %5517 = vmatprep.mubr.bf16.mxu0 %v3707
    %5518 = vmatmul.mubr.bf16.gmra.mrb[0].mxu0 %v3706
    %v5519 = vpop.f32.mrb[0].mxu0
    %v5520 = vadd.f32 %v5477, %v5519
    %v5521 = vpop.f32.mrb[0].mxu0
    %v5522 = vadd.f32 %v5479, %v5521
    %v5523 = vpop.f32.mrb[0].mxu0
    %v5524 = vadd.f32 %v5481, %v5523
    %v5525 = vpop.f32.mrb[0].mxu0
    %v5526 = vadd.f32 %v5483, %v5525
    %5527 = vdwg.mxu0
    %5528 = vmatprep.subr.bf16.mxu0 %v4889
    %5529 = vmatpush1.bf16.msra.mxu0 %v4888
    %5530 = vmatprep.subr.bf16.mxu0 %v4893
    %5531 = vmatpush1.bf16.msra.mxu0 %v4892
    %5532 = vmatprep.subr.bf16.mxu0 %v4897
    %5533 = vmatpush1.bf16.msra.mxu0 %v4896
    %5534 = vmatprep.subr.bf16.mxu0 %v4901
    %5535 = vmatpush1.bf16.msra.mxu0 %v4900
    %5536 = vmatprep.subr.bf16.mxu0 %v4905
    %5537 = vmatpush1.bf16.msra.mxu0 %v4904
    %5538 = vmatprep.subr.bf16.mxu0 %v4909
    %5539 = vmatpush1.bf16.msra.mxu0 %v4908
    %5540 = vmatprep.subr.bf16.mxu0 %v4913
    %5541 = vmatpush1.bf16.msra.mxu0 %v4912
    %5542 = vmatprep.subr.bf16.mxu0 %v4917
    %5543 = vmatpush1.bf16.msra.mxu0 %v4916
    %5544 = vmatprep.subr.bf16.mxu0 %v4921
    %5545 = vmatpush1.bf16.msra.mxu0 %v4920
    %5546 = vmatprep.subr.bf16.mxu0 %v4925
    %5547 = vmatpush1.bf16.msra.mxu0 %v4924
    %5548 = vmatprep.subr.bf16.mxu0 %v4929
    %5549 = vmatpush1.bf16.msra.mxu0 %v4928
    %5550 = vmatprep.subr.bf16.mxu0 %v4933
    %5551 = vmatpush1.bf16.msra.mxu0 %v4932
    %5552 = vmatprep.subr.bf16.mxu0 %v4937
    %5553 = vmatpush1.bf16.msra.mxu0 %v4936
    %5554 = vmatprep.subr.bf16.mxu0 %v4941
    %5555 = vmatpush1.bf16.msra.mxu0 %v4940
    %5556 = vmatprep.subr.bf16.mxu0 %v4945
    %5557 = vmatpush1.bf16.msra.mxu0 %v4944
    %5558 = vmatprep.subr.bf16.mxu0 %v4949
    %5559 = vmatpush1.bf16.msra.mxu0 %v4948
    %5560 = vmatprep.mubr.bf16.mxu0 %v3709
    %5561 = vmatmul.mubr.bf16.gmra.mrb[0].mxu0 %v3708
    %v5562 = vpop.f32.mrb[0].mxu0
    %v5563 = vadd.f32 %v5520, %v5562
    %v5564 = vpop.f32.mrb[0].mxu0
    %v5565 = vadd.f32 %v5522, %v5564
    %v5566 = vpop.f32.mrb[0].mxu0
    %v5567 = vadd.f32 %v5524, %v5566
    %v5568 = vpop.f32.mrb[0].mxu0
    %v5569 = vadd.f32 %v5526, %v5568
    %5570 = vdwg.mxu0
    %5571 = vmatprep.subr.bf16.mxu0 %v4953
    %5572 = vmatpush1.bf16.msra.mxu0 %v4952
    %5573 = vmatprep.subr.bf16.mxu0 %v4957
    %5574 = vmatpush1.bf16.msra.mxu0 %v4956
    %5575 = vmatprep.subr.bf16.mxu0 %v4961
    %5576 = vmatpush1.bf16.msra.mxu0 %v4960
    %5577 = vmatprep.subr.bf16.mxu0 %v4965
    %5578 = vmatpush1.bf16.msra.mxu0 %v4964
    %5579 = vmatprep.subr.bf16.mxu0 %v4969
    %5580 = vmatpush1.bf16.msra.mxu0 %v4968
    %5581 = vmatprep.subr.bf16.mxu0 %v4973
    %5582 = vmatpush1.bf16.msra.mxu0 %v4972
    %5583 = vmatprep.subr.bf16.mxu0 %v4977
    %5584 = vmatpush1.bf16.msra.mxu0 %v4976
    %5585 = vmatprep.subr.bf16.mxu0 %v4981
    %5586 = vmatpush1.bf16.msra.mxu0 %v4980
    %5587 = vmatprep.subr.bf16.mxu0 %v4985
    %5588 = vmatpush1.bf16.msra.mxu0 %v4984
    %5589 = vmatprep.subr.bf16.mxu0 %v4989
    %5590 = vmatpush1.bf16.msra.mxu0 %v4988
    %5591 = vmatprep.subr.bf16.mxu0 %v4993
    %5592 = vmatpush1.bf16.msra.mxu0 %v4992
    %5593 = vmatprep.subr.bf16.mxu0 %v4997
    %5594 = vmatpush1.bf16.msra.mxu0 %v4996
    %5595 = vmatprep.subr.bf16.mxu0 %v5001
    %5596 = vmatpush1.bf16.msra.mxu0 %v5000
    %5597 = vmatprep.subr.bf16.mxu0 %v5005
    %5598 = vmatpush1.bf16.msra.mxu0 %v5004
    %5599 = vmatprep.subr.bf16.mxu0 %v5009
    %5600 = vmatpush1.bf16.msra.mxu0 %v5008
    %5601 = vmatprep.subr.bf16.mxu0 %v5013
    %5602 = vmatpush1.bf16.msra.mxu0 %v5012
    %5603 = vmatprep.mubr.bf16.mxu0 %v3711
    %5604 = vmatmul.mubr.bf16.gmra.mrb[0].mxu0 %v3710
    %v5605 = vpop.f32.mrb[0].mxu0
    %v5606 = vadd.f32 %v5563, %v5605
    %v5607 = vpop.f32.mrb[0].mxu0
    %v5608 = vadd.f32 %v5565, %v5607
    %v5609 = vpop.f32.mrb[0].mxu0
    %v5610 = vadd.f32 %v5567, %v5609
    %v5611 = vpop.f32.mrb[0].mxu0
    %v5612 = vadd.f32 %v5569, %v5611
    %5613 = vdwg.mxu0
    %vm5614 = vcmp.gt.f32.partialorder %v5434, 0.0
    %vm5615 = vcmp.gt.f32.partialorder %v5436, 0.0
    %vm5616 = vcmp.gt.f32.partialorder %v5606, 0.0
    %vm5617 = vcmp.gt.f32.partialorder %v5608, 0.0
    %vm5618 = vcmp.gt.f32.partialorder %v5438, 0.0
    %vm5619 = vcmp.gt.f32.partialorder %v5440, 0.0
    %vm5620 = vcmp.gt.f32.partialorder %v5610, 0.0
    %vm5621 = vcmp.gt.f32.partialorder %v5612, 0.0
    %v5622 = vmul.f32 %v5434, 0.2
    %v5623 = vmul.f32 %v5436, 0.2
    %v5624 = vmul.f32 %v5606, 0.2
    %v5625 = vmul.f32 %v5608, 0.2
    %v5626 = vmul.f32 %v5438, 0.2
    %v5627 = vmul.f32 %v5440, 0.2
    %v5628 = vmul.f32 %v5610, 0.2
    %v5629 = vmul.f32 %v5612, 0.2
    %v5630 = vsel %vm5614, %v5434, %v5622
    %v5631 = vsel %vm5615, %v5436, %v5623
    %v5632 = vsel %vm5616, %v5606, %v5624
    %v5633 = vsel %vm5617, %v5608, %v5625
    %v5634 = vsel %vm5618, %v5438, %v5626
    %v5635 = vsel %vm5619, %v5440, %v5627
    %v5636 = vsel %vm5620, %v5610, %v5628
    %v5637 = vsel %vm5621, %v5612, %v5629
    %v5638 = vpack.c.bf16 %v5634, %v5630
    %v5639 = vpack.c.bf16 %v5635, %v5631
    %v5640 = vpack.c.bf16 %v5636, %v5632
    %v5641 = vpack.c.bf16 %v5637, %v5633
    %v5642 = vld [vmem:[#allocation10] sm:$0xff]
    %v5643 = vld [vmem:[#allocation10 + $0x8] sm:$0xff]
    %v5644 = vld [vmem:[#allocation10 + $0x10] sm:$0xff]
    %v5645 = vld [vmem:[#allocation10 + $0x18] sm:$0xff]
    %v5646 = vld [vmem:[#allocation10 + $0x20] sm:$0xff]
    %v5647 = vld [vmem:[#allocation10 + $0x28] sm:$0xff]
    %v5648 = vld [vmem:[#allocation10 + $0x30] sm:$0xff]
    %v5649 = vld [vmem:[#allocation10 + $0x38] sm:$0xff]
    %v5650 = vld [vmem:[#allocation10 + $0x40] sm:$0xff]
    %v5651 = vld [vmem:[#allocation10 + $0x48] sm:$0xff]
    %v5652 = vld [vmem:[#allocation10 + $0x50] sm:$0xff]
    %v5653 = vld [vmem:[#allocation10 + $0x58] sm:$0xff]
    %v5654 = vld [vmem:[#allocation10 + $0x60] sm:$0xff]
    %v5655 = vld [vmem:[#allocation10 + $0x68] sm:$0xff]
    %v5656 = vld [vmem:[#allocation10 + $0x70] sm:$0xff]
    %v5657 = vld [vmem:[#allocation10 + $0x78] sm:$0xff]
    %v5658 = vld [vmem:[#allocation10 + $0x80] sm:$0xff]
    %v5659 = vld [vmem:[#allocation10 + $0x88] sm:$0xff]
    %v5660 = vld [vmem:[#allocation10 + $0x90] sm:$0xff]
    %v5661 = vld [vmem:[#allocation10 + $0x98] sm:$0xff]
    %v5662 = vld [vmem:[#allocation10 + $0xa0] sm:$0xff]
    %v5663 = vld [vmem:[#allocation10 + $0xa8] sm:$0xff]
    %v5664 = vld [vmem:[#allocation10 + $0xb0] sm:$0xff]
    %v5665 = vld [vmem:[#allocation10 + $0xb8] sm:$0xff]
    %v5666 = vld [vmem:[#allocation10 + $0xc0] sm:$0xff]
    %v5667 = vld [vmem:[#allocation10 + $0xc8] sm:$0xff]
    %v5668 = vld [vmem:[#allocation10 + $0xd0] sm:$0xff]
    %v5669 = vld [vmem:[#allocation10 + $0xd8] sm:$0xff]
    %v5670 = vld [vmem:[#allocation10 + $0xe0] sm:$0xff]
    %v5671 = vld [vmem:[#allocation10 + $0xe8] sm:$0xff]
    %v5672 = vld [vmem:[#allocation10 + $0xf0] sm:$0xff]
    %v5673 = vld [vmem:[#allocation10 + $0xf8] sm:$0xff]
    %v5674 = vld [vmem:[#allocation10 + $0x100] sm:$0xff]
    %v5675 = vld [vmem:[#allocation10 + $0x108] sm:$0xff]
    %v5676 = vld [vmem:[#allocation10 + $0x110] sm:$0xff]
    %v5677 = vld [vmem:[#allocation10 + $0x118] sm:$0xff]
    %v5678 = vld [vmem:[#allocation10 + $0x120] sm:$0xff]
    %v5679 = vld [vmem:[#allocation10 + $0x128] sm:$0xff]
    %v5680 = vld [vmem:[#allocation10 + $0x130] sm:$0xff]
    %v5681 = vld [vmem:[#allocation10 + $0x138] sm:$0xff]
    %v5682 = vld [vmem:[#allocation10 + $0x140] sm:$0xff]
    %v5683 = vld [vmem:[#allocation10 + $0x148] sm:$0xff]
    %v5684 = vld [vmem:[#allocation10 + $0x150] sm:$0xff]
    %v5685 = vld [vmem:[#allocation10 + $0x158] sm:$0xff]
    %v5686 = vld [vmem:[#allocation10 + $0x160] sm:$0xff]
    %v5687 = vld [vmem:[#allocation10 + $0x168] sm:$0xff]
    %v5688 = vld [vmem:[#allocation10 + $0x170] sm:$0xff]
    %v5689 = vld [vmem:[#allocation10 + $0x178] sm:$0xff]
    %v5690 = vld [vmem:[#allocation10 + $0x180] sm:$0xff]
    %v5691 = vld [vmem:[#allocation10 + $0x188] sm:$0xff]
    %v5692 = vld [vmem:[#allocation10 + $0x190] sm:$0xff]
    %v5693 = vld [vmem:[#allocation10 + $0x198] sm:$0xff]
    %v5694 = vld [vmem:[#allocation10 + $0x1a0] sm:$0xff]
    %v5695 = vld [vmem:[#allocation10 + $0x1a8] sm:$0xff]
    %v5696 = vld [vmem:[#allocation10 + $0x1b0] sm:$0xff]
    %v5697 = vld [vmem:[#allocation10 + $0x1b8] sm:$0xff]
    %v5698 = vld [vmem:[#allocation10 + $0x1c0] sm:$0xff]
    %v5699 = vld [vmem:[#allocation10 + $0x1c8] sm:$0xff]
    %v5700 = vld [vmem:[#allocation10 + $0x1d0] sm:$0xff]
    %v5701 = vld [vmem:[#allocation10 + $0x1d8] sm:$0xff]
    %v5702 = vld [vmem:[#allocation10 + $0x1e0] sm:$0xff]
    %v5703 = vld [vmem:[#allocation10 + $0x1e8] sm:$0xff]
    %v5704 = vld [vmem:[#allocation10 + $0x1f0] sm:$0xff]
    %v5705 = vld [vmem:[#allocation10 + $0x1f8] sm:$0xff]
    %v5706 = vld [vmem:[#allocation12] sm:$0x3]
    %v5708 = vlaneseq
    %v5709 = vshrl.u32 %v5708, 7
    %v5710 = vsub.s32 0, %v5709
    %v5711 = vrot.slane %v5706, %v5710
    %v5712 = vlaneseq
    %v5713 = vshrl.u32 %v5712, 7
    %v5714 = vsub.s32 1, %v5713
    %v5715 = vrot.slane %v5706, %v5714
    %v5782 = vunpack.c.l.b16 %v5642
    %v5783 = vunpack.c.h.b16 %v5642
    %v5784 = vunpack.c.l.b16 %v5643
    %v5785 = vunpack.c.h.b16 %v5643
    %v5786 = vunpack.c.l.b16 %v5644
    %v5787 = vunpack.c.h.b16 %v5644
    %v5788 = vunpack.c.l.b16 %v5645
    %v5789 = vunpack.c.h.b16 %v5645
    %v5790 = vunpack.c.l.b16 %v5646
    %v5791 = vunpack.c.h.b16 %v5646
    %v5792 = vunpack.c.l.b16 %v5647
    %v5793 = vunpack.c.h.b16 %v5647
    %v5794 = vunpack.c.l.b16 %v5648
    %v5795 = vunpack.c.h.b16 %v5648
    %v5796 = vunpack.c.l.b16 %v5649
    %v5797 = vunpack.c.h.b16 %v5649
    %v5798 = vunpack.c.l.b16 %v5650
    %v5799 = vunpack.c.h.b16 %v5650
    %v5800 = vunpack.c.l.b16 %v5651
    %v5801 = vunpack.c.h.b16 %v5651
    %v5802 = vunpack.c.l.b16 %v5652
    %v5803 = vunpack.c.h.b16 %v5652
    %v5804 = vunpack.c.l.b16 %v5653
    %v5805 = vunpack.c.h.b16 %v5653
    %v5806 = vunpack.c.l.b16 %v5654
    %v5807 = vunpack.c.h.b16 %v5654
    %v5808 = vunpack.c.l.b16 %v5655
    %v5809 = vunpack.c.h.b16 %v5655
    %v5810 = vunpack.c.l.b16 %v5656
    %v5811 = vunpack.c.h.b16 %v5656
    %v5812 = vunpack.c.l.b16 %v5657
    %v5813 = vunpack.c.h.b16 %v5657
    %v5814 = vunpack.c.l.b16 %v5658
    %v5815 = vunpack.c.h.b16 %v5658
    %v5816 = vunpack.c.l.b16 %v5659
    %v5817 = vunpack.c.h.b16 %v5659
    %v5818 = vunpack.c.l.b16 %v5660
    %v5819 = vunpack.c.h.b16 %v5660
    %v5820 = vunpack.c.l.b16 %v5661
    %v5821 = vunpack.c.h.b16 %v5661
    %v5822 = vunpack.c.l.b16 %v5662
    %v5823 = vunpack.c.h.b16 %v5662
    %v5824 = vunpack.c.l.b16 %v5663
    %v5825 = vunpack.c.h.b16 %v5663
    %v5826 = vunpack.c.l.b16 %v5664
    %v5827 = vunpack.c.h.b16 %v5664
    %v5828 = vunpack.c.l.b16 %v5665
    %v5829 = vunpack.c.h.b16 %v5665
    %v5830 = vunpack.c.l.b16 %v5666
    %v5831 = vunpack.c.h.b16 %v5666
    %v5832 = vunpack.c.l.b16 %v5667
    %v5833 = vunpack.c.h.b16 %v5667
    %v5834 = vunpack.c.l.b16 %v5668
    %v5835 = vunpack.c.h.b16 %v5668
    %v5836 = vunpack.c.l.b16 %v5669
    %v5837 = vunpack.c.h.b16 %v5669
    %v5838 = vunpack.c.l.b16 %v5670
    %v5839 = vunpack.c.h.b16 %v5670
    %v5840 = vunpack.c.l.b16 %v5671
    %v5841 = vunpack.c.h.b16 %v5671
    %v5842 = vunpack.c.l.b16 %v5672
    %v5843 = vunpack.c.h.b16 %v5672
    %v5844 = vunpack.c.l.b16 %v5673
    %v5845 = vunpack.c.h.b16 %v5673
    %v5846 = vunpack.c.l.b16 %v5674
    %v5847 = vunpack.c.h.b16 %v5674
    %v5848 = vunpack.c.l.b16 %v5675
    %v5849 = vunpack.c.h.b16 %v5675
    %v5850 = vunpack.c.l.b16 %v5676
    %v5851 = vunpack.c.h.b16 %v5676
    %v5852 = vunpack.c.l.b16 %v5677
    %v5853 = vunpack.c.h.b16 %v5677
    %v5854 = vunpack.c.l.b16 %v5678
    %v5855 = vunpack.c.h.b16 %v5678
    %v5856 = vunpack.c.l.b16 %v5679
    %v5857 = vunpack.c.h.b16 %v5679
    %v5858 = vunpack.c.l.b16 %v5680
    %v5859 = vunpack.c.h.b16 %v5680
    %v5860 = vunpack.c.l.b16 %v5681
    %v5861 = vunpack.c.h.b16 %v5681
    %v5862 = vunpack.c.l.b16 %v5682
    %v5863 = vunpack.c.h.b16 %v5682
    %v5864 = vunpack.c.l.b16 %v5683
    %v5865 = vunpack.c.h.b16 %v5683
    %v5866 = vunpack.c.l.b16 %v5684
    %v5867 = vunpack.c.h.b16 %v5684
    %v5868 = vunpack.c.l.b16 %v5685
    %v5869 = vunpack.c.h.b16 %v5685
    %v5870 = vunpack.c.l.b16 %v5686
    %v5871 = vunpack.c.h.b16 %v5686
    %v5872 = vunpack.c.l.b16 %v5687
    %v5873 = vunpack.c.h.b16 %v5687
    %v5874 = vunpack.c.l.b16 %v5688
    %v5875 = vunpack.c.h.b16 %v5688
    %v5876 = vunpack.c.l.b16 %v5689
    %v5877 = vunpack.c.h.b16 %v5689
    %v5878 = vunpack.c.l.b16 %v5690
    %v5879 = vunpack.c.h.b16 %v5690
    %v5880 = vunpack.c.l.b16 %v5691
    %v5881 = vunpack.c.h.b16 %v5691
    %v5882 = vunpack.c.l.b16 %v5692
    %v5883 = vunpack.c.h.b16 %v5692
    %v5884 = vunpack.c.l.b16 %v5693
    %v5885 = vunpack.c.h.b16 %v5693
    %v5886 = vunpack.c.l.b16 %v5694
    %v5887 = vunpack.c.h.b16 %v5694
    %v5888 = vunpack.c.l.b16 %v5695
    %v5889 = vunpack.c.h.b16 %v5695
    %v5890 = vunpack.c.l.b16 %v5696
    %v5891 = vunpack.c.h.b16 %v5696
    %v5892 = vunpack.c.l.b16 %v5697
    %v5893 = vunpack.c.h.b16 %v5697
    %v5894 = vunpack.c.l.b16 %v5698
    %v5895 = vunpack.c.h.b16 %v5698
    %v5896 = vunpack.c.l.b16 %v5699
    %v5897 = vunpack.c.h.b16 %v5699
    %v5898 = vunpack.c.l.b16 %v5700
    %v5899 = vunpack.c.h.b16 %v5700
    %v5900 = vunpack.c.l.b16 %v5701
    %v5901 = vunpack.c.h.b16 %v5701
    %v5902 = vunpack.c.l.b16 %v5702
    %v5903 = vunpack.c.h.b16 %v5702
    %v5904 = vunpack.c.l.b16 %v5703
    %v5905 = vunpack.c.h.b16 %v5703
    %v5906 = vunpack.c.l.b16 %v5704
    %v5907 = vunpack.c.h.b16 %v5704
    %v5908 = vunpack.c.l.b16 %v5705
    %v5909 = vunpack.c.h.b16 %v5705
    %v5910 = vpack.c.b16 %v5784, %v5782
    %v5911 = vpack.c.b16 %v5785, %v5783
    %v5912 = vpack.c.b16 %v5788, %v5786
    %v5913 = vpack.c.b16 %v5789, %v5787
    %v5914 = vpack.c.b16 %v5792, %v5790
    %v5915 = vpack.c.b16 %v5793, %v5791
    %v5916 = vpack.c.b16 %v5796, %v5794
    %v5917 = vpack.c.b16 %v5797, %v5795
    %v5918 = vpack.c.b16 %v5800, %v5798
    %v5919 = vpack.c.b16 %v5801, %v5799
    %v5920 = vpack.c.b16 %v5804, %v5802
    %v5921 = vpack.c.b16 %v5805, %v5803
    %v5922 = vpack.c.b16 %v5808, %v5806
    %v5923 = vpack.c.b16 %v5809, %v5807
    %v5924 = vpack.c.b16 %v5812, %v5810
    %v5925 = vpack.c.b16 %v5813, %v5811
    %v5926 = vpack.c.b16 %v5816, %v5814
    %v5927 = vpack.c.b16 %v5817, %v5815
    %v5928 = vpack.c.b16 %v5820, %v5818
    %v5929 = vpack.c.b16 %v5821, %v5819
    %v5930 = vpack.c.b16 %v5824, %v5822
    %v5931 = vpack.c.b16 %v5825, %v5823
    %v5932 = vpack.c.b16 %v5828, %v5826
    %v5933 = vpack.c.b16 %v5829, %v5827
    %v5934 = vpack.c.b16 %v5832, %v5830
    %v5935 = vpack.c.b16 %v5833, %v5831
    %v5936 = vpack.c.b16 %v5836, %v5834
    %v5937 = vpack.c.b16 %v5837, %v5835
    %v5938 = vpack.c.b16 %v5840, %v5838
    %v5939 = vpack.c.b16 %v5841, %v5839
    %v5940 = vpack.c.b16 %v5844, %v5842
    %v5941 = vpack.c.b16 %v5845, %v5843
    %v5942 = vpack.c.b16 %v5848, %v5846
    %v5943 = vpack.c.b16 %v5849, %v5847
    %v5944 = vpack.c.b16 %v5852, %v5850
    %v5945 = vpack.c.b16 %v5853, %v5851
    %v5946 = vpack.c.b16 %v5856, %v5854
    %v5947 = vpack.c.b16 %v5857, %v5855
    %v5948 = vpack.c.b16 %v5860, %v5858
    %v5949 = vpack.c.b16 %v5861, %v5859
    %v5950 = vpack.c.b16 %v5864, %v5862
    %v5951 = vpack.c.b16 %v5865, %v5863
    %v5952 = vpack.c.b16 %v5868, %v5866
    %v5953 = vpack.c.b16 %v5869, %v5867
    %v5954 = vpack.c.b16 %v5872, %v5870
    %v5955 = vpack.c.b16 %v5873, %v5871
    %v5956 = vpack.c.b16 %v5876, %v5874
    %v5957 = vpack.c.b16 %v5877, %v5875
    %v5958 = vpack.c.b16 %v5880, %v5878
    %v5959 = vpack.c.b16 %v5881, %v5879
    %v5960 = vpack.c.b16 %v5884, %v5882
    %v5961 = vpack.c.b16 %v5885, %v5883
    %v5962 = vpack.c.b16 %v5888, %v5886
    %v5963 = vpack.c.b16 %v5889, %v5887
    %v5964 = vpack.c.b16 %v5892, %v5890
    %v5965 = vpack.c.b16 %v5893, %v5891
    %v5966 = vpack.c.b16 %v5896, %v5894
    %v5967 = vpack.c.b16 %v5897, %v5895
    %v5968 = vpack.c.b16 %v5900, %v5898
    %v5969 = vpack.c.b16 %v5901, %v5899
    %v5970 = vpack.c.b16 %v5904, %v5902
    %v5971 = vpack.c.b16 %v5905, %v5903
    %v5972 = vpack.c.b16 %v5908, %v5906
    %v5973 = vpack.c.b16 %v5909, %v5907
    %6038 = vmatprep.subr.bf16.mxu0 %v5911
    %6039 = vmatpush1.bf16.msra.mxu0 %v5910
    %6040 = vmatprep.subr.bf16.mxu0 %v5913
    %6041 = vmatpush1.bf16.msra.mxu0 %v5912
    %6042 = vmatprep.subr.bf16.mxu0 %v5915
    %6043 = vmatpush1.bf16.msra.mxu0 %v5914
    %6044 = vmatprep.subr.bf16.mxu0 %v5917
    %6045 = vmatpush1.bf16.msra.mxu0 %v5916
    %6046 = vmatprep.subr.bf16.mxu0 %v5919
    %6047 = vmatpush1.bf16.msra.mxu0 %v5918
    %6048 = vmatprep.subr.bf16.mxu0 %v5921
    %6049 = vmatpush1.bf16.msra.mxu0 %v5920
    %6050 = vmatprep.subr.bf16.mxu0 %v5923
    %6051 = vmatpush1.bf16.msra.mxu0 %v5922
    %6052 = vmatprep.subr.bf16.mxu0 %v5925
    %6053 = vmatpush1.bf16.msra.mxu0 %v5924
    %6054 = vmatprep.subr.bf16.mxu0 %v5927
    %6055 = vmatpush1.bf16.msra.mxu0 %v5926
    %6056 = vmatprep.subr.bf16.mxu0 %v5929
    %6057 = vmatpush1.bf16.msra.mxu0 %v5928
    %6058 = vmatprep.subr.bf16.mxu0 %v5931
    %6059 = vmatpush1.bf16.msra.mxu0 %v5930
    %6060 = vmatprep.subr.bf16.mxu0 %v5933
    %6061 = vmatpush1.bf16.msra.mxu0 %v5932
    %6062 = vmatprep.subr.bf16.mxu0 %v5935
    %6063 = vmatpush1.bf16.msra.mxu0 %v5934
    %6064 = vmatprep.subr.bf16.mxu0 %v5937
    %6065 = vmatpush1.bf16.msra.mxu0 %v5936
    %6066 = vmatprep.subr.bf16.mxu0 %v5939
    %6067 = vmatpush1.bf16.msra.mxu0 %v5938
    %6068 = vmatprep.subr.bf16.mxu0 %v5941
    %6069 = vmatpush1.bf16.msra.mxu0 %v5940
    %6070 = vmatprep.mubr.bf16.mxu0 %v5639
    %6071 = vmatmul.mubr.bf16.gmra.mrb[0].mxu0 %v5638
    %v6072 = vpop.f32.mrb[0].mxu0
    %v6073 = vadd.f32 %v5711, %v6072
    %v6074 = vpop.f32.mrb[0].mxu0
    %v6075 = vadd.f32 %v5715, %v6074
    %v6076 = vpop.f32.mrb[0].mxu0
    %v6077 = vadd.f32 %v5711, %v6076
    %v6078 = vpop.f32.mrb[0].mxu0
    %v6079 = vadd.f32 %v5715, %v6078
    %6080 = vdwg.mxu0
    %6081 = vmatprep.subr.bf16.mxu0 %v5943
    %6082 = vmatpush1.bf16.msra.mxu0 %v5942
    %6083 = vmatprep.subr.bf16.mxu0 %v5945
    %6084 = vmatpush1.bf16.msra.mxu0 %v5944
    %6085 = vmatprep.subr.bf16.mxu0 %v5947
    %6086 = vmatpush1.bf16.msra.mxu0 %v5946
    %6087 = vmatprep.subr.bf16.mxu0 %v5949
    %6088 = vmatpush1.bf16.msra.mxu0 %v5948
    %6089 = vmatprep.subr.bf16.mxu0 %v5951
    %6090 = vmatpush1.bf16.msra.mxu0 %v5950
    %6091 = vmatprep.subr.bf16.mxu0 %v5953
    %6092 = vmatpush1.bf16.msra.mxu0 %v5952
    %6093 = vmatprep.subr.bf16.mxu0 %v5955
    %6094 = vmatpush1.bf16.msra.mxu0 %v5954
    %6095 = vmatprep.subr.bf16.mxu0 %v5957
    %6096 = vmatpush1.bf16.msra.mxu0 %v5956
    %6097 = vmatprep.subr.bf16.mxu0 %v5959
    %6098 = vmatpush1.bf16.msra.mxu0 %v5958
    %6099 = vmatprep.subr.bf16.mxu0 %v5961
    %6100 = vmatpush1.bf16.msra.mxu0 %v5960
    %6101 = vmatprep.subr.bf16.mxu0 %v5963
    %6102 = vmatpush1.bf16.msra.mxu0 %v5962
    %6103 = vmatprep.subr.bf16.mxu0 %v5965
    %6104 = vmatpush1.bf16.msra.mxu0 %v5964
    %6105 = vmatprep.subr.bf16.mxu0 %v5967
    %6106 = vmatpush1.bf16.msra.mxu0 %v5966
    %6107 = vmatprep.subr.bf16.mxu0 %v5969
    %6108 = vmatpush1.bf16.msra.mxu0 %v5968
    %6109 = vmatprep.subr.bf16.mxu0 %v5971
    %6110 = vmatpush1.bf16.msra.mxu0 %v5970
    %6111 = vmatprep.subr.bf16.mxu0 %v5973
    %6112 = vmatpush1.bf16.msra.mxu0 %v5972
    %6113 = vmatprep.mubr.bf16.mxu0 %v5641
    %6114 = vmatmul.mubr.bf16.gmra.mrb[0].mxu0 %v5640
    %v6115 = vpop.f32.mrb[0].mxu0
    %v6116 = vadd.f32 %v6073, %v6115
    %v6117 = vpop.f32.mrb[0].mxu0
    %v6118 = vadd.f32 %v6075, %v6117
    %v6119 = vpop.f32.mrb[0].mxu0
    %v6120 = vadd.f32 %v6077, %v6119
    %v6121 = vpop.f32.mrb[0].mxu0
    %v6122 = vadd.f32 %v6079, %v6121
    %6123 = vdwg.mxu0
    %vm6124 = vcmp.gt.f32.partialorder %v6116, 0.0
    %vm6125 = vcmp.gt.f32.partialorder %v6118, 0.0
    %vm6126 = vcmp.gt.f32.partialorder %v6120, 0.0
    %vm6127 = vcmp.gt.f32.partialorder %v6122, 0.0
    %v6128 = vmul.f32 %v6116, 0.2
    %v6129 = vmul.f32 %v6118, 0.2
    %v6130 = vmul.f32 %v6120, 0.2
    %v6131 = vmul.f32 %v6122, 0.2
    %v6132 = vsel %vm6124, %v6116, %v6128
    %v6133 = vsel %vm6125, %v6118, %v6129
    %v6134 = vsel %vm6126, %v6120, %v6130
    %v6135 = vsel %vm6127, %v6122, %v6131
    %v6136 = vpack.c.bf16 %v6134, %v6132
    %v6137 = vpack.c.bf16 %v6135, %v6133
    %v6138 = vld [vmem:[#allocation13] sm:$0xf]
    %v6139 = vld [vmem:[#allocation13 + $0x4] sm:$0xf]
    %v6140 = vld [vmem:[#allocation13 + $0x8] sm:$0xf]
    %v6141 = vld [vmem:[#allocation13 + $0xc] sm:$0xf]
    %v6142 = vld [vmem:[#allocation13 + $0x10] sm:$0xf]
    %v6143 = vld [vmem:[#allocation13 + $0x14] sm:$0xf]
    %v6144 = vld [vmem:[#allocation13 + $0x18] sm:$0xf]
    %v6145 = vld [vmem:[#allocation13 + $0x1c] sm:$0xf]
    %v6146 = vld [vmem:[#allocation13 + $0x20] sm:$0xf]
    %v6147 = vld [vmem:[#allocation13 + $0x24] sm:$0xf]
    %v6148 = vld [vmem:[#allocation13 + $0x28] sm:$0xf]
    %v6149 = vld [vmem:[#allocation13 + $0x2c] sm:$0xf]
    %v6150 = vld [vmem:[#allocation13 + $0x30] sm:$0xf]
    %v6151 = vld [vmem:[#allocation13 + $0x34] sm:$0xf]
    %v6152 = vld [vmem:[#allocation13 + $0x38] sm:$0xf]
    %v6153 = vld [vmem:[#allocation13 + $0x3c] sm:$0xf]
    %v6154 = vld [vmem:[#allocation13 + $0x40] sm:$0xf]
    %v6155 = vld [vmem:[#allocation13 + $0x44] sm:$0xf]
    %v6156 = vld [vmem:[#allocation13 + $0x48] sm:$0xf]
    %v6157 = vld [vmem:[#allocation13 + $0x4c] sm:$0xf]
    %v6158 = vld [vmem:[#allocation13 + $0x50] sm:$0xf]
    %v6159 = vld [vmem:[#allocation13 + $0x54] sm:$0xf]
    %v6160 = vld [vmem:[#allocation13 + $0x58] sm:$0xf]
    %v6161 = vld [vmem:[#allocation13 + $0x5c] sm:$0xf]
    %v6162 = vld [vmem:[#allocation13 + $0x60] sm:$0xf]
    %v6163 = vld [vmem:[#allocation13 + $0x64] sm:$0xf]
    %v6164 = vld [vmem:[#allocation13 + $0x68] sm:$0xf]
    %v6165 = vld [vmem:[#allocation13 + $0x6c] sm:$0xf]
    %v6166 = vld [vmem:[#allocation13 + $0x70] sm:$0xf]
    %v6167 = vld [vmem:[#allocation13 + $0x74] sm:$0xf]
    %v6168 = vld [vmem:[#allocation13 + $0x78] sm:$0xf]
    %v6169 = vld [vmem:[#allocation13 + $0x7c] sm:$0xf]
    %v6170 = vld [vmem:[#allocation15] sm:$0x1]
    %v6172 = vlaneseq
    %v6173 = vshrl.u32 %v6172, 7
    %v6174 = vsub.s32 0, %v6173
    %v6175 = vrot.slane %v6170, %v6174
    %v6209 = vunpack.c.l.b16 %v6138
    %v6210 = vunpack.c.l.b16 %v6139
    %v6211 = vunpack.c.l.b16 %v6140
    %v6212 = vunpack.c.l.b16 %v6141
    %v6213 = vunpack.c.l.b16 %v6142
    %v6214 = vunpack.c.l.b16 %v6143
    %v6215 = vunpack.c.l.b16 %v6144
    %v6216 = vunpack.c.l.b16 %v6145
    %v6217 = vunpack.c.l.b16 %v6146
    %v6218 = vunpack.c.l.b16 %v6147
    %v6219 = vunpack.c.l.b16 %v6148
    %v6220 = vunpack.c.l.b16 %v6149
    %v6221 = vunpack.c.l.b16 %v6150
    %v6222 = vunpack.c.l.b16 %v6151
    %v6223 = vunpack.c.l.b16 %v6152
    %v6224 = vunpack.c.l.b16 %v6153
    %v6225 = vunpack.c.l.b16 %v6154
    %v6226 = vunpack.c.l.b16 %v6155
    %v6227 = vunpack.c.l.b16 %v6156
    %v6228 = vunpack.c.l.b16 %v6157
    %v6229 = vunpack.c.l.b16 %v6158
    %v6230 = vunpack.c.l.b16 %v6159
    %v6231 = vunpack.c.l.b16 %v6160
    %v6232 = vunpack.c.l.b16 %v6161
    %v6233 = vunpack.c.l.b16 %v6162
    %v6234 = vunpack.c.l.b16 %v6163
    %v6235 = vunpack.c.l.b16 %v6164
    %v6236 = vunpack.c.l.b16 %v6165
    %v6237 = vunpack.c.l.b16 %v6166
    %v6238 = vunpack.c.l.b16 %v6167
    %v6239 = vunpack.c.l.b16 %v6168
    %v6240 = vunpack.c.l.b16 %v6169
    %v6241 = vpack.c.b16 %v6210, %v6209
    %v6242 = vpack.c.b16 %v6212, %v6211
    %v6243 = vpack.c.b16 %v6214, %v6213
    %v6244 = vpack.c.b16 %v6216, %v6215
    %v6245 = vpack.c.b16 %v6218, %v6217
    %v6246 = vpack.c.b16 %v6220, %v6219
    %v6247 = vpack.c.b16 %v6222, %v6221
    %v6248 = vpack.c.b16 %v6224, %v6223
    %v6249 = vpack.c.b16 %v6226, %v6225
    %v6250 = vpack.c.b16 %v6228, %v6227
    %v6251 = vpack.c.b16 %v6230, %v6229
    %v6252 = vpack.c.b16 %v6232, %v6231
    %v6253 = vpack.c.b16 %v6234, %v6233
    %v6254 = vpack.c.b16 %v6236, %v6235
    %v6255 = vpack.c.b16 %v6238, %v6237
    %v6256 = vpack.c.b16 %v6240, %v6239
    %6273 = vmatprep.subr.bf16.mxu0 0
    %6274 = vmatpush1.bf16.msra.mxu0 %v6241
    %6275 = vmatprep.subr.bf16.mxu0 0
    %6276 = vmatpush1.bf16.msra.mxu0 %v6242
    %6277 = vmatprep.subr.bf16.mxu0 0
    %6278 = vmatpush1.bf16.msra.mxu0 %v6243
    %6279 = vmatprep.subr.bf16.mxu0 0
    %6280 = vmatpush1.bf16.msra.mxu0 %v6244
    %6281 = vmatprep.subr.bf16.mxu0 0
    %6282 = vmatpush1.bf16.msra.mxu0 %v6245
    %6283 = vmatprep.subr.bf16.mxu0 0
    %6284 = vmatpush1.bf16.msra.mxu0 %v6246
    %6285 = vmatprep.subr.bf16.mxu0 0
    %6286 = vmatpush1.bf16.msra.mxu0 %v6247
    %6287 = vmatprep.subr.bf16.mxu0 0
    %6288 = vmatpush1.bf16.msra.mxu0 %v6248
    %6289 = vmatprep.subr.bf16.mxu0 0
    %6290 = vmatpush1.bf16.msra.mxu0 %v6249
    %6291 = vmatprep.subr.bf16.mxu0 0
    %6292 = vmatpush1.bf16.msra.mxu0 %v6250
    %6293 = vmatprep.subr.bf16.mxu0 0
    %6294 = vmatpush1.bf16.msra.mxu0 %v6251
    %6295 = vmatprep.subr.bf16.mxu0 0
    %6296 = vmatpush1.bf16.msra.mxu0 %v6252
    %6297 = vmatprep.subr.bf16.mxu0 0
    %6298 = vmatpush1.bf16.msra.mxu0 %v6253
    %6299 = vmatprep.subr.bf16.mxu0 0
    %6300 = vmatpush1.bf16.msra.mxu0 %v6254
    %6301 = vmatprep.subr.bf16.mxu0 0
    %6302 = vmatpush1.bf16.msra.mxu0 %v6255
    %6303 = vmatprep.subr.bf16.mxu0 0
    %6304 = vmatpush1.bf16.msra.mxu0 %v6256
    %6305 = vmatprep.mubr.bf16.mxu0 %v6137
    %6306 = vmatmul.mubr.bf16.gmra.mrb[0].mxu0 %v6136
    %v6307 = vpop.f32.mrb[0].mxu0
    %v6308 = vadd.f32 %v6175, %v6307
    %v6309 = vpop.f32.mrb[0].mxu0
    %v6310 = vpop.f32.mrb[0].mxu0
    %v6311 = vadd.f32 %v6175, %v6310
    %v6312 = vpop.f32.mrb[0].mxu0
    %6313 = vdwg.mxu0
    %v6314 = vsub.f32 0.0, %v6308
    %v6315 = vsub.f32 0.0, %v6311
    %v6316 = vmul.f32 %v6314, 1.442695
    %v6317 = vpow.pop %v6316
    %v6318 = vmul.f32 %v6315, 1.442695
    %v6319 = vpow.pop %v6318
    %v6320 = vadd.f32 %v6317, 1.0
    %v6321 = vadd.f32 %v6319, 1.0
    %v6322 = vrcp.pop %v6320
    %v6323 = vrcp.pop %v6321
    %6324 = vst [vmem:[%s11] sm:$0xff] %v6322
    %6325 = vst [vmem:[%s11 + $0x8] sm:$0xff] %v6323
    // Predicated region
    $region82: #{discriminator_forward.1} parent=1 // pred_check
      _
    $region83: #{discriminator_forward.1} parent=1 // pred_check_branch
      %6327 = sbr.rel (0) target = $region85
    $region84: #{discriminator_forward.1} parent=1 // pred_region
      _
    $region85: #{discriminator_forward.1} parent=1 // pred_fallthru
      _
    // Predicated region
    $region86: #{discriminator_forward.1} parent=1 // pred_check
      _
    $region87: #{discriminator_forward.1} parent=1 // pred_check_branch
      %6329 = sbr.rel (0) target = $region89
    $region88: #{discriminator_forward.1} parent=1 // pred_region
      _
    $region89: #{discriminator_forward.1} parent=1 // pred_fallthru
      _
    %6330 = vsyncpa [#allocation3], 1
    %6331 = vsyncpa [#allocation5], 1
    %6332 = vsyncpa [#allocation8], 1
    %6333 = vsyncpa [#allocation11], 1
    %6334 = vsyncpa [#allocation14], 1

</llo_original>
